<compile_context>
chip_gen: v5e
topology: v5e:2x2
jax: 0.10.0
libtpu: 0.0.40
codegen_flags: <defaults>
</compile_context>

<pallas_src>
import functools
import math

import jax
import jax.numpy as jnp
from jax.experimental import pallas as pl
from jax.experimental.pallas import tpu as pltpu


_LANE = 128
_VMEM_LIMIT = 64 * 1024 * 1024          # safe on v5e/v6e (128 MiB) and v7x (64 MiB)
_TK_MAX = 2048                          # single K step below this; tile above


def _round_up(n, m):
    return ((n + m - 1) // m) * m


def _choose_tn(n):
    """Row-tile size: big tiles for bandwidth, >=2 grid steps when possible."""
    if n >= 2048:
        return 512
    if n >= 512:
        return 256
    if n >= 128:
        return 128
    return max(16, _round_up(n, 16))


# ---------------------------------------------------------------------------
# Pallas kernels
# ---------------------------------------------------------------------------
def _conv_kernel(*refs, partial_conv, relu):
    """im2col matmul with K-axis accumulation + pconv renorm + bias + ReLU.

    refs (in order): xp, w, b, [rg], o, acc
      xp : (TN, TK) bf16 input patches
      w  : (TK, Cp) bf16 flattened weights
      b  : (1,  Cp) f32 bias
      rg : (TN, 2)  f32 [partial-conv ratio, valid gate]   (partial_conv only)
      o  : (TN, Cp) f32 output
      acc: (TN, Cp) f32 VMEM accumulator scratch
    """
    idx = 0
    xp_ref = refs[idx]; idx += 1
    w_ref = refs[idx]; idx += 1
    b_ref = refs[idx]; idx += 1
    rg_ref = None
    if partial_conv:
        rg_ref = refs[idx]; idx += 1
    o_ref = refs[idx]; idx += 1
    acc_ref = refs[idx]

    k = pl.program_id(1)

    @pl.when(k == 0)
    def _():
        acc_ref[...] = jnp.zeros_like(acc_ref)

    acc_ref[...] += jnp.dot(xp_ref[...], w_ref[...],
                            preferred_element_type=jnp.float32)

    @pl.when(k == pl.num_programs(1) - 1)
    def _():
        out = acc_ref[...]
        if partial_conv:
            rg = rg_ref[...]                     # (TN, 2) f32
            out = out * rg[:, 0:1] + b_ref[...] * rg[:, 1:2]
        else:
            out = out + b_ref[...]
        if relu:
            out = jnp.maximum(out, 0.0)
        o_ref[...] = out.astype(o_ref.dtype)


def _fuse_kernel(t_ref, s_ref, wt_ref, ws_ref, b_ref, o_ref):
    """STF fusion: relu(concat(t, s) @ w + b) without materializing the concat."""
    acc = jnp.dot(t_ref[...], wt_ref[...], preferred_element_type=jnp.float32)
    acc = acc + jnp.dot(s_ref[...], ws_ref[...],
                        preferred_element_type=jnp.float32)
    o_ref[...] = jnp.maximum(acc + b_ref[...], 0.0).astype(o_ref.dtype)


# ---------------------------------------------------------------------------
# Wrappers
# ---------------------------------------------------------------------------
def _extract_patches(x, k, stride, pad):
    """x: (B, H, W, C) -> (B, Ho, Wo, k*k*C), patch order (kh, kw, C)."""
    # TODO(synk): in-kernel patch assembly (overlapping-window BlockSpecs) would
    # avoid the ~k*k x HBM im2col blow-up; patches are emitted in bf16 instead.
    if pad > 0:
        x = jnp.pad(x, ((0, 0), (pad, pad), (pad, pad), (0, 0)))
    B, Hp, Wp, C = x.shape
    Ho = (Hp - k) // stride + 1
    Wo = (Wp - k) // stride + 1
    cols = []
    for dy in range(k):
        for dx in range(k):
            cols.append(x[:, dy:dy + stride * Ho:stride,
                          dx:dx + stride * Wo:stride, :])
    patches = jnp.stack(cols, axis=3)                  # (B, Ho, Wo, k*k, C)
    return patches.reshape(B, Ho, Wo, k * k * C)


def conv2d_pallas(x, w, b, *, kernel, stride, pad, mask=None, relu=True):
    """(Partial) 2D convolution as a bf16 im2col-matmul Pallas kernel.

    x:    (B, H, W, Cin) f32
    mask: (B, H, W, 1) f32 binary (partial conv) or None (plain conv)
    w:    (k*k*Cin, Cout) f32, patch order (kh, kw, Cin);  b: (Cout,) f32
    returns (out (B,Ho,Wo,Cout) f32, new_mask (B,Ho,Wo,1) f32 or None)
    """
    B, H, W, Cin = x.shape
    Cout = w.shape[1]
    kk = kernel * kernel
    partial_conv = mask is not None

    xm = x * mask if partial_conv else x
    xp = _extract_patches(xm.astype(jnp.bfloat16), kernel, stride, pad)
    _, Ho, Wo, K = xp.shape
    N = B * Ho * Wo
    xp = xp.reshape(N, K)

    new_mask = None
    rg = None
    if partial_conv:
        # partial-conv renorm (single-channel mask, slide_winsize = k*k),
        # computed in plain JAX so the kernel output stays lane-dense.
        mp = _extract_patches(mask, kernel, stride, pad)        # (B,Ho,Wo,kk)
        msum = jnp.sum(mp, axis=-1, keepdims=True)              # (B,Ho,Wo,1)
        valid = (msum > 0.0).astype(jnp.float32)
        ratio = jnp.where(msum > 0.0,
                          float(kk) / jnp.maximum(msum, 1e-8), 0.0)
        new_mask = valid
        rg = jnp.concatenate([ratio, valid], axis=-1).reshape(N, 2)

    # lane-dense output: pad Cout up to a multiple of 128
    Cp = _round_up(Cout, _LANE)
    w_p = jnp.pad(w, ((0, 0), (0, Cp - Cout))).astype(jnp.bfloat16)
    b_p = jnp.pad(b, (0, Cp - Cout)).reshape(1, Cp).astype(jnp.float32)

    # K-reduction tiling (keeps resident weight tiles small for deep layers)
    if K > _TK_MAX:
        TK = 1152                                   # 9 * 128
        Kp = _round_up(K, TK)
    else:
        TK = K
        Kp = K
    if Kp != K:
        xp = jnp.pad(xp, ((0, 0), (0, Kp - K)))
        w_p = jnp.pad(w_p, ((0, Kp - K), (0, 0)))
    nk = Kp // TK

    # row tiling with explicit N padding (no full-N fallback)
    TN = _choose_tn(N)
    Np = _round_up(N, TN)
    if Np != N:
        xp = jnp.pad(xp, ((0, Np - N), (0, 0)))
        if partial_conv:
            rg = jnp.pad(rg, ((0, Np - N), (0, 0)))
    grid = (Np // TN, nk)

    in_specs = [
        pl.BlockSpec((TN, TK), lambda i, k: (i, k)),
        pl.BlockSpec((TK, Cp), lambda i, k: (k, 0)),
        pl.BlockSpec((1, Cp), lambda i, k: (0, 0)),
    ]
    inputs = [xp, w_p, b_p]
    if partial_conv:
        in_specs.append(pl.BlockSpec((TN, 2), lambda i, k: (i, 0)))
        inputs.append(rg)

    kern = functools.partial(_conv_kernel, partial_conv=partial_conv, relu=relu)
    out = pl.pallas_call(
        kern,
        out_shape=jax.ShapeDtypeStruct((Np, Cp), jnp.float32),
        grid=grid,
        in_specs=in_specs,
        out_specs=pl.BlockSpec((TN, Cp), lambda i, k: (i, 0)),
        scratch_shapes=[pltpu.VMEM((TN, Cp), jnp.float32)],
        compiler_params=pltpu.CompilerParams(
            dimension_semantics=("parallel", "arbitrary"),
            vmem_limit_bytes=_VMEM_LIMIT),
    )(*inputs)

    out = out[:N, :Cout].reshape(B, Ho, Wo, Cout)
    return out, new_mask


def fuse1x1_pallas(texture, structure, w, b):
    """STF 1x1 fusion conv: relu(concat([t, s], -1) @ w + b), concat-free."""
    B, H, W, C = texture.shape
    Cout = w.shape[1]
    Cp = _round_up(Cout, _LANE)
    N = B * H * W

    t2 = texture.reshape(N, C).astype(jnp.bfloat16)
    s2 = structure.reshape(N, C).astype(jnp.bfloat16)
    wt = jnp.pad(w[:C], ((0, 0), (0, Cp - Cout))).astype(jnp.bfloat16)
    ws = jnp.pad(w[C:], ((0, 0), (0, Cp - Cout))).astype(jnp.bfloat16)
    b_p = jnp.pad(b, (0, Cp - Cout)).reshape(1, Cp).astype(jnp.float32)

    TN = _choose_tn(N)
    Np = _round_up(N, TN)
    if Np != N:
        t2 = jnp.pad(t2, ((0, Np - N), (0, 0)))
        s2 = jnp.pad(s2, ((0, Np - N), (0, 0)))
    grid = (Np // TN,)

    out = pl.pallas_call(
        _fuse_kernel,
        out_shape=jax.ShapeDtypeStruct((Np, Cp), jnp.float32),
        grid=grid,
        in_specs=[
            pl.BlockSpec((TN, C), lambda i: (i, 0)),
            pl.BlockSpec((TN, C), lambda i: (i, 0)),
            pl.BlockSpec((C, Cp), lambda i: (0, 0)),
            pl.BlockSpec((C, Cp), lambda i: (0, 0)),
            pl.BlockSpec((1, Cp), lambda i: (0, 0)),
        ],
        out_specs=pl.BlockSpec((TN, Cp), lambda i: (i, 0)),
        compiler_params=pltpu.CompilerParams(
            dimension_semantics=("parallel",),
            vmem_limit_bytes=_VMEM_LIMIT),
    )(t2, s2, wt, ws, b_p)
    return out[:N, :Cout].reshape(B, H, W, Cout)


# ---------------------------------------------------------------------------
# Parameter initialisation (deterministic, in-script)
# ---------------------------------------------------------------------------
def _init_conv(key, cin, cout, k):
    fan_in = k * k * cin
    w = jax.random.normal(key, (fan_in, cout), jnp.float32) / math.sqrt(fan_in)
    b = jnp.zeros((cout,), jnp.float32)
    return {"w": w, "b": b}


def _parse_out_sample(out_sample):
    mode, k = out_sample.split("-")
    k = int(k)
    stride = 2 if mode == "down" else 1
    pad = k // 2
    return k, stride, pad


def init_encoder_params(key, in_channels, block_num):
    keys = iter(jax.random.split(key, 64))
    p = {}
    t_cfg = [(in_channels, block_num[0], "none-1"),
             (block_num[0], block_num[1], "down-3"),
             (block_num[1], block_num[2], "down-3"),
             (block_num[2], block_num[3], "down-3"),
             (block_num[3], block_num[4], "down-3")]
    s_cfg = [(in_channels, block_num[0], "none-3"),
             (block_num[0], block_num[1], "down-3"),
             (block_num[1], block_num[2], "down-3"),
             (block_num[2], block_num[3], "down-3"),
             (block_num[3], block_num[4], "down-3")]
    for i, (cin, cout, osamp) in enumerate(t_cfg, 1):
        k, s, pad = _parse_out_sample(osamp)
        p[f"t{i}"] = {
            "hist": _init_conv(next(keys), cin, cin, 3),   # HistModule conv3x3
            "conv": _init_conv(next(keys), cin, cout, k),  # PCAttBlock pconv
            "k": k, "s": s, "pad": pad,
        }
    for i, (cin, cout, osamp) in enumerate(s_cfg, 1):
        k, s, pad = _parse_out_sample(osamp)
        p[f"s{i}"] = {
            "conv": _init_conv(next(keys), cin, cout, k),
            "k": k, "s": s, "pad": pad,
        }
    for i, c in enumerate(block_num, 1):
        p[f"f{i}"] = _init_conv(next(keys), 2 * c, c, 1)   # STFModule 1x1 fuse
    return p


# ---------------------------------------------------------------------------
# Encoder blocks (mirroring the PyTorch module structure)
# ---------------------------------------------------------------------------
def texture_block(bp, x, mask):
    # TODO(synk): HistModule internals unknown; modelled as a 3x3 same-channel conv.
    cin = x.shape[-1]
    # Fold the residual (x + hist(x)) into the conv weight's centre tap so the
    # residual add + ReLU fuse into the kernel epilogue (no extra HBM pass):
    #   relu(x + conv(x) + b) == relu(conv'(x) + b),  conv' = conv + identity.
    rows = 4 * cin + jnp.arange(cin)                   # centre tap (kh=1, kw=1)
    w_eff = bp["hist"]["w"].at[rows, jnp.arange(cin)].add(1.0)
    x, _ = conv2d_pallas(x, w_eff, bp["hist"]["b"],
                         kernel=3, stride=1, pad=1, mask=None, relu=True)
    # TODO(synk): PCAttBlock context-attention skipped (context_encode=None).
    return conv2d_pallas(x, bp["conv"]["w"], bp["conv"]["b"],
                         kernel=bp["k"], stride=bp["s"], pad=bp["pad"],
                         mask=mask, relu=True)


def structure_block(bp, x, mask):
    # TODO(synk): PCAttBlock context-attention skipped (context_encode=None).
    return conv2d_pallas(x, bp["conv"]["w"], bp["conv"]["b"],
                         kernel=bp["k"], stride=bp["s"], pad=bp["pad"],
                         mask=mask, relu=True)


def stf_block(bp, texture, structure):
    # TODO(synk): STFModule internals unknown; modelled as concat + 1x1 conv + ReLU
    # (implemented concat-free as two dots into one accumulator).
    fusion = fuse1x1_pallas(texture, structure, bp["w"], bp["b"])
    return texture, structure, fusion


def encoder_forward(params, x_nchw, structure_nchw, mask_nchw,
                    context_encode=None):
    # NCHW -> NHWC
    x = jnp.transpose(x_nchw, (0, 2, 3, 1)).astype(jnp.float32)
    structure = jnp.transpose(structure_nchw, (0, 2, 3, 1)).astype(jnp.float32)
    mask = jnp.transpose(mask_nchw, (0, 2, 3, 1)).astype(jnp.float32)  # (B,H,W,1)

    texture = x
    mask_t, mask_s = mask, mask
    fusions, mask_t_list, mask_s_list = [], [], []
    for i in range(1, 6):
        texture, mask_t = texture_block(params[f"t{i}"], texture, mask_t)
        structure, mask_s = structure_block(params[f"s{i}"], structure, mask_s)
        texture, structure, fusion = stf_block(params[f"f{i}"],
                                               texture, structure)
        fusions.append(fusion)
        mask_t_list.append(mask_t)
        mask_s_list.append(mask_s)

    # make_f_mask_list(..., f_mode='cat'): concat structure & texture masks.
    mask_f_list = [jnp.concatenate([ms, mt], axis=-1)
                   for ms, mt in zip(mask_s_list, mask_t_list)]

    # back to NCHW to match the PyTorch convention
    fusions = [jnp.transpose(f, (0, 3, 1, 2)) for f in fusions]
    mask_f_list = [jnp.transpose(m, (0, 3, 1, 2)) for m in mask_f_list]
    return fusions, mask_f_list


# ---------------------------------------------------------------------------
if __name__ == "__main__":
    B, Cin, H, W = 2, 4, 16, 16
    block_num = [8, 16, 16, 32, 32]          # small stand-in for [64,...,512]

    key = jax.random.PRNGKey(0)
    k_p, k_x, k_s, k_m = jax.random.split(key, 4)

    params = init_encoder_params(k_p, Cin, block_num)

    x = jax.random.normal(k_x, (B, Cin, H, W), jnp.float32)
    structure = jax.random.normal(k_s, (B, Cin, H, W), jnp.float32)
    mask = (jax.random.uniform(k_m, (B, 1, H, W)) > 0.3).astype(jnp.float32)

    fwd = jax.jit(functools.partial(encoder_forward, params))
    fusions, mask_f_list = fwd(x, structure, mask)
    jax.block_until_ready(fusions)
    jax.block_until_ready(mask_f_list)

    assert len(fusions) == 5 and len(mask_f_list) == 5
    assert fusions[0].shape == (B, block_num[0], H, W)
    assert fusions[4].shape == (B, block_num[4], H // 16, W // 16)
    assert mask_f_list[0].shape == (B, 2, H, W)
    print("KERNEL_OK")
</pallas_src>

<mosaic_0001>
module attributes {stable_mosaic.version = 11 : i64} {
  func.func @_conv_kernel(%arg0: i32, %arg1: i32, %arg2: memref<256x36xbf16, #tpu.memory_space<vmem>>, %arg3: memref<36x128xbf16, #tpu.memory_space<vmem>>, %arg4: memref<1x128xf32, #tpu.memory_space<vmem>>, %arg5: memref<256x128xf32, #tpu.memory_space<vmem>>, %arg6: memref<256x128xf32, #tpu.memory_space<vmem>>) attributes {dimension_semantics = [#tpu.dimension_semantics<parallel>, #tpu.dimension_semantics<arbitrary>], iteration_bounds = array<i64: 2, 1>, scalar_prefetch = 0 : i64, scratch_operands = 1 : i64, tpu.core_type = #tpu.core_type<tc>, window_params = [{transform_indices = @transform_0, window_bounds = array<i64: 256, 36>}, {transform_indices = @transform_1, window_bounds = array<i64: 36, 128>}, {pipeline_mode = #tpu.pipeline_mode<synchronous>, transform_indices = @transform_2, window_bounds = array<i64: 1, 128>}, {transform_indices = @transform_3, window_bounds = array<i64: 256, 128>}]} {
    %c0_i32 = arith.constant 0 : i32
    %0 = arith.cmpi eq, %arg1, %c0_i32 : i32
    %1 = arith.extui %0 : i1 to i32
    %c0_i32_0 = arith.constant 0 : i32
    %2 = arith.cmpi ne, %1, %c0_i32_0 : i32
    scf.if %2 {
      %cst_10 = arith.constant 0.000000e+00 : f32
      %12 = vector.broadcast %cst_10 : f32 to vector<256x128xf32>
      %c0_11 = arith.constant 0 : index
      %c0_12 = arith.constant 0 : index
      %13 = vector.load %arg6[%c0_11, %c0_12] : memref<256x128xf32, #tpu.memory_space<vmem>>, vector<256x128xf32>
      tpu.vector_store %arg6[%c0_11, %c0_12], %12 {strides = array<i32>} : memref<256x128xf32, #tpu.memory_space<vmem>>, vector<256x128xf32>,
    } else {
    }
    %c0 = arith.constant 0 : index
    %c0_1 = arith.constant 0 : index
    %3 = vector.load %arg6[%c0, %c0_1] : memref<256x128xf32, #tpu.memory_space<vmem>>, vector<256x128xf32>
    %c0_2 = arith.constant 0 : index
    %c0_3 = arith.constant 0 : index
    %4 = vector.load %arg2[%c0_2, %c0_3] : memref<256x36xbf16, #tpu.memory_space<vmem>>, vector<256x36xbf16>
    %c0_4 = arith.constant 0 : index
    %c0_5 = arith.constant 0 : index
    %5 = vector.load %arg3[%c0_4, %c0_5] : memref<36x128xbf16, #tpu.memory_space<vmem>>, vector<36x128xbf16>
    %cst = arith.constant dense<0.000000e+00> : vector<256x128xf32>
    %6 = tpu.matmul %4, %5, %cst {dimension_numbers = #tpu.dot_dimension_numbers<[1], [0], [0], [1], [0, 0, 1, 1], [], []>} : vector<256x36xbf16>, vector<36x128xbf16>, vector<256x128xf32> -> vector<256x128xf32>
    %7 = arith.addf %3, %6 : vector<256x128xf32>
    %c0_6 = arith.constant 0 : index
    %c0_7 = arith.constant 0 : index
    %8 = vector.load %arg6[%c0_6, %c0_7] : memref<256x128xf32, #tpu.memory_space<vmem>>, vector<256x128xf32>
    tpu.vector_store %arg6[%c0_6, %c0_7], %7 {strides = array<i32>} : memref<256x128xf32, #tpu.memory_space<vmem>>, vector<256x128xf32>,
    %c0_i32_8 = arith.constant 0 : i32
    %9 = arith.cmpi eq, %arg1, %c0_i32_8 : i32
    %10 = arith.extui %9 : i1 to i32
    %c0_i32_9 = arith.constant 0 : i32
    %11 = arith.cmpi ne, %10, %c0_i32_9 : i32
    scf.if %11 {
      %c0_10 = arith.constant 0 : index
      %c0_11 = arith.constant 0 : index
      %12 = vector.load %arg6[%c0_10, %c0_11] : memref<256x128xf32, #tpu.memory_space<vmem>>, vector<256x128xf32>
      %c0_12 = arith.constant 0 : index
      %c0_13 = arith.constant 0 : index
      %13 = vector.load %arg4[%c0_12, %c0_13] : memref<1x128xf32, #tpu.memory_space<vmem>>, vector<1x128xf32>
      %14 = vector.broadcast %13 : vector<1x128xf32> to vector<256x128xf32>
      %15 = arith.addf %12, %14 : vector<256x128xf32>
      %cst_14 = arith.constant 0.000000e+00 : f32
      %16 = vector.broadcast %cst_14 : f32 to vector<256x128xf32>
      %17 = arith.maximumf %15, %16 : vector<256x128xf32>
      %c0_15 = arith.constant 0 : index
      %c0_16 = arith.constant 0 : index
      %18 = vector.load %arg5[%c0_15, %c0_16] : memref<256x128xf32, #tpu.memory_space<vmem>>, vector<256x128xf32>
      tpu.vector_store %arg5[%c0_15, %c0_16], %17 {strides = array<i32>} : memref<256x128xf32, #tpu.memory_space<vmem>>, vector<256x128xf32>,
    } else {
    }
    return
  }
  func.func @transform_0(%arg0: i32, %arg1: i32) -> (i32, i32) {
    %c0_i32 = arith.constant 0 : i32
    return %arg0, %arg1 : i32, i32
  }
  func.func @transform_1(%arg0: i32, %arg1: i32) -> (i32, i32) {
    %c0_i32 = arith.constant 0 : i32
    %c0_i32_0 = arith.constant 0 : i32
    return %arg1, %c0_i32 : i32, i32
  }
  func.func @transform_2(%arg0: i32, %arg1: i32) -> (i32, i32) {
    %c0_i32 = arith.constant 0 : i32
    %c0_i32_0 = arith.constant 0 : i32
    %c0_i32_1 = arith.constant 0 : i32
    return %c0_i32, %c0_i32_0 : i32, i32
  }
  func.func @transform_3(%arg0: i32, %arg1: i32) -> (i32, i32) {
    %c0_i32 = arith.constant 0 : i32
    %c0_i32_0 = arith.constant 0 : i32
    return %arg0, %c0_i32 : i32, i32
  }
}

module attributes {stable_mosaic.version = 11 : i64} {
  func.func @_conv_kernel(%arg0: i32, %arg1: i32, %arg2: memref<256x4xbf16, #tpu.memory_space<vmem>>, %arg3: memref<4x128xbf16, #tpu.memory_space<vmem>>, %arg4: memref<1x128xf32, #tpu.memory_space<vmem>>, %arg5: memref<256x2xf32, #tpu.memory_space<vmem>>, %arg6: memref<256x128xf32, #tpu.memory_space<vmem>>, %arg7: memref<256x128xf32, #tpu.memory_space<vmem>>) attributes {dimension_semantics = [#tpu.dimension_semantics<parallel>, #tpu.dimension_semantics<arbitrary>], iteration_bounds = array<i64: 2, 1>, scalar_prefetch = 0 : i64, scratch_operands = 1 : i64, tpu.core_type = #tpu.core_type<tc>, window_params = [{transform_indices = @transform_0, window_bounds = array<i64: 256, 4>}, {transform_indices = @transform_1, window_bounds = array<i64: 4, 128>}, {pipeline_mode = #tpu.pipeline_mode<synchronous>, transform_indices = @transform_2, window_bounds = array<i64: 1, 128>}, {transform_indices = @transform_3, window_bounds = array<i64: 256, 2>}, {transform_indices = @transform_4, window_bounds = array<i64: 256, 128>}]} {
    %c0_i32 = arith.constant 0 : i32
    %0 = arith.cmpi eq, %arg1, %c0_i32 : i32
    %1 = arith.extui %0 : i1 to i32
    %c0_i32_0 = arith.constant 0 : i32
    %2 = arith.cmpi ne, %1, %c0_i32_0 : i32
    scf.if %2 {
      %cst_10 = arith.constant 0.000000e+00 : f32
      %12 = vector.broadcast %cst_10 : f32 to vector<256x128xf32>
      %c0_11 = arith.constant 0 : index
      %c0_12 = arith.constant 0 : index
      %13 = vector.load %arg7[%c0_11, %c0_12] : memref<256x128xf32, #tpu.memory_space<vmem>>, vector<256x128xf32>
      tpu.vector_store %arg7[%c0_11, %c0_12], %12 {strides = array<i32>} : memref<256x128xf32, #tpu.memory_space<vmem>>, vector<256x128xf32>,
    } else {
    }
    %c0 = arith.constant 0 : index
    %c0_1 = arith.constant 0 : index
    %3 = vector.load %arg7[%c0, %c0_1] : memref<256x128xf32, #tpu.memory_space<vmem>>, vector<256x128xf32>
    %c0_2 = arith.constant 0 : index
    %c0_3 = arith.constant 0 : index
    %4 = vector.load %arg2[%c0_2, %c0_3] : memref<256x4xbf16, #tpu.memory_space<vmem>>, vector<256x4xbf16>
    %c0_4 = arith.constant 0 : index
    %c0_5 = arith.constant 0 : index
    %5 = vector.load %arg3[%c0_4, %c0_5] : memref<4x128xbf16, #tpu.memory_space<vmem>>, vector<4x128xbf16>
    %cst = arith.constant dense<0.000000e+00> : vector<256x128xf32>
    %6 = tpu.matmul %4, %5, %cst {dimension_numbers = #tpu.dot_dimension_numbers<[1], [0], [0], [1], [0, 0, 1, 1], [], []>} : vector<256x4xbf16>, vector<4x128xbf16>, vector<256x128xf32> -> vector<256x128xf32>
    %7 = arith.addf %3, %6 : vector<256x128xf32>
    %c0_6 = arith.constant 0 : index
    %c0_7 = arith.constant 0 : index
    %8 = vector.load %arg7[%c0_6, %c0_7] : memref<256x128xf32, #tpu.memory_space<vmem>>, vector<256x128xf32>
    tpu.vector_store %arg7[%c0_6, %c0_7], %7 {strides = array<i32>} : memref<256x128xf32, #tpu.memory_space<vmem>>, vector<256x128xf32>,
    %c0_i32_8 = arith.constant 0 : i32
    %9 = arith.cmpi eq, %arg1, %c0_i32_8 : i32
    %10 = arith.extui %9 : i1 to i32
    %c0_i32_9 = arith.constant 0 : i32
    %11 = arith.cmpi ne, %10, %c0_i32_9 : i32
    scf.if %11 {
      %c0_10 = arith.constant 0 : index
      %c0_11 = arith.constant 0 : index
      %12 = vector.load %arg7[%c0_10, %c0_11] : memref<256x128xf32, #tpu.memory_space<vmem>>, vector<256x128xf32>
      %c0_12 = arith.constant 0 : index
      %c0_13 = arith.constant 0 : index
      %13 = vector.load %arg5[%c0_12, %c0_13] : memref<256x2xf32, #tpu.memory_space<vmem>>, vector<256x2xf32>
      %14 = vector.extract_strided_slice %13 {offsets = [0, 0], sizes = [256, 1], strides = [1, 1]} : vector<256x2xf32> to vector<256x1xf32>
      %15 = vector.broadcast %14 : vector<256x1xf32> to vector<256x128xf32>
      %16 = arith.mulf %12, %15 : vector<256x128xf32>
      %c0_14 = arith.constant 0 : index
      %c0_15 = arith.constant 0 : index
      %17 = vector.load %arg4[%c0_14, %c0_15] : memref<1x128xf32, #tpu.memory_space<vmem>>, vector<1x128xf32>
      %18 = vector.extract_strided_slice %13 {offsets = [0, 1], sizes = [256, 1], strides = [1, 1]} : vector<256x2xf32> to vector<256x1xf32>
      %19 = vector.broadcast %17 : vector<1x128xf32> to vector<256x128xf32>
      %20 = vector.broadcast %18 : vector<256x1xf32> to vector<256x128xf32>
      %21 = arith.mulf %19, %20 : vector<256x128xf32>
      %22 = arith.addf %16, %21 : vector<256x128xf32>
      %cst_16 = arith.constant 0.000000e+00 : f32
      %23 = vector.broadcast %cst_16 : f32 to vector<256x128xf32>
      %24 = arith.maximumf %22, %23 : vector<256x128xf32>
      %c0_17 = arith.constant 0 : index
      %c0_18 = arith.constant 0 : index
      %25 = vector.load %arg6[%c0_17, %c0_18] : memref<256x128xf32, #tpu.memory_space<vmem>>, vector<256x128xf32>
      tpu.vector_store %arg6[%c0_17, %c0_18], %24 {strides = array<i32>} : memref<256x128xf32, #tpu.memory_space<vmem>>, vector<256x128xf32>,
    } else {
    }
    return
  }
  func.func @transform_0(%arg0: i32, %arg1: i32) -> (i32, i32) {
    %c0_i32 = arith.constant 0 : i32
    return %arg0, %arg1 : i32, i32
  }
  func.func @transform_1(%arg0: i32, %arg1: i32) -> (i32, i32) {
    %c0_i32 = arith.constant 0 : i32
    %c0_i32_0 = arith.constant 0 : i32
    return %arg1, %c0_i32 : i32, i32
  }
  func.func @transform_2(%arg0: i32, %arg1: i32) -> (i32, i32) {
    %c0_i32 = arith.constant 0 : i32
    %c0_i32_0 = arith.constant 0 : i32
    %c0_i32_1 = arith.constant 0 : i32
    return %c0_i32, %c0_i32_0 : i32, i32
  }
  func.func @transform_3(%arg0: i32, %arg1: i32) -> (i32, i32) {
    %c0_i32 = arith.constant 0 : i32
    %c0_i32_0 = arith.constant 0 : i32
    return %arg0, %c0_i32 : i32, i32
  }
  func.func @transform_4(%arg0: i32, %arg1: i32) -> (i32, i32) {
    %c0_i32 = arith.constant 0 : i32
    %c0_i32_0 = arith.constant 0 : i32
    return %arg0, %c0_i32 : i32, i32
  }
}

module attributes {stable_mosaic.version = 11 : i64} {
  func.func @_conv_kernel(%arg0: i32, %arg1: i32, %arg2: memref<256x36xbf16, #tpu.memory_space<vmem>>, %arg3: memref<36x128xbf16, #tpu.memory_space<vmem>>, %arg4: memref<1x128xf32, #tpu.memory_space<vmem>>, %arg5: memref<256x2xf32, #tpu.memory_space<vmem>>, %arg6: memref<256x128xf32, #tpu.memory_space<vmem>>, %arg7: memref<256x128xf32, #tpu.memory_space<vmem>>) attributes {dimension_semantics = [#tpu.dimension_semantics<parallel>, #tpu.dimension_semantics<arbitrary>], iteration_bounds = array<i64: 2, 1>, scalar_prefetch = 0 : i64, scratch_operands = 1 : i64, tpu.core_type = #tpu.core_type<tc>, window_params = [{transform_indices = @transform_0, window_bounds = array<i64: 256, 36>}, {transform_indices = @transform_1, window_bounds = array<i64: 36, 128>}, {pipeline_mode = #tpu.pipeline_mode<synchronous>, transform_indices = @transform_2, window_bounds = array<i64: 1, 128>}, {transform_indices = @transform_3, window_bounds = array<i64: 256, 2>}, {transform_indices = @transform_4, window_bounds = array<i64: 256, 128>}]} {
    %c0_i32 = arith.constant 0 : i32
    %0 = arith.cmpi eq, %arg1, %c0_i32 : i32
    %1 = arith.extui %0 : i1 to i32
    %c0_i32_0 = arith.constant 0 : i32
    %2 = arith.cmpi ne, %1, %c0_i32_0 : i32
    scf.if %2 {
      %cst_10 = arith.constant 0.000000e+00 : f32
      %12 = vector.broadcast %cst_10 : f32 to vector<256x128xf32>
      %c0_11 = arith.constant 0 : index
      %c0_12 = arith.constant 0 : index
      %13 = vector.load %arg7[%c0_11, %c0_12] : memref<256x128xf32, #tpu.memory_space<vmem>>, vector<256x128xf32>
      tpu.vector_store %arg7[%c0_11, %c0_12], %12 {strides = array<i32>} : memref<256x128xf32, #tpu.memory_space<vmem>>, vector<256x128xf32>,
    } else {
    }
    %c0 = arith.constant 0 : index
    %c0_1 = arith.constant 0 : index
    %3 = vector.load %arg7[%c0, %c0_1] : memref<256x128xf32, #tpu.memory_space<vmem>>, vector<256x128xf32>
    %c0_2 = arith.constant 0 : index
    %c0_3 = arith.constant 0 : index
    %4 = vector.load %arg2[%c0_2, %c0_3] : memref<256x36xbf16, #tpu.memory_space<vmem>>, vector<256x36xbf16>
    %c0_4 = arith.constant 0 : index
    %c0_5 = arith.constant 0 : index
    %5 = vector.load %arg3[%c0_4, %c0_5] : memref<36x128xbf16, #tpu.memory_space<vmem>>, vector<36x128xbf16>
    %cst = arith.constant dense<0.000000e+00> : vector<256x128xf32>
    %6 = tpu.matmul %4, %5, %cst {dimension_numbers = #tpu.dot_dimension_numbers<[1], [0], [0], [1], [0, 0, 1, 1], [], []>} : vector<256x36xbf16>, vector<36x128xbf16>, vector<256x128xf32> -> vector<256x128xf32>
    %7 = arith.addf %3, %6 : vector<256x128xf32>
    %c0_6 = arith.constant 0 : index
    %c0_7 = arith.constant 0 : index
    %8 = vector.load %arg7[%c0_6, %c0_7] : memref<256x128xf32, #tpu.memory_space<vmem>>, vector<256x128xf32>
    tpu.vector_store %arg7[%c0_6, %c0_7], %7 {strides = array<i32>} : memref<256x128xf32, #tpu.memory_space<vmem>>, vector<256x128xf32>,
    %c0_i32_8 = arith.constant 0 : i32
    %9 = arith.cmpi eq, %arg1, %c0_i32_8 : i32
    %10 = arith.extui %9 : i1 to i32
    %c0_i32_9 = arith.constant 0 : i32
    %11 = arith.cmpi ne, %10, %c0_i32_9 : i32
    scf.if %11 {
      %c0_10 = arith.constant 0 : index
      %c0_11 = arith.constant 0 : index
      %12 = vector.load %arg7[%c0_10, %c0_11] : memref<256x128xf32, #tpu.memory_space<vmem>>, vector<256x128xf32>
      %c0_12 = arith.constant 0 : index
      %c0_13 = arith.constant 0 : index
      %13 = vector.load %arg5[%c0_12, %c0_13] : memref<256x2xf32, #tpu.memory_space<vmem>>, vector<256x2xf32>
      %14 = vector.extract_strided_slice %13 {offsets = [0, 0], sizes = [256, 1], strides = [1, 1]} : vector<256x2xf32> to vector<256x1xf32>
      %15 = vector.broadcast %14 : vector<256x1xf32> to vector<256x128xf32>
      %16 = arith.mulf %12, %15 : vector<256x128xf32>
      %c0_14 = arith.constant 0 : index
      %c0_15 = arith.constant 0 : index
      %17 = vector.load %arg4[%c0_14, %c0_15] : memref<1x128xf32, #tpu.memory_space<vmem>>, vector<1x128xf32>
      %18 = vector.extract_strided_slice %13 {offsets = [0, 1], sizes = [256, 1], strides = [1, 1]} : vector<256x2xf32> to vector<256x1xf32>
      %19 = vector.broadcast %17 : vector<1x128xf32> to vector<256x128xf32>
      %20 = vector.broadcast %18 : vector<256x1xf32> to vector<256x128xf32>
      %21 = arith.mulf %19, %20 : vector<256x128xf32>
      %22 = arith.addf %16, %21 : vector<256x128xf32>
      %cst_16 = arith.constant 0.000000e+00 : f32
      %23 = vector.broadcast %cst_16 : f32 to vector<256x128xf32>
      %24 = arith.maximumf %22, %23 : vector<256x128xf32>
      %c0_17 = arith.constant 0 : index
      %c0_18 = arith.constant 0 : index
      %25 = vector.load %arg6[%c0_17, %c0_18] : memref<256x128xf32, #tpu.memory_space<vmem>>, vector<256x128xf32>
      tpu.vector_store %arg6[%c0_17, %c0_18], %24 {strides = array<i32>} : memref<256x128xf32, #tpu.memory_space<vmem>>, vector<256x128xf32>,
    } else {
    }
    return
  }
  func.func @transform_0(%arg0: i32, %arg1: i32) -> (i32, i32) {
    %c0_i32 = arith.constant 0 : i32
    return %arg0, %arg1 : i32, i32
  }
  func.func @transform_1(%arg0: i32, %arg1: i32) -> (i32, i32) {
    %c0_i32 = arith.constant 0 : i32
    %c0_i32_0 = arith.constant 0 : i32
    return %arg1, %c0_i32 : i32, i32
  }
  func.func @transform_2(%arg0: i32, %arg1: i32) -> (i32, i32) {
    %c0_i32 = arith.constant 0 : i32
    %c0_i32_0 = arith.constant 0 : i32
    %c0_i32_1 = arith.constant 0 : i32
    return %c0_i32, %c0_i32_0 : i32, i32
  }
  func.func @transform_3(%arg0: i32, %arg1: i32) -> (i32, i32) {
    %c0_i32 = arith.constant 0 : i32
    %c0_i32_0 = arith.constant 0 : i32
    return %arg0, %c0_i32 : i32, i32
  }
  func.func @transform_4(%arg0: i32, %arg1: i32) -> (i32, i32) {
    %c0_i32 = arith.constant 0 : i32
    %c0_i32_0 = arith.constant 0 : i32
    return %arg0, %c0_i32 : i32, i32
  }
}

module attributes {stable_mosaic.version = 11 : i64} {
  func.func @_fuse_kernel(%arg0: i32, %arg1: memref<256x8xbf16, #tpu.memory_space<vmem>>, %arg2: memref<256x8xbf16, #tpu.memory_space<vmem>>, %arg3: memref<8x128xbf16, #tpu.memory_space<vmem>>, %arg4: memref<8x128xbf16, #tpu.memory_space<vmem>>, %arg5: memref<1x128xf32, #tpu.memory_space<vmem>>, %arg6: memref<256x128xf32, #tpu.memory_space<vmem>>) attributes {dimension_semantics = [#tpu.dimension_semantics<parallel>], iteration_bounds = array<i64: 2>, scalar_prefetch = 0 : i64, scratch_operands = 0 : i64, tpu.core_type = #tpu.core_type<tc>, window_params = [{transform_indices = @transform_0, window_bounds = array<i64: 256, 8>}, {transform_indices = @transform_1, window_bounds = array<i64: 256, 8>}, {pipeline_mode = #tpu.pipeline_mode<synchronous>, transform_indices = @transform_2, window_bounds = array<i64: 8, 128>}, {pipeline_mode = #tpu.pipeline_mode<synchronous>, transform_indices = @transform_3, window_bounds = array<i64: 8, 128>}, {pipeline_mode = #tpu.pipeline_mode<synchronous>, transform_indices = @transform_4, window_bounds = array<i64: 1, 128>}, {transform_indices = @transform_5, window_bounds = array<i64: 256, 128>}]} {
    %c0 = arith.constant 0 : index
    %c0_0 = arith.constant 0 : index
    %0 = vector.load %arg1[%c0, %c0_0] : memref<256x8xbf16, #tpu.memory_space<vmem>>, vector<256x8xbf16>
    %c0_1 = arith.constant 0 : index
    %c0_2 = arith.constant 0 : index
    %1 = vector.load %arg3[%c0_1, %c0_2] : memref<8x128xbf16, #tpu.memory_space<vmem>>, vector<8x128xbf16>
    %cst = arith.constant dense<0.000000e+00> : vector<256x128xf32>
    %2 = tpu.matmul %0, %1, %cst {dimension_numbers = #tpu.dot_dimension_numbers<[1], [0], [0], [1], [0, 0, 1, 1], [], []>} : vector<256x8xbf16>, vector<8x128xbf16>, vector<256x128xf32> -> vector<256x128xf32>
    %c0_3 = arith.constant 0 : index
    %c0_4 = arith.constant 0 : index
    %3 = vector.load %arg2[%c0_3, %c0_4] : memref<256x8xbf16, #tpu.memory_space<vmem>>, vector<256x8xbf16>
    %c0_5 = arith.constant 0 : index
    %c0_6 = arith.constant 0 : index
    %4 = vector.load %arg4[%c0_5, %c0_6] : memref<8x128xbf16, #tpu.memory_space<vmem>>, vector<8x128xbf16>
    %cst_7 = arith.constant dense<0.000000e+00> : vector<256x128xf32>
    %5 = tpu.matmul %3, %4, %cst_7 {dimension_numbers = #tpu.dot_dimension_numbers<[1], [0], [0], [1], [0, 0, 1, 1], [], []>} : vector<256x8xbf16>, vector<8x128xbf16>, vector<256x128xf32> -> vector<256x128xf32>
    %6 = arith.addf %2, %5 : vector<256x128xf32>
    %c0_8 = arith.constant 0 : index
    %c0_9 = arith.constant 0 : index
    %7 = vector.load %arg5[%c0_8, %c0_9] : memref<1x128xf32, #tpu.memory_space<vmem>>, vector<1x128xf32>
    %8 = vector.broadcast %7 : vector<1x128xf32> to vector<256x128xf32>
    %9 = arith.addf %6, %8 : vector<256x128xf32>
    %cst_10 = arith.constant 0.000000e+00 : f32
    %10 = vector.broadcast %cst_10 : f32 to vector<256x128xf32>
    %11 = arith.maximumf %9, %10 : vector<256x128xf32>
    %c0_11 = arith.constant 0 : index
    %c0_12 = arith.constant 0 : index
    %12 = vector.load %arg6[%c0_11, %c0_12] : memref<256x128xf32, #tpu.memory_space<vmem>>, vector<256x128xf32>
    tpu.vector_store %arg6[%c0_11, %c0_12], %11 {strides = array<i32>} : memref<256x128xf32, #tpu.memory_space<vmem>>, vector<256x128xf32>,
    return
  }
  func.func @transform_0(%arg0: i32) -> (i32, i32) {
    %c0_i32 = arith.constant 0 : i32
    %c0_i32_0 = arith.constant 0 : i32
    return %arg0, %c0_i32 : i32, i32
  }
  func.func @transform_1(%arg0: i32) -> (i32, i32) {
    %c0_i32 = arith.constant 0 : i32
    %c0_i32_0 = arith.constant 0 : i32
    return %arg0, %c0_i32 : i32, i32
  }
  func.func @transform_2(%arg0: i32) -> (i32, i32) {
    %c0_i32 = arith.constant 0 : i32
    %c0_i32_0 = arith.constant 0 : i32
    %c0_i32_1 = arith.constant 0 : i32
    return %c0_i32, %c0_i32_0 : i32, i32
  }
  func.func @transform_3(%arg0: i32) -> (i32, i32) {
    %c0_i32 = arith.constant 0 : i32
    %c0_i32_0 = arith.constant 0 : i32
    %c0_i32_1 = arith.constant 0 : i32
    return %c0_i32, %c0_i32_0 : i32, i32
  }
  func.func @transform_4(%arg0: i32) -> (i32, i32) {
    %c0_i32 = arith.constant 0 : i32
    %c0_i32_0 = arith.constant 0 : i32
    %c0_i32_1 = arith.constant 0 : i32
    return %c0_i32, %c0_i32_0 : i32, i32
  }
  func.func @transform_5(%arg0: i32) -> (i32, i32) {
    %c0_i32 = arith.constant 0 : i32
    %c0_i32_0 = arith.constant 0 : i32
    return %arg0, %c0_i32 : i32, i32
  }
}

module attributes {stable_mosaic.version = 11 : i64} {
  func.func @_conv_kernel(%arg0: i32, %arg1: i32, %arg2: memref<256x72xbf16, #tpu.memory_space<vmem>>, %arg3: memref<72x128xbf16, #tpu.memory_space<vmem>>, %arg4: memref<1x128xf32, #tpu.memory_space<vmem>>, %arg5: memref<256x128xf32, #tpu.memory_space<vmem>>, %arg6: memref<256x128xf32, #tpu.memory_space<vmem>>) attributes {dimension_semantics = [#tpu.dimension_semantics<parallel>, #tpu.dimension_semantics<arbitrary>], iteration_bounds = array<i64: 2, 1>, scalar_prefetch = 0 : i64, scratch_operands = 1 : i64, tpu.core_type = #tpu.core_type<tc>, window_params = [{transform_indices = @transform_0, window_bounds = array<i64: 256, 72>}, {transform_indices = @transform_1, window_bounds = array<i64: 72, 128>}, {pipeline_mode = #tpu.pipeline_mode<synchronous>, transform_indices = @transform_2, window_bounds = array<i64: 1, 128>}, {transform_indices = @transform_3, window_bounds = array<i64: 256, 128>}]} {
    %c0_i32 = arith.constant 0 : i32
    %0 = arith.cmpi eq, %arg1, %c0_i32 : i32
    %1 = arith.extui %0 : i1 to i32
    %c0_i32_0 = arith.constant 0 : i32
    %2 = arith.cmpi ne, %1, %c0_i32_0 : i32
    scf.if %2 {
      %cst_10 = arith.constant 0.000000e+00 : f32
      %12 = vector.broadcast %cst_10 : f32 to vector<256x128xf32>
      %c0_11 = arith.constant 0 : index
      %c0_12 = arith.constant 0 : index
      %13 = vector.load %arg6[%c0_11, %c0_12] : memref<256x128xf32, #tpu.memory_space<vmem>>, vector<256x128xf32>
      tpu.vector_store %arg6[%c0_11, %c0_12], %12 {strides = array<i32>} : memref<256x128xf32, #tpu.memory_space<vmem>>, vector<256x128xf32>,
    } else {
    }
    %c0 = arith.constant 0 : index
    %c0_1 = arith.constant 0 : index
    %3 = vector.load %arg6[%c0, %c0_1] : memref<256x128xf32, #tpu.memory_space<vmem>>, vector<256x128xf32>
    %c0_2 = arith.constant 0 : index
    %c0_3 = arith.constant 0 : index
    %4 = vector.load %arg2[%c0_2, %c0_3] : memref<256x72xbf16, #tpu.memory_space<vmem>>, vector<256x72xbf16>
    %c0_4 = arith.constant 0 : index
    %c0_5 = arith.constant 0 : index
    %5 = vector.load %arg3[%c0_4, %c0_5] : memref<72x128xbf16, #tpu.memory_space<vmem>>, vector<72x128xbf16>
    %cst = arith.constant dense<0.000000e+00> : vector<256x128xf32>
    %6 = tpu.matmul %4, %5, %cst {dimension_numbers = #tpu.dot_dimension_numbers<[1], [0], [0], [1], [0, 0, 1, 1], [], []>} : vector<256x72xbf16>, vector<72x128xbf16>, vector<256x128xf32> -> vector<256x128xf32>
    %7 = arith.addf %3, %6 : vector<256x128xf32>
    %c0_6 = arith.constant 0 : index
    %c0_7 = arith.constant 0 : index
    %8 = vector.load %arg6[%c0_6, %c0_7] : memref<256x128xf32, #tpu.memory_space<vmem>>, vector<256x128xf32>
    tpu.vector_store %arg6[%c0_6, %c0_7], %7 {strides = array<i32>} : memref<256x128xf32, #tpu.memory_space<vmem>>, vector<256x128xf32>,
    %c0_i32_8 = arith.constant 0 : i32
    %9 = arith.cmpi eq, %arg1, %c0_i32_8 : i32
    %10 = arith.extui %9 : i1 to i32
    %c0_i32_9 = arith.constant 0 : i32
    %11 = arith.cmpi ne, %10, %c0_i32_9 : i32
    scf.if %11 {
      %c0_10 = arith.constant 0 : index
      %c0_11 = arith.constant 0 : index
      %12 = vector.load %arg6[%c0_10, %c0_11] : memref<256x128xf32, #tpu.memory_space<vmem>>, vector<256x128xf32>
      %c0_12 = arith.constant 0 : index
      %c0_13 = arith.constant 0 : index
      %13 = vector.load %arg4[%c0_12, %c0_13] : memref<1x128xf32, #tpu.memory_space<vmem>>, vector<1x128xf32>
      %14 = vector.broadcast %13 : vector<1x128xf32> to vector<256x128xf32>
      %15 = arith.addf %12, %14 : vector<256x128xf32>
      %cst_14 = arith.constant 0.000000e+00 : f32
      %16 = vector.broadcast %cst_14 : f32 to vector<256x128xf32>
      %17 = arith.maximumf %15, %16 : vector<256x128xf32>
      %c0_15 = arith.constant 0 : index
      %c0_16 = arith.constant 0 : index
      %18 = vector.load %arg5[%c0_15, %c0_16] : memref<256x128xf32, #tpu.memory_space<vmem>>, vector<256x128xf32>
      tpu.vector_store %arg5[%c0_15, %c0_16], %17 {strides = array<i32>} : memref<256x128xf32, #tpu.memory_space<vmem>>, vector<256x128xf32>,
    } else {
    }
    return
  }
  func.func @transform_0(%arg0: i32, %arg1: i32) -> (i32, i32) {
    %c0_i32 = arith.constant 0 : i32
    return %arg0, %arg1 : i32, i32
  }
  func.func @transform_1(%arg0: i32, %arg1: i32) -> (i32, i32) {
    %c0_i32 = arith.constant 0 : i32
    %c0_i32_0 = arith.constant 0 : i32
    return %arg1, %c0_i32 : i32, i32
  }
  func.func @transform_2(%arg0: i32, %arg1: i32) -> (i32, i32) {
    %c0_i32 = arith.constant 0 : i32
    %c0_i32_0 = arith.constant 0 : i32
    %c0_i32_1 = arith.constant 0 : i32
    return %c0_i32, %c0_i32_0 : i32, i32
  }
  func.func @transform_3(%arg0: i32, %arg1: i32) -> (i32, i32) {
    %c0_i32 = arith.constant 0 : i32
    %c0_i32_0 = arith.constant 0 : i32
    return %arg0, %c0_i32 : i32, i32
  }
}

module attributes {stable_mosaic.version = 11 : i64} {
  func.func @_fuse_kernel(%arg0: i32, %arg1: memref<128x16xbf16, #tpu.memory_space<vmem>>, %arg2: memref<128x16xbf16, #tpu.memory_space<vmem>>, %arg3: memref<16x128xbf16, #tpu.memory_space<vmem>>, %arg4: memref<16x128xbf16, #tpu.memory_space<vmem>>, %arg5: memref<1x128xf32, #tpu.memory_space<vmem>>, %arg6: memref<128x128xf32, #tpu.memory_space<vmem>>) attributes {dimension_semantics = [#tpu.dimension_semantics<parallel>], iteration_bounds = array<i64: 1>, scalar_prefetch = 0 : i64, scratch_operands = 0 : i64, tpu.core_type = #tpu.core_type<tc>, window_params = [{transform_indices = @transform_0, window_bounds = array<i64: 128, 16>}, {transform_indices = @transform_1, window_bounds = array<i64: 128, 16>}, {pipeline_mode = #tpu.pipeline_mode<synchronous>, transform_indices = @transform_2, window_bounds = array<i64: 16, 128>}, {pipeline_mode = #tpu.pipeline_mode<synchronous>, transform_indices = @transform_3, window_bounds = array<i64: 16, 128>}, {pipeline_mode = #tpu.pipeline_mode<synchronous>, transform_indices = @transform_4, window_bounds = array<i64: 1, 128>}, {transform_indices = @transform_5, window_bounds = array<i64: 128, 128>}]} {
    %c0 = arith.constant 0 : index
    %c0_0 = arith.constant 0 : index
    %0 = vector.load %arg1[%c0, %c0_0] : memref<128x16xbf16, #tpu.memory_space<vmem>>, vector<128x16xbf16>
    %c0_1 = arith.constant 0 : index
    %c0_2 = arith.constant 0 : index
    %1 = vector.load %arg3[%c0_1, %c0_2] : memref<16x128xbf16, #tpu.memory_space<vmem>>, vector<16x128xbf16>
    %cst = arith.constant dense<0.000000e+00> : vector<128x128xf32>
    %2 = tpu.matmul %0, %1, %cst {dimension_numbers = #tpu.dot_dimension_numbers<[1], [0], [0], [1], [0, 0, 1, 1], [], []>} : vector<128x16xbf16>, vector<16x128xbf16>, vector<128x128xf32> -> vector<128x128xf32>
    %c0_3 = arith.constant 0 : index
    %c0_4 = arith.constant 0 : index
    %3 = vector.load %arg2[%c0_3, %c0_4] : memref<128x16xbf16, #tpu.memory_space<vmem>>, vector<128x16xbf16>
    %c0_5 = arith.constant 0 : index
    %c0_6 = arith.constant 0 : index
    %4 = vector.load %arg4[%c0_5, %c0_6] : memref<16x128xbf16, #tpu.memory_space<vmem>>, vector<16x128xbf16>
    %cst_7 = arith.constant dense<0.000000e+00> : vector<128x128xf32>
    %5 = tpu.matmul %3, %4, %cst_7 {dimension_numbers = #tpu.dot_dimension_numbers<[1], [0], [0], [1], [0, 0, 1, 1], [], []>} : vector<128x16xbf16>, vector<16x128xbf16>, vector<128x128xf32> -> vector<128x128xf32>
    %6 = arith.addf %2, %5 : vector<128x128xf32>
    %c0_8 = arith.constant 0 : index
    %c0_9 = arith.constant 0 : index
    %7 = vector.load %arg5[%c0_8, %c0_9] : memref<1x128xf32, #tpu.memory_space<vmem>>, vector<1x128xf32>
    %8 = vector.broadcast %7 : vector<1x128xf32> to vector<128x128xf32>
    %9 = arith.addf %6, %8 : vector<128x128xf32>
    %cst_10 = arith.constant 0.000000e+00 : f32
    %10 = vector.broadcast %cst_10 : f32 to vector<128x128xf32>
    %11 = arith.maximumf %9, %10 : vector<128x128xf32>
    %c0_11 = arith.constant 0 : index
    %c0_12 = arith.constant 0 : index
    %12 = vector.load %arg6[%c0_11, %c0_12] : memref<128x128xf32, #tpu.memory_space<vmem>>, vector<128x128xf32>
    tpu.vector_store %arg6[%c0_11, %c0_12], %11 {strides = array<i32>} : memref<128x128xf32, #tpu.memory_space<vmem>>, vector<128x128xf32>,
    return
  }
  func.func @transform_0(%arg0: i32) -> (i32, i32) {
    %c0_i32 = arith.constant 0 : i32
    %c0_i32_0 = arith.constant 0 : i32
    return %arg0, %c0_i32 : i32, i32
  }
  func.func @transform_1(%arg0: i32) -> (i32, i32) {
    %c0_i32 = arith.constant 0 : i32
    %c0_i32_0 = arith.constant 0 : i32
    return %arg0, %c0_i32 : i32, i32
  }
  func.func @transform_2(%arg0: i32) -> (i32, i32) {
    %c0_i32 = arith.constant 0 : i32
    %c0_i32_0 = arith.constant 0 : i32
    %c0_i32_1 = arith.constant 0 : i32
    return %c0_i32, %c0_i32_0 : i32, i32
  }
  func.func @transform_3(%arg0: i32) -> (i32, i32) {
    %c0_i32 = arith.constant 0 : i32
    %c0_i32_0 = arith.constant 0 : i32
    %c0_i32_1 = arith.constant 0 : i32
    return %c0_i32, %c0_i32_0 : i32, i32
  }
  func.func @transform_4(%arg0: i32) -> (i32, i32) {
    %c0_i32 = arith.constant 0 : i32
    %c0_i32_0 = arith.constant 0 : i32
    %c0_i32_1 = arith.constant 0 : i32
    return %c0_i32, %c0_i32_0 : i32, i32
  }
  func.func @transform_5(%arg0: i32) -> (i32, i32) {
    %c0_i32 = arith.constant 0 : i32
    %c0_i32_0 = arith.constant 0 : i32
    return %arg0, %c0_i32 : i32, i32
  }
}

module attributes {stable_mosaic.version = 11 : i64} {
  func.func @_conv_kernel(%arg0: i32, %arg1: i32, %arg2: memref<128x72xbf16, #tpu.memory_space<vmem>>, %arg3: memref<72x128xbf16, #tpu.memory_space<vmem>>, %arg4: memref<1x128xf32, #tpu.memory_space<vmem>>, %arg5: memref<128x2xf32, #tpu.memory_space<vmem>>, %arg6: memref<128x128xf32, #tpu.memory_space<vmem>>, %arg7: memref<128x128xf32, #tpu.memory_space<vmem>>) attributes {dimension_semantics = [#tpu.dimension_semantics<parallel>, #tpu.dimension_semantics<arbitrary>], iteration_bounds = array<i64: 1, 1>, scalar_prefetch = 0 : i64, scratch_operands = 1 : i64, tpu.core_type = #tpu.core_type<tc>, window_params = [{transform_indices = @transform_0, window_bounds = array<i64: 128, 72>}, {transform_indices = @transform_1, window_bounds = array<i64: 72, 128>}, {pipeline_mode = #tpu.pipeline_mode<synchronous>, transform_indices = @transform_2, window_bounds = array<i64: 1, 128>}, {transform_indices = @transform_3, window_bounds = array<i64: 128, 2>}, {transform_indices = @transform_4, window_bounds = array<i64: 128, 128>}]} {
    %c0_i32 = arith.constant 0 : i32
    %0 = arith.cmpi eq, %arg1, %c0_i32 : i32
    %1 = arith.extui %0 : i1 to i32
    %c0_i32_0 = arith.constant 0 : i32
    %2 = arith.cmpi ne, %1, %c0_i32_0 : i32
    scf.if %2 {
      %cst_10 = arith.constant 0.000000e+00 : f32
      %12 = vector.broadcast %cst_10 : f32 to vector<128x128xf32>
      %c0_11 = arith.constant 0 : index
      %c0_12 = arith.constant 0 : index
      %13 = vector.load %arg7[%c0_11, %c0_12] : memref<128x128xf32, #tpu.memory_space<vmem>>, vector<128x128xf32>
      tpu.vector_store %arg7[%c0_11, %c0_12], %12 {strides = array<i32>} : memref<128x128xf32, #tpu.memory_space<vmem>>, vector<128x128xf32>,
    } else {
    }
    %c0 = arith.constant 0 : index
    %c0_1 = arith.constant 0 : index
    %3 = vector.load %arg7[%c0, %c0_1] : memref<128x128xf32, #tpu.memory_space<vmem>>, vector<128x128xf32>
    %c0_2 = arith.constant 0 : index
    %c0_3 = arith.constant 0 : index
    %4 = vector.load %arg2[%c0_2, %c0_3] : memref<128x72xbf16, #tpu.memory_space<vmem>>, vector<128x72xbf16>
    %c0_4 = arith.constant 0 : index
    %c0_5 = arith.constant 0 : index
    %5 = vector.load %arg3[%c0_4, %c0_5] : memref<72x128xbf16, #tpu.memory_space<vmem>>, vector<72x128xbf16>
    %cst = arith.constant dense<0.000000e+00> : vector<128x128xf32>
    %6 = tpu.matmul %4, %5, %cst {dimension_numbers = #tpu.dot_dimension_numbers<[1], [0], [0], [1], [0, 0, 1, 1], [], []>} : vector<128x72xbf16>, vector<72x128xbf16>, vector<128x128xf32> -> vector<128x128xf32>
    %7 = arith.addf %3, %6 : vector<128x128xf32>
    %c0_6 = arith.constant 0 : index
    %c0_7 = arith.constant 0 : index
    %8 = vector.load %arg7[%c0_6, %c0_7] : memref<128x128xf32, #tpu.memory_space<vmem>>, vector<128x128xf32>
    tpu.vector_store %arg7[%c0_6, %c0_7], %7 {strides = array<i32>} : memref<128x128xf32, #tpu.memory_space<vmem>>, vector<128x128xf32>,
    %c0_i32_8 = arith.constant 0 : i32
    %9 = arith.cmpi eq, %arg1, %c0_i32_8 : i32
    %10 = arith.extui %9 : i1 to i32
    %c0_i32_9 = arith.constant 0 : i32
    %11 = arith.cmpi ne, %10, %c0_i32_9 : i32
    scf.if %11 {
      %c0_10 = arith.constant 0 : index
      %c0_11 = arith.constant 0 : index
      %12 = vector.load %arg7[%c0_10, %c0_11] : memref<128x128xf32, #tpu.memory_space<vmem>>, vector<128x128xf32>
      %c0_12 = arith.constant 0 : index
      %c0_13 = arith.constant 0 : index
      %13 = vector.load %arg5[%c0_12, %c0_13] : memref<128x2xf32, #tpu.memory_space<vmem>>, vector<128x2xf32>
      %14 = vector.extract_strided_slice %13 {offsets = [0, 0], sizes = [128, 1], strides = [1, 1]} : vector<128x2xf32> to vector<128x1xf32>
      %15 = vector.broadcast %14 : vector<128x1xf32> to vector<128x128xf32>
      %16 = arith.mulf %12, %15 : vector<128x128xf32>
      %c0_14 = arith.constant 0 : index
      %c0_15 = arith.constant 0 : index
      %17 = vector.load %arg4[%c0_14, %c0_15] : memref<1x128xf32, #tpu.memory_space<vmem>>, vector<1x128xf32>
      %18 = vector.extract_strided_slice %13 {offsets = [0, 1], sizes = [128, 1], strides = [1, 1]} : vector<128x2xf32> to vector<128x1xf32>
      %19 = vector.broadcast %17 : vector<1x128xf32> to vector<128x128xf32>
      %20 = vector.broadcast %18 : vector<128x1xf32> to vector<128x128xf32>
      %21 = arith.mulf %19, %20 : vector<128x128xf32>
      %22 = arith.addf %16, %21 : vector<128x128xf32>
      %cst_16 = arith.constant 0.000000e+00 : f32
      %23 = vector.broadcast %cst_16 : f32 to vector<128x128xf32>
      %24 = arith.maximumf %22, %23 : vector<128x128xf32>
      %c0_17 = arith.constant 0 : index
      %c0_18 = arith.constant 0 : index
      %25 = vector.load %arg6[%c0_17, %c0_18] : memref<128x128xf32, #tpu.memory_space<vmem>>, vector<128x128xf32>
      tpu.vector_store %arg6[%c0_17, %c0_18], %24 {strides = array<i32>} : memref<128x128xf32, #tpu.memory_space<vmem>>, vector<128x128xf32>,
    } else {
    }
    return
  }
  func.func @transform_0(%arg0: i32, %arg1: i32) -> (i32, i32) {
    %c0_i32 = arith.constant 0 : i32
    return %arg0, %arg1 : i32, i32
  }
  func.func @transform_1(%arg0: i32, %arg1: i32) -> (i32, i32) {
    %c0_i32 = arith.constant 0 : i32
    %c0_i32_0 = arith.constant 0 : i32
    return %arg1, %c0_i32 : i32, i32
  }
  func.func @transform_2(%arg0: i32, %arg1: i32) -> (i32, i32) {
    %c0_i32 = arith.constant 0 : i32
    %c0_i32_0 = arith.constant 0 : i32
    %c0_i32_1 = arith.constant 0 : i32
    return %c0_i32, %c0_i32_0 : i32, i32
  }
  func.func @transform_3(%arg0: i32, %arg1: i32) -> (i32, i32) {
    %c0_i32 = arith.constant 0 : i32
    %c0_i32_0 = arith.constant 0 : i32
    return %arg0, %c0_i32 : i32, i32
  }
  func.func @transform_4(%arg0: i32, %arg1: i32) -> (i32, i32) {
    %c0_i32 = arith.constant 0 : i32
    %c0_i32_0 = arith.constant 0 : i32
    return %arg0, %c0_i32 : i32, i32
  }
}

module attributes {stable_mosaic.version = 11 : i64} {
  func.func @_conv_kernel(%arg0: i32, %arg1: i32, %arg2: memref<128x144xbf16, #tpu.memory_space<vmem>>, %arg3: memref<144x128xbf16, #tpu.memory_space<vmem>>, %arg4: memref<1x128xf32, #tpu.memory_space<vmem>>, %arg5: memref<128x128xf32, #tpu.memory_space<vmem>>, %arg6: memref<128x128xf32, #tpu.memory_space<vmem>>) attributes {dimension_semantics = [#tpu.dimension_semantics<parallel>, #tpu.dimension_semantics<arbitrary>], iteration_bounds = array<i64: 1, 1>, scalar_prefetch = 0 : i64, scratch_operands = 1 : i64, tpu.core_type = #tpu.core_type<tc>, window_params = [{transform_indices = @transform_0, window_bounds = array<i64: 128, 144>}, {transform_indices = @transform_1, window_bounds = array<i64: 144, 128>}, {pipeline_mode = #tpu.pipeline_mode<synchronous>, transform_indices = @transform_2, window_bounds = array<i64: 1, 128>}, {transform_indices = @transform_3, window_bounds = array<i64: 128, 128>}]} {
    %c0_i32 = arith.constant 0 : i32
    %0 = arith.cmpi eq, %arg1, %c0_i32 : i32
    %1 = arith.extui %0 : i1 to i32
    %c0_i32_0 = arith.constant 0 : i32
    %2 = arith.cmpi ne, %1, %c0_i32_0 : i32
    scf.if %2 {
      %cst_10 = arith.constant 0.000000e+00 : f32
      %12 = vector.broadcast %cst_10 : f32 to vector<128x128xf32>
      %c0_11 = arith.constant 0 : index
      %c0_12 = arith.constant 0 : index
      %13 = vector.load %arg6[%c0_11, %c0_12] : memref<128x128xf32, #tpu.memory_space<vmem>>, vector<128x128xf32>
      tpu.vector_store %arg6[%c0_11, %c0_12], %12 {strides = array<i32>} : memref<128x128xf32, #tpu.memory_space<vmem>>, vector<128x128xf32>,
    } else {
    }
    %c0 = arith.constant 0 : index
    %c0_1 = arith.constant 0 : index
    %3 = vector.load %arg6[%c0, %c0_1] : memref<128x128xf32, #tpu.memory_space<vmem>>, vector<128x128xf32>
    %c0_2 = arith.constant 0 : index
    %c0_3 = arith.constant 0 : index
    %4 = vector.load %arg2[%c0_2, %c0_3] : memref<128x144xbf16, #tpu.memory_space<vmem>>, vector<128x144xbf16>
    %c0_4 = arith.constant 0 : index
    %c0_5 = arith.constant 0 : index
    %5 = vector.load %arg3[%c0_4, %c0_5] : memref<144x128xbf16, #tpu.memory_space<vmem>>, vector<144x128xbf16>
    %cst = arith.constant dense<0.000000e+00> : vector<128x128xf32>
    %6 = tpu.matmul %4, %5, %cst {dimension_numbers = #tpu.dot_dimension_numbers<[1], [0], [0], [1], [0, 0, 1, 1], [], []>} : vector<128x144xbf16>, vector<144x128xbf16>, vector<128x128xf32> -> vector<128x128xf32>
    %7 = arith.addf %3, %6 : vector<128x128xf32>
    %c0_6 = arith.constant 0 : index
    %c0_7 = arith.constant 0 : index
    %8 = vector.load %arg6[%c0_6, %c0_7] : memref<128x128xf32, #tpu.memory_space<vmem>>, vector<128x128xf32>
    tpu.vector_store %arg6[%c0_6, %c0_7], %7 {strides = array<i32>} : memref<128x128xf32, #tpu.memory_space<vmem>>, vector<128x128xf32>,
    %c0_i32_8 = arith.constant 0 : i32
    %9 = arith.cmpi eq, %arg1, %c0_i32_8 : i32
    %10 = arith.extui %9 : i1 to i32
    %c0_i32_9 = arith.constant 0 : i32
    %11 = arith.cmpi ne, %10, %c0_i32_9 : i32
    scf.if %11 {
      %c0_10 = arith.constant 0 : index
      %c0_11 = arith.constant 0 : index
      %12 = vector.load %arg6[%c0_10, %c0_11] : memref<128x128xf32, #tpu.memory_space<vmem>>, vector<128x128xf32>
      %c0_12 = arith.constant 0 : index
      %c0_13 = arith.constant 0 : index
      %13 = vector.load %arg4[%c0_12, %c0_13] : memref<1x128xf32, #tpu.memory_space<vmem>>, vector<1x128xf32>
      %14 = vector.broadcast %13 : vector<1x128xf32> to vector<128x128xf32>
      %15 = arith.addf %12, %14 : vector<128x128xf32>
      %cst_14 = arith.constant 0.000000e+00 : f32
      %16 = vector.broadcast %cst_14 : f32 to vector<128x128xf32>
      %17 = arith.maximumf %15, %16 : vector<128x128xf32>
      %c0_15 = arith.constant 0 : index
      %c0_16 = arith.constant 0 : index
      %18 = vector.load %arg5[%c0_15, %c0_16] : memref<128x128xf32, #tpu.memory_space<vmem>>, vector<128x128xf32>
      tpu.vector_store %arg5[%c0_15, %c0_16], %17 {strides = array<i32>} : memref<128x128xf32, #tpu.memory_space<vmem>>, vector<128x128xf32>,
    } else {
    }
    return
  }
  func.func @transform_0(%arg0: i32, %arg1: i32) -> (i32, i32) {
    %c0_i32 = arith.constant 0 : i32
    return %arg0, %arg1 : i32, i32
  }
  func.func @transform_1(%arg0: i32, %arg1: i32) -> (i32, i32) {
    %c0_i32 = arith.constant 0 : i32
    %c0_i32_0 = arith.constant 0 : i32
    return %arg1, %c0_i32 : i32, i32
  }
  func.func @transform_2(%arg0: i32, %arg1: i32) -> (i32, i32) {
    %c0_i32 = arith.constant 0 : i32
    %c0_i32_0 = arith.constant 0 : i32
    %c0_i32_1 = arith.constant 0 : i32
    return %c0_i32, %c0_i32_0 : i32, i32
  }
  func.func @transform_3(%arg0: i32, %arg1: i32) -> (i32, i32) {
    %c0_i32 = arith.constant 0 : i32
    %c0_i32_0 = arith.constant 0 : i32
    return %arg0, %c0_i32 : i32, i32
  }
}

module attributes {stable_mosaic.version = 11 : i64} {
  func.func @_conv_kernel(%arg0: i32, %arg1: i32, %arg2: memref<32x144xbf16, #tpu.memory_space<vmem>>, %arg3: memref<144x128xbf16, #tpu.memory_space<vmem>>, %arg4: memref<1x128xf32, #tpu.memory_space<vmem>>, %arg5: memref<32x2xf32, #tpu.memory_space<vmem>>, %arg6: memref<32x128xf32, #tpu.memory_space<vmem>>, %arg7: memref<32x128xf32, #tpu.memory_space<vmem>>) attributes {dimension_semantics = [#tpu.dimension_semantics<parallel>, #tpu.dimension_semantics<arbitrary>], iteration_bounds = array<i64: 1, 1>, scalar_prefetch = 0 : i64, scratch_operands = 1 : i64, tpu.core_type = #tpu.core_type<tc>, window_params = [{transform_indices = @transform_0, window_bounds = array<i64: 32, 144>}, {transform_indices = @transform_1, window_bounds = array<i64: 144, 128>}, {pipeline_mode = #tpu.pipeline_mode<synchronous>, transform_indices = @transform_2, window_bounds = array<i64: 1, 128>}, {transform_indices = @transform_3, window_bounds = array<i64: 32, 2>}, {transform_indices = @transform_4, window_bounds = array<i64: 32, 128>}]} {
    %c0_i32 = arith.constant 0 : i32
    %0 = arith.cmpi eq, %arg1, %c0_i32 : i32
    %1 = arith.extui %0 : i1 to i32
    %c0_i32_0 = arith.constant 0 : i32
    %2 = arith.cmpi ne, %1, %c0_i32_0 : i32
    scf.if %2 {
      %cst_10 = arith.constant 0.000000e+00 : f32
      %12 = vector.broadcast %cst_10 : f32 to vector<32x128xf32>
      %c0_11 = arith.constant 0 : index
      %c0_12 = arith.constant 0 : index
      %13 = vector.load %arg7[%c0_11, %c0_12] : memref<32x128xf32, #tpu.memory_space<vmem>>, vector<32x128xf32>
      tpu.vector_store %arg7[%c0_11, %c0_12], %12 {strides = array<i32>} : memref<32x128xf32, #tpu.memory_space<vmem>>, vector<32x128xf32>,
    } else {
    }
    %c0 = arith.constant 0 : index
    %c0_1 = arith.constant 0 : index
    %3 = vector.load %arg7[%c0, %c0_1] : memref<32x128xf32, #tpu.memory_space<vmem>>, vector<32x128xf32>
    %c0_2 = arith.constant 0 : index
    %c0_3 = arith.constant 0 : index
    %4 = vector.load %arg2[%c0_2, %c0_3] : memref<32x144xbf16, #tpu.memory_space<vmem>>, vector<32x144xbf16>
    %c0_4 = arith.constant 0 : index
    %c0_5 = arith.constant 0 : index
    %5 = vector.load %arg3[%c0_4, %c0_5] : memref<144x128xbf16, #tpu.memory_space<vmem>>, vector<144x128xbf16>
    %cst = arith.constant dense<0.000000e+00> : vector<32x128xf32>
    %6 = tpu.matmul %4, %5, %cst {dimension_numbers = #tpu.dot_dimension_numbers<[1], [0], [0], [1], [0, 0, 1, 1], [], []>} : vector<32x144xbf16>, vector<144x128xbf16>, vector<32x128xf32> -> vector<32x128xf32>
    %7 = arith.addf %3, %6 : vector<32x128xf32>
    %c0_6 = arith.constant 0 : index
    %c0_7 = arith.constant 0 : index
    %8 = vector.load %arg7[%c0_6, %c0_7] : memref<32x128xf32, #tpu.memory_space<vmem>>, vector<32x128xf32>
    tpu.vector_store %arg7[%c0_6, %c0_7], %7 {strides = array<i32>} : memref<32x128xf32, #tpu.memory_space<vmem>>, vector<32x128xf32>,
    %c0_i32_8 = arith.constant 0 : i32
    %9 = arith.cmpi eq, %arg1, %c0_i32_8 : i32
    %10 = arith.extui %9 : i1 to i32
    %c0_i32_9 = arith.constant 0 : i32
    %11 = arith.cmpi ne, %10, %c0_i32_9 : i32
    scf.if %11 {
      %c0_10 = arith.constant 0 : index
      %c0_11 = arith.constant 0 : index
      %12 = vector.load %arg7[%c0_10, %c0_11] : memref<32x128xf32, #tpu.memory_space<vmem>>, vector<32x128xf32>
      %c0_12 = arith.constant 0 : index
      %c0_13 = arith.constant 0 : index
      %13 = vector.load %arg5[%c0_12, %c0_13] : memref<32x2xf32, #tpu.memory_space<vmem>>, vector<32x2xf32>
      %14 = vector.extract_strided_slice %13 {offsets = [0, 0], sizes = [32, 1], strides = [1, 1]} : vector<32x2xf32> to vector<32x1xf32>
      %15 = vector.broadcast %14 : vector<32x1xf32> to vector<32x128xf32>
      %16 = arith.mulf %12, %15 : vector<32x128xf32>
      %c0_14 = arith.constant 0 : index
      %c0_15 = arith.constant 0 : index
      %17 = vector.load %arg4[%c0_14, %c0_15] : memref<1x128xf32, #tpu.memory_space<vmem>>, vector<1x128xf32>
      %18 = vector.extract_strided_slice %13 {offsets = [0, 1], sizes = [32, 1], strides = [1, 1]} : vector<32x2xf32> to vector<32x1xf32>
      %19 = vector.broadcast %17 : vector<1x128xf32> to vector<32x128xf32>
      %20 = vector.broadcast %18 : vector<32x1xf32> to vector<32x128xf32>
      %21 = arith.mulf %19, %20 : vector<32x128xf32>
      %22 = arith.addf %16, %21 : vector<32x128xf32>
      %cst_16 = arith.constant 0.000000e+00 : f32
      %23 = vector.broadcast %cst_16 : f32 to vector<32x128xf32>
      %24 = arith.maximumf %22, %23 : vector<32x128xf32>
      %c0_17 = arith.constant 0 : index
      %c0_18 = arith.constant 0 : index
      %25 = vector.load %arg6[%c0_17, %c0_18] : memref<32x128xf32, #tpu.memory_space<vmem>>, vector<32x128xf32>
      tpu.vector_store %arg6[%c0_17, %c0_18], %24 {strides = array<i32>} : memref<32x128xf32, #tpu.memory_space<vmem>>, vector<32x128xf32>,
    } else {
    }
    return
  }
  func.func @transform_0(%arg0: i32, %arg1: i32) -> (i32, i32) {
    %c0_i32 = arith.constant 0 : i32
    return %arg0, %arg1 : i32, i32
  }
  func.func @transform_1(%arg0: i32, %arg1: i32) -> (i32, i32) {
    %c0_i32 = arith.constant 0 : i32
    %c0_i32_0 = arith.constant 0 : i32
    return %arg1, %c0_i32 : i32, i32
  }
  func.func @transform_2(%arg0: i32, %arg1: i32) -> (i32, i32) {
    %c0_i32 = arith.constant 0 : i32
    %c0_i32_0 = arith.constant 0 : i32
    %c0_i32_1 = arith.constant 0 : i32
    return %c0_i32, %c0_i32_0 : i32, i32
  }
  func.func @transform_3(%arg0: i32, %arg1: i32) -> (i32, i32) {
    %c0_i32 = arith.constant 0 : i32
    %c0_i32_0 = arith.constant 0 : i32
    return %arg0, %c0_i32 : i32, i32
  }
  func.func @transform_4(%arg0: i32, %arg1: i32) -> (i32, i32) {
    %c0_i32 = arith.constant 0 : i32
    %c0_i32_0 = arith.constant 0 : i32
    return %arg0, %c0_i32 : i32, i32
  }
}

module attributes {stable_mosaic.version = 11 : i64} {
  func.func @_fuse_kernel(%arg0: i32, %arg1: memref<32x16xbf16, #tpu.memory_space<vmem>>, %arg2: memref<32x16xbf16, #tpu.memory_space<vmem>>, %arg3: memref<16x128xbf16, #tpu.memory_space<vmem>>, %arg4: memref<16x128xbf16, #tpu.memory_space<vmem>>, %arg5: memref<1x128xf32, #tpu.memory_space<vmem>>, %arg6: memref<32x128xf32, #tpu.memory_space<vmem>>) attributes {dimension_semantics = [#tpu.dimension_semantics<parallel>], iteration_bounds = array<i64: 1>, scalar_prefetch = 0 : i64, scratch_operands = 0 : i64, tpu.core_type = #tpu.core_type<tc>, window_params = [{transform_indices = @transform_0, window_bounds = array<i64: 32, 16>}, {transform_indices = @transform_1, window_bounds = array<i64: 32, 16>}, {pipeline_mode = #tpu.pipeline_mode<synchronous>, transform_indices = @transform_2, window_bounds = array<i64: 16, 128>}, {pipeline_mode = #tpu.pipeline_mode<synchronous>, transform_indices = @transform_3, window_bounds = array<i64: 16, 128>}, {pipeline_mode = #tpu.pipeline_mode<synchronous>, transform_indices = @transform_4, window_bounds = array<i64: 1, 128>}, {transform_indices = @transform_5, window_bounds = array<i64: 32, 128>}]} {
    %c0 = arith.constant 0 : index
    %c0_0 = arith.constant 0 : index
    %0 = vector.load %arg1[%c0, %c0_0] : memref<32x16xbf16, #tpu.memory_space<vmem>>, vector<32x16xbf16>
    %c0_1 = arith.constant 0 : index
    %c0_2 = arith.constant 0 : index
    %1 = vector.load %arg3[%c0_1, %c0_2] : memref<16x128xbf16, #tpu.memory_space<vmem>>, vector<16x128xbf16>
    %cst = arith.constant dense<0.000000e+00> : vector<32x128xf32>
    %2 = tpu.matmul %0, %1, %cst {dimension_numbers = #tpu.dot_dimension_numbers<[1], [0], [0], [1], [0, 0, 1, 1], [], []>} : vector<32x16xbf16>, vector<16x128xbf16>, vector<32x128xf32> -> vector<32x128xf32>
    %c0_3 = arith.constant 0 : index
    %c0_4 = arith.constant 0 : index
    %3 = vector.load %arg2[%c0_3, %c0_4] : memref<32x16xbf16, #tpu.memory_space<vmem>>, vector<32x16xbf16>
    %c0_5 = arith.constant 0 : index
    %c0_6 = arith.constant 0 : index
    %4 = vector.load %arg4[%c0_5, %c0_6] : memref<16x128xbf16, #tpu.memory_space<vmem>>, vector<16x128xbf16>
    %cst_7 = arith.constant dense<0.000000e+00> : vector<32x128xf32>
    %5 = tpu.matmul %3, %4, %cst_7 {dimension_numbers = #tpu.dot_dimension_numbers<[1], [0], [0], [1], [0, 0, 1, 1], [], []>} : vector<32x16xbf16>, vector<16x128xbf16>, vector<32x128xf32> -> vector<32x128xf32>
    %6 = arith.addf %2, %5 : vector<32x128xf32>
    %c0_8 = arith.constant 0 : index
    %c0_9 = arith.constant 0 : index
    %7 = vector.load %arg5[%c0_8, %c0_9] : memref<1x128xf32, #tpu.memory_space<vmem>>, vector<1x128xf32>
    %8 = vector.broadcast %7 : vector<1x128xf32> to vector<32x128xf32>
    %9 = arith.addf %6, %8 : vector<32x128xf32>
    %cst_10 = arith.constant 0.000000e+00 : f32
    %10 = vector.broadcast %cst_10 : f32 to vector<32x128xf32>
    %11 = arith.maximumf %9, %10 : vector<32x128xf32>
    %c0_11 = arith.constant 0 : index
    %c0_12 = arith.constant 0 : index
    %12 = vector.load %arg6[%c0_11, %c0_12] : memref<32x128xf32, #tpu.memory_space<vmem>>, vector<32x128xf32>
    tpu.vector_store %arg6[%c0_11, %c0_12], %11 {strides = array<i32>} : memref<32x128xf32, #tpu.memory_space<vmem>>, vector<32x128xf32>,
    return
  }
  func.func @transform_0(%arg0: i32) -> (i32, i32) {
    %c0_i32 = arith.constant 0 : i32
    %c0_i32_0 = arith.constant 0 : i32
    return %arg0, %c0_i32 : i32, i32
  }
  func.func @transform_1(%arg0: i32) -> (i32, i32) {
    %c0_i32 = arith.constant 0 : i32
    %c0_i32_0 = arith.constant 0 : i32
    return %arg0, %c0_i32 : i32, i32
  }
  func.func @transform_2(%arg0: i32) -> (i32, i32) {
    %c0_i32 = arith.constant 0 : i32
    %c0_i32_0 = arith.constant 0 : i32
    %c0_i32_1 = arith.constant 0 : i32
    return %c0_i32, %c0_i32_0 : i32, i32
  }
  func.func @transform_3(%arg0: i32) -> (i32, i32) {
    %c0_i32 = arith.constant 0 : i32
    %c0_i32_0 = arith.constant 0 : i32
    %c0_i32_1 = arith.constant 0 : i32
    return %c0_i32, %c0_i32_0 : i32, i32
  }
  func.func @transform_4(%arg0: i32) -> (i32, i32) {
    %c0_i32 = arith.constant 0 : i32
    %c0_i32_0 = arith.constant 0 : i32
    %c0_i32_1 = arith.constant 0 : i32
    return %c0_i32, %c0_i32_0 : i32, i32
  }
  func.func @transform_5(%arg0: i32) -> (i32, i32) {
    %c0_i32 = arith.constant 0 : i32
    %c0_i32_0 = arith.constant 0 : i32
    return %arg0, %c0_i32 : i32, i32
  }
}

module attributes {stable_mosaic.version = 11 : i64} {
  func.func @_conv_kernel(%arg0: i32, %arg1: i32, %arg2: memref<32x144xbf16, #tpu.memory_space<vmem>>, %arg3: memref<144x128xbf16, #tpu.memory_space<vmem>>, %arg4: memref<1x128xf32, #tpu.memory_space<vmem>>, %arg5: memref<32x128xf32, #tpu.memory_space<vmem>>, %arg6: memref<32x128xf32, #tpu.memory_space<vmem>>) attributes {dimension_semantics = [#tpu.dimension_semantics<parallel>, #tpu.dimension_semantics<arbitrary>], iteration_bounds = array<i64: 1, 1>, scalar_prefetch = 0 : i64, scratch_operands = 1 : i64, tpu.core_type = #tpu.core_type<tc>, window_params = [{transform_indices = @transform_0, window_bounds = array<i64: 32, 144>}, {transform_indices = @transform_1, window_bounds = array<i64: 144, 128>}, {pipeline_mode = #tpu.pipeline_mode<synchronous>, transform_indices = @transform_2, window_bounds = array<i64: 1, 128>}, {transform_indices = @transform_3, window_bounds = array<i64: 32, 128>}]} {
    %c0_i32 = arith.constant 0 : i32
    %0 = arith.cmpi eq, %arg1, %c0_i32 : i32
    %1 = arith.extui %0 : i1 to i32
    %c0_i32_0 = arith.constant 0 : i32
    %2 = arith.cmpi ne, %1, %c0_i32_0 : i32
    scf.if %2 {
      %cst_10 = arith.constant 0.000000e+00 : f32
      %12 = vector.broadcast %cst_10 : f32 to vector<32x128xf32>
      %c0_11 = arith.constant 0 : index
      %c0_12 = arith.constant 0 : index
      %13 = vector.load %arg6[%c0_11, %c0_12] : memref<32x128xf32, #tpu.memory_space<vmem>>, vector<32x128xf32>
      tpu.vector_store %arg6[%c0_11, %c0_12], %12 {strides = array<i32>} : memref<32x128xf32, #tpu.memory_space<vmem>>, vector<32x128xf32>,
    } else {
    }
    %c0 = arith.constant 0 : index
    %c0_1 = arith.constant 0 : index
    %3 = vector.load %arg6[%c0, %c0_1] : memref<32x128xf32, #tpu.memory_space<vmem>>, vector<32x128xf32>
    %c0_2 = arith.constant 0 : index
    %c0_3 = arith.constant 0 : index
    %4 = vector.load %arg2[%c0_2, %c0_3] : memref<32x144xbf16, #tpu.memory_space<vmem>>, vector<32x144xbf16>
    %c0_4 = arith.constant 0 : index
    %c0_5 = arith.constant 0 : index
    %5 = vector.load %arg3[%c0_4, %c0_5] : memref<144x128xbf16, #tpu.memory_space<vmem>>, vector<144x128xbf16>
    %cst = arith.constant dense<0.000000e+00> : vector<32x128xf32>
    %6 = tpu.matmul %4, %5, %cst {dimension_numbers = #tpu.dot_dimension_numbers<[1], [0], [0], [1], [0, 0, 1, 1], [], []>} : vector<32x144xbf16>, vector<144x128xbf16>, vector<32x128xf32> -> vector<32x128xf32>
    %7 = arith.addf %3, %6 : vector<32x128xf32>
    %c0_6 = arith.constant 0 : index
    %c0_7 = arith.constant 0 : index
    %8 = vector.load %arg6[%c0_6, %c0_7] : memref<32x128xf32, #tpu.memory_space<vmem>>, vector<32x128xf32>
    tpu.vector_store %arg6[%c0_6, %c0_7], %7 {strides = array<i32>} : memref<32x128xf32, #tpu.memory_space<vmem>>, vector<32x128xf32>,
    %c0_i32_8 = arith.constant 0 : i32
    %9 = arith.cmpi eq, %arg1, %c0_i32_8 : i32
    %10 = arith.extui %9 : i1 to i32
    %c0_i32_9 = arith.constant 0 : i32
    %11 = arith.cmpi ne, %10, %c0_i32_9 : i32
    scf.if %11 {
      %c0_10 = arith.constant 0 : index
      %c0_11 = arith.constant 0 : index
      %12 = vector.load %arg6[%c0_10, %c0_11] : memref<32x128xf32, #tpu.memory_space<vmem>>, vector<32x128xf32>
      %c0_12 = arith.constant 0 : index
      %c0_13 = arith.constant 0 : index
      %13 = vector.load %arg4[%c0_12, %c0_13] : memref<1x128xf32, #tpu.memory_space<vmem>>, vector<1x128xf32>
      %14 = vector.broadcast %13 : vector<1x128xf32> to vector<32x128xf32>
      %15 = arith.addf %12, %14 : vector<32x128xf32>
      %cst_14 = arith.constant 0.000000e+00 : f32
      %16 = vector.broadcast %cst_14 : f32 to vector<32x128xf32>
      %17 = arith.maximumf %15, %16 : vector<32x128xf32>
      %c0_15 = arith.constant 0 : index
      %c0_16 = arith.constant 0 : index
      %18 = vector.load %arg5[%c0_15, %c0_16] : memref<32x128xf32, #tpu.memory_space<vmem>>, vector<32x128xf32>
      tpu.vector_store %arg5[%c0_15, %c0_16], %17 {strides = array<i32>} : memref<32x128xf32, #tpu.memory_space<vmem>>, vector<32x128xf32>,
    } else {
    }
    return
  }
  func.func @transform_0(%arg0: i32, %arg1: i32) -> (i32, i32) {
    %c0_i32 = arith.constant 0 : i32
    return %arg0, %arg1 : i32, i32
  }
  func.func @transform_1(%arg0: i32, %arg1: i32) -> (i32, i32) {
    %c0_i32 = arith.constant 0 : i32
    %c0_i32_0 = arith.constant 0 : i32
    return %arg1, %c0_i32 : i32, i32
  }
  func.func @transform_2(%arg0: i32, %arg1: i32) -> (i32, i32) {
    %c0_i32 = arith.constant 0 : i32
    %c0_i32_0 = arith.constant 0 : i32
    %c0_i32_1 = arith.constant 0 : i32
    return %c0_i32, %c0_i32_0 : i32, i32
  }
  func.func @transform_3(%arg0: i32, %arg1: i32) -> (i32, i32) {
    %c0_i32 = arith.constant 0 : i32
    %c0_i32_0 = arith.constant 0 : i32
    return %arg0, %c0_i32 : i32, i32
  }
}

module attributes {stable_mosaic.version = 11 : i64} {
  func.func @_conv_kernel(%arg0: i32, %arg1: i32, %arg2: memref<16x144xbf16, #tpu.memory_space<vmem>>, %arg3: memref<144x128xbf16, #tpu.memory_space<vmem>>, %arg4: memref<1x128xf32, #tpu.memory_space<vmem>>, %arg5: memref<16x2xf32, #tpu.memory_space<vmem>>, %arg6: memref<16x128xf32, #tpu.memory_space<vmem>>, %arg7: memref<16x128xf32, #tpu.memory_space<vmem>>) attributes {dimension_semantics = [#tpu.dimension_semantics<parallel>, #tpu.dimension_semantics<arbitrary>], iteration_bounds = array<i64: 1, 1>, scalar_prefetch = 0 : i64, scratch_operands = 1 : i64, tpu.core_type = #tpu.core_type<tc>, window_params = [{transform_indices = @transform_0, window_bounds = array<i64: 16, 144>}, {transform_indices = @transform_1, window_bounds = array<i64: 144, 128>}, {pipeline_mode = #tpu.pipeline_mode<synchronous>, transform_indices = @transform_2, window_bounds = array<i64: 1, 128>}, {transform_indices = @transform_3, window_bounds = array<i64: 16, 2>}, {transform_indices = @transform_4, window_bounds = array<i64: 16, 128>}]} {
    %c0_i32 = arith.constant 0 : i32
    %0 = arith.cmpi eq, %arg1, %c0_i32 : i32
    %1 = arith.extui %0 : i1 to i32
    %c0_i32_0 = arith.constant 0 : i32
    %2 = arith.cmpi ne, %1, %c0_i32_0 : i32
    scf.if %2 {
      %cst_10 = arith.constant 0.000000e+00 : f32
      %12 = vector.broadcast %cst_10 : f32 to vector<16x128xf32>
      %c0_11 = arith.constant 0 : index
      %c0_12 = arith.constant 0 : index
      %13 = vector.load %arg7[%c0_11, %c0_12] : memref<16x128xf32, #tpu.memory_space<vmem>>, vector<16x128xf32>
      tpu.vector_store %arg7[%c0_11, %c0_12], %12 {strides = array<i32>} : memref<16x128xf32, #tpu.memory_space<vmem>>, vector<16x128xf32>,
    } else {
    }
    %c0 = arith.constant 0 : index
    %c0_1 = arith.constant 0 : index
    %3 = vector.load %arg7[%c0, %c0_1] : memref<16x128xf32, #tpu.memory_space<vmem>>, vector<16x128xf32>
    %c0_2 = arith.constant 0 : index
    %c0_3 = arith.constant 0 : index
    %4 = vector.load %arg2[%c0_2, %c0_3] : memref<16x144xbf16, #tpu.memory_space<vmem>>, vector<16x144xbf16>
    %c0_4 = arith.constant 0 : index
    %c0_5 = arith.constant 0 : index
    %5 = vector.load %arg3[%c0_4, %c0_5] : memref<144x128xbf16, #tpu.memory_space<vmem>>, vector<144x128xbf16>
    %cst = arith.constant dense<0.000000e+00> : vector<16x128xf32>
    %6 = tpu.matmul %4, %5, %cst {dimension_numbers = #tpu.dot_dimension_numbers<[1], [0], [0], [1], [0, 0, 1, 1], [], []>} : vector<16x144xbf16>, vector<144x128xbf16>, vector<16x128xf32> -> vector<16x128xf32>
    %7 = arith.addf %3, %6 : vector<16x128xf32>
    %c0_6 = arith.constant 0 : index
    %c0_7 = arith.constant 0 : index
    %8 = vector.load %arg7[%c0_6, %c0_7] : memref<16x128xf32, #tpu.memory_space<vmem>>, vector<16x128xf32>
    tpu.vector_store %arg7[%c0_6, %c0_7], %7 {strides = array<i32>} : memref<16x128xf32, #tpu.memory_space<vmem>>, vector<16x128xf32>,
    %c0_i32_8 = arith.constant 0 : i32
    %9 = arith.cmpi eq, %arg1, %c0_i32_8 : i32
    %10 = arith.extui %9 : i1 to i32
    %c0_i32_9 = arith.constant 0 : i32
    %11 = arith.cmpi ne, %10, %c0_i32_9 : i32
    scf.if %11 {
      %c0_10 = arith.constant 0 : index
      %c0_11 = arith.constant 0 : index
      %12 = vector.load %arg7[%c0_10, %c0_11] : memref<16x128xf32, #tpu.memory_space<vmem>>, vector<16x128xf32>
      %c0_12 = arith.constant 0 : index
      %c0_13 = arith.constant 0 : index
      %13 = vector.load %arg5[%c0_12, %c0_13] : memref<16x2xf32, #tpu.memory_space<vmem>>, vector<16x2xf32>
      %14 = vector.extract_strided_slice %13 {offsets = [0, 0], sizes = [16, 1], strides = [1, 1]} : vector<16x2xf32> to vector<16x1xf32>
      %15 = vector.broadcast %14 : vector<16x1xf32> to vector<16x128xf32>
      %16 = arith.mulf %12, %15 : vector<16x128xf32>
      %c0_14 = arith.constant 0 : index
      %c0_15 = arith.constant 0 : index
      %17 = vector.load %arg4[%c0_14, %c0_15] : memref<1x128xf32, #tpu.memory_space<vmem>>, vector<1x128xf32>
      %18 = vector.extract_strided_slice %13 {offsets = [0, 1], sizes = [16, 1], strides = [1, 1]} : vector<16x2xf32> to vector<16x1xf32>
      %19 = vector.broadcast %17 : vector<1x128xf32> to vector<16x128xf32>
      %20 = vector.broadcast %18 : vector<16x1xf32> to vector<16x128xf32>
      %21 = arith.mulf %19, %20 : vector<16x128xf32>
      %22 = arith.addf %16, %21 : vector<16x128xf32>
      %cst_16 = arith.constant 0.000000e+00 : f32
      %23 = vector.broadcast %cst_16 : f32 to vector<16x128xf32>
      %24 = arith.maximumf %22, %23 : vector<16x128xf32>
      %c0_17 = arith.constant 0 : index
      %c0_18 = arith.constant 0 : index
      %25 = vector.load %arg6[%c0_17, %c0_18] : memref<16x128xf32, #tpu.memory_space<vmem>>, vector<16x128xf32>
      tpu.vector_store %arg6[%c0_17, %c0_18], %24 {strides = array<i32>} : memref<16x128xf32, #tpu.memory_space<vmem>>, vector<16x128xf32>,
    } else {
    }
    return
  }
  func.func @transform_0(%arg0: i32, %arg1: i32) -> (i32, i32) {
    %c0_i32 = arith.constant 0 : i32
    return %arg0, %arg1 : i32, i32
  }
  func.func @transform_1(%arg0: i32, %arg1: i32) -> (i32, i32) {
    %c0_i32 = arith.constant 0 : i32
    %c0_i32_0 = arith.constant 0 : i32
    return %arg1, %c0_i32 : i32, i32
  }
  func.func @transform_2(%arg0: i32, %arg1: i32) -> (i32, i32) {
    %c0_i32 = arith.constant 0 : i32
    %c0_i32_0 = arith.constant 0 : i32
    %c0_i32_1 = arith.constant 0 : i32
    return %c0_i32, %c0_i32_0 : i32, i32
  }
  func.func @transform_3(%arg0: i32, %arg1: i32) -> (i32, i32) {
    %c0_i32 = arith.constant 0 : i32
    %c0_i32_0 = arith.constant 0 : i32
    return %arg0, %c0_i32 : i32, i32
  }
  func.func @transform_4(%arg0: i32, %arg1: i32) -> (i32, i32) {
    %c0_i32 = arith.constant 0 : i32
    %c0_i32_0 = arith.constant 0 : i32
    return %arg0, %c0_i32 : i32, i32
  }
}

module attributes {stable_mosaic.version = 11 : i64} {
  func.func @_fuse_kernel(%arg0: i32, %arg1: memref<16x32xbf16, #tpu.memory_space<vmem>>, %arg2: memref<16x32xbf16, #tpu.memory_space<vmem>>, %arg3: memref<32x128xbf16, #tpu.memory_space<vmem>>, %arg4: memref<32x128xbf16, #tpu.memory_space<vmem>>, %arg5: memref<1x128xf32, #tpu.memory_space<vmem>>, %arg6: memref<16x128xf32, #tpu.memory_space<vmem>>) attributes {dimension_semantics = [#tpu.dimension_semantics<parallel>], iteration_bounds = array<i64: 1>, scalar_prefetch = 0 : i64, scratch_operands = 0 : i64, tpu.core_type = #tpu.core_type<tc>, window_params = [{transform_indices = @transform_0, window_bounds = array<i64: 16, 32>}, {transform_indices = @transform_1, window_bounds = array<i64: 16, 32>}, {pipeline_mode = #tpu.pipeline_mode<synchronous>, transform_indices = @transform_2, window_bounds = array<i64: 32, 128>}, {pipeline_mode = #tpu.pipeline_mode<synchronous>, transform_indices = @transform_3, window_bounds = array<i64: 32, 128>}, {pipeline_mode = #tpu.pipeline_mode<synchronous>, transform_indices = @transform_4, window_bounds = array<i64: 1, 128>}, {transform_indices = @transform_5, window_bounds = array<i64: 16, 128>}]} {
    %c0 = arith.constant 0 : index
    %c0_0 = arith.constant 0 : index
    %0 = vector.load %arg1[%c0, %c0_0] : memref<16x32xbf16, #tpu.memory_space<vmem>>, vector<16x32xbf16>
    %c0_1 = arith.constant 0 : index
    %c0_2 = arith.constant 0 : index
    %1 = vector.load %arg3[%c0_1, %c0_2] : memref<32x128xbf16, #tpu.memory_space<vmem>>, vector<32x128xbf16>
    %cst = arith.constant dense<0.000000e+00> : vector<16x128xf32>
    %2 = tpu.matmul %0, %1, %cst {dimension_numbers = #tpu.dot_dimension_numbers<[1], [0], [0], [1], [0, 0, 1, 1], [], []>} : vector<16x32xbf16>, vector<32x128xbf16>, vector<16x128xf32> -> vector<16x128xf32>
    %c0_3 = arith.constant 0 : index
    %c0_4 = arith.constant 0 : index
    %3 = vector.load %arg2[%c0_3, %c0_4] : memref<16x32xbf16, #tpu.memory_space<vmem>>, vector<16x32xbf16>
    %c0_5 = arith.constant 0 : index
    %c0_6 = arith.constant 0 : index
    %4 = vector.load %arg4[%c0_5, %c0_6] : memref<32x128xbf16, #tpu.memory_space<vmem>>, vector<32x128xbf16>
    %cst_7 = arith.constant dense<0.000000e+00> : vector<16x128xf32>
    %5 = tpu.matmul %3, %4, %cst_7 {dimension_numbers = #tpu.dot_dimension_numbers<[1], [0], [0], [1], [0, 0, 1, 1], [], []>} : vector<16x32xbf16>, vector<32x128xbf16>, vector<16x128xf32> -> vector<16x128xf32>
    %6 = arith.addf %2, %5 : vector<16x128xf32>
    %c0_8 = arith.constant 0 : index
    %c0_9 = arith.constant 0 : index
    %7 = vector.load %arg5[%c0_8, %c0_9] : memref<1x128xf32, #tpu.memory_space<vmem>>, vector<1x128xf32>
    %8 = vector.broadcast %7 : vector<1x128xf32> to vector<16x128xf32>
    %9 = arith.addf %6, %8 : vector<16x128xf32>
    %cst_10 = arith.constant 0.000000e+00 : f32
    %10 = vector.broadcast %cst_10 : f32 to vector<16x128xf32>
    %11 = arith.maximumf %9, %10 : vector<16x128xf32>
    %c0_11 = arith.constant 0 : index
    %c0_12 = arith.constant 0 : index
    %12 = vector.load %arg6[%c0_11, %c0_12] : memref<16x128xf32, #tpu.memory_space<vmem>>, vector<16x128xf32>
    tpu.vector_store %arg6[%c0_11, %c0_12], %11 {strides = array<i32>} : memref<16x128xf32, #tpu.memory_space<vmem>>, vector<16x128xf32>,
    return
  }
  func.func @transform_0(%arg0: i32) -> (i32, i32) {
    %c0_i32 = arith.constant 0 : i32
    %c0_i32_0 = arith.constant 0 : i32
    return %arg0, %c0_i32 : i32, i32
  }
  func.func @transform_1(%arg0: i32) -> (i32, i32) {
    %c0_i32 = arith.constant 0 : i32
    %c0_i32_0 = arith.constant 0 : i32
    return %arg0, %c0_i32 : i32, i32
  }
  func.func @transform_2(%arg0: i32) -> (i32, i32) {
    %c0_i32 = arith.constant 0 : i32
    %c0_i32_0 = arith.constant 0 : i32
    %c0_i32_1 = arith.constant 0 : i32
    return %c0_i32, %c0_i32_0 : i32, i32
  }
  func.func @transform_3(%arg0: i32) -> (i32, i32) {
    %c0_i32 = arith.constant 0 : i32
    %c0_i32_0 = arith.constant 0 : i32
    %c0_i32_1 = arith.constant 0 : i32
    return %c0_i32, %c0_i32_0 : i32, i32
  }
  func.func @transform_4(%arg0: i32) -> (i32, i32) {
    %c0_i32 = arith.constant 0 : i32
    %c0_i32_0 = arith.constant 0 : i32
    %c0_i32_1 = arith.constant 0 : i32
    return %c0_i32, %c0_i32_0 : i32, i32
  }
  func.func @transform_5(%arg0: i32) -> (i32, i32) {
    %c0_i32 = arith.constant 0 : i32
    %c0_i32_0 = arith.constant 0 : i32
    return %arg0, %c0_i32 : i32, i32
  }
}

module attributes {stable_mosaic.version = 11 : i64} {
  func.func @_conv_kernel(%arg0: i32, %arg1: i32, %arg2: memref<16x288xbf16, #tpu.memory_space<vmem>>, %arg3: memref<288x128xbf16, #tpu.memory_space<vmem>>, %arg4: memref<1x128xf32, #tpu.memory_space<vmem>>, %arg5: memref<16x128xf32, #tpu.memory_space<vmem>>, %arg6: memref<16x128xf32, #tpu.memory_space<vmem>>) attributes {dimension_semantics = [#tpu.dimension_semantics<parallel>, #tpu.dimension_semantics<arbitrary>], iteration_bounds = array<i64: 1, 1>, scalar_prefetch = 0 : i64, scratch_operands = 1 : i64, tpu.core_type = #tpu.core_type<tc>, window_params = [{transform_indices = @transform_0, window_bounds = array<i64: 16, 288>}, {transform_indices = @transform_1, window_bounds = array<i64: 288, 128>}, {pipeline_mode = #tpu.pipeline_mode<synchronous>, transform_indices = @transform_2, window_bounds = array<i64: 1, 128>}, {transform_indices = @transform_3, window_bounds = array<i64: 16, 128>}]} {
    %c0_i32 = arith.constant 0 : i32
    %0 = arith.cmpi eq, %arg1, %c0_i32 : i32
    %1 = arith.extui %0 : i1 to i32
    %c0_i32_0 = arith.constant 0 : i32
    %2 = arith.cmpi ne, %1, %c0_i32_0 : i32
    scf.if %2 {
      %cst_10 = arith.constant 0.000000e+00 : f32
      %12 = vector.broadcast %cst_10 : f32 to vector<16x128xf32>
      %c0_11 = arith.constant 0 : index
      %c0_12 = arith.constant 0 : index
      %13 = vector.load %arg6[%c0_11, %c0_12] : memref<16x128xf32, #tpu.memory_space<vmem>>, vector<16x128xf32>
      tpu.vector_store %arg6[%c0_11, %c0_12], %12 {strides = array<i32>} : memref<16x128xf32, #tpu.memory_space<vmem>>, vector<16x128xf32>,
    } else {
    }
    %c0 = arith.constant 0 : index
    %c0_1 = arith.constant 0 : index
    %3 = vector.load %arg6[%c0, %c0_1] : memref<16x128xf32, #tpu.memory_space<vmem>>, vector<16x128xf32>
    %c0_2 = arith.constant 0 : index
    %c0_3 = arith.constant 0 : index
    %4 = vector.load %arg2[%c0_2, %c0_3] : memref<16x288xbf16, #tpu.memory_space<vmem>>, vector<16x288xbf16>
    %c0_4 = arith.constant 0 : index
    %c0_5 = arith.constant 0 : index
    %5 = vector.load %arg3[%c0_4, %c0_5] : memref<288x128xbf16, #tpu.memory_space<vmem>>, vector<288x128xbf16>
    %cst = arith.constant dense<0.000000e+00> : vector<16x128xf32>
    %6 = tpu.matmul %4, %5, %cst {dimension_numbers = #tpu.dot_dimension_numbers<[1], [0], [0], [1], [0, 0, 1, 1], [], []>} : vector<16x288xbf16>, vector<288x128xbf16>, vector<16x128xf32> -> vector<16x128xf32>
    %7 = arith.addf %3, %6 : vector<16x128xf32>
    %c0_6 = arith.constant 0 : index
    %c0_7 = arith.constant 0 : index
    %8 = vector.load %arg6[%c0_6, %c0_7] : memref<16x128xf32, #tpu.memory_space<vmem>>, vector<16x128xf32>
    tpu.vector_store %arg6[%c0_6, %c0_7], %7 {strides = array<i32>} : memref<16x128xf32, #tpu.memory_space<vmem>>, vector<16x128xf32>,
    %c0_i32_8 = arith.constant 0 : i32
    %9 = arith.cmpi eq, %arg1, %c0_i32_8 : i32
    %10 = arith.extui %9 : i1 to i32
    %c0_i32_9 = arith.constant 0 : i32
    %11 = arith.cmpi ne, %10, %c0_i32_9 : i32
    scf.if %11 {
      %c0_10 = arith.constant 0 : index
      %c0_11 = arith.constant 0 : index
      %12 = vector.load %arg6[%c0_10, %c0_11] : memref<16x128xf32, #tpu.memory_space<vmem>>, vector<16x128xf32>
      %c0_12 = arith.constant 0 : index
      %c0_13 = arith.constant 0 : index
      %13 = vector.load %arg4[%c0_12, %c0_13] : memref<1x128xf32, #tpu.memory_space<vmem>>, vector<1x128xf32>
      %14 = vector.broadcast %13 : vector<1x128xf32> to vector<16x128xf32>
      %15 = arith.addf %12, %14 : vector<16x128xf32>
      %cst_14 = arith.constant 0.000000e+00 : f32
      %16 = vector.broadcast %cst_14 : f32 to vector<16x128xf32>
      %17 = arith.maximumf %15, %16 : vector<16x128xf32>
      %c0_15 = arith.constant 0 : index
      %c0_16 = arith.constant 0 : index
      %18 = vector.load %arg5[%c0_15, %c0_16] : memref<16x128xf32, #tpu.memory_space<vmem>>, vector<16x128xf32>
      tpu.vector_store %arg5[%c0_15, %c0_16], %17 {strides = array<i32>} : memref<16x128xf32, #tpu.memory_space<vmem>>, vector<16x128xf32>,
    } else {
    }
    return
  }
  func.func @transform_0(%arg0: i32, %arg1: i32) -> (i32, i32) {
    %c0_i32 = arith.constant 0 : i32
    return %arg0, %arg1 : i32, i32
  }
  func.func @transform_1(%arg0: i32, %arg1: i32) -> (i32, i32) {
    %c0_i32 = arith.constant 0 : i32
    %c0_i32_0 = arith.constant 0 : i32
    return %arg1, %c0_i32 : i32, i32
  }
  func.func @transform_2(%arg0: i32, %arg1: i32) -> (i32, i32) {
    %c0_i32 = arith.constant 0 : i32
    %c0_i32_0 = arith.constant 0 : i32
    %c0_i32_1 = arith.constant 0 : i32
    return %c0_i32, %c0_i32_0 : i32, i32
  }
  func.func @transform_3(%arg0: i32, %arg1: i32) -> (i32, i32) {
    %c0_i32 = arith.constant 0 : i32
    %c0_i32_0 = arith.constant 0 : i32
    return %arg0, %c0_i32 : i32, i32
  }
}

module attributes {stable_mosaic.version = 11 : i64} {
  func.func @_conv_kernel(%arg0: i32, %arg1: i32, %arg2: memref<16x288xbf16, #tpu.memory_space<vmem>>, %arg3: memref<288x128xbf16, #tpu.memory_space<vmem>>, %arg4: memref<1x128xf32, #tpu.memory_space<vmem>>, %arg5: memref<16x2xf32, #tpu.memory_space<vmem>>, %arg6: memref<16x128xf32, #tpu.memory_space<vmem>>, %arg7: memref<16x128xf32, #tpu.memory_space<vmem>>) attributes {dimension_semantics = [#tpu.dimension_semantics<parallel>, #tpu.dimension_semantics<arbitrary>], iteration_bounds = array<i64: 1, 1>, scalar_prefetch = 0 : i64, scratch_operands = 1 : i64, tpu.core_type = #tpu.core_type<tc>, window_params = [{transform_indices = @transform_0, window_bounds = array<i64: 16, 288>}, {transform_indices = @transform_1, window_bounds = array<i64: 288, 128>}, {pipeline_mode = #tpu.pipeline_mode<synchronous>, transform_indices = @transform_2, window_bounds = array<i64: 1, 128>}, {transform_indices = @transform_3, window_bounds = array<i64: 16, 2>}, {transform_indices = @transform_4, window_bounds = array<i64: 16, 128>}]} {
    %c0_i32 = arith.constant 0 : i32
    %0 = arith.cmpi eq, %arg1, %c0_i32 : i32
    %1 = arith.extui %0 : i1 to i32
    %c0_i32_0 = arith.constant 0 : i32
    %2 = arith.cmpi ne, %1, %c0_i32_0 : i32
    scf.if %2 {
      %cst_10 = arith.constant 0.000000e+00 : f32
      %12 = vector.broadcast %cst_10 : f32 to vector<16x128xf32>
      %c0_11 = arith.constant 0 : index
      %c0_12 = arith.constant 0 : index
      %13 = vector.load %arg7[%c0_11, %c0_12] : memref<16x128xf32, #tpu.memory_space<vmem>>, vector<16x128xf32>
      tpu.vector_store %arg7[%c0_11, %c0_12], %12 {strides = array<i32>} : memref<16x128xf32, #tpu.memory_space<vmem>>, vector<16x128xf32>,
    } else {
    }
    %c0 = arith.constant 0 : index
    %c0_1 = arith.constant 0 : index
    %3 = vector.load %arg7[%c0, %c0_1] : memref<16x128xf32, #tpu.memory_space<vmem>>, vector<16x128xf32>
    %c0_2 = arith.constant 0 : index
    %c0_3 = arith.constant 0 : index
    %4 = vector.load %arg2[%c0_2, %c0_3] : memref<16x288xbf16, #tpu.memory_space<vmem>>, vector<16x288xbf16>
    %c0_4 = arith.constant 0 : index
    %c0_5 = arith.constant 0 : index
    %5 = vector.load %arg3[%c0_4, %c0_5] : memref<288x128xbf16, #tpu.memory_space<vmem>>, vector<288x128xbf16>
    %cst = arith.constant dense<0.000000e+00> : vector<16x128xf32>
    %6 = tpu.matmul %4, %5, %cst {dimension_numbers = #tpu.dot_dimension_numbers<[1], [0], [0], [1], [0, 0, 1, 1], [], []>} : vector<16x288xbf16>, vector<288x128xbf16>, vector<16x128xf32> -> vector<16x128xf32>
    %7 = arith.addf %3, %6 : vector<16x128xf32>
    %c0_6 = arith.constant 0 : index
    %c0_7 = arith.constant 0 : index
    %8 = vector.load %arg7[%c0_6, %c0_7] : memref<16x128xf32, #tpu.memory_space<vmem>>, vector<16x128xf32>
    tpu.vector_store %arg7[%c0_6, %c0_7], %7 {strides = array<i32>} : memref<16x128xf32, #tpu.memory_space<vmem>>, vector<16x128xf32>,
    %c0_i32_8 = arith.constant 0 : i32
    %9 = arith.cmpi eq, %arg1, %c0_i32_8 : i32
    %10 = arith.extui %9 : i1 to i32
    %c0_i32_9 = arith.constant 0 : i32
    %11 = arith.cmpi ne, %10, %c0_i32_9 : i32
    scf.if %11 {
      %c0_10 = arith.constant 0 : index
      %c0_11 = arith.constant 0 : index
      %12 = vector.load %arg7[%c0_10, %c0_11] : memref<16x128xf32, #tpu.memory_space<vmem>>, vector<16x128xf32>
      %c0_12 = arith.constant 0 : index
      %c0_13 = arith.constant 0 : index
      %13 = vector.load %arg5[%c0_12, %c0_13] : memref<16x2xf32, #tpu.memory_space<vmem>>, vector<16x2xf32>
      %14 = vector.extract_strided_slice %13 {offsets = [0, 0], sizes = [16, 1], strides = [1, 1]} : vector<16x2xf32> to vector<16x1xf32>
      %15 = vector.broadcast %14 : vector<16x1xf32> to vector<16x128xf32>
      %16 = arith.mulf %12, %15 : vector<16x128xf32>
      %c0_14 = arith.constant 0 : index
      %c0_15 = arith.constant 0 : index
      %17 = vector.load %arg4[%c0_14, %c0_15] : memref<1x128xf32, #tpu.memory_space<vmem>>, vector<1x128xf32>
      %18 = vector.extract_strided_slice %13 {offsets = [0, 1], sizes = [16, 1], strides = [1, 1]} : vector<16x2xf32> to vector<16x1xf32>
      %19 = vector.broadcast %17 : vector<1x128xf32> to vector<16x128xf32>
      %20 = vector.broadcast %18 : vector<16x1xf32> to vector<16x128xf32>
      %21 = arith.mulf %19, %20 : vector<16x128xf32>
      %22 = arith.addf %16, %21 : vector<16x128xf32>
      %cst_16 = arith.constant 0.000000e+00 : f32
      %23 = vector.broadcast %cst_16 : f32 to vector<16x128xf32>
      %24 = arith.maximumf %22, %23 : vector<16x128xf32>
      %c0_17 = arith.constant 0 : index
      %c0_18 = arith.constant 0 : index
      %25 = vector.load %arg6[%c0_17, %c0_18] : memref<16x128xf32, #tpu.memory_space<vmem>>, vector<16x128xf32>
      tpu.vector_store %arg6[%c0_17, %c0_18], %24 {strides = array<i32>} : memref<16x128xf32, #tpu.memory_space<vmem>>, vector<16x128xf32>,
    } else {
    }
    return
  }
  func.func @transform_0(%arg0: i32, %arg1: i32) -> (i32, i32) {
    %c0_i32 = arith.constant 0 : i32
    return %arg0, %arg1 : i32, i32
  }
  func.func @transform_1(%arg0: i32, %arg1: i32) -> (i32, i32) {
    %c0_i32 = arith.constant 0 : i32
    %c0_i32_0 = arith.constant 0 : i32
    return %arg1, %c0_i32 : i32, i32
  }
  func.func @transform_2(%arg0: i32, %arg1: i32) -> (i32, i32) {
    %c0_i32 = arith.constant 0 : i32
    %c0_i32_0 = arith.constant 0 : i32
    %c0_i32_1 = arith.constant 0 : i32
    return %c0_i32, %c0_i32_0 : i32, i32
  }
  func.func @transform_3(%arg0: i32, %arg1: i32) -> (i32, i32) {
    %c0_i32 = arith.constant 0 : i32
    %c0_i32_0 = arith.constant 0 : i32
    return %arg0, %c0_i32 : i32, i32
  }
  func.func @transform_4(%arg0: i32, %arg1: i32) -> (i32, i32) {
    %c0_i32 = arith.constant 0 : i32
    %c0_i32_0 = arith.constant 0 : i32
    return %arg0, %c0_i32 : i32, i32
  }
}

</mosaic_0001>

<llo_original>
// kernel: encoder_forward.20
$region0: #{encoder_forward.20}
  #allocation0 [shape = 'u32[]', space=smem, size = 0x4, offset = 0x4, fixed_abs, tag = 'smem constant byte address 0x4 - core index']
  #allocation1 [shape = 'u32[72,128]{1,0:T(1,128)}', space=vmem, size = 0x9000, scoped, tag = 'internal scratch']
  #allocation2 [shape = 'f32[256,128]{1,0:T(8,128)}', space=vmem, size = 0x20000, scoped, tag = 'scratch operand']
  %s0 = inlined_call_operand.vmem [shape: bf16[512,36], index: 0, kind: input, shape index: {}]
  %s1 = inlined_call_operand.vmem [shape: bf16[36,128], index: 1, kind: input, shape index: {}]
  %s2 = inlined_call_operand.vmem [shape: f32[1,128], index: 2, kind: input, shape index: {}]
  %s3 = inlined_call_operand.vmem [shape: f32[512,128], index: 3, kind: output, shape index: {}]
  %s4 = sld [smem:[#allocation0]]
  $region53: #{encoder_forward.20} parent=0
    _
  %s6 = ssub.s32 1, %s4
  %s7 = scalar_select 0, %s6, %s4
  loop: start=0, step=1, limit=4
  $region2: #{encoder_forward.20} parent=0 // loop_pre_header
    _
  $region3: #{encoder_forward.20} parent=0 // loop_header
    %s9 = sphi 0, %s13
    %p10 = scmp.ge.s32.totalorder %s9, 4
    %s16 = sphi 0, %s28
    %s17 = sphi 0, %s24
    %s18 = sphi 0, %s16
    %s19 = sphi 0, %s17
    %s20 = sphi 0, %s18
    %s21 = sphi 0, %s19
    %s33 = sphi 0, %s35
    %s36 = sphi 0, %s33
    %s37 = sphi 0, %s36
    %s53 = sphi 0, %s37
    %s59 = sphi 0, %s61
    %s62 = sphi 0, %s59
    %s63 = sphi 0, %s62
    %s79 = sphi 0, %s63
    %s83 = sphi 0, %s83
    %s85 = sphi 0, %s83
    %s86 = sphi 0, %s85
    %s100 = sphi 0, %s86
    %s106 = sphi 0, %s108
    %s109 = sphi 0, %s106
    %s110 = sphi 0, %s109
    %s126 = sphi 0, %s110
  $region4: #{encoder_forward.20} parent=0 // loop_header_branch
    %12 = sbr.rel (%p10) target = $region8
  $region5: #{encoder_forward.20} parent=0 // loop_body
    %s14 = ssub.s32 %s9, 1
    %s15 = ssub.s32 %s9, 2
    %s22 = sadd.s32 1, %s17
    %p23 = scmp.ge.s32.totalorder %s22, 1
    %s24 = scalar_select %p23, 0, %s22
    %s25 = sadd.s32 1, %s16
    %s26 = scalar_select %p23, %s25, %s16
    %p27 = scmp.ge.s32.totalorder %s26, 2
    %s28 = scalar_select %p27, 0, %s26
    %s29 = ssub.s32 %s16, %s28
    %s30 = ssub.s32 %s17, %s24
    %s31 = sor.u32 %s29, %s30
    %p32 = scmp.eq.s32.totalorder %s31, 0
    %s34 = sadd.s32 %s33, 1
    %s35 = scalar_select %p32, %s33, %s34
    %p38 = pneg %p32
    %p39 = scmp.eq.s32.totalorder %s9, 1
    %p40 = por %p38, %p39
    %p41 = scmp.ne.s32.totalorder %s33, %s36
    %p42 = scmp.eq.s32.totalorder %s9, 0
    %p43 = por %p41, %p42
    %p44 = scmp.ne.s32.totalorder %s33, %s36
    %p45 = scmp.eq.s32.totalorder %s14, 1
    %p46 = por %p44, %p45
    %p47 = scmp.ne.s32.totalorder %s36, %s37
    %p48 = scmp.eq.s32.totalorder %s14, 0
    %p49 = por %p47, %p48
    %p50 = scmp.ne.s32.totalorder %s36, %s37
    %p51 = scmp.eq.s32.totalorder %s15, 1
    %p52 = por %p50, %p51
    %p54 = scmp.ne.s32.totalorder %s37, %s53
    %p55 = scmp.eq.s32.totalorder %s15, 0
    %p56 = por %p54, %p55
    %s57 = ssub.s32 %s17, %s24
    %p58 = scmp.eq.s32.totalorder %s57, 0
    %s60 = sadd.s32 %s59, 1
    %s61 = scalar_select %p58, %s59, %s60
    %p64 = pneg %p58
    %p65 = scmp.eq.s32.totalorder %s9, 1
    %p66 = por %p64, %p65
    %p67 = scmp.ne.s32.totalorder %s59, %s62
    %p68 = scmp.eq.s32.totalorder %s9, 0
    %p69 = por %p67, %p68
    %p70 = scmp.ne.s32.totalorder %s59, %s62
    %p71 = scmp.eq.s32.totalorder %s14, 1
    %p72 = por %p70, %p71
    %p73 = scmp.ne.s32.totalorder %s62, %s63
    %p74 = scmp.eq.s32.totalorder %s14, 0
    %p75 = por %p73, %p74
    %p76 = scmp.ne.s32.totalorder %s62, %s63
    %p77 = scmp.eq.s32.totalorder %s15, 1
    %p78 = por %p76, %p77
    %p80 = scmp.ne.s32.totalorder %s63, %s79
    %p81 = scmp.eq.s32.totalorder %s15, 0
    %p82 = por %p80, %p81
    %s84 = sadd.s32 %s83, 1
    %p87 = scmp.eq.s32.totalorder %s9, 1
    %p88 = scmp.ne.s32.totalorder %s83, %s85
    %p89 = scmp.eq.s32.totalorder %s9, 0
    %p90 = por %p88, %p89
    %p91 = scmp.ne.s32.totalorder %s83, %s85
    %p92 = scmp.eq.s32.totalorder %s14, 1
    %p93 = por %p91, %p92
    %p94 = scmp.ne.s32.totalorder %s85, %s86
    %p95 = scmp.eq.s32.totalorder %s14, 0
    %p96 = por %p94, %p95
    %p97 = scmp.ne.s32.totalorder %s85, %s86
    %p98 = scmp.eq.s32.totalorder %s15, 1
    %p99 = por %p97, %p98
    %p101 = scmp.ne.s32.totalorder %s86, %s100
    %p102 = scmp.eq.s32.totalorder %s15, 0
    %p103 = por %p101, %p102
    %s104 = ssub.s32 %s16, %s28
    %p105 = scmp.eq.s32.totalorder %s104, 0
    %s107 = sadd.s32 %s106, 1
    %s108 = scalar_select %p105, %s106, %s107
    %p111 = pneg %p105
    %p112 = scmp.eq.s32.totalorder %s9, 1
    %p113 = por %p111, %p112
    %p114 = scmp.ne.s32.totalorder %s106, %s109
    %p115 = scmp.eq.s32.totalorder %s9, 0
    %p116 = por %p114, %p115
    %p117 = scmp.ne.s32.totalorder %s106, %s109
    %p118 = scmp.eq.s32.totalorder %s14, 1
    %p119 = por %p117, %p118
    %p120 = scmp.ne.s32.totalorder %s109, %s110
    %p121 = scmp.eq.s32.totalorder %s14, 0
    %p122 = por %p120, %p121
    %p123 = scmp.ne.s32.totalorder %s109, %s110
    %p124 = scmp.eq.s32.totalorder %s15, 1
    %p125 = por %p123, %p124
    %p127 = scmp.ne.s32.totalorder %s110, %s126
    %p128 = scmp.eq.s32.totalorder %s15, 0
    %p129 = por %p127, %p128
    %p130 = scmp.le.s32.totalorder 1, %s9
    %p131 = scmp.lt.s32.totalorder %s9, 3
    %p132 = pnand %p130, %p131
    %p133 = pneg %p132
    // Predicated region
    $region9: #{encoder_forward.20} parent=5 // pred_check
      _
    $region10: #{encoder_forward.20} parent=5 // pred_check_branch
      %135 = sbr.rel (%p132) target = $region12
    $region11: #{encoder_forward.20} parent=5 // pred_region
      %s136 = ssub.s32 %s9, 1
      // Predicated region
      $region13: #{encoder_forward.20} parent=11 // pred_check
        %p137 = pneg %p75
      $region14: #{encoder_forward.20} parent=11 // pred_check_branch
        %139 = sbr.rel (%p137) target = $region16
      $region15: #{encoder_forward.20} parent=11 // pred_region
        %s140 = smul.u32 5, %s19
        %p141 = scmp.lt.s32.totalorder %s140, 4
        %s142 = scalar_select %p141, %s140, 4
        %s143 = smul.addr %s142, 4
        %s144 = scalar_lea.vmem %s1, %s143
        %s145 = smul.u32 5, %s19
      $region16: #{encoder_forward.20} parent=11 // pred_fallthru
        _
      // Predicated region
      $region17: #{encoder_forward.20} parent=11 // pred_check
        %p146 = pneg %p96
      $region18: #{encoder_forward.20} parent=11 // pred_check_branch
        %148 = sbr.rel (%p146) target = $region20
      $region19: #{encoder_forward.20} parent=11 // pred_region
        _
      $region20: #{encoder_forward.20} parent=11 // pred_fallthru
        _
    $region12: #{encoder_forward.20} parent=5 // pred_fallthru
      _
    %p149 = scmp.lt.s32.totalorder %s9, 2
    // Predicated region
    $region21: #{encoder_forward.20} parent=5 // pred_check
      %p150 = pneg %p149
    $region22: #{encoder_forward.20} parent=5 // pred_check_branch
      %152 = sbr.rel (%p150) target = $region24
    $region23: #{encoder_forward.20} parent=5 // pred_region
      // Predicated region
      $region25: #{encoder_forward.20} parent=23 // pred_check
        %p153 = pneg %p43
      $region26: #{encoder_forward.20} parent=23 // pred_check_branch
        %155 = sbr.rel (%p153) target = $region28
      $region27: #{encoder_forward.20} parent=23 // pred_region
        %s156 = smul.u32 32, %s16
        %p157 = scmp.lt.s32.totalorder %s156, 63
        %s158 = scalar_select %p157, %s156, 63
        %p159 = scmp.lt.s32.totalorder %s17, 0
        %s160 = scalar_select %p159, %s17, 0
        %s161 = sadd.s32 %s160, %s158
        %s162 = smul.addr %s161, 4
        %s163 = scalar_lea.vmem %s0, %s162
        %s164 = smul.u32 32, %s16
      $region28: #{encoder_forward.20} parent=23 // pred_fallthru
        _
    $region24: #{encoder_forward.20} parent=5 // pred_fallthru
      _
    %p165 = scmp.le.s32.totalorder 1, %s9
    %p166 = scmp.lt.s32.totalorder %s9, 3
    %p167 = pnand %p165, %p166
    %p168 = pneg %p167
    // Predicated region
    $region29: #{encoder_forward.20} parent=5 // pred_check
      _
    $region30: #{encoder_forward.20} parent=5 // pred_check_branch
      %170 = sbr.rel (%p167) target = $region32
    $region31: #{encoder_forward.20} parent=5 // pred_region
      %s171 = ssub.s32 %s9, 1
      %s172 = smul.u32 32, %s18
      %p173 = scmp.lt.s32.totalorder %s172, 63
      %s174 = scalar_select %p173, %s172, 63
      %p175 = scmp.lt.s32.totalorder %s19, 0
      %s176 = scalar_select %p175, %s19, 0
      %s177 = sadd.s32 %s176, %s174
      %s178 = smul.addr %s177, 4
      %s179 = scalar_lea.vmem %s0, %s178
      %p180 = pneg %p49
      %p181 = pneg %p46
      %s182 = smul.u32 5, %s19
      %p183 = scmp.lt.s32.totalorder %s182, 4
      %s184 = scalar_select %p183, %s182, 4
      %s185 = smul.addr %s184, 4
      %s186 = scalar_lea.vmem %s1, %s185
      %p187 = pneg %p75
      %p188 = pneg %p72
      %p189 = pneg %p96
      %p190 = pneg %p93
      %p191 = pneg %p122
      %p192 = pneg %p119
      %s193 = smul.u32 32, %s18
      %p194 = scmp.lt.s32.totalorder %s193, 63
      %s195 = scalar_select %p194, %s193, 63
      %s196 = smul.addr %s195, 8
      %s197 = scalar_lea.vmem %s3, %s196
      %s198 = smul.u32 32, %s18
      %p199 = scmp.lt.s32.totalorder %s198, 63
      %s200 = scalar_select %p199, %s198, 63
      %p201 = scmp.lt.s32.totalorder %s19, 0
      %s202 = scalar_select %p201, %s19, 0
      %s203 = sadd.s32 %s202, %s200
      %s204 = smul.addr %s203, 4
      %s205 = scalar_lea.vmem %s0, %s204
      %s206 = smul.u32 32, %s18
      %s207 = smul.u32 5, %s19
      %p208 = scmp.lt.s32.totalorder %s207, 4
      %s209 = scalar_select %p208, %s207, 4
      %s210 = smul.addr %s209, 4
      %s211 = scalar_lea.vmem %s1, %s210
      %s212 = smul.u32 5, %s19
      %s213 = smul.u32 32, %s18
      %p214 = scmp.lt.s32.totalorder %s213, 63
      %s215 = scalar_select %p214, %s213, 63
      %s216 = smul.addr %s215, 8
      %s217 = scalar_lea.vmem %s3, %s216
      %s218 = smul.u32 32, %s18
      %p220 = scmp.eq.s32.totalorder %s19, 0
      // Predicated region
      $region33: #{encoder_forward.20} parent=31 // pred_check
        %p221 = pneg %p220
      $region34: #{encoder_forward.20} parent=31 // pred_check_branch
        %223 = sbr.rel (%p221) target = $region36
      $region35: #{encoder_forward.20} parent=31 // pred_region
        %224 = vst [vmem:[#allocation2] sm:$0xff] 0.0
        %225 = vst [vmem:[#allocation2 + $0x8] sm:$0xff] 0.0
        %226 = vst [vmem:[#allocation2 + $0x10] sm:$0xff] 0.0
        %227 = vst [vmem:[#allocation2 + $0x18] sm:$0xff] 0.0
        %228 = vst [vmem:[#allocation2 + $0x20] sm:$0xff] 0.0
        %229 = vst [vmem:[#allocation2 + $0x28] sm:$0xff] 0.0
        %230 = vst [vmem:[#allocation2 + $0x30] sm:$0xff] 0.0
        %231 = vst [vmem:[#allocation2 + $0x38] sm:$0xff] 0.0
        %232 = vst [vmem:[#allocation2 + $0x40] sm:$0xff] 0.0
        %233 = vst [vmem:[#allocation2 + $0x48] sm:$0xff] 0.0
        %234 = vst [vmem:[#allocation2 + $0x50] sm:$0xff] 0.0
        %235 = vst [vmem:[#allocation2 + $0x58] sm:$0xff] 0.0
        %236 = vst [vmem:[#allocation2 + $0x60] sm:$0xff] 0.0
        %237 = vst [vmem:[#allocation2 + $0x68] sm:$0xff] 0.0
        %238 = vst [vmem:[#allocation2 + $0x70] sm:$0xff] 0.0
        %239 = vst [vmem:[#allocation2 + $0x78] sm:$0xff] 0.0
        %240 = vst [vmem:[#allocation2 + $0x80] sm:$0xff] 0.0
        %241 = vst [vmem:[#allocation2 + $0x88] sm:$0xff] 0.0
        %242 = vst [vmem:[#allocation2 + $0x90] sm:$0xff] 0.0
        %243 = vst [vmem:[#allocation2 + $0x98] sm:$0xff] 0.0
        %244 = vst [vmem:[#allocation2 + $0xa0] sm:$0xff] 0.0
        %245 = vst [vmem:[#allocation2 + $0xa8] sm:$0xff] 0.0
        %246 = vst [vmem:[#allocation2 + $0xb0] sm:$0xff] 0.0
        %247 = vst [vmem:[#allocation2 + $0xb8] sm:$0xff] 0.0
        %248 = vst [vmem:[#allocation2 + $0xc0] sm:$0xff] 0.0
        %249 = vst [vmem:[#allocation2 + $0xc8] sm:$0xff] 0.0
        %250 = vst [vmem:[#allocation2 + $0xd0] sm:$0xff] 0.0
        %251 = vst [vmem:[#allocation2 + $0xd8] sm:$0xff] 0.0
        %252 = vst [vmem:[#allocation2 + $0xe0] sm:$0xff] 0.0
        %253 = vst [vmem:[#allocation2 + $0xe8] sm:$0xff] 0.0
        %254 = vst [vmem:[#allocation2 + $0xf0] sm:$0xff] 0.0
        %255 = vst [vmem:[#allocation2 + $0xf8] sm:$0xff] 0.0
      $region36: #{encoder_forward.20} parent=31 // pred_fallthru
        _
      %v256 = vld [vmem:[#allocation2] sm:$0xff]
      %v257 = vld [vmem:[#allocation2 + $0x8] sm:$0xff]
      %v258 = vld [vmem:[#allocation2 + $0x10] sm:$0xff]
      %v259 = vld [vmem:[#allocation2 + $0x18] sm:$0xff]
      %v260 = vld [vmem:[#allocation2 + $0x20] sm:$0xff]
      %v261 = vld [vmem:[#allocation2 + $0x28] sm:$0xff]
      %v262 = vld [vmem:[#allocation2 + $0x30] sm:$0xff]
      %v263 = vld [vmem:[#allocation2 + $0x38] sm:$0xff]
      %v264 = vld [vmem:[#allocation2 + $0x40] sm:$0xff]
      %v265 = vld [vmem:[#allocation2 + $0x48] sm:$0xff]
      %v266 = vld [vmem:[#allocation2 + $0x50] sm:$0xff]
      %v267 = vld [vmem:[#allocation2 + $0x58] sm:$0xff]
      %v268 = vld [vmem:[#allocation2 + $0x60] sm:$0xff]
      %v269 = vld [vmem:[#allocation2 + $0x68] sm:$0xff]
      %v270 = vld [vmem:[#allocation2 + $0x70] sm:$0xff]
      %v271 = vld [vmem:[#allocation2 + $0x78] sm:$0xff]
      %v272 = vld [vmem:[#allocation2 + $0x80] sm:$0xff]
      %v273 = vld [vmem:[#allocation2 + $0x88] sm:$0xff]
      %v274 = vld [vmem:[#allocation2 + $0x90] sm:$0xff]
      %v275 = vld [vmem:[#allocation2 + $0x98] sm:$0xff]
      %v276 = vld [vmem:[#allocation2 + $0xa0] sm:$0xff]
      %v277 = vld [vmem:[#allocation2 + $0xa8] sm:$0xff]
      %v278 = vld [vmem:[#allocation2 + $0xb0] sm:$0xff]
      %v279 = vld [vmem:[#allocation2 + $0xb8] sm:$0xff]
      %v280 = vld [vmem:[#allocation2 + $0xc0] sm:$0xff]
      %v281 = vld [vmem:[#allocation2 + $0xc8] sm:$0xff]
      %v282 = vld [vmem:[#allocation2 + $0xd0] sm:$0xff]
      %v283 = vld [vmem:[#allocation2 + $0xd8] sm:$0xff]
      %v284 = vld [vmem:[#allocation2 + $0xe0] sm:$0xff]
      %v285 = vld [vmem:[#allocation2 + $0xe8] sm:$0xff]
      %v286 = vld [vmem:[#allocation2 + $0xf0] sm:$0xff]
      %v287 = vld [vmem:[#allocation2 + $0xf8] sm:$0xff]
      %v288 = vld [vmem:[%s205] sm:$0xf]
      %v289 = vld [vmem:[%s205 + $0x4] sm:$0xf]
      %v290 = vld [vmem:[%s205 + $0x8] sm:$0xf]
      %v291 = vld [vmem:[%s205 + $0xc] sm:$0xf]
      %v292 = vld [vmem:[%s205 + $0x10] sm:$0xf]
      %v293 = vld [vmem:[%s205 + $0x14] sm:$0xf]
      %v294 = vld [vmem:[%s205 + $0x18] sm:$0xf]
      %v295 = vld [vmem:[%s205 + $0x1c] sm:$0xf]
      %v296 = vld [vmem:[%s205 + $0x20] sm:$0xf]
      %v297 = vld [vmem:[%s205 + $0x24] sm:$0xf]
      %v298 = vld [vmem:[%s205 + $0x28] sm:$0xf]
      %v299 = vld [vmem:[%s205 + $0x2c] sm:$0xf]
      %v300 = vld [vmem:[%s205 + $0x30] sm:$0xf]
      %v301 = vld [vmem:[%s205 + $0x34] sm:$0xf]
      %v302 = vld [vmem:[%s205 + $0x38] sm:$0xf]
      %v303 = vld [vmem:[%s205 + $0x3c] sm:$0xf]
      %v304 = vld [vmem:[%s205 + $0x40] sm:$0xf]
      %v305 = vld [vmem:[%s205 + $0x44] sm:$0xf]
      %v306 = vld [vmem:[%s205 + $0x48] sm:$0xf]
      %v307 = vld [vmem:[%s205 + $0x4c] sm:$0xf]
      %v308 = vld [vmem:[%s205 + $0x50] sm:$0xf]
      %v309 = vld [vmem:[%s205 + $0x54] sm:$0xf]
      %v310 = vld [vmem:[%s205 + $0x58] sm:$0xf]
      %v311 = vld [vmem:[%s205 + $0x5c] sm:$0xf]
      %v312 = vld [vmem:[%s205 + $0x60] sm:$0xf]
      %v313 = vld [vmem:[%s205 + $0x64] sm:$0xf]
      %v314 = vld [vmem:[%s205 + $0x68] sm:$0xf]
      %v315 = vld [vmem:[%s205 + $0x6c] sm:$0xf]
      %v316 = vld [vmem:[%s205 + $0x70] sm:$0xf]
      %v317 = vld [vmem:[%s205 + $0x74] sm:$0xf]
      %v318 = vld [vmem:[%s205 + $0x78] sm:$0xf]
      %v319 = vld [vmem:[%s205 + $0x7c] sm:$0xf]
      %v320 = vld [vmem:[%s211] sm:$0xf]
      %v321 = vld [vmem:[%s211 + $0x4] sm:$0xf]
      %v322 = vld [vmem:[%s211 + $0x8] sm:$0xf]
      %v323 = vld [vmem:[%s211 + $0xc] sm:$0xf]
      %v324 = vld [vmem:[%s211 + $0x10] sm:$0x3]
      %v357 = vunpack.c.l.b16 %v288
      %v358 = vunpack.c.l.b16 %v289
      %v359 = vunpack.c.l.b16 %v290
      %v360 = vunpack.c.l.b16 %v291
      %v361 = vunpack.c.l.b16 %v292
      %v362 = vunpack.c.l.b16 %v293
      %v363 = vunpack.c.l.b16 %v294
      %v364 = vunpack.c.l.b16 %v295
      %v365 = vunpack.c.l.b16 %v296
      %v366 = vunpack.c.l.b16 %v297
      %v367 = vunpack.c.l.b16 %v298
      %v368 = vunpack.c.l.b16 %v299
      %v369 = vunpack.c.l.b16 %v300
      %v370 = vunpack.c.l.b16 %v301
      %v371 = vunpack.c.l.b16 %v302
      %v372 = vunpack.c.l.b16 %v303
      %v373 = vunpack.c.l.b16 %v304
      %v374 = vunpack.c.l.b16 %v305
      %v375 = vunpack.c.l.b16 %v306
      %v376 = vunpack.c.l.b16 %v307
      %v377 = vunpack.c.l.b16 %v308
      %v378 = vunpack.c.l.b16 %v309
      %v379 = vunpack.c.l.b16 %v310
      %v380 = vunpack.c.l.b16 %v311
      %v381 = vunpack.c.l.b16 %v312
      %v382 = vunpack.c.l.b16 %v313
      %v383 = vunpack.c.l.b16 %v314
      %v384 = vunpack.c.l.b16 %v315
      %v385 = vunpack.c.l.b16 %v316
      %v386 = vunpack.c.l.b16 %v317
      %v387 = vunpack.c.l.b16 %v318
      %v388 = vunpack.c.l.b16 %v319
      %v389 = vpack.c.b16 %v358, %v357
      %v390 = vpack.c.b16 %v360, %v359
      %v391 = vpack.c.b16 %v362, %v361
      %v392 = vpack.c.b16 %v364, %v363
      %v393 = vpack.c.b16 %v366, %v365
      %v394 = vpack.c.b16 %v368, %v367
      %v395 = vpack.c.b16 %v370, %v369
      %v396 = vpack.c.b16 %v372, %v371
      %v397 = vpack.c.b16 %v374, %v373
      %v398 = vpack.c.b16 %v376, %v375
      %v399 = vpack.c.b16 %v378, %v377
      %v400 = vpack.c.b16 %v380, %v379
      %v401 = vpack.c.b16 %v382, %v381
      %v402 = vpack.c.b16 %v384, %v383
      %v403 = vpack.c.b16 %v386, %v385
      %v404 = vpack.c.b16 %v388, %v387
      %v410 = vunpack.c.l.b16 %v320
      %v411 = vunpack.c.l.b16 %v321
      %v412 = vunpack.c.l.b16 %v322
      %v413 = vunpack.c.l.b16 %v323
      %v414 = vunpack.c.l.b16 %v324
      %v415 = vpack.c.b16 %v411, %v410
      %v416 = vpack.c.b16 %v413, %v412
      %v417 = vpack.c.b16 %v414, %v414
      %vm420 = vcmask 293888
      %v422 = vsel %vm420, %v389, 0
      %v425 = vsel %vm420, %v390, 0
      %v428 = vsel %vm420, %v391, 0
      %v431 = vsel %vm420, %v392, 0
      %v434 = vsel %vm420, %v393, 0
      %v437 = vsel %vm420, %v394, 0
      %v440 = vsel %vm420, %v395, 0
      %v443 = vsel %vm420, %v396, 0
      %v446 = vsel %vm420, %v397, 0
      %v449 = vsel %vm420, %v398, 0
      %v452 = vsel %vm420, %v399, 0
      %v455 = vsel %vm420, %v400, 0
      %v458 = vsel %vm420, %v401, 0
      %v461 = vsel %vm420, %v402, 0
      %v464 = vsel %vm420, %v403, 0
      %v467 = vsel %vm420, %v404, 0
      %vm469 = vcmask 1041408
      %v471 = vsel %vm469, %v417, 0
      %473 = vmatpush.bf16.msra.mxu0 0
      %474 = vmatpush.bf16.msra.mxu0 0
      %475 = vmatpush.bf16.msra.mxu0 0
      %476 = vmatpush.bf16.msra.mxu0 0
      %477 = vmatpush.bf16.msra.mxu0 0
      %478 = vmatpush.bf16.msra.mxu0 %v471
      %479 = vmatpush.bf16.msra.mxu0 %v416
      %480 = vmatpush.bf16.msra.mxu0 %v415
      %481 = vmatmul.bf16.gmra.mxu0 %v422
      %v482 = vpop.f32.mrf.mxu0
      %v483 = vadd.f32 0.0, %v482
      %v484 = vpop.f32.mrf.mxu0
      %v485 = vadd.f32 0.0, %v484
      %486 = vmatmul.bf16.gmra.mxu0 %v425
      %v487 = vpop.f32.mrf.mxu0
      %v488 = vadd.f32 0.0, %v487
      %v489 = vpop.f32.mrf.mxu0
      %v490 = vadd.f32 0.0, %v489
      %491 = vmatmul.bf16.gmra.mxu0 %v428
      %v492 = vpop.f32.mrf.mxu0
      %v493 = vadd.f32 0.0, %v492
      %v494 = vpop.f32.mrf.mxu0
      %v495 = vadd.f32 0.0, %v494
      %496 = vmatmul.bf16.gmra.mxu0 %v431
      %v497 = vpop.f32.mrf.mxu0
      %v498 = vadd.f32 0.0, %v497
      %v499 = vpop.f32.mrf.mxu0
      %v500 = vadd.f32 0.0, %v499
      %501 = vmatmul.bf16.gmra.mxu0 %v434
      %v502 = vpop.f32.mrf.mxu0
      %v503 = vadd.f32 0.0, %v502
      %v504 = vpop.f32.mrf.mxu0
      %v505 = vadd.f32 0.0, %v504
      %506 = vmatmul.bf16.gmra.mxu0 %v437
      %v507 = vpop.f32.mrf.mxu0
      %v508 = vadd.f32 0.0, %v507
      %v509 = vpop.f32.mrf.mxu0
      %v510 = vadd.f32 0.0, %v509
      %511 = vmatmul.bf16.gmra.mxu0 %v440
      %v512 = vpop.f32.mrf.mxu0
      %v513 = vadd.f32 0.0, %v512
      %v514 = vpop.f32.mrf.mxu0
      %v515 = vadd.f32 0.0, %v514
      %516 = vmatmul.bf16.gmra.mxu0 %v443
      %v517 = vpop.f32.mrf.mxu0
      %v518 = vadd.f32 0.0, %v517
      %v519 = vpop.f32.mrf.mxu0
      %v520 = vadd.f32 0.0, %v519
      %521 = vmatmul.bf16.gmra.mxu0 %v446
      %v522 = vpop.f32.mrf.mxu0
      %v523 = vadd.f32 0.0, %v522
      %v524 = vpop.f32.mrf.mxu0
      %v525 = vadd.f32 0.0, %v524
      %526 = vmatmul.bf16.gmra.mxu0 %v449
      %v527 = vpop.f32.mrf.mxu0
      %v528 = vadd.f32 0.0, %v527
      %v529 = vpop.f32.mrf.mxu0
      %v530 = vadd.f32 0.0, %v529
      %531 = vmatmul.bf16.gmra.mxu0 %v452
      %v532 = vpop.f32.mrf.mxu0
      %v533 = vadd.f32 0.0, %v532
      %v534 = vpop.f32.mrf.mxu0
      %v535 = vadd.f32 0.0, %v534
      %536 = vmatmul.bf16.gmra.mxu0 %v455
      %v537 = vpop.f32.mrf.mxu0
      %v538 = vadd.f32 0.0, %v537
      %v539 = vpop.f32.mrf.mxu0
      %v540 = vadd.f32 0.0, %v539
      %541 = vmatmul.bf16.gmra.mxu0 %v458
      %v542 = vpop.f32.mrf.mxu0
      %v543 = vadd.f32 0.0, %v542
      %v544 = vpop.f32.mrf.mxu0
      %v545 = vadd.f32 0.0, %v544
      %546 = vmatmul.bf16.gmra.mxu0 %v461
      %v547 = vpop.f32.mrf.mxu0
      %v548 = vadd.f32 0.0, %v547
      %v549 = vpop.f32.mrf.mxu0
      %v550 = vadd.f32 0.0, %v549
      %551 = vmatmul.bf16.gmra.mxu0 %v464
      %v552 = vpop.f32.mrf.mxu0
      %v553 = vadd.f32 0.0, %v552
      %v554 = vpop.f32.mrf.mxu0
      %v555 = vadd.f32 0.0, %v554
      %556 = vmatmul.bf16.gmra.mxu0 %v467
      %v557 = vpop.f32.mrf.mxu0
      %v558 = vadd.f32 0.0, %v557
      %v559 = vpop.f32.mrf.mxu0
      %v560 = vadd.f32 0.0, %v559
      %561 = vdwg.mxu0
      %v562 = vadd.f32 %v256, %v483
      %v563 = vadd.f32 %v257, %v485
      %v564 = vadd.f32 %v258, %v488
      %v565 = vadd.f32 %v259, %v490
      %v566 = vadd.f32 %v260, %v493
      %v567 = vadd.f32 %v261, %v495
      %v568 = vadd.f32 %v262, %v498
      %v569 = vadd.f32 %v263, %v500
      %v570 = vadd.f32 %v264, %v503
      %v571 = vadd.f32 %v265, %v505
      %v572 = vadd.f32 %v266, %v508
      %v573 = vadd.f32 %v267, %v510
      %v574 = vadd.f32 %v268, %v513
      %v575 = vadd.f32 %v269, %v515
      %v576 = vadd.f32 %v270, %v518
      %v577 = vadd.f32 %v271, %v520
      %v578 = vadd.f32 %v272, %v523
      %v579 = vadd.f32 %v273, %v525
      %v580 = vadd.f32 %v274, %v528
      %v581 = vadd.f32 %v275, %v530
      %v582 = vadd.f32 %v276, %v533
      %v583 = vadd.f32 %v277, %v535
      %v584 = vadd.f32 %v278, %v538
      %v585 = vadd.f32 %v279, %v540
      %v586 = vadd.f32 %v280, %v543
      %v587 = vadd.f32 %v281, %v545
      %v588 = vadd.f32 %v282, %v548
      %v589 = vadd.f32 %v283, %v550
      %v590 = vadd.f32 %v284, %v553
      %v591 = vadd.f32 %v285, %v555
      %v592 = vadd.f32 %v286, %v558
      %v593 = vadd.f32 %v287, %v560
      %594 = vst [vmem:[#allocation2] sm:$0xff] %v562
      %595 = vst [vmem:[#allocation2 + $0x8] sm:$0xff] %v563
      %596 = vst [vmem:[#allocation2 + $0x10] sm:$0xff] %v564
      %597 = vst [vmem:[#allocation2 + $0x18] sm:$0xff] %v565
      %598 = vst [vmem:[#allocation2 + $0x20] sm:$0xff] %v566
      %599 = vst [vmem:[#allocation2 + $0x28] sm:$0xff] %v567
      %600 = vst [vmem:[#allocation2 + $0x30] sm:$0xff] %v568
      %601 = vst [vmem:[#allocation2 + $0x38] sm:$0xff] %v569
      %602 = vst [vmem:[#allocation2 + $0x40] sm:$0xff] %v570
      %603 = vst [vmem:[#allocation2 + $0x48] sm:$0xff] %v571
      %604 = vst [vmem:[#allocation2 + $0x50] sm:$0xff] %v572
      %605 = vst [vmem:[#allocation2 + $0x58] sm:$0xff] %v573
      %606 = vst [vmem:[#allocation2 + $0x60] sm:$0xff] %v574
      %607 = vst [vmem:[#allocation2 + $0x68] sm:$0xff] %v575
      %608 = vst [vmem:[#allocation2 + $0x70] sm:$0xff] %v576
      %609 = vst [vmem:[#allocation2 + $0x78] sm:$0xff] %v577
      %610 = vst [vmem:[#allocation2 + $0x80] sm:$0xff] %v578
      %611 = vst [vmem:[#allocation2 + $0x88] sm:$0xff] %v579
      %612 = vst [vmem:[#allocation2 + $0x90] sm:$0xff] %v580
      %613 = vst [vmem:[#allocation2 + $0x98] sm:$0xff] %v581
      %614 = vst [vmem:[#allocation2 + $0xa0] sm:$0xff] %v582
      %615 = vst [vmem:[#allocation2 + $0xa8] sm:$0xff] %v583
      %616 = vst [vmem:[#allocation2 + $0xb0] sm:$0xff] %v584
      %617 = vst [vmem:[#allocation2 + $0xb8] sm:$0xff] %v585
      %618 = vst [vmem:[#allocation2 + $0xc0] sm:$0xff] %v586
      %619 = vst [vmem:[#allocation2 + $0xc8] sm:$0xff] %v587
      %620 = vst [vmem:[#allocation2 + $0xd0] sm:$0xff] %v588
      %621 = vst [vmem:[#allocation2 + $0xd8] sm:$0xff] %v589
      %622 = vst [vmem:[#allocation2 + $0xe0] sm:$0xff] %v590
      %623 = vst [vmem:[#allocation2 + $0xe8] sm:$0xff] %v591
      %624 = vst [vmem:[#allocation2 + $0xf0] sm:$0xff] %v592
      %625 = vst [vmem:[#allocation2 + $0xf8] sm:$0xff] %v593
      // Predicated region
      $region37: #{encoder_forward.20} parent=31 // pred_check
        %p626 = pneg %p220
      $region38: #{encoder_forward.20} parent=31 // pred_check_branch
        %628 = sbr.rel (%p626) target = $region40
      $region39: #{encoder_forward.20} parent=31 // pred_region
        %v629 = vld [vmem:[#allocation2] sm:$0xff]
        %v630 = vld [vmem:[#allocation2 + $0x8] sm:$0xff]
        %v631 = vld [vmem:[#allocation2 + $0x10] sm:$0xff]
        %v632 = vld [vmem:[#allocation2 + $0x18] sm:$0xff]
        %v633 = vld [vmem:[#allocation2 + $0x20] sm:$0xff]
        %v634 = vld [vmem:[#allocation2 + $0x28] sm:$0xff]
        %v635 = vld [vmem:[#allocation2 + $0x30] sm:$0xff]
        %v636 = vld [vmem:[#allocation2 + $0x38] sm:$0xff]
        %v637 = vld [vmem:[#allocation2 + $0x40] sm:$0xff]
        %v638 = vld [vmem:[#allocation2 + $0x48] sm:$0xff]
        %v639 = vld [vmem:[#allocation2 + $0x50] sm:$0xff]
        %v640 = vld [vmem:[#allocation2 + $0x58] sm:$0xff]
        %v641 = vld [vmem:[#allocation2 + $0x60] sm:$0xff]
        %v642 = vld [vmem:[#allocation2 + $0x68] sm:$0xff]
        %v643 = vld [vmem:[#allocation2 + $0x70] sm:$0xff]
        %v644 = vld [vmem:[#allocation2 + $0x78] sm:$0xff]
        %v645 = vld [vmem:[#allocation2 + $0x80] sm:$0xff]
        %v646 = vld [vmem:[#allocation2 + $0x88] sm:$0xff]
        %v647 = vld [vmem:[#allocation2 + $0x90] sm:$0xff]
        %v648 = vld [vmem:[#allocation2 + $0x98] sm:$0xff]
        %v649 = vld [vmem:[#allocation2 + $0xa0] sm:$0xff]
        %v650 = vld [vmem:[#allocation2 + $0xa8] sm:$0xff]
        %v651 = vld [vmem:[#allocation2 + $0xb0] sm:$0xff]
        %v652 = vld [vmem:[#allocation2 + $0xb8] sm:$0xff]
        %v653 = vld [vmem:[#allocation2 + $0xc0] sm:$0xff]
        %v654 = vld [vmem:[#allocation2 + $0xc8] sm:$0xff]
        %v655 = vld [vmem:[#allocation2 + $0xd0] sm:$0xff]
        %v656 = vld [vmem:[#allocation2 + $0xd8] sm:$0xff]
        %v657 = vld [vmem:[#allocation2 + $0xe0] sm:$0xff]
        %v658 = vld [vmem:[#allocation2 + $0xe8] sm:$0xff]
        %v659 = vld [vmem:[#allocation2 + $0xf0] sm:$0xff]
        %v660 = vld [vmem:[#allocation2 + $0xf8] sm:$0xff]
        %v661 = vld [vmem:[%s2] sm:$0x1]
        %v663 = vperm.slane %v661, 0
        %v665 = vadd.f32 %v629, %v663
        %v666 = vadd.f32 %v630, %v663
        %v667 = vadd.f32 %v631, %v663
        %v668 = vadd.f32 %v632, %v663
        %v669 = vadd.f32 %v633, %v663
        %v670 = vadd.f32 %v634, %v663
        %v671 = vadd.f32 %v635, %v663
        %v672 = vadd.f32 %v636, %v663
        %v673 = vadd.f32 %v637, %v663
        %v674 = vadd.f32 %v638, %v663
        %v675 = vadd.f32 %v639, %v663
        %v676 = vadd.f32 %v640, %v663
        %v677 = vadd.f32 %v641, %v663
        %v678 = vadd.f32 %v642, %v663
        %v679 = vadd.f32 %v643, %v663
        %v680 = vadd.f32 %v644, %v663
        %v681 = vadd.f32 %v645, %v663
        %v682 = vadd.f32 %v646, %v663
        %v683 = vadd.f32 %v647, %v663
        %v684 = vadd.f32 %v648, %v663
        %v685 = vadd.f32 %v649, %v663
        %v686 = vadd.f32 %v650, %v663
        %v687 = vadd.f32 %v651, %v663
        %v688 = vadd.f32 %v652, %v663
        %v689 = vadd.f32 %v653, %v663
        %v690 = vadd.f32 %v654, %v663
        %v691 = vadd.f32 %v655, %v663
        %v692 = vadd.f32 %v656, %v663
        %v693 = vadd.f32 %v657, %v663
        %v694 = vadd.f32 %v658, %v663
        %v695 = vadd.f32 %v659, %v663
        %v696 = vadd.f32 %v660, %v663
        %v697 = vmax.f32 %v665, 0.0
        %v698 = vmax.f32 %v666, 0.0
        %v699 = vmax.f32 %v667, 0.0
        %v700 = vmax.f32 %v668, 0.0
        %v701 = vmax.f32 %v669, 0.0
        %v702 = vmax.f32 %v670, 0.0
        %v703 = vmax.f32 %v671, 0.0
        %v704 = vmax.f32 %v672, 0.0
        %v705 = vmax.f32 %v673, 0.0
        %v706 = vmax.f32 %v674, 0.0
        %v707 = vmax.f32 %v675, 0.0
        %v708 = vmax.f32 %v676, 0.0
        %v709 = vmax.f32 %v677, 0.0
        %v710 = vmax.f32 %v678, 0.0
        %v711 = vmax.f32 %v679, 0.0
        %v712 = vmax.f32 %v680, 0.0
        %v713 = vmax.f32 %v681, 0.0
        %v714 = vmax.f32 %v682, 0.0
        %v715 = vmax.f32 %v683, 0.0
        %v716 = vmax.f32 %v684, 0.0
        %v717 = vmax.f32 %v685, 0.0
        %v718 = vmax.f32 %v686, 0.0
        %v719 = vmax.f32 %v687, 0.0
        %v720 = vmax.f32 %v688, 0.0
        %v721 = vmax.f32 %v689, 0.0
        %v722 = vmax.f32 %v690, 0.0
        %v723 = vmax.f32 %v691, 0.0
        %v724 = vmax.f32 %v692, 0.0
        %v725 = vmax.f32 %v693, 0.0
        %v726 = vmax.f32 %v694, 0.0
        %v727 = vmax.f32 %v695, 0.0
        %v728 = vmax.f32 %v696, 0.0
        %729 = vst [vmem:[%s217] sm:$0xff] %v697
        %730 = vst [vmem:[%s217 + $0x8] sm:$0xff] %v698
        %731 = vst [vmem:[%s217 + $0x10] sm:$0xff] %v699
        %732 = vst [vmem:[%s217 + $0x18] sm:$0xff] %v700
        %733 = vst [vmem:[%s217 + $0x20] sm:$0xff] %v701
        %734 = vst [vmem:[%s217 + $0x28] sm:$0xff] %v702
        %735 = vst [vmem:[%s217 + $0x30] sm:$0xff] %v703
        %736 = vst [vmem:[%s217 + $0x38] sm:$0xff] %v704
        %737 = vst [vmem:[%s217 + $0x40] sm:$0xff] %v705
        %738 = vst [vmem:[%s217 + $0x48] sm:$0xff] %v706
        %739 = vst [vmem:[%s217 + $0x50] sm:$0xff] %v707
        %740 = vst [vmem:[%s217 + $0x58] sm:$0xff] %v708
        %741 = vst [vmem:[%s217 + $0x60] sm:$0xff] %v709
        %742 = vst [vmem:[%s217 + $0x68] sm:$0xff] %v710
        %743 = vst [vmem:[%s217 + $0x70] sm:$0xff] %v711
        %744 = vst [vmem:[%s217 + $0x78] sm:$0xff] %v712
        %745 = vst [vmem:[%s217 + $0x80] sm:$0xff] %v713
        %746 = vst [vmem:[%s217 + $0x88] sm:$0xff] %v714
        %747 = vst [vmem:[%s217 + $0x90] sm:$0xff] %v715
        %748 = vst [vmem:[%s217 + $0x98] sm:$0xff] %v716
        %749 = vst [vmem:[%s217 + $0xa0] sm:$0xff] %v717
        %750 = vst [vmem:[%s217 + $0xa8] sm:$0xff] %v718
        %751 = vst [vmem:[%s217 + $0xb0] sm:$0xff] %v719
        %752 = vst [vmem:[%s217 + $0xb8] sm:$0xff] %v720
        %753 = vst [vmem:[%s217 + $0xc0] sm:$0xff] %v721
        %754 = vst [vmem:[%s217 + $0xc8] sm:$0xff] %v722
        %755 = vst [vmem:[%s217 + $0xd0] sm:$0xff] %v723
        %756 = vst [vmem:[%s217 + $0xd8] sm:$0xff] %v724
        %757 = vst [vmem:[%s217 + $0xe0] sm:$0xff] %v725
        %758 = vst [vmem:[%s217 + $0xe8] sm:$0xff] %v726
        %759 = vst [vmem:[%s217 + $0xf0] sm:$0xff] %v727
        %760 = vst [vmem:[%s217 + $0xf8] sm:$0xff] %v728
      $region40: #{encoder_forward.20} parent=31 // pred_fallthru
        _
      %s761 = smul.u32 32, %s18
      %p762 = scmp.lt.s32.totalorder %s761, 63
      %s763 = scalar_select %p762, %s761, 63
      %s764 = smul.addr %s763, 8
      %s765 = scalar_lea.vmem %s3, %s764
      // Predicated region
      $region41: #{encoder_forward.20} parent=31 // pred_check
        %p766 = pneg %p119
      $region42: #{encoder_forward.20} parent=31 // pred_check_branch
        %768 = sbr.rel (%p766) target = $region44
      $region43: #{encoder_forward.20} parent=31 // pred_region
        %s769 = smul.u32 32, %s18
      $region44: #{encoder_forward.20} parent=31 // pred_fallthru
        _
    $region32: #{encoder_forward.20} parent=5 // pred_fallthru
      _
    %p770 = scmp.le.s32.totalorder 2, %s9
    // Predicated region
    $region45: #{encoder_forward.20} parent=5 // pred_check
      %p771 = pneg %p770
    $region46: #{encoder_forward.20} parent=5 // pred_check_branch
      %773 = sbr.rel (%p771) target = $region48
    $region47: #{encoder_forward.20} parent=5 // pred_region
      %s774 = ssub.s32 %s9, 2
      // Predicated region
      $region49: #{encoder_forward.20} parent=47 // pred_check
        %p775 = pneg %p125
      $region50: #{encoder_forward.20} parent=47 // pred_check_branch
        %777 = sbr.rel (%p775) target = $region52
      $region51: #{encoder_forward.20} parent=47 // pred_region
        %s778 = smul.u32 32, %s20
        %p779 = scmp.lt.s32.totalorder %s778, 63
        %s780 = scalar_select %p779, %s778, 63
        %s781 = smul.addr %s780, 8
        %s782 = scalar_lea.vmem %s3, %s781
      $region52: #{encoder_forward.20} parent=47 // pred_fallthru
        _
    $region48: #{encoder_forward.20} parent=5 // pred_fallthru
      _
  $region6: #{encoder_forward.20} parent=0 // loop_footer
    %s13 = sadd.s32 1, %s9
  $region7: #{encoder_forward.20} parent=0 // loop_footer_branch
    %8 = sbr.rel target = $region3
  $region8: #{encoder_forward.20} parent=0 // loop_exit
    _

// kernel: encoder_forward.21
$region0: #{encoder_forward.21}
  #allocation0 [shape = 'u32[]', space=smem, size = 0x4, offset = 0x4, fixed_abs, tag = 'smem constant byte address 0x4 - core index']
  #allocation1 [shape = 'u32[72,128]{1,0:T(1,128)}', space=vmem, size = 0x9000, scoped, tag = 'internal scratch']
  #allocation2 [shape = 'f32[256,128]{1,0:T(8,128)}', space=vmem, size = 0x20000, scoped, tag = 'scratch operand']
  %s0 = inlined_call_operand.vmem [shape: bf16[512,4], index: 0, kind: input, shape index: {}]
  %s1 = inlined_call_operand.vmem [shape: bf16[4,128], index: 1, kind: input, shape index: {}]
  %s2 = inlined_call_operand.vmem [shape: f32[1,128], index: 2, kind: input, shape index: {}]
  %s3 = inlined_call_operand.vmem [shape: f32[512,2], index: 3, kind: input, shape index: {}]
  %s4 = inlined_call_operand.vmem [shape: f32[512,128], index: 4, kind: output, shape index: {}]
  %s5 = sld [smem:[#allocation0]]
  $region57: #{encoder_forward.21} parent=0
    _
  %s7 = ssub.s32 1, %s5
  %s8 = scalar_select 0, %s7, %s5
  loop: start=0, step=1, limit=4
  $region2: #{encoder_forward.21} parent=0 // loop_pre_header
    _
  $region3: #{encoder_forward.21} parent=0 // loop_header
    %s10 = sphi 0, %s14
    %p11 = scmp.ge.s32.totalorder %s10, 4
    %s17 = sphi 0, %s29
    %s18 = sphi 0, %s25
    %s19 = sphi 0, %s17
    %s20 = sphi 0, %s18
    %s21 = sphi 0, %s19
    %s22 = sphi 0, %s20
    %s34 = sphi 0, %s36
    %s37 = sphi 0, %s34
    %s38 = sphi 0, %s37
    %s54 = sphi 0, %s38
    %s60 = sphi 0, %s62
    %s63 = sphi 0, %s60
    %s64 = sphi 0, %s63
    %s80 = sphi 0, %s64
    %s84 = sphi 0, %s84
    %s86 = sphi 0, %s84
    %s87 = sphi 0, %s86
    %s101 = sphi 0, %s87
    %s107 = sphi 0, %s109
    %s110 = sphi 0, %s107
    %s111 = sphi 0, %s110
    %s127 = sphi 0, %s111
    %s133 = sphi 0, %s135
    %s136 = sphi 0, %s133
    %s137 = sphi 0, %s136
    %s153 = sphi 0, %s137
  $region4: #{encoder_forward.21} parent=0 // loop_header_branch
    %13 = sbr.rel (%p11) target = $region8
  $region5: #{encoder_forward.21} parent=0 // loop_body
    %s15 = ssub.s32 %s10, 1
    %s16 = ssub.s32 %s10, 2
    %s23 = sadd.s32 1, %s18
    %p24 = scmp.ge.s32.totalorder %s23, 1
    %s25 = scalar_select %p24, 0, %s23
    %s26 = sadd.s32 1, %s17
    %s27 = scalar_select %p24, %s26, %s17
    %p28 = scmp.ge.s32.totalorder %s27, 2
    %s29 = scalar_select %p28, 0, %s27
    %s30 = ssub.s32 %s17, %s29
    %s31 = ssub.s32 %s18, %s25
    %s32 = sor.u32 %s30, %s31
    %p33 = scmp.eq.s32.totalorder %s32, 0
    %s35 = sadd.s32 %s34, 1
    %s36 = scalar_select %p33, %s34, %s35
    %p39 = pneg %p33
    %p40 = scmp.eq.s32.totalorder %s10, 1
    %p41 = por %p39, %p40
    %p42 = scmp.ne.s32.totalorder %s34, %s37
    %p43 = scmp.eq.s32.totalorder %s10, 0
    %p44 = por %p42, %p43
    %p45 = scmp.ne.s32.totalorder %s34, %s37
    %p46 = scmp.eq.s32.totalorder %s15, 1
    %p47 = por %p45, %p46
    %p48 = scmp.ne.s32.totalorder %s37, %s38
    %p49 = scmp.eq.s32.totalorder %s15, 0
    %p50 = por %p48, %p49
    %p51 = scmp.ne.s32.totalorder %s37, %s38
    %p52 = scmp.eq.s32.totalorder %s16, 1
    %p53 = por %p51, %p52
    %p55 = scmp.ne.s32.totalorder %s38, %s54
    %p56 = scmp.eq.s32.totalorder %s16, 0
    %p57 = por %p55, %p56
    %s58 = ssub.s32 %s18, %s25
    %p59 = scmp.eq.s32.totalorder %s58, 0
    %s61 = sadd.s32 %s60, 1
    %s62 = scalar_select %p59, %s60, %s61
    %p65 = pneg %p59
    %p66 = scmp.eq.s32.totalorder %s10, 1
    %p67 = por %p65, %p66
    %p68 = scmp.ne.s32.totalorder %s60, %s63
    %p69 = scmp.eq.s32.totalorder %s10, 0
    %p70 = por %p68, %p69
    %p71 = scmp.ne.s32.totalorder %s60, %s63
    %p72 = scmp.eq.s32.totalorder %s15, 1
    %p73 = por %p71, %p72
    %p74 = scmp.ne.s32.totalorder %s63, %s64
    %p75 = scmp.eq.s32.totalorder %s15, 0
    %p76 = por %p74, %p75
    %p77 = scmp.ne.s32.totalorder %s63, %s64
    %p78 = scmp.eq.s32.totalorder %s16, 1
    %p79 = por %p77, %p78
    %p81 = scmp.ne.s32.totalorder %s64, %s80
    %p82 = scmp.eq.s32.totalorder %s16, 0
    %p83 = por %p81, %p82
    %s85 = sadd.s32 %s84, 1
    %p88 = scmp.eq.s32.totalorder %s10, 1
    %p89 = scmp.ne.s32.totalorder %s84, %s86
    %p90 = scmp.eq.s32.totalorder %s10, 0
    %p91 = por %p89, %p90
    %p92 = scmp.ne.s32.totalorder %s84, %s86
    %p93 = scmp.eq.s32.totalorder %s15, 1
    %p94 = por %p92, %p93
    %p95 = scmp.ne.s32.totalorder %s86, %s87
    %p96 = scmp.eq.s32.totalorder %s15, 0
    %p97 = por %p95, %p96
    %p98 = scmp.ne.s32.totalorder %s86, %s87
    %p99 = scmp.eq.s32.totalorder %s16, 1
    %p100 = por %p98, %p99
    %p102 = scmp.ne.s32.totalorder %s87, %s101
    %p103 = scmp.eq.s32.totalorder %s16, 0
    %p104 = por %p102, %p103
    %s105 = ssub.s32 %s17, %s29
    %p106 = scmp.eq.s32.totalorder %s105, 0
    %s108 = sadd.s32 %s107, 1
    %s109 = scalar_select %p106, %s107, %s108
    %p112 = pneg %p106
    %p113 = scmp.eq.s32.totalorder %s10, 1
    %p114 = por %p112, %p113
    %p115 = scmp.ne.s32.totalorder %s107, %s110
    %p116 = scmp.eq.s32.totalorder %s10, 0
    %p117 = por %p115, %p116
    %p118 = scmp.ne.s32.totalorder %s107, %s110
    %p119 = scmp.eq.s32.totalorder %s15, 1
    %p120 = por %p118, %p119
    %p121 = scmp.ne.s32.totalorder %s110, %s111
    %p122 = scmp.eq.s32.totalorder %s15, 0
    %p123 = por %p121, %p122
    %p124 = scmp.ne.s32.totalorder %s110, %s111
    %p125 = scmp.eq.s32.totalorder %s16, 1
    %p126 = por %p124, %p125
    %p128 = scmp.ne.s32.totalorder %s111, %s127
    %p129 = scmp.eq.s32.totalorder %s16, 0
    %p130 = por %p128, %p129
    %s131 = ssub.s32 %s17, %s29
    %p132 = scmp.eq.s32.totalorder %s131, 0
    %s134 = sadd.s32 %s133, 1
    %s135 = scalar_select %p132, %s133, %s134
    %p138 = pneg %p132
    %p139 = scmp.eq.s32.totalorder %s10, 1
    %p140 = por %p138, %p139
    %p141 = scmp.ne.s32.totalorder %s133, %s136
    %p142 = scmp.eq.s32.totalorder %s10, 0
    %p143 = por %p141, %p142
    %p144 = scmp.ne.s32.totalorder %s133, %s136
    %p145 = scmp.eq.s32.totalorder %s15, 1
    %p146 = por %p144, %p145
    %p147 = scmp.ne.s32.totalorder %s136, %s137
    %p148 = scmp.eq.s32.totalorder %s15, 0
    %p149 = por %p147, %p148
    %p150 = scmp.ne.s32.totalorder %s136, %s137
    %p151 = scmp.eq.s32.totalorder %s16, 1
    %p152 = por %p150, %p151
    %p154 = scmp.ne.s32.totalorder %s137, %s153
    %p155 = scmp.eq.s32.totalorder %s16, 0
    %p156 = por %p154, %p155
    %p157 = scmp.le.s32.totalorder 1, %s10
    %p158 = scmp.lt.s32.totalorder %s10, 3
    %p159 = pnand %p157, %p158
    %p160 = pneg %p159
    // Predicated region
    $region9: #{encoder_forward.21} parent=5 // pred_check
      _
    $region10: #{encoder_forward.21} parent=5 // pred_check_branch
      %162 = sbr.rel (%p159) target = $region12
    $region11: #{encoder_forward.21} parent=5 // pred_region
      %s163 = ssub.s32 %s10, 1
      // Predicated region
      $region13: #{encoder_forward.21} parent=11 // pred_check
        %p164 = pneg %p76
      $region14: #{encoder_forward.21} parent=11 // pred_check_branch
        %166 = sbr.rel (%p164) target = $region16
      $region15: #{encoder_forward.21} parent=11 // pred_region
        %p167 = scmp.lt.s32.totalorder %s20, 0
        %s168 = scalar_select %p167, %s20, 0
        %s169 = smul.addr %s168, 2
        %s170 = scalar_lea.vmem %s1, %s169
      $region16: #{encoder_forward.21} parent=11 // pred_fallthru
        _
      // Predicated region
      $region17: #{encoder_forward.21} parent=11 // pred_check
        %p171 = pneg %p97
      $region18: #{encoder_forward.21} parent=11 // pred_check_branch
        %173 = sbr.rel (%p171) target = $region20
      $region19: #{encoder_forward.21} parent=11 // pred_region
        _
      $region20: #{encoder_forward.21} parent=11 // pred_fallthru
        _
    $region12: #{encoder_forward.21} parent=5 // pred_fallthru
      _
    %p174 = scmp.lt.s32.totalorder %s10, 2
    // Predicated region
    $region21: #{encoder_forward.21} parent=5 // pred_check
      %p175 = pneg %p174
    $region22: #{encoder_forward.21} parent=5 // pred_check_branch
      %177 = sbr.rel (%p175) target = $region24
    $region23: #{encoder_forward.21} parent=5 // pred_region
      // Predicated region
      $region25: #{encoder_forward.21} parent=23 // pred_check
        %p178 = pneg %p44
      $region26: #{encoder_forward.21} parent=23 // pred_check_branch
        %180 = sbr.rel (%p178) target = $region28
      $region27: #{encoder_forward.21} parent=23 // pred_region
        %s181 = smul.u32 32, %s17
        %p182 = scmp.lt.s32.totalorder %s181, 63
        %s183 = scalar_select %p182, %s181, 63
        %p184 = scmp.lt.s32.totalorder %s18, 0
        %s185 = scalar_select %p184, %s18, 0
        %s186 = sadd.s32 %s185, %s183
        %s187 = smul.addr %s186, 4
        %s188 = scalar_lea.vmem %s0, %s187
        %s189 = smul.u32 32, %s17
      $region28: #{encoder_forward.21} parent=23 // pred_fallthru
        _
      // Predicated region
      $region29: #{encoder_forward.21} parent=23 // pred_check
        %p190 = pneg %p117
      $region30: #{encoder_forward.21} parent=23 // pred_check_branch
        %192 = sbr.rel (%p190) target = $region32
      $region31: #{encoder_forward.21} parent=23 // pred_region
        %s193 = smul.u32 32, %s17
        %p194 = scmp.lt.s32.totalorder %s193, 63
        %s195 = scalar_select %p194, %s193, 63
        %s196 = smul.addr %s195, 8
        %s197 = scalar_lea.vmem %s3, %s196
        %s198 = smul.u32 32, %s17
      $region32: #{encoder_forward.21} parent=23 // pred_fallthru
        _
    $region24: #{encoder_forward.21} parent=5 // pred_fallthru
      _
    %p199 = scmp.le.s32.totalorder 1, %s10
    %p200 = scmp.lt.s32.totalorder %s10, 3
    %p201 = pnand %p199, %p200
    %p202 = pneg %p201
    // Predicated region
    $region33: #{encoder_forward.21} parent=5 // pred_check
      _
    $region34: #{encoder_forward.21} parent=5 // pred_check_branch
      %204 = sbr.rel (%p201) target = $region36
    $region35: #{encoder_forward.21} parent=5 // pred_region
      %s205 = ssub.s32 %s10, 1
      %s206 = smul.u32 32, %s19
      %p207 = scmp.lt.s32.totalorder %s206, 63
      %s208 = scalar_select %p207, %s206, 63
      %p209 = scmp.lt.s32.totalorder %s20, 0
      %s210 = scalar_select %p209, %s20, 0
      %s211 = sadd.s32 %s210, %s208
      %s212 = smul.addr %s211, 4
      %s213 = scalar_lea.vmem %s0, %s212
      %p214 = pneg %p50
      %p215 = pneg %p47
      %p216 = scmp.lt.s32.totalorder %s20, 0
      %s217 = scalar_select %p216, %s20, 0
      %s218 = smul.addr %s217, 2
      %s219 = scalar_lea.vmem %s1, %s218
      %p220 = pneg %p76
      %p221 = pneg %p73
      %p222 = pneg %p97
      %p223 = pneg %p94
      %s224 = smul.u32 32, %s19
      %p225 = scmp.lt.s32.totalorder %s224, 63
      %s226 = scalar_select %p225, %s224, 63
      %s227 = smul.addr %s226, 8
      %s228 = scalar_lea.vmem %s3, %s227
      %p229 = pneg %p123
      %p230 = pneg %p120
      %p231 = pneg %p149
      %p232 = pneg %p146
      %s233 = smul.u32 32, %s19
      %p234 = scmp.lt.s32.totalorder %s233, 63
      %s235 = scalar_select %p234, %s233, 63
      %s236 = smul.addr %s235, 8
      %s237 = scalar_lea.vmem %s4, %s236
      %s238 = smul.u32 32, %s19
      %p239 = scmp.lt.s32.totalorder %s238, 63
      %s240 = scalar_select %p239, %s238, 63
      %p241 = scmp.lt.s32.totalorder %s20, 0
      %s242 = scalar_select %p241, %s20, 0
      %s243 = sadd.s32 %s242, %s240
      %s244 = smul.addr %s243, 4
      %s245 = scalar_lea.vmem %s0, %s244
      %s246 = smul.u32 32, %s19
      %p247 = scmp.lt.s32.totalorder %s20, 0
      %s248 = scalar_select %p247, %s20, 0
      %s249 = smul.addr %s248, 2
      %s250 = scalar_lea.vmem %s1, %s249
      %s251 = smul.u32 32, %s19
      %p252 = scmp.lt.s32.totalorder %s251, 63
      %s253 = scalar_select %p252, %s251, 63
      %s254 = smul.addr %s253, 8
      %s255 = scalar_lea.vmem %s3, %s254
      %s256 = smul.u32 32, %s19
      %s257 = smul.u32 32, %s19
      %p258 = scmp.lt.s32.totalorder %s257, 63
      %s259 = scalar_select %p258, %s257, 63
      %s260 = smul.addr %s259, 8
      %s261 = scalar_lea.vmem %s4, %s260
      %s262 = smul.u32 32, %s19
      %p264 = scmp.eq.s32.totalorder %s20, 0
      // Predicated region
      $region37: #{encoder_forward.21} parent=35 // pred_check
        %p265 = pneg %p264
      $region38: #{encoder_forward.21} parent=35 // pred_check_branch
        %267 = sbr.rel (%p265) target = $region40
      $region39: #{encoder_forward.21} parent=35 // pred_region
        %268 = vst [vmem:[#allocation2] sm:$0xff] 0.0
        %269 = vst [vmem:[#allocation2 + $0x8] sm:$0xff] 0.0
        %270 = vst [vmem:[#allocation2 + $0x10] sm:$0xff] 0.0
        %271 = vst [vmem:[#allocation2 + $0x18] sm:$0xff] 0.0
        %272 = vst [vmem:[#allocation2 + $0x20] sm:$0xff] 0.0
        %273 = vst [vmem:[#allocation2 + $0x28] sm:$0xff] 0.0
        %274 = vst [vmem:[#allocation2 + $0x30] sm:$0xff] 0.0
        %275 = vst [vmem:[#allocation2 + $0x38] sm:$0xff] 0.0
        %276 = vst [vmem:[#allocation2 + $0x40] sm:$0xff] 0.0
        %277 = vst [vmem:[#allocation2 + $0x48] sm:$0xff] 0.0
        %278 = vst [vmem:[#allocation2 + $0x50] sm:$0xff] 0.0
        %279 = vst [vmem:[#allocation2 + $0x58] sm:$0xff] 0.0
        %280 = vst [vmem:[#allocation2 + $0x60] sm:$0xff] 0.0
        %281 = vst [vmem:[#allocation2 + $0x68] sm:$0xff] 0.0
        %282 = vst [vmem:[#allocation2 + $0x70] sm:$0xff] 0.0
        %283 = vst [vmem:[#allocation2 + $0x78] sm:$0xff] 0.0
        %284 = vst [vmem:[#allocation2 + $0x80] sm:$0xff] 0.0
        %285 = vst [vmem:[#allocation2 + $0x88] sm:$0xff] 0.0
        %286 = vst [vmem:[#allocation2 + $0x90] sm:$0xff] 0.0
        %287 = vst [vmem:[#allocation2 + $0x98] sm:$0xff] 0.0
        %288 = vst [vmem:[#allocation2 + $0xa0] sm:$0xff] 0.0
        %289 = vst [vmem:[#allocation2 + $0xa8] sm:$0xff] 0.0
        %290 = vst [vmem:[#allocation2 + $0xb0] sm:$0xff] 0.0
        %291 = vst [vmem:[#allocation2 + $0xb8] sm:$0xff] 0.0
        %292 = vst [vmem:[#allocation2 + $0xc0] sm:$0xff] 0.0
        %293 = vst [vmem:[#allocation2 + $0xc8] sm:$0xff] 0.0
        %294 = vst [vmem:[#allocation2 + $0xd0] sm:$0xff] 0.0
        %295 = vst [vmem:[#allocation2 + $0xd8] sm:$0xff] 0.0
        %296 = vst [vmem:[#allocation2 + $0xe0] sm:$0xff] 0.0
        %297 = vst [vmem:[#allocation2 + $0xe8] sm:$0xff] 0.0
        %298 = vst [vmem:[#allocation2 + $0xf0] sm:$0xff] 0.0
        %299 = vst [vmem:[#allocation2 + $0xf8] sm:$0xff] 0.0
      $region40: #{encoder_forward.21} parent=35 // pred_fallthru
        _
      %v300 = vld [vmem:[#allocation2] sm:$0xff]
      %v301 = vld [vmem:[#allocation2 + $0x8] sm:$0xff]
      %v302 = vld [vmem:[#allocation2 + $0x10] sm:$0xff]
      %v303 = vld [vmem:[#allocation2 + $0x18] sm:$0xff]
      %v304 = vld [vmem:[#allocation2 + $0x20] sm:$0xff]
      %v305 = vld [vmem:[#allocation2 + $0x28] sm:$0xff]
      %v306 = vld [vmem:[#allocation2 + $0x30] sm:$0xff]
      %v307 = vld [vmem:[#allocation2 + $0x38] sm:$0xff]
      %v308 = vld [vmem:[#allocation2 + $0x40] sm:$0xff]
      %v309 = vld [vmem:[#allocation2 + $0x48] sm:$0xff]
      %v310 = vld [vmem:[#allocation2 + $0x50] sm:$0xff]
      %v311 = vld [vmem:[#allocation2 + $0x58] sm:$0xff]
      %v312 = vld [vmem:[#allocation2 + $0x60] sm:$0xff]
      %v313 = vld [vmem:[#allocation2 + $0x68] sm:$0xff]
      %v314 = vld [vmem:[#allocation2 + $0x70] sm:$0xff]
      %v315 = vld [vmem:[#allocation2 + $0x78] sm:$0xff]
      %v316 = vld [vmem:[#allocation2 + $0x80] sm:$0xff]
      %v317 = vld [vmem:[#allocation2 + $0x88] sm:$0xff]
      %v318 = vld [vmem:[#allocation2 + $0x90] sm:$0xff]
      %v319 = vld [vmem:[#allocation2 + $0x98] sm:$0xff]
      %v320 = vld [vmem:[#allocation2 + $0xa0] sm:$0xff]
      %v321 = vld [vmem:[#allocation2 + $0xa8] sm:$0xff]
      %v322 = vld [vmem:[#allocation2 + $0xb0] sm:$0xff]
      %v323 = vld [vmem:[#allocation2 + $0xb8] sm:$0xff]
      %v324 = vld [vmem:[#allocation2 + $0xc0] sm:$0xff]
      %v325 = vld [vmem:[#allocation2 + $0xc8] sm:$0xff]
      %v326 = vld [vmem:[#allocation2 + $0xd0] sm:$0xff]
      %v327 = vld [vmem:[#allocation2 + $0xd8] sm:$0xff]
      %v328 = vld [vmem:[#allocation2 + $0xe0] sm:$0xff]
      %v329 = vld [vmem:[#allocation2 + $0xe8] sm:$0xff]
      %v330 = vld [vmem:[#allocation2 + $0xf0] sm:$0xff]
      %v331 = vld [vmem:[#allocation2 + $0xf8] sm:$0xff]
      %v332 = vld [vmem:[%s245] sm:$0xf]
      %v333 = vld [vmem:[%s245 + $0x4] sm:$0xf]
      %v334 = vld [vmem:[%s245 + $0x8] sm:$0xf]
      %v335 = vld [vmem:[%s245 + $0xc] sm:$0xf]
      %v336 = vld [vmem:[%s245 + $0x10] sm:$0xf]
      %v337 = vld [vmem:[%s245 + $0x14] sm:$0xf]
      %v338 = vld [vmem:[%s245 + $0x18] sm:$0xf]
      %v339 = vld [vmem:[%s245 + $0x1c] sm:$0xf]
      %v340 = vld [vmem:[%s245 + $0x20] sm:$0xf]
      %v341 = vld [vmem:[%s245 + $0x24] sm:$0xf]
      %v342 = vld [vmem:[%s245 + $0x28] sm:$0xf]
      %v343 = vld [vmem:[%s245 + $0x2c] sm:$0xf]
      %v344 = vld [vmem:[%s245 + $0x30] sm:$0xf]
      %v345 = vld [vmem:[%s245 + $0x34] sm:$0xf]
      %v346 = vld [vmem:[%s245 + $0x38] sm:$0xf]
      %v347 = vld [vmem:[%s245 + $0x3c] sm:$0xf]
      %v348 = vld [vmem:[%s245 + $0x40] sm:$0xf]
      %v349 = vld [vmem:[%s245 + $0x44] sm:$0xf]
      %v350 = vld [vmem:[%s245 + $0x48] sm:$0xf]
      %v351 = vld [vmem:[%s245 + $0x4c] sm:$0xf]
      %v352 = vld [vmem:[%s245 + $0x50] sm:$0xf]
      %v353 = vld [vmem:[%s245 + $0x54] sm:$0xf]
      %v354 = vld [vmem:[%s245 + $0x58] sm:$0xf]
      %v355 = vld [vmem:[%s245 + $0x5c] sm:$0xf]
      %v356 = vld [vmem:[%s245 + $0x60] sm:$0xf]
      %v357 = vld [vmem:[%s245 + $0x64] sm:$0xf]
      %v358 = vld [vmem:[%s245 + $0x68] sm:$0xf]
      %v359 = vld [vmem:[%s245 + $0x6c] sm:$0xf]
      %v360 = vld [vmem:[%s245 + $0x70] sm:$0xf]
      %v361 = vld [vmem:[%s245 + $0x74] sm:$0xf]
      %v362 = vld [vmem:[%s245 + $0x78] sm:$0xf]
      %v363 = vld [vmem:[%s245 + $0x7c] sm:$0xf]
      %v364 = vld [vmem:[%s250] sm:$0x3]
      %v397 = vunpack.c.l.b16 %v332
      %v398 = vunpack.c.l.b16 %v333
      %v399 = vunpack.c.l.b16 %v334
      %v400 = vunpack.c.l.b16 %v335
      %v401 = vunpack.c.l.b16 %v336
      %v402 = vunpack.c.l.b16 %v337
      %v403 = vunpack.c.l.b16 %v338
      %v404 = vunpack.c.l.b16 %v339
      %v405 = vunpack.c.l.b16 %v340
      %v406 = vunpack.c.l.b16 %v341
      %v407 = vunpack.c.l.b16 %v342
      %v408 = vunpack.c.l.b16 %v343
      %v409 = vunpack.c.l.b16 %v344
      %v410 = vunpack.c.l.b16 %v345
      %v411 = vunpack.c.l.b16 %v346
      %v412 = vunpack.c.l.b16 %v347
      %v413 = vunpack.c.l.b16 %v348
      %v414 = vunpack.c.l.b16 %v349
      %v415 = vunpack.c.l.b16 %v350
      %v416 = vunpack.c.l.b16 %v351
      %v417 = vunpack.c.l.b16 %v352
      %v418 = vunpack.c.l.b16 %v353
      %v419 = vunpack.c.l.b16 %v354
      %v420 = vunpack.c.l.b16 %v355
      %v421 = vunpack.c.l.b16 %v356
      %v422 = vunpack.c.l.b16 %v357
      %v423 = vunpack.c.l.b16 %v358
      %v424 = vunpack.c.l.b16 %v359
      %v425 = vunpack.c.l.b16 %v360
      %v426 = vunpack.c.l.b16 %v361
      %v427 = vunpack.c.l.b16 %v362
      %v428 = vunpack.c.l.b16 %v363
      %v429 = vpack.c.b16 %v398, %v397
      %v430 = vpack.c.b16 %v400, %v399
      %v431 = vpack.c.b16 %v402, %v401
      %v432 = vpack.c.b16 %v404, %v403
      %v433 = vpack.c.b16 %v406, %v405
      %v434 = vpack.c.b16 %v408, %v407
      %v435 = vpack.c.b16 %v410, %v409
      %v436 = vpack.c.b16 %v412, %v411
      %v437 = vpack.c.b16 %v414, %v413
      %v438 = vpack.c.b16 %v416, %v415
      %v439 = vpack.c.b16 %v418, %v417
      %v440 = vpack.c.b16 %v420, %v419
      %v441 = vpack.c.b16 %v422, %v421
      %v442 = vpack.c.b16 %v424, %v423
      %v443 = vpack.c.b16 %v426, %v425
      %v444 = vpack.c.b16 %v428, %v427
      %vm445 = vcmask 31744
      %v447 = vsel %vm445, %v429, 0
      %v450 = vsel %vm445, %v430, 0
      %v453 = vsel %vm445, %v431, 0
      %v456 = vsel %vm445, %v432, 0
      %v459 = vsel %vm445, %v433, 0
      %v462 = vsel %vm445, %v434, 0
      %v465 = vsel %vm445, %v435, 0
      %v468 = vsel %vm445, %v436, 0
      %v471 = vsel %vm445, %v437, 0
      %v474 = vsel %vm445, %v438, 0
      %v477 = vsel %vm445, %v439, 0
      %v480 = vsel %vm445, %v440, 0
      %v483 = vsel %vm445, %v441, 0
      %v486 = vsel %vm445, %v442, 0
      %v489 = vsel %vm445, %v443, 0
      %v492 = vsel %vm445, %v444, 0
      %vm494 = vcmask 1041408
      %v496 = vsel %vm494, %v364, 0
      %498 = vmatpush.bf16.msra.mxu0 0
      %499 = vmatpush.bf16.msra.mxu0 0
      %500 = vmatpush.bf16.msra.mxu0 0
      %501 = vmatpush.bf16.msra.mxu0 0
      %502 = vmatpush.bf16.msra.mxu0 0
      %503 = vmatpush.bf16.msra.mxu0 0
      %504 = vmatpush.bf16.msra.mxu0 0
      %505 = vmatpush.bf16.msra.mxu0 %v496
      %506 = vmatmul.bf16.gmra.mxu0 %v447
      %v507 = vpop.f32.mrf.mxu0
      %v508 = vadd.f32 0.0, %v507
      %v509 = vpop.f32.mrf.mxu0
      %v510 = vadd.f32 0.0, %v509
      %511 = vmatmul.bf16.gmra.mxu0 %v450
      %v512 = vpop.f32.mrf.mxu0
      %v513 = vadd.f32 0.0, %v512
      %v514 = vpop.f32.mrf.mxu0
      %v515 = vadd.f32 0.0, %v514
      %516 = vmatmul.bf16.gmra.mxu0 %v453
      %v517 = vpop.f32.mrf.mxu0
      %v518 = vadd.f32 0.0, %v517
      %v519 = vpop.f32.mrf.mxu0
      %v520 = vadd.f32 0.0, %v519
      %521 = vmatmul.bf16.gmra.mxu0 %v456
      %v522 = vpop.f32.mrf.mxu0
      %v523 = vadd.f32 0.0, %v522
      %v524 = vpop.f32.mrf.mxu0
      %v525 = vadd.f32 0.0, %v524
      %526 = vmatmul.bf16.gmra.mxu0 %v459
      %v527 = vpop.f32.mrf.mxu0
      %v528 = vadd.f32 0.0, %v527
      %v529 = vpop.f32.mrf.mxu0
      %v530 = vadd.f32 0.0, %v529
      %531 = vmatmul.bf16.gmra.mxu0 %v462
      %v532 = vpop.f32.mrf.mxu0
      %v533 = vadd.f32 0.0, %v532
      %v534 = vpop.f32.mrf.mxu0
      %v535 = vadd.f32 0.0, %v534
      %536 = vmatmul.bf16.gmra.mxu0 %v465
      %v537 = vpop.f32.mrf.mxu0
      %v538 = vadd.f32 0.0, %v537
      %v539 = vpop.f32.mrf.mxu0
      %v540 = vadd.f32 0.0, %v539
      %541 = vmatmul.bf16.gmra.mxu0 %v468
      %v542 = vpop.f32.mrf.mxu0
      %v543 = vadd.f32 0.0, %v542
      %v544 = vpop.f32.mrf.mxu0
      %v545 = vadd.f32 0.0, %v544
      %546 = vmatmul.bf16.gmra.mxu0 %v471
      %v547 = vpop.f32.mrf.mxu0
      %v548 = vadd.f32 0.0, %v547
      %v549 = vpop.f32.mrf.mxu0
      %v550 = vadd.f32 0.0, %v549
      %551 = vmatmul.bf16.gmra.mxu0 %v474
      %v552 = vpop.f32.mrf.mxu0
      %v553 = vadd.f32 0.0, %v552
      %v554 = vpop.f32.mrf.mxu0
      %v555 = vadd.f32 0.0, %v554
      %556 = vmatmul.bf16.gmra.mxu0 %v477
      %v557 = vpop.f32.mrf.mxu0
      %v558 = vadd.f32 0.0, %v557
      %v559 = vpop.f32.mrf.mxu0
      %v560 = vadd.f32 0.0, %v559
      %561 = vmatmul.bf16.gmra.mxu0 %v480
      %v562 = vpop.f32.mrf.mxu0
      %v563 = vadd.f32 0.0, %v562
      %v564 = vpop.f32.mrf.mxu0
      %v565 = vadd.f32 0.0, %v564
      %566 = vmatmul.bf16.gmra.mxu0 %v483
      %v567 = vpop.f32.mrf.mxu0
      %v568 = vadd.f32 0.0, %v567
      %v569 = vpop.f32.mrf.mxu0
      %v570 = vadd.f32 0.0, %v569
      %571 = vmatmul.bf16.gmra.mxu0 %v486
      %v572 = vpop.f32.mrf.mxu0
      %v573 = vadd.f32 0.0, %v572
      %v574 = vpop.f32.mrf.mxu0
      %v575 = vadd.f32 0.0, %v574
      %576 = vmatmul.bf16.gmra.mxu0 %v489
      %v577 = vpop.f32.mrf.mxu0
      %v578 = vadd.f32 0.0, %v577
      %v579 = vpop.f32.mrf.mxu0
      %v580 = vadd.f32 0.0, %v579
      %581 = vmatmul.bf16.gmra.mxu0 %v492
      %v582 = vpop.f32.mrf.mxu0
      %v583 = vadd.f32 0.0, %v582
      %v584 = vpop.f32.mrf.mxu0
      %v585 = vadd.f32 0.0, %v584
      %586 = vdwg.mxu0
      %v587 = vadd.f32 %v300, %v508
      %v588 = vadd.f32 %v301, %v510
      %v589 = vadd.f32 %v302, %v513
      %v590 = vadd.f32 %v303, %v515
      %v591 = vadd.f32 %v304, %v518
      %v592 = vadd.f32 %v305, %v520
      %v593 = vadd.f32 %v306, %v523
      %v594 = vadd.f32 %v307, %v525
      %v595 = vadd.f32 %v308, %v528
      %v596 = vadd.f32 %v309, %v530
      %v597 = vadd.f32 %v310, %v533
      %v598 = vadd.f32 %v311, %v535
      %v599 = vadd.f32 %v312, %v538
      %v600 = vadd.f32 %v313, %v540
      %v601 = vadd.f32 %v314, %v543
      %v602 = vadd.f32 %v315, %v545
      %v603 = vadd.f32 %v316, %v548
      %v604 = vadd.f32 %v317, %v550
      %v605 = vadd.f32 %v318, %v553
      %v606 = vadd.f32 %v319, %v555
      %v607 = vadd.f32 %v320, %v558
      %v608 = vadd.f32 %v321, %v560
      %v609 = vadd.f32 %v322, %v563
      %v610 = vadd.f32 %v323, %v565
      %v611 = vadd.f32 %v324, %v568
      %v612 = vadd.f32 %v325, %v570
      %v613 = vadd.f32 %v326, %v573
      %v614 = vadd.f32 %v327, %v575
      %v615 = vadd.f32 %v328, %v578
      %v616 = vadd.f32 %v329, %v580
      %v617 = vadd.f32 %v330, %v583
      %v618 = vadd.f32 %v331, %v585
      %619 = vst [vmem:[#allocation2] sm:$0xff] %v587
      %620 = vst [vmem:[#allocation2 + $0x8] sm:$0xff] %v588
      %621 = vst [vmem:[#allocation2 + $0x10] sm:$0xff] %v589
      %622 = vst [vmem:[#allocation2 + $0x18] sm:$0xff] %v590
      %623 = vst [vmem:[#allocation2 + $0x20] sm:$0xff] %v591
      %624 = vst [vmem:[#allocation2 + $0x28] sm:$0xff] %v592
      %625 = vst [vmem:[#allocation2 + $0x30] sm:$0xff] %v593
      %626 = vst [vmem:[#allocation2 + $0x38] sm:$0xff] %v594
      %627 = vst [vmem:[#allocation2 + $0x40] sm:$0xff] %v595
      %628 = vst [vmem:[#allocation2 + $0x48] sm:$0xff] %v596
      %629 = vst [vmem:[#allocation2 + $0x50] sm:$0xff] %v597
      %630 = vst [vmem:[#allocation2 + $0x58] sm:$0xff] %v598
      %631 = vst [vmem:[#allocation2 + $0x60] sm:$0xff] %v599
      %632 = vst [vmem:[#allocation2 + $0x68] sm:$0xff] %v600
      %633 = vst [vmem:[#allocation2 + $0x70] sm:$0xff] %v601
      %634 = vst [vmem:[#allocation2 + $0x78] sm:$0xff] %v602
      %635 = vst [vmem:[#allocation2 + $0x80] sm:$0xff] %v603
      %636 = vst [vmem:[#allocation2 + $0x88] sm:$0xff] %v604
      %637 = vst [vmem:[#allocation2 + $0x90] sm:$0xff] %v605
      %638 = vst [vmem:[#allocation2 + $0x98] sm:$0xff] %v606
      %639 = vst [vmem:[#allocation2 + $0xa0] sm:$0xff] %v607
      %640 = vst [vmem:[#allocation2 + $0xa8] sm:$0xff] %v608
      %641 = vst [vmem:[#allocation2 + $0xb0] sm:$0xff] %v609
      %642 = vst [vmem:[#allocation2 + $0xb8] sm:$0xff] %v610
      %643 = vst [vmem:[#allocation2 + $0xc0] sm:$0xff] %v611
      %644 = vst [vmem:[#allocation2 + $0xc8] sm:$0xff] %v612
      %645 = vst [vmem:[#allocation2 + $0xd0] sm:$0xff] %v613
      %646 = vst [vmem:[#allocation2 + $0xd8] sm:$0xff] %v614
      %647 = vst [vmem:[#allocation2 + $0xe0] sm:$0xff] %v615
      %648 = vst [vmem:[#allocation2 + $0xe8] sm:$0xff] %v616
      %649 = vst [vmem:[#allocation2 + $0xf0] sm:$0xff] %v617
      %650 = vst [vmem:[#allocation2 + $0xf8] sm:$0xff] %v618
      // Predicated region
      $region41: #{encoder_forward.21} parent=35 // pred_check
        %p651 = pneg %p264
      $region42: #{encoder_forward.21} parent=35 // pred_check_branch
        %653 = sbr.rel (%p651) target = $region44
      $region43: #{encoder_forward.21} parent=35 // pred_region
        %v654 = vld [vmem:[#allocation2] sm:$0xff]
        %v655 = vld [vmem:[#allocation2 + $0x8] sm:$0xff]
        %v656 = vld [vmem:[#allocation2 + $0x10] sm:$0xff]
        %v657 = vld [vmem:[#allocation2 + $0x18] sm:$0xff]
        %v658 = vld [vmem:[#allocation2 + $0x20] sm:$0xff]
        %v659 = vld [vmem:[#allocation2 + $0x28] sm:$0xff]
        %v660 = vld [vmem:[#allocation2 + $0x30] sm:$0xff]
        %v661 = vld [vmem:[#allocation2 + $0x38] sm:$0xff]
        %v662 = vld [vmem:[#allocation2 + $0x40] sm:$0xff]
        %v663 = vld [vmem:[#allocation2 + $0x48] sm:$0xff]
        %v664 = vld [vmem:[#allocation2 + $0x50] sm:$0xff]
        %v665 = vld [vmem:[#allocation2 + $0x58] sm:$0xff]
        %v666 = vld [vmem:[#allocation2 + $0x60] sm:$0xff]
        %v667 = vld [vmem:[#allocation2 + $0x68] sm:$0xff]
        %v668 = vld [vmem:[#allocation2 + $0x70] sm:$0xff]
        %v669 = vld [vmem:[#allocation2 + $0x78] sm:$0xff]
        %v670 = vld [vmem:[#allocation2 + $0x80] sm:$0xff]
        %v671 = vld [vmem:[#allocation2 + $0x88] sm:$0xff]
        %v672 = vld [vmem:[#allocation2 + $0x90] sm:$0xff]
        %v673 = vld [vmem:[#allocation2 + $0x98] sm:$0xff]
        %v674 = vld [vmem:[#allocation2 + $0xa0] sm:$0xff]
        %v675 = vld [vmem:[#allocation2 + $0xa8] sm:$0xff]
        %v676 = vld [vmem:[#allocation2 + $0xb0] sm:$0xff]
        %v677 = vld [vmem:[#allocation2 + $0xb8] sm:$0xff]
        %v678 = vld [vmem:[#allocation2 + $0xc0] sm:$0xff]
        %v679 = vld [vmem:[#allocation2 + $0xc8] sm:$0xff]
        %v680 = vld [vmem:[#allocation2 + $0xd0] sm:$0xff]
        %v681 = vld [vmem:[#allocation2 + $0xd8] sm:$0xff]
        %v682 = vld [vmem:[#allocation2 + $0xe0] sm:$0xff]
        %v683 = vld [vmem:[#allocation2 + $0xe8] sm:$0xff]
        %v684 = vld [vmem:[#allocation2 + $0xf0] sm:$0xff]
        %v685 = vld [vmem:[#allocation2 + $0xf8] sm:$0xff]
        %v686 = vld [vmem:[%s255] sm:$0xff]
        %v687 = vld [vmem:[%s255 + $0x8] sm:$0xff]
        %v688 = vld [vmem:[%s255 + $0x10] sm:$0xff]
        %v689 = vld [vmem:[%s255 + $0x18] sm:$0xff]
        %v690 = vld [vmem:[%s255 + $0x20] sm:$0xff]
        %v691 = vld [vmem:[%s255 + $0x28] sm:$0xff]
        %v692 = vld [vmem:[%s255 + $0x30] sm:$0xff]
        %v693 = vld [vmem:[%s255 + $0x38] sm:$0xff]
        %v694 = vld [vmem:[%s255 + $0x40] sm:$0xff]
        %v695 = vld [vmem:[%s255 + $0x48] sm:$0xff]
        %v696 = vld [vmem:[%s255 + $0x50] sm:$0xff]
        %v697 = vld [vmem:[%s255 + $0x58] sm:$0xff]
        %v698 = vld [vmem:[%s255 + $0x60] sm:$0xff]
        %v699 = vld [vmem:[%s255 + $0x68] sm:$0xff]
        %v700 = vld [vmem:[%s255 + $0x70] sm:$0xff]
        %v701 = vld [vmem:[%s255 + $0x78] sm:$0xff]
        %v702 = vld [vmem:[%s255 + $0x80] sm:$0xff]
        %v703 = vld [vmem:[%s255 + $0x88] sm:$0xff]
        %v704 = vld [vmem:[%s255 + $0x90] sm:$0xff]
        %v705 = vld [vmem:[%s255 + $0x98] sm:$0xff]
        %v706 = vld [vmem:[%s255 + $0xa0] sm:$0xff]
        %v707 = vld [vmem:[%s255 + $0xa8] sm:$0xff]
        %v708 = vld [vmem:[%s255 + $0xb0] sm:$0xff]
        %v709 = vld [vmem:[%s255 + $0xb8] sm:$0xff]
        %v710 = vld [vmem:[%s255 + $0xc0] sm:$0xff]
        %v711 = vld [vmem:[%s255 + $0xc8] sm:$0xff]
        %v712 = vld [vmem:[%s255 + $0xd0] sm:$0xff]
        %v713 = vld [vmem:[%s255 + $0xd8] sm:$0xff]
        %v714 = vld [vmem:[%s255 + $0xe0] sm:$0xff]
        %v715 = vld [vmem:[%s255 + $0xe8] sm:$0xff]
        %v716 = vld [vmem:[%s255 + $0xf0] sm:$0xff]
        %v717 = vld [vmem:[%s255 + $0xf8] sm:$0xff]
        %719 = vset.pattern.permute.xlu0 0
        %720 = vperm.xlu0 %719, %v686
        %v721 = vpop.permute.xlu0 %720
        %724 = vset.pattern.permute.xlu0 0
        %725 = vperm.xlu0 %724, %v687
        %v726 = vpop.permute.xlu0 %725
        %729 = vset.pattern.permute.xlu0 0
        %730 = vperm.xlu0 %729, %v688
        %v731 = vpop.permute.xlu0 %730
        %734 = vset.pattern.permute.xlu0 0
        %735 = vperm.xlu0 %734, %v689
        %v736 = vpop.permute.xlu0 %735
        %739 = vset.pattern.permute.xlu0 0
        %740 = vperm.xlu0 %739, %v690
        %v741 = vpop.permute.xlu0 %740
        %744 = vset.pattern.permute.xlu0 0
        %745 = vperm.xlu0 %744, %v691
        %v746 = vpop.permute.xlu0 %745
        %749 = vset.pattern.permute.xlu0 0
        %750 = vperm.xlu0 %749, %v692
        %v751 = vpop.permute.xlu0 %750
        %754 = vset.pattern.permute.xlu0 0
        %755 = vperm.xlu0 %754, %v693
        %v756 = vpop.permute.xlu0 %755
        %759 = vset.pattern.permute.xlu0 0
        %760 = vperm.xlu0 %759, %v694
        %v761 = vpop.permute.xlu0 %760
        %764 = vset.pattern.permute.xlu0 0
        %765 = vperm.xlu0 %764, %v695
        %v766 = vpop.permute.xlu0 %765
        %769 = vset.pattern.permute.xlu0 0
        %770 = vperm.xlu0 %769, %v696
        %v771 = vpop.permute.xlu0 %770
        %774 = vset.pattern.permute.xlu0 0
        %775 = vperm.xlu0 %774, %v697
        %v776 = vpop.permute.xlu0 %775
        %779 = vset.pattern.permute.xlu0 0
        %780 = vperm.xlu0 %779, %v698
        %v781 = vpop.permute.xlu0 %780
        %784 = vset.pattern.permute.xlu0 0
        %785 = vperm.xlu0 %784, %v699
        %v786 = vpop.permute.xlu0 %785
        %789 = vset.pattern.permute.xlu0 0
        %790 = vperm.xlu0 %789, %v700
        %v791 = vpop.permute.xlu0 %790
        %794 = vset.pattern.permute.xlu0 0
        %795 = vperm.xlu0 %794, %v701
        %v796 = vpop.permute.xlu0 %795
        %799 = vset.pattern.permute.xlu0 0
        %800 = vperm.xlu0 %799, %v702
        %v801 = vpop.permute.xlu0 %800
        %804 = vset.pattern.permute.xlu0 0
        %805 = vperm.xlu0 %804, %v703
        %v806 = vpop.permute.xlu0 %805
        %809 = vset.pattern.permute.xlu0 0
        %810 = vperm.xlu0 %809, %v704
        %v811 = vpop.permute.xlu0 %810
        %814 = vset.pattern.permute.xlu0 0
        %815 = vperm.xlu0 %814, %v705
        %v816 = vpop.permute.xlu0 %815
        %819 = vset.pattern.permute.xlu0 0
        %820 = vperm.xlu0 %819, %v706
        %v821 = vpop.permute.xlu0 %820
        %824 = vset.pattern.permute.xlu0 0
        %825 = vperm.xlu0 %824, %v707
        %v826 = vpop.permute.xlu0 %825
        %829 = vset.pattern.permute.xlu0 0
        %830 = vperm.xlu0 %829, %v708
        %v831 = vpop.permute.xlu0 %830
        %834 = vset.pattern.permute.xlu0 0
        %835 = vperm.xlu0 %834, %v709
        %v836 = vpop.permute.xlu0 %835
        %839 = vset.pattern.permute.xlu0 0
        %840 = vperm.xlu0 %839, %v710
        %v841 = vpop.permute.xlu0 %840
        %844 = vset.pattern.permute.xlu0 0
        %845 = vperm.xlu0 %844, %v711
        %v846 = vpop.permute.xlu0 %845
        %849 = vset.pattern.permute.xlu0 0
        %850 = vperm.xlu0 %849, %v712
        %v851 = vpop.permute.xlu0 %850
        %854 = vset.pattern.permute.xlu0 0
        %855 = vperm.xlu0 %854, %v713
        %v856 = vpop.permute.xlu0 %855
        %859 = vset.pattern.permute.xlu0 0
        %860 = vperm.xlu0 %859, %v714
        %v861 = vpop.permute.xlu0 %860
        %864 = vset.pattern.permute.xlu0 0
        %865 = vperm.xlu0 %864, %v715
        %v866 = vpop.permute.xlu0 %865
        %869 = vset.pattern.permute.xlu0 0
        %870 = vperm.xlu0 %869, %v716
        %v871 = vpop.permute.xlu0 %870
        %874 = vset.pattern.permute.xlu0 0
        %875 = vperm.xlu0 %874, %v717
        %v876 = vpop.permute.xlu0 %875
        %v878 = vmul.f32 %v654, %v721
        %v879 = vmul.f32 %v655, %v726
        %v880 = vmul.f32 %v656, %v731
        %v881 = vmul.f32 %v657, %v736
        %v882 = vmul.f32 %v658, %v741
        %v883 = vmul.f32 %v659, %v746
        %v884 = vmul.f32 %v660, %v751
        %v885 = vmul.f32 %v661, %v756
        %v886 = vmul.f32 %v662, %v761
        %v887 = vmul.f32 %v663, %v766
        %v888 = vmul.f32 %v664, %v771
        %v889 = vmul.f32 %v665, %v776
        %v890 = vmul.f32 %v666, %v781
        %v891 = vmul.f32 %v667, %v786
        %v892 = vmul.f32 %v668, %v791
        %v893 = vmul.f32 %v669, %v796
        %v894 = vmul.f32 %v670, %v801
        %v895 = vmul.f32 %v671, %v806
        %v896 = vmul.f32 %v672, %v811
        %v897 = vmul.f32 %v673, %v816
        %v898 = vmul.f32 %v674, %v821
        %v899 = vmul.f32 %v675, %v826
        %v900 = vmul.f32 %v676, %v831
        %v901 = vmul.f32 %v677, %v836
        %v902 = vmul.f32 %v678, %v841
        %v903 = vmul.f32 %v679, %v846
        %v904 = vmul.f32 %v680, %v851
        %v905 = vmul.f32 %v681, %v856
        %v906 = vmul.f32 %v682, %v861
        %v907 = vmul.f32 %v683, %v866
        %v908 = vmul.f32 %v684, %v871
        %v909 = vmul.f32 %v685, %v876
        %v910 = vld [vmem:[%s2] sm:$0x1]
        %v912 = vperm.slane %v910, 0
        %914 = vset.pattern.permute.xlu0 1
        %915 = vperm.xlu0 %914, %v686
        %v916 = vpop.permute.xlu0 %915
        %918 = vset.pattern.permute.xlu0 1
        %919 = vperm.xlu0 %918, %v687
        %v920 = vpop.permute.xlu0 %919
        %922 = vset.pattern.permute.xlu0 1
        %923 = vperm.xlu0 %922, %v688
        %v924 = vpop.permute.xlu0 %923
        %926 = vset.pattern.permute.xlu0 1
        %927 = vperm.xlu0 %926, %v689
        %v928 = vpop.permute.xlu0 %927
        %930 = vset.pattern.permute.xlu0 1
        %931 = vperm.xlu0 %930, %v690
        %v932 = vpop.permute.xlu0 %931
        %934 = vset.pattern.permute.xlu0 1
        %935 = vperm.xlu0 %934, %v691
        %v936 = vpop.permute.xlu0 %935
        %938 = vset.pattern.permute.xlu0 1
        %939 = vperm.xlu0 %938, %v692
        %v940 = vpop.permute.xlu0 %939
        %942 = vset.pattern.permute.xlu0 1
        %943 = vperm.xlu0 %942, %v693
        %v944 = vpop.permute.xlu0 %943
        %946 = vset.pattern.permute.xlu0 1
        %947 = vperm.xlu0 %946, %v694
        %v948 = vpop.permute.xlu0 %947
        %950 = vset.pattern.permute.xlu0 1
        %951 = vperm.xlu0 %950, %v695
        %v952 = vpop.permute.xlu0 %951
        %954 = vset.pattern.permute.xlu0 1
        %955 = vperm.xlu0 %954, %v696
        %v956 = vpop.permute.xlu0 %955
        %958 = vset.pattern.permute.xlu0 1
        %959 = vperm.xlu0 %958, %v697
        %v960 = vpop.permute.xlu0 %959
        %962 = vset.pattern.permute.xlu0 1
        %963 = vperm.xlu0 %962, %v698
        %v964 = vpop.permute.xlu0 %963
        %966 = vset.pattern.permute.xlu0 1
        %967 = vperm.xlu0 %966, %v699
        %v968 = vpop.permute.xlu0 %967
        %970 = vset.pattern.permute.xlu0 1
        %971 = vperm.xlu0 %970, %v700
        %v972 = vpop.permute.xlu0 %971
        %974 = vset.pattern.permute.xlu0 1
        %975 = vperm.xlu0 %974, %v701
        %v976 = vpop.permute.xlu0 %975
        %978 = vset.pattern.permute.xlu0 1
        %979 = vperm.xlu0 %978, %v702
        %v980 = vpop.permute.xlu0 %979
        %982 = vset.pattern.permute.xlu0 1
        %983 = vperm.xlu0 %982, %v703
        %v984 = vpop.permute.xlu0 %983
        %986 = vset.pattern.permute.xlu0 1
        %987 = vperm.xlu0 %986, %v704
        %v988 = vpop.permute.xlu0 %987
        %990 = vset.pattern.permute.xlu0 1
        %991 = vperm.xlu0 %990, %v705
        %v992 = vpop.permute.xlu0 %991
        %994 = vset.pattern.permute.xlu0 1
        %995 = vperm.xlu0 %994, %v706
        %v996 = vpop.permute.xlu0 %995
        %998 = vset.pattern.permute.xlu0 1
        %999 = vperm.xlu0 %998, %v707
        %v1000 = vpop.permute.xlu0 %999
        %1002 = vset.pattern.permute.xlu0 1
        %1003 = vperm.xlu0 %1002, %v708
        %v1004 = vpop.permute.xlu0 %1003
        %1006 = vset.pattern.permute.xlu0 1
        %1007 = vperm.xlu0 %1006, %v709
        %v1008 = vpop.permute.xlu0 %1007
        %1010 = vset.pattern.permute.xlu0 1
        %1011 = vperm.xlu0 %1010, %v710
        %v1012 = vpop.permute.xlu0 %1011
        %1014 = vset.pattern.permute.xlu0 1
        %1015 = vperm.xlu0 %1014, %v711
        %v1016 = vpop.permute.xlu0 %1015
        %1018 = vset.pattern.permute.xlu0 1
        %1019 = vperm.xlu0 %1018, %v712
        %v1020 = vpop.permute.xlu0 %1019
        %1022 = vset.pattern.permute.xlu0 1
        %1023 = vperm.xlu0 %1022, %v713
        %v1024 = vpop.permute.xlu0 %1023
        %1026 = vset.pattern.permute.xlu0 1
        %1027 = vperm.xlu0 %1026, %v714
        %v1028 = vpop.permute.xlu0 %1027
        %1030 = vset.pattern.permute.xlu0 1
        %1031 = vperm.xlu0 %1030, %v715
        %v1032 = vpop.permute.xlu0 %1031
        %1034 = vset.pattern.permute.xlu0 1
        %1035 = vperm.xlu0 %1034, %v716
        %v1036 = vpop.permute.xlu0 %1035
        %1038 = vset.pattern.permute.xlu0 1
        %1039 = vperm.xlu0 %1038, %v717
        %v1040 = vpop.permute.xlu0 %1039
        %v1042 = vmul.f32 %v912, %v916
        %v1043 = vmul.f32 %v912, %v920
        %v1044 = vmul.f32 %v912, %v924
        %v1045 = vmul.f32 %v912, %v928
        %v1046 = vmul.f32 %v912, %v932
        %v1047 = vmul.f32 %v912, %v936
        %v1048 = vmul.f32 %v912, %v940
        %v1049 = vmul.f32 %v912, %v944
        %v1050 = vmul.f32 %v912, %v948
        %v1051 = vmul.f32 %v912, %v952
        %v1052 = vmul.f32 %v912, %v956
        %v1053 = vmul.f32 %v912, %v960
        %v1054 = vmul.f32 %v912, %v964
        %v1055 = vmul.f32 %v912, %v968
        %v1056 = vmul.f32 %v912, %v972
        %v1057 = vmul.f32 %v912, %v976
        %v1058 = vmul.f32 %v912, %v980
        %v1059 = vmul.f32 %v912, %v984
        %v1060 = vmul.f32 %v912, %v988
        %v1061 = vmul.f32 %v912, %v992
        %v1062 = vmul.f32 %v912, %v996
        %v1063 = vmul.f32 %v912, %v1000
        %v1064 = vmul.f32 %v912, %v1004
        %v1065 = vmul.f32 %v912, %v1008
        %v1066 = vmul.f32 %v912, %v1012
        %v1067 = vmul.f32 %v912, %v1016
        %v1068 = vmul.f32 %v912, %v1020
        %v1069 = vmul.f32 %v912, %v1024
        %v1070 = vmul.f32 %v912, %v1028
        %v1071 = vmul.f32 %v912, %v1032
        %v1072 = vmul.f32 %v912, %v1036
        %v1073 = vmul.f32 %v912, %v1040
        %v1074 = vadd.f32 %v878, %v1042
        %v1075 = vadd.f32 %v879, %v1043
        %v1076 = vadd.f32 %v880, %v1044
        %v1077 = vadd.f32 %v881, %v1045
        %v1078 = vadd.f32 %v882, %v1046
        %v1079 = vadd.f32 %v883, %v1047
        %v1080 = vadd.f32 %v884, %v1048
        %v1081 = vadd.f32 %v885, %v1049
        %v1082 = vadd.f32 %v886, %v1050
        %v1083 = vadd.f32 %v887, %v1051
        %v1084 = vadd.f32 %v888, %v1052
        %v1085 = vadd.f32 %v889, %v1053
        %v1086 = vadd.f32 %v890, %v1054
        %v1087 = vadd.f32 %v891, %v1055
        %v1088 = vadd.f32 %v892, %v1056
        %v1089 = vadd.f32 %v893, %v1057
        %v1090 = vadd.f32 %v894, %v1058
        %v1091 = vadd.f32 %v895, %v1059
        %v1092 = vadd.f32 %v896, %v1060
        %v1093 = vadd.f32 %v897, %v1061
        %v1094 = vadd.f32 %v898, %v1062
        %v1095 = vadd.f32 %v899, %v1063
        %v1096 = vadd.f32 %v900, %v1064
        %v1097 = vadd.f32 %v901, %v1065
        %v1098 = vadd.f32 %v902, %v1066
        %v1099 = vadd.f32 %v903, %v1067
        %v1100 = vadd.f32 %v904, %v1068
        %v1101 = vadd.f32 %v905, %v1069
        %v1102 = vadd.f32 %v906, %v1070
        %v1103 = vadd.f32 %v907, %v1071
        %v1104 = vadd.f32 %v908, %v1072
        %v1105 = vadd.f32 %v909, %v1073
        %v1106 = vmax.f32 %v1074, 0.0
        %v1107 = vmax.f32 %v1075, 0.0
        %v1108 = vmax.f32 %v1076, 0.0
        %v1109 = vmax.f32 %v1077, 0.0
        %v1110 = vmax.f32 %v1078, 0.0
        %v1111 = vmax.f32 %v1079, 0.0
        %v1112 = vmax.f32 %v1080, 0.0
        %v1113 = vmax.f32 %v1081, 0.0
        %v1114 = vmax.f32 %v1082, 0.0
        %v1115 = vmax.f32 %v1083, 0.0
        %v1116 = vmax.f32 %v1084, 0.0
        %v1117 = vmax.f32 %v1085, 0.0
        %v1118 = vmax.f32 %v1086, 0.0
        %v1119 = vmax.f32 %v1087, 0.0
        %v1120 = vmax.f32 %v1088, 0.0
        %v1121 = vmax.f32 %v1089, 0.0
        %v1122 = vmax.f32 %v1090, 0.0
        %v1123 = vmax.f32 %v1091, 0.0
        %v1124 = vmax.f32 %v1092, 0.0
        %v1125 = vmax.f32 %v1093, 0.0
        %v1126 = vmax.f32 %v1094, 0.0
        %v1127 = vmax.f32 %v1095, 0.0
        %v1128 = vmax.f32 %v1096, 0.0
        %v1129 = vmax.f32 %v1097, 0.0
        %v1130 = vmax.f32 %v1098, 0.0
        %v1131 = vmax.f32 %v1099, 0.0
        %v1132 = vmax.f32 %v1100, 0.0
        %v1133 = vmax.f32 %v1101, 0.0
        %v1134 = vmax.f32 %v1102, 0.0
        %v1135 = vmax.f32 %v1103, 0.0
        %v1136 = vmax.f32 %v1104, 0.0
        %v1137 = vmax.f32 %v1105, 0.0
        %1138 = vst [vmem:[%s261] sm:$0xff] %v1106
        %1139 = vst [vmem:[%s261 + $0x8] sm:$0xff] %v1107
        %1140 = vst [vmem:[%s261 + $0x10] sm:$0xff] %v1108
        %1141 = vst [vmem:[%s261 + $0x18] sm:$0xff] %v1109
        %1142 = vst [vmem:[%s261 + $0x20] sm:$0xff] %v1110
        %1143 = vst [vmem:[%s261 + $0x28] sm:$0xff] %v1111
        %1144 = vst [vmem:[%s261 + $0x30] sm:$0xff] %v1112
        %1145 = vst [vmem:[%s261 + $0x38] sm:$0xff] %v1113
        %1146 = vst [vmem:[%s261 + $0x40] sm:$0xff] %v1114
        %1147 = vst [vmem:[%s261 + $0x48] sm:$0xff] %v1115
        %1148 = vst [vmem:[%s261 + $0x50] sm:$0xff] %v1116
        %1149 = vst [vmem:[%s261 + $0x58] sm:$0xff] %v1117
        %1150 = vst [vmem:[%s261 + $0x60] sm:$0xff] %v1118
        %1151 = vst [vmem:[%s261 + $0x68] sm:$0xff] %v1119
        %1152 = vst [vmem:[%s261 + $0x70] sm:$0xff] %v1120
        %1153 = vst [vmem:[%s261 + $0x78] sm:$0xff] %v1121
        %1154 = vst [vmem:[%s261 + $0x80] sm:$0xff] %v1122
        %1155 = vst [vmem:[%s261 + $0x88] sm:$0xff] %v1123
        %1156 = vst [vmem:[%s261 + $0x90] sm:$0xff] %v1124
        %1157 = vst [vmem:[%s261 + $0x98] sm:$0xff] %v1125
        %1158 = vst [vmem:[%s261 + $0xa0] sm:$0xff] %v1126
        %1159 = vst [vmem:[%s261 + $0xa8] sm:$0xff] %v1127
        %1160 = vst [vmem:[%s261 + $0xb0] sm:$0xff] %v1128
        %1161 = vst [vmem:[%s261 + $0xb8] sm:$0xff] %v1129
        %1162 = vst [vmem:[%s261 + $0xc0] sm:$0xff] %v1130
        %1163 = vst [vmem:[%s261 + $0xc8] sm:$0xff] %v1131
        %1164 = vst [vmem:[%s261 + $0xd0] sm:$0xff] %v1132
        %1165 = vst [vmem:[%s261 + $0xd8] sm:$0xff] %v1133
        %1166 = vst [vmem:[%s261 + $0xe0] sm:$0xff] %v1134
        %1167 = vst [vmem:[%s261 + $0xe8] sm:$0xff] %v1135
        %1168 = vst [vmem:[%s261 + $0xf0] sm:$0xff] %v1136
        %1169 = vst [vmem:[%s261 + $0xf8] sm:$0xff] %v1137
      $region44: #{encoder_forward.21} parent=35 // pred_fallthru
        _
      %s1170 = smul.u32 32, %s19
      %p1171 = scmp.lt.s32.totalorder %s1170, 63
      %s1172 = scalar_select %p1171, %s1170, 63
      %s1173 = smul.addr %s1172, 8
      %s1174 = scalar_lea.vmem %s4, %s1173
      // Predicated region
      $region45: #{encoder_forward.21} parent=35 // pred_check
        %p1175 = pneg %p146
      $region46: #{encoder_forward.21} parent=35 // pred_check_branch
        %1177 = sbr.rel (%p1175) target = $region48
      $region47: #{encoder_forward.21} parent=35 // pred_region
        %s1178 = smul.u32 32, %s19
      $region48: #{encoder_forward.21} parent=35 // pred_fallthru
        _
    $region36: #{encoder_forward.21} parent=5 // pred_fallthru
      _
    %p1179 = scmp.le.s32.totalorder 2, %s10
    // Predicated region
    $region49: #{encoder_forward.21} parent=5 // pred_check
      %p1180 = pneg %p1179
    $region50: #{encoder_forward.21} parent=5 // pred_check_branch
      %1182 = sbr.rel (%p1180) target = $region52
    $region51: #{encoder_forward.21} parent=5 // pred_region
      %s1183 = ssub.s32 %s10, 2
      // Predicated region
      $region53: #{encoder_forward.21} parent=51 // pred_check
        %p1184 = pneg %p152
      $region54: #{encoder_forward.21} parent=51 // pred_check_branch
        %1186 = sbr.rel (%p1184) target = $region56
      $region55: #{encoder_forward.21} parent=51 // pred_region
        %s1187 = smul.u32 32, %s21
        %p1188 = scmp.lt.s32.totalorder %s1187, 63
        %s1189 = scalar_select %p1188, %s1187, 63
        %s1190 = smul.addr %s1189, 8
        %s1191 = scalar_lea.vmem %s4, %s1190
      $region56: #{encoder_forward.21} parent=51 // pred_fallthru
        _
    $region52: #{encoder_forward.21} parent=5 // pred_fallthru
      _
  $region6: #{encoder_forward.21} parent=0 // loop_footer
    %s14 = sadd.s32 1, %s10
  $region7: #{encoder_forward.21} parent=0 // loop_footer_branch
    %9 = sbr.rel target = $region3
  $region8: #{encoder_forward.21} parent=0 // loop_exit
    _

// kernel: encoder_forward.22
$region0: #{encoder_forward.22}
  #allocation0 [shape = 'u32[]', space=smem, size = 0x4, offset = 0x4, fixed_abs, tag = 'smem constant byte address 0x4 - core index']
  #allocation1 [shape = 'u32[72,128]{1,0:T(1,128)}', space=vmem, size = 0x9000, scoped, tag = 'internal scratch']
  #allocation2 [shape = 'f32[256,128]{1,0:T(8,128)}', space=vmem, size = 0x20000, scoped, tag = 'scratch operand']
  %s0 = inlined_call_operand.vmem [shape: bf16[512,36], index: 0, kind: input, shape index: {}]
  %s1 = inlined_call_operand.vmem [shape: bf16[36,128], index: 1, kind: input, shape index: {}]
  %s2 = inlined_call_operand.vmem [shape: f32[1,128], index: 2, kind: input, shape index: {}]
  %s3 = inlined_call_operand.vmem [shape: f32[512,2], index: 3, kind: input, shape index: {}]
  %s4 = inlined_call_operand.vmem [shape: f32[512,128], index: 4, kind: output, shape index: {}]
  %s5 = sld [smem:[#allocation0]]
  $region57: #{encoder_forward.22} parent=0
    _
  %s7 = ssub.s32 1, %s5
  %s8 = scalar_select 0, %s7, %s5
  loop: start=0, step=1, limit=4
  $region2: #{encoder_forward.22} parent=0 // loop_pre_header
    _
  $region3: #{encoder_forward.22} parent=0 // loop_header
    %s10 = sphi 0, %s14
    %p11 = scmp.ge.s32.totalorder %s10, 4
    %s17 = sphi 0, %s29
    %s18 = sphi 0, %s25
    %s19 = sphi 0, %s17
    %s20 = sphi 0, %s18
    %s21 = sphi 0, %s19
    %s22 = sphi 0, %s20
    %s34 = sphi 0, %s36
    %s37 = sphi 0, %s34
    %s38 = sphi 0, %s37
    %s54 = sphi 0, %s38
    %s60 = sphi 0, %s62
    %s63 = sphi 0, %s60
    %s64 = sphi 0, %s63
    %s80 = sphi 0, %s64
    %s84 = sphi 0, %s84
    %s86 = sphi 0, %s84
    %s87 = sphi 0, %s86
    %s101 = sphi 0, %s87
    %s107 = sphi 0, %s109
    %s110 = sphi 0, %s107
    %s111 = sphi 0, %s110
    %s127 = sphi 0, %s111
    %s133 = sphi 0, %s135
    %s136 = sphi 0, %s133
    %s137 = sphi 0, %s136
    %s153 = sphi 0, %s137
  $region4: #{encoder_forward.22} parent=0 // loop_header_branch
    %13 = sbr.rel (%p11) target = $region8
  $region5: #{encoder_forward.22} parent=0 // loop_body
    %s15 = ssub.s32 %s10, 1
    %s16 = ssub.s32 %s10, 2
    %s23 = sadd.s32 1, %s18
    %p24 = scmp.ge.s32.totalorder %s23, 1
    %s25 = scalar_select %p24, 0, %s23
    %s26 = sadd.s32 1, %s17
    %s27 = scalar_select %p24, %s26, %s17
    %p28 = scmp.ge.s32.totalorder %s27, 2
    %s29 = scalar_select %p28, 0, %s27
    %s30 = ssub.s32 %s17, %s29
    %s31 = ssub.s32 %s18, %s25
    %s32 = sor.u32 %s30, %s31
    %p33 = scmp.eq.s32.totalorder %s32, 0
    %s35 = sadd.s32 %s34, 1
    %s36 = scalar_select %p33, %s34, %s35
    %p39 = pneg %p33
    %p40 = scmp.eq.s32.totalorder %s10, 1
    %p41 = por %p39, %p40
    %p42 = scmp.ne.s32.totalorder %s34, %s37
    %p43 = scmp.eq.s32.totalorder %s10, 0
    %p44 = por %p42, %p43
    %p45 = scmp.ne.s32.totalorder %s34, %s37
    %p46 = scmp.eq.s32.totalorder %s15, 1
    %p47 = por %p45, %p46
    %p48 = scmp.ne.s32.totalorder %s37, %s38
    %p49 = scmp.eq.s32.totalorder %s15, 0
    %p50 = por %p48, %p49
    %p51 = scmp.ne.s32.totalorder %s37, %s38
    %p52 = scmp.eq.s32.totalorder %s16, 1
    %p53 = por %p51, %p52
    %p55 = scmp.ne.s32.totalorder %s38, %s54
    %p56 = scmp.eq.s32.totalorder %s16, 0
    %p57 = por %p55, %p56
    %s58 = ssub.s32 %s18, %s25
    %p59 = scmp.eq.s32.totalorder %s58, 0
    %s61 = sadd.s32 %s60, 1
    %s62 = scalar_select %p59, %s60, %s61
    %p65 = pneg %p59
    %p66 = scmp.eq.s32.totalorder %s10, 1
    %p67 = por %p65, %p66
    %p68 = scmp.ne.s32.totalorder %s60, %s63
    %p69 = scmp.eq.s32.totalorder %s10, 0
    %p70 = por %p68, %p69
    %p71 = scmp.ne.s32.totalorder %s60, %s63
    %p72 = scmp.eq.s32.totalorder %s15, 1
    %p73 = por %p71, %p72
    %p74 = scmp.ne.s32.totalorder %s63, %s64
    %p75 = scmp.eq.s32.totalorder %s15, 0
    %p76 = por %p74, %p75
    %p77 = scmp.ne.s32.totalorder %s63, %s64
    %p78 = scmp.eq.s32.totalorder %s16, 1
    %p79 = por %p77, %p78
    %p81 = scmp.ne.s32.totalorder %s64, %s80
    %p82 = scmp.eq.s32.totalorder %s16, 0
    %p83 = por %p81, %p82
    %s85 = sadd.s32 %s84, 1
    %p88 = scmp.eq.s32.totalorder %s10, 1
    %p89 = scmp.ne.s32.totalorder %s84, %s86
    %p90 = scmp.eq.s32.totalorder %s10, 0
    %p91 = por %p89, %p90
    %p92 = scmp.ne.s32.totalorder %s84, %s86
    %p93 = scmp.eq.s32.totalorder %s15, 1
    %p94 = por %p92, %p93
    %p95 = scmp.ne.s32.totalorder %s86, %s87
    %p96 = scmp.eq.s32.totalorder %s15, 0
    %p97 = por %p95, %p96
    %p98 = scmp.ne.s32.totalorder %s86, %s87
    %p99 = scmp.eq.s32.totalorder %s16, 1
    %p100 = por %p98, %p99
    %p102 = scmp.ne.s32.totalorder %s87, %s101
    %p103 = scmp.eq.s32.totalorder %s16, 0
    %p104 = por %p102, %p103
    %s105 = ssub.s32 %s17, %s29
    %p106 = scmp.eq.s32.totalorder %s105, 0
    %s108 = sadd.s32 %s107, 1
    %s109 = scalar_select %p106, %s107, %s108
    %p112 = pneg %p106
    %p113 = scmp.eq.s32.totalorder %s10, 1
    %p114 = por %p112, %p113
    %p115 = scmp.ne.s32.totalorder %s107, %s110
    %p116 = scmp.eq.s32.totalorder %s10, 0
    %p117 = por %p115, %p116
    %p118 = scmp.ne.s32.totalorder %s107, %s110
    %p119 = scmp.eq.s32.totalorder %s15, 1
    %p120 = por %p118, %p119
    %p121 = scmp.ne.s32.totalorder %s110, %s111
    %p122 = scmp.eq.s32.totalorder %s15, 0
    %p123 = por %p121, %p122
    %p124 = scmp.ne.s32.totalorder %s110, %s111
    %p125 = scmp.eq.s32.totalorder %s16, 1
    %p126 = por %p124, %p125
    %p128 = scmp.ne.s32.totalorder %s111, %s127
    %p129 = scmp.eq.s32.totalorder %s16, 0
    %p130 = por %p128, %p129
    %s131 = ssub.s32 %s17, %s29
    %p132 = scmp.eq.s32.totalorder %s131, 0
    %s134 = sadd.s32 %s133, 1
    %s135 = scalar_select %p132, %s133, %s134
    %p138 = pneg %p132
    %p139 = scmp.eq.s32.totalorder %s10, 1
    %p140 = por %p138, %p139
    %p141 = scmp.ne.s32.totalorder %s133, %s136
    %p142 = scmp.eq.s32.totalorder %s10, 0
    %p143 = por %p141, %p142
    %p144 = scmp.ne.s32.totalorder %s133, %s136
    %p145 = scmp.eq.s32.totalorder %s15, 1
    %p146 = por %p144, %p145
    %p147 = scmp.ne.s32.totalorder %s136, %s137
    %p148 = scmp.eq.s32.totalorder %s15, 0
    %p149 = por %p147, %p148
    %p150 = scmp.ne.s32.totalorder %s136, %s137
    %p151 = scmp.eq.s32.totalorder %s16, 1
    %p152 = por %p150, %p151
    %p154 = scmp.ne.s32.totalorder %s137, %s153
    %p155 = scmp.eq.s32.totalorder %s16, 0
    %p156 = por %p154, %p155
    %p157 = scmp.le.s32.totalorder 1, %s10
    %p158 = scmp.lt.s32.totalorder %s10, 3
    %p159 = pnand %p157, %p158
    %p160 = pneg %p159
    // Predicated region
    $region9: #{encoder_forward.22} parent=5 // pred_check
      _
    $region10: #{encoder_forward.22} parent=5 // pred_check_branch
      %162 = sbr.rel (%p159) target = $region12
    $region11: #{encoder_forward.22} parent=5 // pred_region
      %s163 = ssub.s32 %s10, 1
      // Predicated region
      $region13: #{encoder_forward.22} parent=11 // pred_check
        %p164 = pneg %p76
      $region14: #{encoder_forward.22} parent=11 // pred_check_branch
        %166 = sbr.rel (%p164) target = $region16
      $region15: #{encoder_forward.22} parent=11 // pred_region
        %s167 = smul.u32 5, %s20
        %p168 = scmp.lt.s32.totalorder %s167, 4
        %s169 = scalar_select %p168, %s167, 4
        %s170 = smul.addr %s169, 4
        %s171 = scalar_lea.vmem %s1, %s170
        %s172 = smul.u32 5, %s20
      $region16: #{encoder_forward.22} parent=11 // pred_fallthru
        _
      // Predicated region
      $region17: #{encoder_forward.22} parent=11 // pred_check
        %p173 = pneg %p97
      $region18: #{encoder_forward.22} parent=11 // pred_check_branch
        %175 = sbr.rel (%p173) target = $region20
      $region19: #{encoder_forward.22} parent=11 // pred_region
        _
      $region20: #{encoder_forward.22} parent=11 // pred_fallthru
        _
    $region12: #{encoder_forward.22} parent=5 // pred_fallthru
      _
    %p176 = scmp.lt.s32.totalorder %s10, 2
    // Predicated region
    $region21: #{encoder_forward.22} parent=5 // pred_check
      %p177 = pneg %p176
    $region22: #{encoder_forward.22} parent=5 // pred_check_branch
      %179 = sbr.rel (%p177) target = $region24
    $region23: #{encoder_forward.22} parent=5 // pred_region
      // Predicated region
      $region25: #{encoder_forward.22} parent=23 // pred_check
        %p180 = pneg %p44
      $region26: #{encoder_forward.22} parent=23 // pred_check_branch
        %182 = sbr.rel (%p180) target = $region28
      $region27: #{encoder_forward.22} parent=23 // pred_region
        %s183 = smul.u32 32, %s17
        %p184 = scmp.lt.s32.totalorder %s183, 63
        %s185 = scalar_select %p184, %s183, 63
        %p186 = scmp.lt.s32.totalorder %s18, 0
        %s187 = scalar_select %p186, %s18, 0
        %s188 = sadd.s32 %s187, %s185
        %s189 = smul.addr %s188, 4
        %s190 = scalar_lea.vmem %s0, %s189
        %s191 = smul.u32 32, %s17
      $region28: #{encoder_forward.22} parent=23 // pred_fallthru
        _
      // Predicated region
      $region29: #{encoder_forward.22} parent=23 // pred_check
        %p192 = pneg %p117
      $region30: #{encoder_forward.22} parent=23 // pred_check_branch
        %194 = sbr.rel (%p192) target = $region32
      $region31: #{encoder_forward.22} parent=23 // pred_region
        %s195 = smul.u32 32, %s17
        %p196 = scmp.lt.s32.totalorder %s195, 63
        %s197 = scalar_select %p196, %s195, 63
        %s198 = smul.addr %s197, 8
        %s199 = scalar_lea.vmem %s3, %s198
        %s200 = smul.u32 32, %s17
      $region32: #{encoder_forward.22} parent=23 // pred_fallthru
        _
    $region24: #{encoder_forward.22} parent=5 // pred_fallthru
      _
    %p201 = scmp.le.s32.totalorder 1, %s10
    %p202 = scmp.lt.s32.totalorder %s10, 3
    %p203 = pnand %p201, %p202
    %p204 = pneg %p203
    // Predicated region
    $region33: #{encoder_forward.22} parent=5 // pred_check
      _
    $region34: #{encoder_forward.22} parent=5 // pred_check_branch
      %206 = sbr.rel (%p203) target = $region36
    $region35: #{encoder_forward.22} parent=5 // pred_region
      %s207 = ssub.s32 %s10, 1
      %s208 = smul.u32 32, %s19
      %p209 = scmp.lt.s32.totalorder %s208, 63
      %s210 = scalar_select %p209, %s208, 63
      %p211 = scmp.lt.s32.totalorder %s20, 0
      %s212 = scalar_select %p211, %s20, 0
      %s213 = sadd.s32 %s212, %s210
      %s214 = smul.addr %s213, 4
      %s215 = scalar_lea.vmem %s0, %s214
      %p216 = pneg %p50
      %p217 = pneg %p47
      %s218 = smul.u32 5, %s20
      %p219 = scmp.lt.s32.totalorder %s218, 4
      %s220 = scalar_select %p219, %s218, 4
      %s221 = smul.addr %s220, 4
      %s222 = scalar_lea.vmem %s1, %s221
      %p223 = pneg %p76
      %p224 = pneg %p73
      %p225 = pneg %p97
      %p226 = pneg %p94
      %s227 = smul.u32 32, %s19
      %p228 = scmp.lt.s32.totalorder %s227, 63
      %s229 = scalar_select %p228, %s227, 63
      %s230 = smul.addr %s229, 8
      %s231 = scalar_lea.vmem %s3, %s230
      %p232 = pneg %p123
      %p233 = pneg %p120
      %p234 = pneg %p149
      %p235 = pneg %p146
      %s236 = smul.u32 32, %s19
      %p237 = scmp.lt.s32.totalorder %s236, 63
      %s238 = scalar_select %p237, %s236, 63
      %s239 = smul.addr %s238, 8
      %s240 = scalar_lea.vmem %s4, %s239
      %s241 = smul.u32 32, %s19
      %p242 = scmp.lt.s32.totalorder %s241, 63
      %s243 = scalar_select %p242, %s241, 63
      %p244 = scmp.lt.s32.totalorder %s20, 0
      %s245 = scalar_select %p244, %s20, 0
      %s246 = sadd.s32 %s245, %s243
      %s247 = smul.addr %s246, 4
      %s248 = scalar_lea.vmem %s0, %s247
      %s249 = smul.u32 32, %s19
      %s250 = smul.u32 5, %s20
      %p251 = scmp.lt.s32.totalorder %s250, 4
      %s252 = scalar_select %p251, %s250, 4
      %s253 = smul.addr %s252, 4
      %s254 = scalar_lea.vmem %s1, %s253
      %s255 = smul.u32 5, %s20
      %s256 = smul.u32 32, %s19
      %p257 = scmp.lt.s32.totalorder %s256, 63
      %s258 = scalar_select %p257, %s256, 63
      %s259 = smul.addr %s258, 8
      %s260 = scalar_lea.vmem %s3, %s259
      %s261 = smul.u32 32, %s19
      %s262 = smul.u32 32, %s19
      %p263 = scmp.lt.s32.totalorder %s262, 63
      %s264 = scalar_select %p263, %s262, 63
      %s265 = smul.addr %s264, 8
      %s266 = scalar_lea.vmem %s4, %s265
      %s267 = smul.u32 32, %s19
      %p269 = scmp.eq.s32.totalorder %s20, 0
      // Predicated region
      $region37: #{encoder_forward.22} parent=35 // pred_check
        %p270 = pneg %p269
      $region38: #{encoder_forward.22} parent=35 // pred_check_branch
        %272 = sbr.rel (%p270) target = $region40
      $region39: #{encoder_forward.22} parent=35 // pred_region
        %273 = vst [vmem:[#allocation2] sm:$0xff] 0.0
        %274 = vst [vmem:[#allocation2 + $0x8] sm:$0xff] 0.0
        %275 = vst [vmem:[#allocation2 + $0x10] sm:$0xff] 0.0
        %276 = vst [vmem:[#allocation2 + $0x18] sm:$0xff] 0.0
        %277 = vst [vmem:[#allocation2 + $0x20] sm:$0xff] 0.0
        %278 = vst [vmem:[#allocation2 + $0x28] sm:$0xff] 0.0
        %279 = vst [vmem:[#allocation2 + $0x30] sm:$0xff] 0.0
        %280 = vst [vmem:[#allocation2 + $0x38] sm:$0xff] 0.0
        %281 = vst [vmem:[#allocation2 + $0x40] sm:$0xff] 0.0
        %282 = vst [vmem:[#allocation2 + $0x48] sm:$0xff] 0.0
        %283 = vst [vmem:[#allocation2 + $0x50] sm:$0xff] 0.0
        %284 = vst [vmem:[#allocation2 + $0x58] sm:$0xff] 0.0
        %285 = vst [vmem:[#allocation2 + $0x60] sm:$0xff] 0.0
        %286 = vst [vmem:[#allocation2 + $0x68] sm:$0xff] 0.0
        %287 = vst [vmem:[#allocation2 + $0x70] sm:$0xff] 0.0
        %288 = vst [vmem:[#allocation2 + $0x78] sm:$0xff] 0.0
        %289 = vst [vmem:[#allocation2 + $0x80] sm:$0xff] 0.0
        %290 = vst [vmem:[#allocation2 + $0x88] sm:$0xff] 0.0
        %291 = vst [vmem:[#allocation2 + $0x90] sm:$0xff] 0.0
        %292 = vst [vmem:[#allocation2 + $0x98] sm:$0xff] 0.0
        %293 = vst [vmem:[#allocation2 + $0xa0] sm:$0xff] 0.0
        %294 = vst [vmem:[#allocation2 + $0xa8] sm:$0xff] 0.0
        %295 = vst [vmem:[#allocation2 + $0xb0] sm:$0xff] 0.0
        %296 = vst [vmem:[#allocation2 + $0xb8] sm:$0xff] 0.0
        %297 = vst [vmem:[#allocation2 + $0xc0] sm:$0xff] 0.0
        %298 = vst [vmem:[#allocation2 + $0xc8] sm:$0xff] 0.0
        %299 = vst [vmem:[#allocation2 + $0xd0] sm:$0xff] 0.0
        %300 = vst [vmem:[#allocation2 + $0xd8] sm:$0xff] 0.0
        %301 = vst [vmem:[#allocation2 + $0xe0] sm:$0xff] 0.0
        %302 = vst [vmem:[#allocation2 + $0xe8] sm:$0xff] 0.0
        %303 = vst [vmem:[#allocation2 + $0xf0] sm:$0xff] 0.0
        %304 = vst [vmem:[#allocation2 + $0xf8] sm:$0xff] 0.0
      $region40: #{encoder_forward.22} parent=35 // pred_fallthru
        _
      %v305 = vld [vmem:[#allocation2] sm:$0xff]
      %v306 = vld [vmem:[#allocation2 + $0x8] sm:$0xff]
      %v307 = vld [vmem:[#allocation2 + $0x10] sm:$0xff]
      %v308 = vld [vmem:[#allocation2 + $0x18] sm:$0xff]
      %v309 = vld [vmem:[#allocation2 + $0x20] sm:$0xff]
      %v310 = vld [vmem:[#allocation2 + $0x28] sm:$0xff]
      %v311 = vld [vmem:[#allocation2 + $0x30] sm:$0xff]
      %v312 = vld [vmem:[#allocation2 + $0x38] sm:$0xff]
      %v313 = vld [vmem:[#allocation2 + $0x40] sm:$0xff]
      %v314 = vld [vmem:[#allocation2 + $0x48] sm:$0xff]
      %v315 = vld [vmem:[#allocation2 + $0x50] sm:$0xff]
      %v316 = vld [vmem:[#allocation2 + $0x58] sm:$0xff]
      %v317 = vld [vmem:[#allocation2 + $0x60] sm:$0xff]
      %v318 = vld [vmem:[#allocation2 + $0x68] sm:$0xff]
      %v319 = vld [vmem:[#allocation2 + $0x70] sm:$0xff]
      %v320 = vld [vmem:[#allocation2 + $0x78] sm:$0xff]
      %v321 = vld [vmem:[#allocation2 + $0x80] sm:$0xff]
      %v322 = vld [vmem:[#allocation2 + $0x88] sm:$0xff]
      %v323 = vld [vmem:[#allocation2 + $0x90] sm:$0xff]
      %v324 = vld [vmem:[#allocation2 + $0x98] sm:$0xff]
      %v325 = vld [vmem:[#allocation2 + $0xa0] sm:$0xff]
      %v326 = vld [vmem:[#allocation2 + $0xa8] sm:$0xff]
      %v327 = vld [vmem:[#allocation2 + $0xb0] sm:$0xff]
      %v328 = vld [vmem:[#allocation2 + $0xb8] sm:$0xff]
      %v329 = vld [vmem:[#allocation2 + $0xc0] sm:$0xff]
      %v330 = vld [vmem:[#allocation2 + $0xc8] sm:$0xff]
      %v331 = vld [vmem:[#allocation2 + $0xd0] sm:$0xff]
      %v332 = vld [vmem:[#allocation2 + $0xd8] sm:$0xff]
      %v333 = vld [vmem:[#allocation2 + $0xe0] sm:$0xff]
      %v334 = vld [vmem:[#allocation2 + $0xe8] sm:$0xff]
      %v335 = vld [vmem:[#allocation2 + $0xf0] sm:$0xff]
      %v336 = vld [vmem:[#allocation2 + $0xf8] sm:$0xff]
      %v337 = vld [vmem:[%s248] sm:$0xf]
      %v338 = vld [vmem:[%s248 + $0x4] sm:$0xf]
      %v339 = vld [vmem:[%s248 + $0x8] sm:$0xf]
      %v340 = vld [vmem:[%s248 + $0xc] sm:$0xf]
      %v341 = vld [vmem:[%s248 + $0x10] sm:$0xf]
      %v342 = vld [vmem:[%s248 + $0x14] sm:$0xf]
      %v343 = vld [vmem:[%s248 + $0x18] sm:$0xf]
      %v344 = vld [vmem:[%s248 + $0x1c] sm:$0xf]
      %v345 = vld [vmem:[%s248 + $0x20] sm:$0xf]
      %v346 = vld [vmem:[%s248 + $0x24] sm:$0xf]
      %v347 = vld [vmem:[%s248 + $0x28] sm:$0xf]
      %v348 = vld [vmem:[%s248 + $0x2c] sm:$0xf]
      %v349 = vld [vmem:[%s248 + $0x30] sm:$0xf]
      %v350 = vld [vmem:[%s248 + $0x34] sm:$0xf]
      %v351 = vld [vmem:[%s248 + $0x38] sm:$0xf]
      %v352 = vld [vmem:[%s248 + $0x3c] sm:$0xf]
      %v353 = vld [vmem:[%s248 + $0x40] sm:$0xf]
      %v354 = vld [vmem:[%s248 + $0x44] sm:$0xf]
      %v355 = vld [vmem:[%s248 + $0x48] sm:$0xf]
      %v356 = vld [vmem:[%s248 + $0x4c] sm:$0xf]
      %v357 = vld [vmem:[%s248 + $0x50] sm:$0xf]
      %v358 = vld [vmem:[%s248 + $0x54] sm:$0xf]
      %v359 = vld [vmem:[%s248 + $0x58] sm:$0xf]
      %v360 = vld [vmem:[%s248 + $0x5c] sm:$0xf]
      %v361 = vld [vmem:[%s248 + $0x60] sm:$0xf]
      %v362 = vld [vmem:[%s248 + $0x64] sm:$0xf]
      %v363 = vld [vmem:[%s248 + $0x68] sm:$0xf]
      %v364 = vld [vmem:[%s248 + $0x6c] sm:$0xf]
      %v365 = vld [vmem:[%s248 + $0x70] sm:$0xf]
      %v366 = vld [vmem:[%s248 + $0x74] sm:$0xf]
      %v367 = vld [vmem:[%s248 + $0x78] sm:$0xf]
      %v368 = vld [vmem:[%s248 + $0x7c] sm:$0xf]
      %v369 = vld [vmem:[%s254] sm:$0xf]
      %v370 = vld [vmem:[%s254 + $0x4] sm:$0xf]
      %v371 = vld [vmem:[%s254 + $0x8] sm:$0xf]
      %v372 = vld [vmem:[%s254 + $0xc] sm:$0xf]
      %v373 = vld [vmem:[%s254 + $0x10] sm:$0x3]
      %v406 = vunpack.c.l.b16 %v337
      %v407 = vunpack.c.l.b16 %v338
      %v408 = vunpack.c.l.b16 %v339
      %v409 = vunpack.c.l.b16 %v340
      %v410 = vunpack.c.l.b16 %v341
      %v411 = vunpack.c.l.b16 %v342
      %v412 = vunpack.c.l.b16 %v343
      %v413 = vunpack.c.l.b16 %v344
      %v414 = vunpack.c.l.b16 %v345
      %v415 = vunpack.c.l.b16 %v346
      %v416 = vunpack.c.l.b16 %v347
      %v417 = vunpack.c.l.b16 %v348
      %v418 = vunpack.c.l.b16 %v349
      %v419 = vunpack.c.l.b16 %v350
      %v420 = vunpack.c.l.b16 %v351
      %v421 = vunpack.c.l.b16 %v352
      %v422 = vunpack.c.l.b16 %v353
      %v423 = vunpack.c.l.b16 %v354
      %v424 = vunpack.c.l.b16 %v355
      %v425 = vunpack.c.l.b16 %v356
      %v426 = vunpack.c.l.b16 %v357
      %v427 = vunpack.c.l.b16 %v358
      %v428 = vunpack.c.l.b16 %v359
      %v429 = vunpack.c.l.b16 %v360
      %v430 = vunpack.c.l.b16 %v361
      %v431 = vunpack.c.l.b16 %v362
      %v432 = vunpack.c.l.b16 %v363
      %v433 = vunpack.c.l.b16 %v364
      %v434 = vunpack.c.l.b16 %v365
      %v435 = vunpack.c.l.b16 %v366
      %v436 = vunpack.c.l.b16 %v367
      %v437 = vunpack.c.l.b16 %v368
      %v438 = vpack.c.b16 %v407, %v406
      %v439 = vpack.c.b16 %v409, %v408
      %v440 = vpack.c.b16 %v411, %v410
      %v441 = vpack.c.b16 %v413, %v412
      %v442 = vpack.c.b16 %v415, %v414
      %v443 = vpack.c.b16 %v417, %v416
      %v444 = vpack.c.b16 %v419, %v418
      %v445 = vpack.c.b16 %v421, %v420
      %v446 = vpack.c.b16 %v423, %v422
      %v447 = vpack.c.b16 %v425, %v424
      %v448 = vpack.c.b16 %v427, %v426
      %v449 = vpack.c.b16 %v429, %v428
      %v450 = vpack.c.b16 %v431, %v430
      %v451 = vpack.c.b16 %v433, %v432
      %v452 = vpack.c.b16 %v435, %v434
      %v453 = vpack.c.b16 %v437, %v436
      %v459 = vunpack.c.l.b16 %v369
      %v460 = vunpack.c.l.b16 %v370
      %v461 = vunpack.c.l.b16 %v371
      %v462 = vunpack.c.l.b16 %v372
      %v463 = vunpack.c.l.b16 %v373
      %v464 = vpack.c.b16 %v460, %v459
      %v465 = vpack.c.b16 %v462, %v461
      %v466 = vpack.c.b16 %v463, %v463
      %vm469 = vcmask 293888
      %v471 = vsel %vm469, %v438, 0
      %v474 = vsel %vm469, %v439, 0
      %v477 = vsel %vm469, %v440, 0
      %v480 = vsel %vm469, %v441, 0
      %v483 = vsel %vm469, %v442, 0
      %v486 = vsel %vm469, %v443, 0
      %v489 = vsel %vm469, %v444, 0
      %v492 = vsel %vm469, %v445, 0
      %v495 = vsel %vm469, %v446, 0
      %v498 = vsel %vm469, %v447, 0
      %v501 = vsel %vm469, %v448, 0
      %v504 = vsel %vm469, %v449, 0
      %v507 = vsel %vm469, %v450, 0
      %v510 = vsel %vm469, %v451, 0
      %v513 = vsel %vm469, %v452, 0
      %v516 = vsel %vm469, %v453, 0
      %vm518 = vcmask 1041408
      %v520 = vsel %vm518, %v466, 0
      %522 = vmatpush.bf16.msra.mxu0 0
      %523 = vmatpush.bf16.msra.mxu0 0
      %524 = vmatpush.bf16.msra.mxu0 0
      %525 = vmatpush.bf16.msra.mxu0 0
      %526 = vmatpush.bf16.msra.mxu0 0
      %527 = vmatpush.bf16.msra.mxu0 %v520
      %528 = vmatpush.bf16.msra.mxu0 %v465
      %529 = vmatpush.bf16.msra.mxu0 %v464
      %530 = vmatmul.bf16.gmra.mxu0 %v471
      %v531 = vpop.f32.mrf.mxu0
      %v532 = vadd.f32 0.0, %v531
      %v533 = vpop.f32.mrf.mxu0
      %v534 = vadd.f32 0.0, %v533
      %535 = vmatmul.bf16.gmra.mxu0 %v474
      %v536 = vpop.f32.mrf.mxu0
      %v537 = vadd.f32 0.0, %v536
      %v538 = vpop.f32.mrf.mxu0
      %v539 = vadd.f32 0.0, %v538
      %540 = vmatmul.bf16.gmra.mxu0 %v477
      %v541 = vpop.f32.mrf.mxu0
      %v542 = vadd.f32 0.0, %v541
      %v543 = vpop.f32.mrf.mxu0
      %v544 = vadd.f32 0.0, %v543
      %545 = vmatmul.bf16.gmra.mxu0 %v480
      %v546 = vpop.f32.mrf.mxu0
      %v547 = vadd.f32 0.0, %v546
      %v548 = vpop.f32.mrf.mxu0
      %v549 = vadd.f32 0.0, %v548
      %550 = vmatmul.bf16.gmra.mxu0 %v483
      %v551 = vpop.f32.mrf.mxu0
      %v552 = vadd.f32 0.0, %v551
      %v553 = vpop.f32.mrf.mxu0
      %v554 = vadd.f32 0.0, %v553
      %555 = vmatmul.bf16.gmra.mxu0 %v486
      %v556 = vpop.f32.mrf.mxu0
      %v557 = vadd.f32 0.0, %v556
      %v558 = vpop.f32.mrf.mxu0
      %v559 = vadd.f32 0.0, %v558
      %560 = vmatmul.bf16.gmra.mxu0 %v489
      %v561 = vpop.f32.mrf.mxu0
      %v562 = vadd.f32 0.0, %v561
      %v563 = vpop.f32.mrf.mxu0
      %v564 = vadd.f32 0.0, %v563
      %565 = vmatmul.bf16.gmra.mxu0 %v492
      %v566 = vpop.f32.mrf.mxu0
      %v567 = vadd.f32 0.0, %v566
      %v568 = vpop.f32.mrf.mxu0
      %v569 = vadd.f32 0.0, %v568
      %570 = vmatmul.bf16.gmra.mxu0 %v495
      %v571 = vpop.f32.mrf.mxu0
      %v572 = vadd.f32 0.0, %v571
      %v573 = vpop.f32.mrf.mxu0
      %v574 = vadd.f32 0.0, %v573
      %575 = vmatmul.bf16.gmra.mxu0 %v498
      %v576 = vpop.f32.mrf.mxu0
      %v577 = vadd.f32 0.0, %v576
      %v578 = vpop.f32.mrf.mxu0
      %v579 = vadd.f32 0.0, %v578
      %580 = vmatmul.bf16.gmra.mxu0 %v501
      %v581 = vpop.f32.mrf.mxu0
      %v582 = vadd.f32 0.0, %v581
      %v583 = vpop.f32.mrf.mxu0
      %v584 = vadd.f32 0.0, %v583
      %585 = vmatmul.bf16.gmra.mxu0 %v504
      %v586 = vpop.f32.mrf.mxu0
      %v587 = vadd.f32 0.0, %v586
      %v588 = vpop.f32.mrf.mxu0
      %v589 = vadd.f32 0.0, %v588
      %590 = vmatmul.bf16.gmra.mxu0 %v507
      %v591 = vpop.f32.mrf.mxu0
      %v592 = vadd.f32 0.0, %v591
      %v593 = vpop.f32.mrf.mxu0
      %v594 = vadd.f32 0.0, %v593
      %595 = vmatmul.bf16.gmra.mxu0 %v510
      %v596 = vpop.f32.mrf.mxu0
      %v597 = vadd.f32 0.0, %v596
      %v598 = vpop.f32.mrf.mxu0
      %v599 = vadd.f32 0.0, %v598
      %600 = vmatmul.bf16.gmra.mxu0 %v513
      %v601 = vpop.f32.mrf.mxu0
      %v602 = vadd.f32 0.0, %v601
      %v603 = vpop.f32.mrf.mxu0
      %v604 = vadd.f32 0.0, %v603
      %605 = vmatmul.bf16.gmra.mxu0 %v516
      %v606 = vpop.f32.mrf.mxu0
      %v607 = vadd.f32 0.0, %v606
      %v608 = vpop.f32.mrf.mxu0
      %v609 = vadd.f32 0.0, %v608
      %610 = vdwg.mxu0
      %v611 = vadd.f32 %v305, %v532
      %v612 = vadd.f32 %v306, %v534
      %v613 = vadd.f32 %v307, %v537
      %v614 = vadd.f32 %v308, %v539
      %v615 = vadd.f32 %v309, %v542
      %v616 = vadd.f32 %v310, %v544
      %v617 = vadd.f32 %v311, %v547
      %v618 = vadd.f32 %v312, %v549
      %v619 = vadd.f32 %v313, %v552
      %v620 = vadd.f32 %v314, %v554
      %v621 = vadd.f32 %v315, %v557
      %v622 = vadd.f32 %v316, %v559
      %v623 = vadd.f32 %v317, %v562
      %v624 = vadd.f32 %v318, %v564
      %v625 = vadd.f32 %v319, %v567
      %v626 = vadd.f32 %v320, %v569
      %v627 = vadd.f32 %v321, %v572
      %v628 = vadd.f32 %v322, %v574
      %v629 = vadd.f32 %v323, %v577
      %v630 = vadd.f32 %v324, %v579
      %v631 = vadd.f32 %v325, %v582
      %v632 = vadd.f32 %v326, %v584
      %v633 = vadd.f32 %v327, %v587
      %v634 = vadd.f32 %v328, %v589
      %v635 = vadd.f32 %v329, %v592
      %v636 = vadd.f32 %v330, %v594
      %v637 = vadd.f32 %v331, %v597
      %v638 = vadd.f32 %v332, %v599
      %v639 = vadd.f32 %v333, %v602
      %v640 = vadd.f32 %v334, %v604
      %v641 = vadd.f32 %v335, %v607
      %v642 = vadd.f32 %v336, %v609
      %643 = vst [vmem:[#allocation2] sm:$0xff] %v611
      %644 = vst [vmem:[#allocation2 + $0x8] sm:$0xff] %v612
      %645 = vst [vmem:[#allocation2 + $0x10] sm:$0xff] %v613
      %646 = vst [vmem:[#allocation2 + $0x18] sm:$0xff] %v614
      %647 = vst [vmem:[#allocation2 + $0x20] sm:$0xff] %v615
      %648 = vst [vmem:[#allocation2 + $0x28] sm:$0xff] %v616
      %649 = vst [vmem:[#allocation2 + $0x30] sm:$0xff] %v617
      %650 = vst [vmem:[#allocation2 + $0x38] sm:$0xff] %v618
      %651 = vst [vmem:[#allocation2 + $0x40] sm:$0xff] %v619
      %652 = vst [vmem:[#allocation2 + $0x48] sm:$0xff] %v620
      %653 = vst [vmem:[#allocation2 + $0x50] sm:$0xff] %v621
      %654 = vst [vmem:[#allocation2 + $0x58] sm:$0xff] %v622
      %655 = vst [vmem:[#allocation2 + $0x60] sm:$0xff] %v623
      %656 = vst [vmem:[#allocation2 + $0x68] sm:$0xff] %v624
      %657 = vst [vmem:[#allocation2 + $0x70] sm:$0xff] %v625
      %658 = vst [vmem:[#allocation2 + $0x78] sm:$0xff] %v626
      %659 = vst [vmem:[#allocation2 + $0x80] sm:$0xff] %v627
      %660 = vst [vmem:[#allocation2 + $0x88] sm:$0xff] %v628
      %661 = vst [vmem:[#allocation2 + $0x90] sm:$0xff] %v629
      %662 = vst [vmem:[#allocation2 + $0x98] sm:$0xff] %v630
      %663 = vst [vmem:[#allocation2 + $0xa0] sm:$0xff] %v631
      %664 = vst [vmem:[#allocation2 + $0xa8] sm:$0xff] %v632
      %665 = vst [vmem:[#allocation2 + $0xb0] sm:$0xff] %v633
      %666 = vst [vmem:[#allocation2 + $0xb8] sm:$0xff] %v634
      %667 = vst [vmem:[#allocation2 + $0xc0] sm:$0xff] %v635
      %668 = vst [vmem:[#allocation2 + $0xc8] sm:$0xff] %v636
      %669 = vst [vmem:[#allocation2 + $0xd0] sm:$0xff] %v637
      %670 = vst [vmem:[#allocation2 + $0xd8] sm:$0xff] %v638
      %671 = vst [vmem:[#allocation2 + $0xe0] sm:$0xff] %v639
      %672 = vst [vmem:[#allocation2 + $0xe8] sm:$0xff] %v640
      %673 = vst [vmem:[#allocation2 + $0xf0] sm:$0xff] %v641
      %674 = vst [vmem:[#allocation2 + $0xf8] sm:$0xff] %v642
      // Predicated region
      $region41: #{encoder_forward.22} parent=35 // pred_check
        %p675 = pneg %p269
      $region42: #{encoder_forward.22} parent=35 // pred_check_branch
        %677 = sbr.rel (%p675) target = $region44
      $region43: #{encoder_forward.22} parent=35 // pred_region
        %v678 = vld [vmem:[#allocation2] sm:$0xff]
        %v679 = vld [vmem:[#allocation2 + $0x8] sm:$0xff]
        %v680 = vld [vmem:[#allocation2 + $0x10] sm:$0xff]
        %v681 = vld [vmem:[#allocation2 + $0x18] sm:$0xff]
        %v682 = vld [vmem:[#allocation2 + $0x20] sm:$0xff]
        %v683 = vld [vmem:[#allocation2 + $0x28] sm:$0xff]
        %v684 = vld [vmem:[#allocation2 + $0x30] sm:$0xff]
        %v685 = vld [vmem:[#allocation2 + $0x38] sm:$0xff]
        %v686 = vld [vmem:[#allocation2 + $0x40] sm:$0xff]
        %v687 = vld [vmem:[#allocation2 + $0x48] sm:$0xff]
        %v688 = vld [vmem:[#allocation2 + $0x50] sm:$0xff]
        %v689 = vld [vmem:[#allocation2 + $0x58] sm:$0xff]
        %v690 = vld [vmem:[#allocation2 + $0x60] sm:$0xff]
        %v691 = vld [vmem:[#allocation2 + $0x68] sm:$0xff]
        %v692 = vld [vmem:[#allocation2 + $0x70] sm:$0xff]
        %v693 = vld [vmem:[#allocation2 + $0x78] sm:$0xff]
        %v694 = vld [vmem:[#allocation2 + $0x80] sm:$0xff]
        %v695 = vld [vmem:[#allocation2 + $0x88] sm:$0xff]
        %v696 = vld [vmem:[#allocation2 + $0x90] sm:$0xff]
        %v697 = vld [vmem:[#allocation2 + $0x98] sm:$0xff]
        %v698 = vld [vmem:[#allocation2 + $0xa0] sm:$0xff]
        %v699 = vld [vmem:[#allocation2 + $0xa8] sm:$0xff]
        %v700 = vld [vmem:[#allocation2 + $0xb0] sm:$0xff]
        %v701 = vld [vmem:[#allocation2 + $0xb8] sm:$0xff]
        %v702 = vld [vmem:[#allocation2 + $0xc0] sm:$0xff]
        %v703 = vld [vmem:[#allocation2 + $0xc8] sm:$0xff]
        %v704 = vld [vmem:[#allocation2 + $0xd0] sm:$0xff]
        %v705 = vld [vmem:[#allocation2 + $0xd8] sm:$0xff]
        %v706 = vld [vmem:[#allocation2 + $0xe0] sm:$0xff]
        %v707 = vld [vmem:[#allocation2 + $0xe8] sm:$0xff]
        %v708 = vld [vmem:[#allocation2 + $0xf0] sm:$0xff]
        %v709 = vld [vmem:[#allocation2 + $0xf8] sm:$0xff]
        %v710 = vld [vmem:[%s260] sm:$0xff]
        %v711 = vld [vmem:[%s260 + $0x8] sm:$0xff]
        %v712 = vld [vmem:[%s260 + $0x10] sm:$0xff]
        %v713 = vld [vmem:[%s260 + $0x18] sm:$0xff]
        %v714 = vld [vmem:[%s260 + $0x20] sm:$0xff]
        %v715 = vld [vmem:[%s260 + $0x28] sm:$0xff]
        %v716 = vld [vmem:[%s260 + $0x30] sm:$0xff]
        %v717 = vld [vmem:[%s260 + $0x38] sm:$0xff]
        %v718 = vld [vmem:[%s260 + $0x40] sm:$0xff]
        %v719 = vld [vmem:[%s260 + $0x48] sm:$0xff]
        %v720 = vld [vmem:[%s260 + $0x50] sm:$0xff]
        %v721 = vld [vmem:[%s260 + $0x58] sm:$0xff]
        %v722 = vld [vmem:[%s260 + $0x60] sm:$0xff]
        %v723 = vld [vmem:[%s260 + $0x68] sm:$0xff]
        %v724 = vld [vmem:[%s260 + $0x70] sm:$0xff]
        %v725 = vld [vmem:[%s260 + $0x78] sm:$0xff]
        %v726 = vld [vmem:[%s260 + $0x80] sm:$0xff]
        %v727 = vld [vmem:[%s260 + $0x88] sm:$0xff]
        %v728 = vld [vmem:[%s260 + $0x90] sm:$0xff]
        %v729 = vld [vmem:[%s260 + $0x98] sm:$0xff]
        %v730 = vld [vmem:[%s260 + $0xa0] sm:$0xff]
        %v731 = vld [vmem:[%s260 + $0xa8] sm:$0xff]
        %v732 = vld [vmem:[%s260 + $0xb0] sm:$0xff]
        %v733 = vld [vmem:[%s260 + $0xb8] sm:$0xff]
        %v734 = vld [vmem:[%s260 + $0xc0] sm:$0xff]
        %v735 = vld [vmem:[%s260 + $0xc8] sm:$0xff]
        %v736 = vld [vmem:[%s260 + $0xd0] sm:$0xff]
        %v737 = vld [vmem:[%s260 + $0xd8] sm:$0xff]
        %v738 = vld [vmem:[%s260 + $0xe0] sm:$0xff]
        %v739 = vld [vmem:[%s260 + $0xe8] sm:$0xff]
        %v740 = vld [vmem:[%s260 + $0xf0] sm:$0xff]
        %v741 = vld [vmem:[%s260 + $0xf8] sm:$0xff]
        %743 = vset.pattern.permute.xlu0 0
        %744 = vperm.xlu0 %743, %v710
        %v745 = vpop.permute.xlu0 %744
        %748 = vset.pattern.permute.xlu0 0
        %749 = vperm.xlu0 %748, %v711
        %v750 = vpop.permute.xlu0 %749
        %753 = vset.pattern.permute.xlu0 0
        %754 = vperm.xlu0 %753, %v712
        %v755 = vpop.permute.xlu0 %754
        %758 = vset.pattern.permute.xlu0 0
        %759 = vperm.xlu0 %758, %v713
        %v760 = vpop.permute.xlu0 %759
        %763 = vset.pattern.permute.xlu0 0
        %764 = vperm.xlu0 %763, %v714
        %v765 = vpop.permute.xlu0 %764
        %768 = vset.pattern.permute.xlu0 0
        %769 = vperm.xlu0 %768, %v715
        %v770 = vpop.permute.xlu0 %769
        %773 = vset.pattern.permute.xlu0 0
        %774 = vperm.xlu0 %773, %v716
        %v775 = vpop.permute.xlu0 %774
        %778 = vset.pattern.permute.xlu0 0
        %779 = vperm.xlu0 %778, %v717
        %v780 = vpop.permute.xlu0 %779
        %783 = vset.pattern.permute.xlu0 0
        %784 = vperm.xlu0 %783, %v718
        %v785 = vpop.permute.xlu0 %784
        %788 = vset.pattern.permute.xlu0 0
        %789 = vperm.xlu0 %788, %v719
        %v790 = vpop.permute.xlu0 %789
        %793 = vset.pattern.permute.xlu0 0
        %794 = vperm.xlu0 %793, %v720
        %v795 = vpop.permute.xlu0 %794
        %798 = vset.pattern.permute.xlu0 0
        %799 = vperm.xlu0 %798, %v721
        %v800 = vpop.permute.xlu0 %799
        %803 = vset.pattern.permute.xlu0 0
        %804 = vperm.xlu0 %803, %v722
        %v805 = vpop.permute.xlu0 %804
        %808 = vset.pattern.permute.xlu0 0
        %809 = vperm.xlu0 %808, %v723
        %v810 = vpop.permute.xlu0 %809
        %813 = vset.pattern.permute.xlu0 0
        %814 = vperm.xlu0 %813, %v724
        %v815 = vpop.permute.xlu0 %814
        %818 = vset.pattern.permute.xlu0 0
        %819 = vperm.xlu0 %818, %v725
        %v820 = vpop.permute.xlu0 %819
        %823 = vset.pattern.permute.xlu0 0
        %824 = vperm.xlu0 %823, %v726
        %v825 = vpop.permute.xlu0 %824
        %828 = vset.pattern.permute.xlu0 0
        %829 = vperm.xlu0 %828, %v727
        %v830 = vpop.permute.xlu0 %829
        %833 = vset.pattern.permute.xlu0 0
        %834 = vperm.xlu0 %833, %v728
        %v835 = vpop.permute.xlu0 %834
        %838 = vset.pattern.permute.xlu0 0
        %839 = vperm.xlu0 %838, %v729
        %v840 = vpop.permute.xlu0 %839
        %843 = vset.pattern.permute.xlu0 0
        %844 = vperm.xlu0 %843, %v730
        %v845 = vpop.permute.xlu0 %844
        %848 = vset.pattern.permute.xlu0 0
        %849 = vperm.xlu0 %848, %v731
        %v850 = vpop.permute.xlu0 %849
        %853 = vset.pattern.permute.xlu0 0
        %854 = vperm.xlu0 %853, %v732
        %v855 = vpop.permute.xlu0 %854
        %858 = vset.pattern.permute.xlu0 0
        %859 = vperm.xlu0 %858, %v733
        %v860 = vpop.permute.xlu0 %859
        %863 = vset.pattern.permute.xlu0 0
        %864 = vperm.xlu0 %863, %v734
        %v865 = vpop.permute.xlu0 %864
        %868 = vset.pattern.permute.xlu0 0
        %869 = vperm.xlu0 %868, %v735
        %v870 = vpop.permute.xlu0 %869
        %873 = vset.pattern.permute.xlu0 0
        %874 = vperm.xlu0 %873, %v736
        %v875 = vpop.permute.xlu0 %874
        %878 = vset.pattern.permute.xlu0 0
        %879 = vperm.xlu0 %878, %v737
        %v880 = vpop.permute.xlu0 %879
        %883 = vset.pattern.permute.xlu0 0
        %884 = vperm.xlu0 %883, %v738
        %v885 = vpop.permute.xlu0 %884
        %888 = vset.pattern.permute.xlu0 0
        %889 = vperm.xlu0 %888, %v739
        %v890 = vpop.permute.xlu0 %889
        %893 = vset.pattern.permute.xlu0 0
        %894 = vperm.xlu0 %893, %v740
        %v895 = vpop.permute.xlu0 %894
        %898 = vset.pattern.permute.xlu0 0
        %899 = vperm.xlu0 %898, %v741
        %v900 = vpop.permute.xlu0 %899
        %v902 = vmul.f32 %v678, %v745
        %v903 = vmul.f32 %v679, %v750
        %v904 = vmul.f32 %v680, %v755
        %v905 = vmul.f32 %v681, %v760
        %v906 = vmul.f32 %v682, %v765
        %v907 = vmul.f32 %v683, %v770
        %v908 = vmul.f32 %v684, %v775
        %v909 = vmul.f32 %v685, %v780
        %v910 = vmul.f32 %v686, %v785
        %v911 = vmul.f32 %v687, %v790
        %v912 = vmul.f32 %v688, %v795
        %v913 = vmul.f32 %v689, %v800
        %v914 = vmul.f32 %v690, %v805
        %v915 = vmul.f32 %v691, %v810
        %v916 = vmul.f32 %v692, %v815
        %v917 = vmul.f32 %v693, %v820
        %v918 = vmul.f32 %v694, %v825
        %v919 = vmul.f32 %v695, %v830
        %v920 = vmul.f32 %v696, %v835
        %v921 = vmul.f32 %v697, %v840
        %v922 = vmul.f32 %v698, %v845
        %v923 = vmul.f32 %v699, %v850
        %v924 = vmul.f32 %v700, %v855
        %v925 = vmul.f32 %v701, %v860
        %v926 = vmul.f32 %v702, %v865
        %v927 = vmul.f32 %v703, %v870
        %v928 = vmul.f32 %v704, %v875
        %v929 = vmul.f32 %v705, %v880
        %v930 = vmul.f32 %v706, %v885
        %v931 = vmul.f32 %v707, %v890
        %v932 = vmul.f32 %v708, %v895
        %v933 = vmul.f32 %v709, %v900
        %v934 = vld [vmem:[%s2] sm:$0x1]
        %v936 = vperm.slane %v934, 0
        %938 = vset.pattern.permute.xlu0 1
        %939 = vperm.xlu0 %938, %v710
        %v940 = vpop.permute.xlu0 %939
        %942 = vset.pattern.permute.xlu0 1
        %943 = vperm.xlu0 %942, %v711
        %v944 = vpop.permute.xlu0 %943
        %946 = vset.pattern.permute.xlu0 1
        %947 = vperm.xlu0 %946, %v712
        %v948 = vpop.permute.xlu0 %947
        %950 = vset.pattern.permute.xlu0 1
        %951 = vperm.xlu0 %950, %v713
        %v952 = vpop.permute.xlu0 %951
        %954 = vset.pattern.permute.xlu0 1
        %955 = vperm.xlu0 %954, %v714
        %v956 = vpop.permute.xlu0 %955
        %958 = vset.pattern.permute.xlu0 1
        %959 = vperm.xlu0 %958, %v715
        %v960 = vpop.permute.xlu0 %959
        %962 = vset.pattern.permute.xlu0 1
        %963 = vperm.xlu0 %962, %v716
        %v964 = vpop.permute.xlu0 %963
        %966 = vset.pattern.permute.xlu0 1
        %967 = vperm.xlu0 %966, %v717
        %v968 = vpop.permute.xlu0 %967
        %970 = vset.pattern.permute.xlu0 1
        %971 = vperm.xlu0 %970, %v718
        %v972 = vpop.permute.xlu0 %971
        %974 = vset.pattern.permute.xlu0 1
        %975 = vperm.xlu0 %974, %v719
        %v976 = vpop.permute.xlu0 %975
        %978 = vset.pattern.permute.xlu0 1
        %979 = vperm.xlu0 %978, %v720
        %v980 = vpop.permute.xlu0 %979
        %982 = vset.pattern.permute.xlu0 1
        %983 = vperm.xlu0 %982, %v721
        %v984 = vpop.permute.xlu0 %983
        %986 = vset.pattern.permute.xlu0 1
        %987 = vperm.xlu0 %986, %v722
        %v988 = vpop.permute.xlu0 %987
        %990 = vset.pattern.permute.xlu0 1
        %991 = vperm.xlu0 %990, %v723
        %v992 = vpop.permute.xlu0 %991
        %994 = vset.pattern.permute.xlu0 1
        %995 = vperm.xlu0 %994, %v724
        %v996 = vpop.permute.xlu0 %995
        %998 = vset.pattern.permute.xlu0 1
        %999 = vperm.xlu0 %998, %v725
        %v1000 = vpop.permute.xlu0 %999
        %1002 = vset.pattern.permute.xlu0 1
        %1003 = vperm.xlu0 %1002, %v726
        %v1004 = vpop.permute.xlu0 %1003
        %1006 = vset.pattern.permute.xlu0 1
        %1007 = vperm.xlu0 %1006, %v727
        %v1008 = vpop.permute.xlu0 %1007
        %1010 = vset.pattern.permute.xlu0 1
        %1011 = vperm.xlu0 %1010, %v728
        %v1012 = vpop.permute.xlu0 %1011
        %1014 = vset.pattern.permute.xlu0 1
        %1015 = vperm.xlu0 %1014, %v729
        %v1016 = vpop.permute.xlu0 %1015
        %1018 = vset.pattern.permute.xlu0 1
        %1019 = vperm.xlu0 %1018, %v730
        %v1020 = vpop.permute.xlu0 %1019
        %1022 = vset.pattern.permute.xlu0 1
        %1023 = vperm.xlu0 %1022, %v731
        %v1024 = vpop.permute.xlu0 %1023
        %1026 = vset.pattern.permute.xlu0 1
        %1027 = vperm.xlu0 %1026, %v732
        %v1028 = vpop.permute.xlu0 %1027
        %1030 = vset.pattern.permute.xlu0 1
        %1031 = vperm.xlu0 %1030, %v733
        %v1032 = vpop.permute.xlu0 %1031
        %1034 = vset.pattern.permute.xlu0 1
        %1035 = vperm.xlu0 %1034, %v734
        %v1036 = vpop.permute.xlu0 %1035
        %1038 = vset.pattern.permute.xlu0 1
        %1039 = vperm.xlu0 %1038, %v735
        %v1040 = vpop.permute.xlu0 %1039
        %1042 = vset.pattern.permute.xlu0 1
        %1043 = vperm.xlu0 %1042, %v736
        %v1044 = vpop.permute.xlu0 %1043
        %1046 = vset.pattern.permute.xlu0 1
        %1047 = vperm.xlu0 %1046, %v737
        %v1048 = vpop.permute.xlu0 %1047
        %1050 = vset.pattern.permute.xlu0 1
        %1051 = vperm.xlu0 %1050, %v738
        %v1052 = vpop.permute.xlu0 %1051
        %1054 = vset.pattern.permute.xlu0 1
        %1055 = vperm.xlu0 %1054, %v739
        %v1056 = vpop.permute.xlu0 %1055
        %1058 = vset.pattern.permute.xlu0 1
        %1059 = vperm.xlu0 %1058, %v740
        %v1060 = vpop.permute.xlu0 %1059
        %1062 = vset.pattern.permute.xlu0 1
        %1063 = vperm.xlu0 %1062, %v741
        %v1064 = vpop.permute.xlu0 %1063
        %v1066 = vmul.f32 %v936, %v940
        %v1067 = vmul.f32 %v936, %v944
        %v1068 = vmul.f32 %v936, %v948
        %v1069 = vmul.f32 %v936, %v952
        %v1070 = vmul.f32 %v936, %v956
        %v1071 = vmul.f32 %v936, %v960
        %v1072 = vmul.f32 %v936, %v964
        %v1073 = vmul.f32 %v936, %v968
        %v1074 = vmul.f32 %v936, %v972
        %v1075 = vmul.f32 %v936, %v976
        %v1076 = vmul.f32 %v936, %v980
        %v1077 = vmul.f32 %v936, %v984
        %v1078 = vmul.f32 %v936, %v988
        %v1079 = vmul.f32 %v936, %v992
        %v1080 = vmul.f32 %v936, %v996
        %v1081 = vmul.f32 %v936, %v1000
        %v1082 = vmul.f32 %v936, %v1004
        %v1083 = vmul.f32 %v936, %v1008
        %v1084 = vmul.f32 %v936, %v1012
        %v1085 = vmul.f32 %v936, %v1016
        %v1086 = vmul.f32 %v936, %v1020
        %v1087 = vmul.f32 %v936, %v1024
        %v1088 = vmul.f32 %v936, %v1028
        %v1089 = vmul.f32 %v936, %v1032
        %v1090 = vmul.f32 %v936, %v1036
        %v1091 = vmul.f32 %v936, %v1040
        %v1092 = vmul.f32 %v936, %v1044
        %v1093 = vmul.f32 %v936, %v1048
        %v1094 = vmul.f32 %v936, %v1052
        %v1095 = vmul.f32 %v936, %v1056
        %v1096 = vmul.f32 %v936, %v1060
        %v1097 = vmul.f32 %v936, %v1064
        %v1098 = vadd.f32 %v902, %v1066
        %v1099 = vadd.f32 %v903, %v1067
        %v1100 = vadd.f32 %v904, %v1068
        %v1101 = vadd.f32 %v905, %v1069
        %v1102 = vadd.f32 %v906, %v1070
        %v1103 = vadd.f32 %v907, %v1071
        %v1104 = vadd.f32 %v908, %v1072
        %v1105 = vadd.f32 %v909, %v1073
        %v1106 = vadd.f32 %v910, %v1074
        %v1107 = vadd.f32 %v911, %v1075
        %v1108 = vadd.f32 %v912, %v1076
        %v1109 = vadd.f32 %v913, %v1077
        %v1110 = vadd.f32 %v914, %v1078
        %v1111 = vadd.f32 %v915, %v1079
        %v1112 = vadd.f32 %v916, %v1080
        %v1113 = vadd.f32 %v917, %v1081
        %v1114 = vadd.f32 %v918, %v1082
        %v1115 = vadd.f32 %v919, %v1083
        %v1116 = vadd.f32 %v920, %v1084
        %v1117 = vadd.f32 %v921, %v1085
        %v1118 = vadd.f32 %v922, %v1086
        %v1119 = vadd.f32 %v923, %v1087
        %v1120 = vadd.f32 %v924, %v1088
        %v1121 = vadd.f32 %v925, %v1089
        %v1122 = vadd.f32 %v926, %v1090
        %v1123 = vadd.f32 %v927, %v1091
        %v1124 = vadd.f32 %v928, %v1092
        %v1125 = vadd.f32 %v929, %v1093
        %v1126 = vadd.f32 %v930, %v1094
        %v1127 = vadd.f32 %v931, %v1095
        %v1128 = vadd.f32 %v932, %v1096
        %v1129 = vadd.f32 %v933, %v1097
        %v1130 = vmax.f32 %v1098, 0.0
        %v1131 = vmax.f32 %v1099, 0.0
        %v1132 = vmax.f32 %v1100, 0.0
        %v1133 = vmax.f32 %v1101, 0.0
        %v1134 = vmax.f32 %v1102, 0.0
        %v1135 = vmax.f32 %v1103, 0.0
        %v1136 = vmax.f32 %v1104, 0.0
        %v1137 = vmax.f32 %v1105, 0.0
        %v1138 = vmax.f32 %v1106, 0.0
        %v1139 = vmax.f32 %v1107, 0.0
        %v1140 = vmax.f32 %v1108, 0.0
        %v1141 = vmax.f32 %v1109, 0.0
        %v1142 = vmax.f32 %v1110, 0.0
        %v1143 = vmax.f32 %v1111, 0.0
        %v1144 = vmax.f32 %v1112, 0.0
        %v1145 = vmax.f32 %v1113, 0.0
        %v1146 = vmax.f32 %v1114, 0.0
        %v1147 = vmax.f32 %v1115, 0.0
        %v1148 = vmax.f32 %v1116, 0.0
        %v1149 = vmax.f32 %v1117, 0.0
        %v1150 = vmax.f32 %v1118, 0.0
        %v1151 = vmax.f32 %v1119, 0.0
        %v1152 = vmax.f32 %v1120, 0.0
        %v1153 = vmax.f32 %v1121, 0.0
        %v1154 = vmax.f32 %v1122, 0.0
        %v1155 = vmax.f32 %v1123, 0.0
        %v1156 = vmax.f32 %v1124, 0.0
        %v1157 = vmax.f32 %v1125, 0.0
        %v1158 = vmax.f32 %v1126, 0.0
        %v1159 = vmax.f32 %v1127, 0.0
        %v1160 = vmax.f32 %v1128, 0.0
        %v1161 = vmax.f32 %v1129, 0.0
        %1162 = vst [vmem:[%s266] sm:$0xff] %v1130
        %1163 = vst [vmem:[%s266 + $0x8] sm:$0xff] %v1131
        %1164 = vst [vmem:[%s266 + $0x10] sm:$0xff] %v1132
        %1165 = vst [vmem:[%s266 + $0x18] sm:$0xff] %v1133
        %1166 = vst [vmem:[%s266 + $0x20] sm:$0xff] %v1134
        %1167 = vst [vmem:[%s266 + $0x28] sm:$0xff] %v1135
        %1168 = vst [vmem:[%s266 + $0x30] sm:$0xff] %v1136
        %1169 = vst [vmem:[%s266 + $0x38] sm:$0xff] %v1137
        %1170 = vst [vmem:[%s266 + $0x40] sm:$0xff] %v1138
        %1171 = vst [vmem:[%s266 + $0x48] sm:$0xff] %v1139
        %1172 = vst [vmem:[%s266 + $0x50] sm:$0xff] %v1140
        %1173 = vst [vmem:[%s266 + $0x58] sm:$0xff] %v1141
        %1174 = vst [vmem:[%s266 + $0x60] sm:$0xff] %v1142
        %1175 = vst [vmem:[%s266 + $0x68] sm:$0xff] %v1143
        %1176 = vst [vmem:[%s266 + $0x70] sm:$0xff] %v1144
        %1177 = vst [vmem:[%s266 + $0x78] sm:$0xff] %v1145
        %1178 = vst [vmem:[%s266 + $0x80] sm:$0xff] %v1146
        %1179 = vst [vmem:[%s266 + $0x88] sm:$0xff] %v1147
        %1180 = vst [vmem:[%s266 + $0x90] sm:$0xff] %v1148
        %1181 = vst [vmem:[%s266 + $0x98] sm:$0xff] %v1149
        %1182 = vst [vmem:[%s266 + $0xa0] sm:$0xff] %v1150
        %1183 = vst [vmem:[%s266 + $0xa8] sm:$0xff] %v1151
        %1184 = vst [vmem:[%s266 + $0xb0] sm:$0xff] %v1152
        %1185 = vst [vmem:[%s266 + $0xb8] sm:$0xff] %v1153
        %1186 = vst [vmem:[%s266 + $0xc0] sm:$0xff] %v1154
        %1187 = vst [vmem:[%s266 + $0xc8] sm:$0xff] %v1155
        %1188 = vst [vmem:[%s266 + $0xd0] sm:$0xff] %v1156
        %1189 = vst [vmem:[%s266 + $0xd8] sm:$0xff] %v1157
        %1190 = vst [vmem:[%s266 + $0xe0] sm:$0xff] %v1158
        %1191 = vst [vmem:[%s266 + $0xe8] sm:$0xff] %v1159
        %1192 = vst [vmem:[%s266 + $0xf0] sm:$0xff] %v1160
        %1193 = vst [vmem:[%s266 + $0xf8] sm:$0xff] %v1161
      $region44: #{encoder_forward.22} parent=35 // pred_fallthru
        _
      %s1194 = smul.u32 32, %s19
      %p1195 = scmp.lt.s32.totalorder %s1194, 63
      %s1196 = scalar_select %p1195, %s1194, 63
      %s1197 = smul.addr %s1196, 8
      %s1198 = scalar_lea.vmem %s4, %s1197
      // Predicated region
      $region45: #{encoder_forward.22} parent=35 // pred_check
        %p1199 = pneg %p146
      $region46: #{encoder_forward.22} parent=35 // pred_check_branch
        %1201 = sbr.rel (%p1199) target = $region48
      $region47: #{encoder_forward.22} parent=35 // pred_region
        %s1202 = smul.u32 32, %s19
      $region48: #{encoder_forward.22} parent=35 // pred_fallthru
        _
    $region36: #{encoder_forward.22} parent=5 // pred_fallthru
      _
    %p1203 = scmp.le.s32.totalorder 2, %s10
    // Predicated region
    $region49: #{encoder_forward.22} parent=5 // pred_check
      %p1204 = pneg %p1203
    $region50: #{encoder_forward.22} parent=5 // pred_check_branch
      %1206 = sbr.rel (%p1204) target = $region52
    $region51: #{encoder_forward.22} parent=5 // pred_region
      %s1207 = ssub.s32 %s10, 2
      // Predicated region
      $region53: #{encoder_forward.22} parent=51 // pred_check
        %p1208 = pneg %p152
      $region54: #{encoder_forward.22} parent=51 // pred_check_branch
        %1210 = sbr.rel (%p1208) target = $region56
      $region55: #{encoder_forward.22} parent=51 // pred_region
        %s1211 = smul.u32 32, %s21
        %p1212 = scmp.lt.s32.totalorder %s1211, 63
        %s1213 = scalar_select %p1212, %s1211, 63
        %s1214 = smul.addr %s1213, 8
        %s1215 = scalar_lea.vmem %s4, %s1214
      $region56: #{encoder_forward.22} parent=51 // pred_fallthru
        _
    $region52: #{encoder_forward.22} parent=5 // pred_fallthru
      _
  $region6: #{encoder_forward.22} parent=0 // loop_footer
    %s14 = sadd.s32 1, %s10
  $region7: #{encoder_forward.22} parent=0 // loop_footer_branch
    %9 = sbr.rel target = $region3
  $region8: #{encoder_forward.22} parent=0 // loop_exit
    _

// kernel: encoder_forward.23
$region0: #{encoder_forward.23}
  #allocation0 [shape = 'u32[]', space=smem, size = 0x4, offset = 0x4, fixed_abs, tag = 'smem constant byte address 0x4 - core index']
  #allocation1 [shape = 'u32[72,128]{1,0:T(1,128)}', space=vmem, size = 0x9000, scoped, tag = 'internal scratch']
  %s0 = inlined_call_operand.vmem [shape: bf16[512,8], index: 0, kind: input, shape index: {}]
  %s1 = inlined_call_operand.vmem [shape: bf16[512,8], index: 1, kind: input, shape index: {}]
  %s2 = inlined_call_operand.vmem [shape: bf16[8,128], index: 2, kind: input, shape index: {}]
  %s3 = inlined_call_operand.vmem [shape: bf16[8,128], index: 3, kind: input, shape index: {}]
  %s4 = inlined_call_operand.vmem [shape: f32[1,128], index: 4, kind: input, shape index: {}]
  %s5 = inlined_call_operand.vmem [shape: f32[512,128], index: 5, kind: output, shape index: {}]
  %s6 = sld [smem:[#allocation0]]
  $region53: #{encoder_forward.23} parent=0
    _
  %s8 = ssub.s32 1, %s6
  %s9 = scalar_select 0, %s8, %s6
  loop: start=0, step=1, limit=4
  $region2: #{encoder_forward.23} parent=0 // loop_pre_header
    _
  $region3: #{encoder_forward.23} parent=0 // loop_header
    %s11 = sphi 0, %s15
    %p12 = scmp.ge.s32.totalorder %s11, 4
    %s21 = sphi 0, %s23
    %s24 = sphi 0, %s21
    %s25 = sphi 0, %s24
    %s41 = sphi 0, %s25
    %s47 = sphi 0, %s49
    %s50 = sphi 0, %s47
    %s51 = sphi 0, %s50
    %s67 = sphi 0, %s51
    %s71 = sphi 0, %s71
    %s73 = sphi 0, %s71
    %s74 = sphi 0, %s73
    %s88 = sphi 0, %s74
    %s92 = sphi 0, %s92
    %s94 = sphi 0, %s92
    %s95 = sphi 0, %s94
    %s109 = sphi 0, %s95
    %s113 = sphi 0, %s113
    %s115 = sphi 0, %s113
    %s116 = sphi 0, %s115
    %s130 = sphi 0, %s116
    %s136 = sphi 0, %s138
    %s139 = sphi 0, %s136
    %s140 = sphi 0, %s139
    %s156 = sphi 0, %s140
  $region4: #{encoder_forward.23} parent=0 // loop_header_branch
    %14 = sbr.rel (%p12) target = $region8
  $region5: #{encoder_forward.23} parent=0 // loop_body
    %s16 = ssub.s32 %s11, 1
    %s17 = ssub.s32 %s11, 2
    %s18 = sadd.s32 %s11, 1
    %s19 = ssub.s32 %s11, %s18
    %p20 = scmp.eq.s32.totalorder %s19, 0
    %s22 = sadd.s32 %s21, 1
    %s23 = scalar_select %p20, %s21, %s22
    %p26 = pneg %p20
    %p27 = scmp.eq.s32.totalorder %s11, 1
    %p28 = por %p26, %p27
    %p29 = scmp.ne.s32.totalorder %s21, %s24
    %p30 = scmp.eq.s32.totalorder %s11, 0
    %p31 = por %p29, %p30
    %p32 = scmp.ne.s32.totalorder %s21, %s24
    %p33 = scmp.eq.s32.totalorder %s16, 1
    %p34 = por %p32, %p33
    %p35 = scmp.ne.s32.totalorder %s24, %s25
    %p36 = scmp.eq.s32.totalorder %s16, 0
    %p37 = por %p35, %p36
    %p38 = scmp.ne.s32.totalorder %s24, %s25
    %p39 = scmp.eq.s32.totalorder %s17, 1
    %p40 = por %p38, %p39
    %p42 = scmp.ne.s32.totalorder %s25, %s41
    %p43 = scmp.eq.s32.totalorder %s17, 0
    %p44 = por %p42, %p43
    %s45 = ssub.s32 %s11, %s18
    %p46 = scmp.eq.s32.totalorder %s45, 0
    %s48 = sadd.s32 %s47, 1
    %s49 = scalar_select %p46, %s47, %s48
    %p52 = pneg %p46
    %p53 = scmp.eq.s32.totalorder %s11, 1
    %p54 = por %p52, %p53
    %p55 = scmp.ne.s32.totalorder %s47, %s50
    %p56 = scmp.eq.s32.totalorder %s11, 0
    %p57 = por %p55, %p56
    %p58 = scmp.ne.s32.totalorder %s47, %s50
    %p59 = scmp.eq.s32.totalorder %s16, 1
    %p60 = por %p58, %p59
    %p61 = scmp.ne.s32.totalorder %s50, %s51
    %p62 = scmp.eq.s32.totalorder %s16, 0
    %p63 = por %p61, %p62
    %p64 = scmp.ne.s32.totalorder %s50, %s51
    %p65 = scmp.eq.s32.totalorder %s17, 1
    %p66 = por %p64, %p65
    %p68 = scmp.ne.s32.totalorder %s51, %s67
    %p69 = scmp.eq.s32.totalorder %s17, 0
    %p70 = por %p68, %p69
    %s72 = sadd.s32 %s71, 1
    %p75 = scmp.eq.s32.totalorder %s11, 1
    %p76 = scmp.ne.s32.totalorder %s71, %s73
    %p77 = scmp.eq.s32.totalorder %s11, 0
    %p78 = por %p76, %p77
    %p79 = scmp.ne.s32.totalorder %s71, %s73
    %p80 = scmp.eq.s32.totalorder %s16, 1
    %p81 = por %p79, %p80
    %p82 = scmp.ne.s32.totalorder %s73, %s74
    %p83 = scmp.eq.s32.totalorder %s16, 0
    %p84 = por %p82, %p83
    %p85 = scmp.ne.s32.totalorder %s73, %s74
    %p86 = scmp.eq.s32.totalorder %s17, 1
    %p87 = por %p85, %p86
    %p89 = scmp.ne.s32.totalorder %s74, %s88
    %p90 = scmp.eq.s32.totalorder %s17, 0
    %p91 = por %p89, %p90
    %s93 = sadd.s32 %s92, 1
    %p96 = scmp.eq.s32.totalorder %s11, 1
    %p97 = scmp.ne.s32.totalorder %s92, %s94
    %p98 = scmp.eq.s32.totalorder %s11, 0
    %p99 = por %p97, %p98
    %p100 = scmp.ne.s32.totalorder %s92, %s94
    %p101 = scmp.eq.s32.totalorder %s16, 1
    %p102 = por %p100, %p101
    %p103 = scmp.ne.s32.totalorder %s94, %s95
    %p104 = scmp.eq.s32.totalorder %s16, 0
    %p105 = por %p103, %p104
    %p106 = scmp.ne.s32.totalorder %s94, %s95
    %p107 = scmp.eq.s32.totalorder %s17, 1
    %p108 = por %p106, %p107
    %p110 = scmp.ne.s32.totalorder %s95, %s109
    %p111 = scmp.eq.s32.totalorder %s17, 0
    %p112 = por %p110, %p111
    %s114 = sadd.s32 %s113, 1
    %p117 = scmp.eq.s32.totalorder %s11, 1
    %p118 = scmp.ne.s32.totalorder %s113, %s115
    %p119 = scmp.eq.s32.totalorder %s11, 0
    %p120 = por %p118, %p119
    %p121 = scmp.ne.s32.totalorder %s113, %s115
    %p122 = scmp.eq.s32.totalorder %s16, 1
    %p123 = por %p121, %p122
    %p124 = scmp.ne.s32.totalorder %s115, %s116
    %p125 = scmp.eq.s32.totalorder %s16, 0
    %p126 = por %p124, %p125
    %p127 = scmp.ne.s32.totalorder %s115, %s116
    %p128 = scmp.eq.s32.totalorder %s17, 1
    %p129 = por %p127, %p128
    %p131 = scmp.ne.s32.totalorder %s116, %s130
    %p132 = scmp.eq.s32.totalorder %s17, 0
    %p133 = por %p131, %p132
    %s134 = ssub.s32 %s11, %s18
    %p135 = scmp.eq.s32.totalorder %s134, 0
    %s137 = sadd.s32 %s136, 1
    %s138 = scalar_select %p135, %s136, %s137
    %p141 = pneg %p135
    %p142 = scmp.eq.s32.totalorder %s11, 1
    %p143 = por %p141, %p142
    %p144 = scmp.ne.s32.totalorder %s136, %s139
    %p145 = scmp.eq.s32.totalorder %s11, 0
    %p146 = por %p144, %p145
    %p147 = scmp.ne.s32.totalorder %s136, %s139
    %p148 = scmp.eq.s32.totalorder %s16, 1
    %p149 = por %p147, %p148
    %p150 = scmp.ne.s32.totalorder %s139, %s140
    %p151 = scmp.eq.s32.totalorder %s16, 0
    %p152 = por %p150, %p151
    %p153 = scmp.ne.s32.totalorder %s139, %s140
    %p154 = scmp.eq.s32.totalorder %s17, 1
    %p155 = por %p153, %p154
    %p157 = scmp.ne.s32.totalorder %s140, %s156
    %p158 = scmp.eq.s32.totalorder %s17, 0
    %p159 = por %p157, %p158
    %p160 = scmp.le.s32.totalorder 1, %s11
    %p161 = scmp.lt.s32.totalorder %s11, 3
    %p162 = pnand %p160, %p161
    %p163 = pneg %p162
    // Predicated region
    $region9: #{encoder_forward.23} parent=5 // pred_check
      _
    $region10: #{encoder_forward.23} parent=5 // pred_check_branch
      %165 = sbr.rel (%p162) target = $region12
    $region11: #{encoder_forward.23} parent=5 // pred_region
      %s166 = ssub.s32 %s11, 1
      // Predicated region
      $region13: #{encoder_forward.23} parent=11 // pred_check
        %p167 = pneg %p84
      $region14: #{encoder_forward.23} parent=11 // pred_check_branch
        %169 = sbr.rel (%p167) target = $region16
      $region15: #{encoder_forward.23} parent=11 // pred_region
        _
      $region16: #{encoder_forward.23} parent=11 // pred_fallthru
        _
      // Predicated region
      $region17: #{encoder_forward.23} parent=11 // pred_check
        %p170 = pneg %p105
      $region18: #{encoder_forward.23} parent=11 // pred_check_branch
        %172 = sbr.rel (%p170) target = $region20
      $region19: #{encoder_forward.23} parent=11 // pred_region
        _
      $region20: #{encoder_forward.23} parent=11 // pred_fallthru
        _
      // Predicated region
      $region21: #{encoder_forward.23} parent=11 // pred_check
        %p173 = pneg %p126
      $region22: #{encoder_forward.23} parent=11 // pred_check_branch
        %175 = sbr.rel (%p173) target = $region24
      $region23: #{encoder_forward.23} parent=11 // pred_region
        _
      $region24: #{encoder_forward.23} parent=11 // pred_fallthru
        _
    $region12: #{encoder_forward.23} parent=5 // pred_fallthru
      _
    %p176 = scmp.lt.s32.totalorder %s11, 2
    // Predicated region
    $region25: #{encoder_forward.23} parent=5 // pred_check
      %p177 = pneg %p176
    $region26: #{encoder_forward.23} parent=5 // pred_check_branch
      %179 = sbr.rel (%p177) target = $region28
    $region27: #{encoder_forward.23} parent=5 // pred_region
      // Predicated region
      $region29: #{encoder_forward.23} parent=27 // pred_check
        %p180 = pneg %p31
      $region30: #{encoder_forward.23} parent=27 // pred_check_branch
        %182 = sbr.rel (%p180) target = $region32
      $region31: #{encoder_forward.23} parent=27 // pred_region
        %s183 = smul.u32 32, %s11
        %p184 = scmp.lt.s32.totalorder %s183, 63
        %s185 = scalar_select %p184, %s183, 63
        %s186 = smul.addr %s185, 4
        %s187 = scalar_lea.vmem %s0, %s186
        %s188 = smul.u32 32, %s11
      $region32: #{encoder_forward.23} parent=27 // pred_fallthru
        _
      // Predicated region
      $region33: #{encoder_forward.23} parent=27 // pred_check
        %p189 = pneg %p57
      $region34: #{encoder_forward.23} parent=27 // pred_check_branch
        %191 = sbr.rel (%p189) target = $region36
      $region35: #{encoder_forward.23} parent=27 // pred_region
        %s192 = smul.u32 32, %s11
        %p193 = scmp.lt.s32.totalorder %s192, 63
        %s194 = scalar_select %p193, %s192, 63
        %s195 = smul.addr %s194, 4
        %s196 = scalar_lea.vmem %s1, %s195
        %s197 = smul.u32 32, %s11
      $region36: #{encoder_forward.23} parent=27 // pred_fallthru
        _
    $region28: #{encoder_forward.23} parent=5 // pred_fallthru
      _
    %p198 = scmp.le.s32.totalorder 1, %s11
    %p199 = scmp.lt.s32.totalorder %s11, 3
    %p200 = pnand %p198, %p199
    %p201 = pneg %p200
    // Predicated region
    $region37: #{encoder_forward.23} parent=5 // pred_check
      _
    $region38: #{encoder_forward.23} parent=5 // pred_check_branch
      %203 = sbr.rel (%p200) target = $region40
    $region39: #{encoder_forward.23} parent=5 // pred_region
      %s204 = ssub.s32 %s11, 1
      %s205 = smul.u32 32, %s16
      %p206 = scmp.lt.s32.totalorder %s205, 63
      %s207 = scalar_select %p206, %s205, 63
      %s208 = smul.addr %s207, 4
      %s209 = scalar_lea.vmem %s0, %s208
      %p210 = pneg %p37
      %p211 = pneg %p34
      %s212 = smul.u32 32, %s16
      %p213 = scmp.lt.s32.totalorder %s212, 63
      %s214 = scalar_select %p213, %s212, 63
      %s215 = smul.addr %s214, 4
      %s216 = scalar_lea.vmem %s1, %s215
      %p217 = pneg %p63
      %p218 = pneg %p60
      %p219 = pneg %p84
      %p220 = pneg %p81
      %p221 = pneg %p105
      %p222 = pneg %p102
      %p223 = pneg %p126
      %p224 = pneg %p123
      %p225 = pneg %p152
      %p226 = pneg %p149
      %s227 = smul.u32 32, %s16
      %p228 = scmp.lt.s32.totalorder %s227, 63
      %s229 = scalar_select %p228, %s227, 63
      %s230 = smul.addr %s229, 8
      %s231 = scalar_lea.vmem %s5, %s230
      %s232 = smul.u32 32, %s16
      %p233 = scmp.lt.s32.totalorder %s232, 63
      %s234 = scalar_select %p233, %s232, 63
      %s235 = smul.addr %s234, 4
      %s236 = scalar_lea.vmem %s0, %s235
      %s237 = smul.u32 32, %s16
      %s238 = smul.u32 32, %s16
      %p239 = scmp.lt.s32.totalorder %s238, 63
      %s240 = scalar_select %p239, %s238, 63
      %s241 = smul.addr %s240, 4
      %s242 = scalar_lea.vmem %s1, %s241
      %s243 = smul.u32 32, %s16
      %s244 = smul.u32 32, %s16
      %p245 = scmp.lt.s32.totalorder %s244, 63
      %s246 = scalar_select %p245, %s244, 63
      %s247 = smul.addr %s246, 8
      %s248 = scalar_lea.vmem %s5, %s247
      %s249 = smul.u32 32, %s16
      %v251 = vld [vmem:[%s236] sm:$0xf]
      %v252 = vld [vmem:[%s236 + $0x4] sm:$0xf]
      %v253 = vld [vmem:[%s236 + $0x8] sm:$0xf]
      %v254 = vld [vmem:[%s236 + $0xc] sm:$0xf]
      %v255 = vld [vmem:[%s236 + $0x10] sm:$0xf]
      %v256 = vld [vmem:[%s236 + $0x14] sm:$0xf]
      %v257 = vld [vmem:[%s236 + $0x18] sm:$0xf]
      %v258 = vld [vmem:[%s236 + $0x1c] sm:$0xf]
      %v259 = vld [vmem:[%s236 + $0x20] sm:$0xf]
      %v260 = vld [vmem:[%s236 + $0x24] sm:$0xf]
      %v261 = vld [vmem:[%s236 + $0x28] sm:$0xf]
      %v262 = vld [vmem:[%s236 + $0x2c] sm:$0xf]
      %v263 = vld [vmem:[%s236 + $0x30] sm:$0xf]
      %v264 = vld [vmem:[%s236 + $0x34] sm:$0xf]
      %v265 = vld [vmem:[%s236 + $0x38] sm:$0xf]
      %v266 = vld [vmem:[%s236 + $0x3c] sm:$0xf]
      %v267 = vld [vmem:[%s236 + $0x40] sm:$0xf]
      %v268 = vld [vmem:[%s236 + $0x44] sm:$0xf]
      %v269 = vld [vmem:[%s236 + $0x48] sm:$0xf]
      %v270 = vld [vmem:[%s236 + $0x4c] sm:$0xf]
      %v271 = vld [vmem:[%s236 + $0x50] sm:$0xf]
      %v272 = vld [vmem:[%s236 + $0x54] sm:$0xf]
      %v273 = vld [vmem:[%s236 + $0x58] sm:$0xf]
      %v274 = vld [vmem:[%s236 + $0x5c] sm:$0xf]
      %v275 = vld [vmem:[%s236 + $0x60] sm:$0xf]
      %v276 = vld [vmem:[%s236 + $0x64] sm:$0xf]
      %v277 = vld [vmem:[%s236 + $0x68] sm:$0xf]
      %v278 = vld [vmem:[%s236 + $0x6c] sm:$0xf]
      %v279 = vld [vmem:[%s236 + $0x70] sm:$0xf]
      %v280 = vld [vmem:[%s236 + $0x74] sm:$0xf]
      %v281 = vld [vmem:[%s236 + $0x78] sm:$0xf]
      %v282 = vld [vmem:[%s236 + $0x7c] sm:$0xf]
      %v283 = vld [vmem:[%s2] sm:$0xf]
      %v284 = vld [vmem:[%s242] sm:$0xf]
      %v285 = vld [vmem:[%s242 + $0x4] sm:$0xf]
      %v286 = vld [vmem:[%s242 + $0x8] sm:$0xf]
      %v287 = vld [vmem:[%s242 + $0xc] sm:$0xf]
      %v288 = vld [vmem:[%s242 + $0x10] sm:$0xf]
      %v289 = vld [vmem:[%s242 + $0x14] sm:$0xf]
      %v290 = vld [vmem:[%s242 + $0x18] sm:$0xf]
      %v291 = vld [vmem:[%s242 + $0x1c] sm:$0xf]
      %v292 = vld [vmem:[%s242 + $0x20] sm:$0xf]
      %v293 = vld [vmem:[%s242 + $0x24] sm:$0xf]
      %v294 = vld [vmem:[%s242 + $0x28] sm:$0xf]
      %v295 = vld [vmem:[%s242 + $0x2c] sm:$0xf]
      %v296 = vld [vmem:[%s242 + $0x30] sm:$0xf]
      %v297 = vld [vmem:[%s242 + $0x34] sm:$0xf]
      %v298 = vld [vmem:[%s242 + $0x38] sm:$0xf]
      %v299 = vld [vmem:[%s242 + $0x3c] sm:$0xf]
      %v300 = vld [vmem:[%s242 + $0x40] sm:$0xf]
      %v301 = vld [vmem:[%s242 + $0x44] sm:$0xf]
      %v302 = vld [vmem:[%s242 + $0x48] sm:$0xf]
      %v303 = vld [vmem:[%s242 + $0x4c] sm:$0xf]
      %v304 = vld [vmem:[%s242 + $0x50] sm:$0xf]
      %v305 = vld [vmem:[%s242 + $0x54] sm:$0xf]
      %v306 = vld [vmem:[%s242 + $0x58] sm:$0xf]
      %v307 = vld [vmem:[%s242 + $0x5c] sm:$0xf]
      %v308 = vld [vmem:[%s242 + $0x60] sm:$0xf]
      %v309 = vld [vmem:[%s242 + $0x64] sm:$0xf]
      %v310 = vld [vmem:[%s242 + $0x68] sm:$0xf]
      %v311 = vld [vmem:[%s242 + $0x6c] sm:$0xf]
      %v312 = vld [vmem:[%s242 + $0x70] sm:$0xf]
      %v313 = vld [vmem:[%s242 + $0x74] sm:$0xf]
      %v314 = vld [vmem:[%s242 + $0x78] sm:$0xf]
      %v315 = vld [vmem:[%s242 + $0x7c] sm:$0xf]
      %v316 = vld [vmem:[%s3] sm:$0xf]
      %v349 = vunpack.c.l.b16 %v284
      %v350 = vunpack.c.l.b16 %v285
      %v351 = vunpack.c.l.b16 %v286
      %v352 = vunpack.c.l.b16 %v287
      %v353 = vunpack.c.l.b16 %v288
      %v354 = vunpack.c.l.b16 %v289
      %v355 = vunpack.c.l.b16 %v290
      %v356 = vunpack.c.l.b16 %v291
      %v357 = vunpack.c.l.b16 %v292
      %v358 = vunpack.c.l.b16 %v293
      %v359 = vunpack.c.l.b16 %v294
      %v360 = vunpack.c.l.b16 %v295
      %v361 = vunpack.c.l.b16 %v296
      %v362 = vunpack.c.l.b16 %v297
      %v363 = vunpack.c.l.b16 %v298
      %v364 = vunpack.c.l.b16 %v299
      %v365 = vunpack.c.l.b16 %v300
      %v366 = vunpack.c.l.b16 %v301
      %v367 = vunpack.c.l.b16 %v302
      %v368 = vunpack.c.l.b16 %v303
      %v369 = vunpack.c.l.b16 %v304
      %v370 = vunpack.c.l.b16 %v305
      %v371 = vunpack.c.l.b16 %v306
      %v372 = vunpack.c.l.b16 %v307
      %v373 = vunpack.c.l.b16 %v308
      %v374 = vunpack.c.l.b16 %v309
      %v375 = vunpack.c.l.b16 %v310
      %v376 = vunpack.c.l.b16 %v311
      %v377 = vunpack.c.l.b16 %v312
      %v378 = vunpack.c.l.b16 %v313
      %v379 = vunpack.c.l.b16 %v314
      %v380 = vunpack.c.l.b16 %v315
      %v381 = vpack.c.b16 %v350, %v349
      %v382 = vpack.c.b16 %v352, %v351
      %v383 = vpack.c.b16 %v354, %v353
      %v384 = vpack.c.b16 %v356, %v355
      %v385 = vpack.c.b16 %v358, %v357
      %v386 = vpack.c.b16 %v360, %v359
      %v387 = vpack.c.b16 %v362, %v361
      %v388 = vpack.c.b16 %v364, %v363
      %v389 = vpack.c.b16 %v366, %v365
      %v390 = vpack.c.b16 %v368, %v367
      %v391 = vpack.c.b16 %v370, %v369
      %v392 = vpack.c.b16 %v372, %v371
      %v393 = vpack.c.b16 %v374, %v373
      %v394 = vpack.c.b16 %v376, %v375
      %v395 = vpack.c.b16 %v378, %v377
      %v396 = vpack.c.b16 %v380, %v379
      %vm397 = vcmask 64512
      %v399 = vsel %vm397, %v381, 0
      %v402 = vsel %vm397, %v382, 0
      %v405 = vsel %vm397, %v383, 0
      %v408 = vsel %vm397, %v384, 0
      %v411 = vsel %vm397, %v385, 0
      %v414 = vsel %vm397, %v386, 0
      %v417 = vsel %vm397, %v387, 0
      %v420 = vsel %vm397, %v388, 0
      %v423 = vsel %vm397, %v389, 0
      %v426 = vsel %vm397, %v390, 0
      %v429 = vsel %vm397, %v391, 0
      %v432 = vsel %vm397, %v392, 0
      %v435 = vsel %vm397, %v393, 0
      %v438 = vsel %vm397, %v394, 0
      %v441 = vsel %vm397, %v395, 0
      %v444 = vsel %vm397, %v396, 0
      %vm446 = vcmask 1043456
      %v448 = vsel %vm446, %v316, 0
      %450 = vmatpush.bf16.msra.mxu0 0
      %451 = vmatpush.bf16.msra.mxu0 0
      %452 = vmatpush.bf16.msra.mxu0 0
      %453 = vmatpush.bf16.msra.mxu0 0
      %454 = vmatpush.bf16.msra.mxu0 0
      %455 = vmatpush.bf16.msra.mxu0 0
      %456 = vmatpush.bf16.msra.mxu0 0
      %457 = vmatpush.bf16.msra.mxu0 %v448
      %458 = vmatmul.bf16.gmra.mxu0 %v399
      %v459 = vpop.f32.mrf.mxu0
      %v460 = vadd.f32 0.0, %v459
      %v461 = vpop.f32.mrf.mxu0
      %v462 = vadd.f32 0.0, %v461
      %463 = vmatmul.bf16.gmra.mxu0 %v402
      %v464 = vpop.f32.mrf.mxu0
      %v465 = vadd.f32 0.0, %v464
      %v466 = vpop.f32.mrf.mxu0
      %v467 = vadd.f32 0.0, %v466
      %468 = vmatmul.bf16.gmra.mxu0 %v405
      %v469 = vpop.f32.mrf.mxu0
      %v470 = vadd.f32 0.0, %v469
      %v471 = vpop.f32.mrf.mxu0
      %v472 = vadd.f32 0.0, %v471
      %473 = vmatmul.bf16.gmra.mxu0 %v408
      %v474 = vpop.f32.mrf.mxu0
      %v475 = vadd.f32 0.0, %v474
      %v476 = vpop.f32.mrf.mxu0
      %v477 = vadd.f32 0.0, %v476
      %478 = vmatmul.bf16.gmra.mxu0 %v411
      %v479 = vpop.f32.mrf.mxu0
      %v480 = vadd.f32 0.0, %v479
      %v481 = vpop.f32.mrf.mxu0
      %v482 = vadd.f32 0.0, %v481
      %483 = vmatmul.bf16.gmra.mxu0 %v414
      %v484 = vpop.f32.mrf.mxu0
      %v485 = vadd.f32 0.0, %v484
      %v486 = vpop.f32.mrf.mxu0
      %v487 = vadd.f32 0.0, %v486
      %488 = vmatmul.bf16.gmra.mxu0 %v417
      %v489 = vpop.f32.mrf.mxu0
      %v490 = vadd.f32 0.0, %v489
      %v491 = vpop.f32.mrf.mxu0
      %v492 = vadd.f32 0.0, %v491
      %493 = vmatmul.bf16.gmra.mxu0 %v420
      %v494 = vpop.f32.mrf.mxu0
      %v495 = vadd.f32 0.0, %v494
      %v496 = vpop.f32.mrf.mxu0
      %v497 = vadd.f32 0.0, %v496
      %498 = vmatmul.bf16.gmra.mxu0 %v423
      %v499 = vpop.f32.mrf.mxu0
      %v500 = vadd.f32 0.0, %v499
      %v501 = vpop.f32.mrf.mxu0
      %v502 = vadd.f32 0.0, %v501
      %503 = vmatmul.bf16.gmra.mxu0 %v426
      %v504 = vpop.f32.mrf.mxu0
      %v505 = vadd.f32 0.0, %v504
      %v506 = vpop.f32.mrf.mxu0
      %v507 = vadd.f32 0.0, %v506
      %508 = vmatmul.bf16.gmra.mxu0 %v429
      %v509 = vpop.f32.mrf.mxu0
      %v510 = vadd.f32 0.0, %v509
      %v511 = vpop.f32.mrf.mxu0
      %v512 = vadd.f32 0.0, %v511
      %513 = vmatmul.bf16.gmra.mxu0 %v432
      %v514 = vpop.f32.mrf.mxu0
      %v515 = vadd.f32 0.0, %v514
      %v516 = vpop.f32.mrf.mxu0
      %v517 = vadd.f32 0.0, %v516
      %518 = vmatmul.bf16.gmra.mxu0 %v435
      %v519 = vpop.f32.mrf.mxu0
      %v520 = vadd.f32 0.0, %v519
      %v521 = vpop.f32.mrf.mxu0
      %v522 = vadd.f32 0.0, %v521
      %523 = vmatmul.bf16.gmra.mxu0 %v438
      %v524 = vpop.f32.mrf.mxu0
      %v525 = vadd.f32 0.0, %v524
      %v526 = vpop.f32.mrf.mxu0
      %v527 = vadd.f32 0.0, %v526
      %528 = vmatmul.bf16.gmra.mxu0 %v441
      %v529 = vpop.f32.mrf.mxu0
      %v530 = vadd.f32 0.0, %v529
      %v531 = vpop.f32.mrf.mxu0
      %v532 = vadd.f32 0.0, %v531
      %533 = vmatmul.bf16.gmra.mxu0 %v444
      %v534 = vpop.f32.mrf.mxu0
      %v535 = vadd.f32 0.0, %v534
      %v536 = vpop.f32.mrf.mxu0
      %v537 = vadd.f32 0.0, %v536
      %538 = vdwg.mxu0
      %v571 = vunpack.c.l.b16 %v251
      %v572 = vunpack.c.l.b16 %v252
      %v573 = vunpack.c.l.b16 %v253
      %v574 = vunpack.c.l.b16 %v254
      %v575 = vunpack.c.l.b16 %v255
      %v576 = vunpack.c.l.b16 %v256
      %v577 = vunpack.c.l.b16 %v257
      %v578 = vunpack.c.l.b16 %v258
      %v579 = vunpack.c.l.b16 %v259
      %v580 = vunpack.c.l.b16 %v260
      %v581 = vunpack.c.l.b16 %v261
      %v582 = vunpack.c.l.b16 %v262
      %v583 = vunpack.c.l.b16 %v263
      %v584 = vunpack.c.l.b16 %v264
      %v585 = vunpack.c.l.b16 %v265
      %v586 = vunpack.c.l.b16 %v266
      %v587 = vunpack.c.l.b16 %v267
      %v588 = vunpack.c.l.b16 %v268
      %v589 = vunpack.c.l.b16 %v269
      %v590 = vunpack.c.l.b16 %v270
      %v591 = vunpack.c.l.b16 %v271
      %v592 = vunpack.c.l.b16 %v272
      %v593 = vunpack.c.l.b16 %v273
      %v594 = vunpack.c.l.b16 %v274
      %v595 = vunpack.c.l.b16 %v275
      %v596 = vunpack.c.l.b16 %v276
      %v597 = vunpack.c.l.b16 %v277
      %v598 = vunpack.c.l.b16 %v278
      %v599 = vunpack.c.l.b16 %v279
      %v600 = vunpack.c.l.b16 %v280
      %v601 = vunpack.c.l.b16 %v281
      %v602 = vunpack.c.l.b16 %v282
      %v603 = vpack.c.b16 %v572, %v571
      %v604 = vpack.c.b16 %v574, %v573
      %v605 = vpack.c.b16 %v576, %v575
      %v606 = vpack.c.b16 %v578, %v577
      %v607 = vpack.c.b16 %v580, %v579
      %v608 = vpack.c.b16 %v582, %v581
      %v609 = vpack.c.b16 %v584, %v583
      %v610 = vpack.c.b16 %v586, %v585
      %v611 = vpack.c.b16 %v588, %v587
      %v612 = vpack.c.b16 %v590, %v589
      %v613 = vpack.c.b16 %v592, %v591
      %v614 = vpack.c.b16 %v594, %v593
      %v615 = vpack.c.b16 %v596, %v595
      %v616 = vpack.c.b16 %v598, %v597
      %v617 = vpack.c.b16 %v600, %v599
      %v618 = vpack.c.b16 %v602, %v601
      %v620 = vsel %vm397, %v603, 0
      %v623 = vsel %vm397, %v604, 0
      %v626 = vsel %vm397, %v605, 0
      %v629 = vsel %vm397, %v606, 0
      %v632 = vsel %vm397, %v607, 0
      %v635 = vsel %vm397, %v608, 0
      %v638 = vsel %vm397, %v609, 0
      %v641 = vsel %vm397, %v610, 0
      %v644 = vsel %vm397, %v611, 0
      %v647 = vsel %vm397, %v612, 0
      %v650 = vsel %vm397, %v613, 0
      %v653 = vsel %vm397, %v614, 0
      %v656 = vsel %vm397, %v615, 0
      %v659 = vsel %vm397, %v616, 0
      %v662 = vsel %vm397, %v617, 0
      %v665 = vsel %vm397, %v618, 0
      %v668 = vsel %vm446, %v283, 0
      %670 = vmatpush.bf16.msra.mxu0 0
      %671 = vmatpush.bf16.msra.mxu0 0
      %672 = vmatpush.bf16.msra.mxu0 0
      %673 = vmatpush.bf16.msra.mxu0 0
      %674 = vmatpush.bf16.msra.mxu0 0
      %675 = vmatpush.bf16.msra.mxu0 0
      %676 = vmatpush.bf16.msra.mxu0 0
      %677 = vmatpush.bf16.msra.mxu0 %v668
      %678 = vmatmul.bf16.gmra.mxu0 %v620
      %v679 = vpop.f32.mrf.mxu0
      %v680 = vadd.f32 %v460, %v679
      %v681 = vpop.f32.mrf.mxu0
      %v682 = vadd.f32 %v462, %v681
      %683 = vmatmul.bf16.gmra.mxu0 %v623
      %v684 = vpop.f32.mrf.mxu0
      %v685 = vadd.f32 %v465, %v684
      %v686 = vpop.f32.mrf.mxu0
      %v687 = vadd.f32 %v467, %v686
      %688 = vmatmul.bf16.gmra.mxu0 %v626
      %v689 = vpop.f32.mrf.mxu0
      %v690 = vadd.f32 %v470, %v689
      %v691 = vpop.f32.mrf.mxu0
      %v692 = vadd.f32 %v472, %v691
      %693 = vmatmul.bf16.gmra.mxu0 %v629
      %v694 = vpop.f32.mrf.mxu0
      %v695 = vadd.f32 %v475, %v694
      %v696 = vpop.f32.mrf.mxu0
      %v697 = vadd.f32 %v477, %v696
      %698 = vmatmul.bf16.gmra.mxu0 %v632
      %v699 = vpop.f32.mrf.mxu0
      %v700 = vadd.f32 %v480, %v699
      %v701 = vpop.f32.mrf.mxu0
      %v702 = vadd.f32 %v482, %v701
      %703 = vmatmul.bf16.gmra.mxu0 %v635
      %v704 = vpop.f32.mrf.mxu0
      %v705 = vadd.f32 %v485, %v704
      %v706 = vpop.f32.mrf.mxu0
      %v707 = vadd.f32 %v487, %v706
      %708 = vmatmul.bf16.gmra.mxu0 %v638
      %v709 = vpop.f32.mrf.mxu0
      %v710 = vadd.f32 %v490, %v709
      %v711 = vpop.f32.mrf.mxu0
      %v712 = vadd.f32 %v492, %v711
      %713 = vmatmul.bf16.gmra.mxu0 %v641
      %v714 = vpop.f32.mrf.mxu0
      %v715 = vadd.f32 %v495, %v714
      %v716 = vpop.f32.mrf.mxu0
      %v717 = vadd.f32 %v497, %v716
      %718 = vmatmul.bf16.gmra.mxu0 %v644
      %v719 = vpop.f32.mrf.mxu0
      %v720 = vadd.f32 %v500, %v719
      %v721 = vpop.f32.mrf.mxu0
      %v722 = vadd.f32 %v502, %v721
      %723 = vmatmul.bf16.gmra.mxu0 %v647
      %v724 = vpop.f32.mrf.mxu0
      %v725 = vadd.f32 %v505, %v724
      %v726 = vpop.f32.mrf.mxu0
      %v727 = vadd.f32 %v507, %v726
      %728 = vmatmul.bf16.gmra.mxu0 %v650
      %v729 = vpop.f32.mrf.mxu0
      %v730 = vadd.f32 %v510, %v729
      %v731 = vpop.f32.mrf.mxu0
      %v732 = vadd.f32 %v512, %v731
      %733 = vmatmul.bf16.gmra.mxu0 %v653
      %v734 = vpop.f32.mrf.mxu0
      %v735 = vadd.f32 %v515, %v734
      %v736 = vpop.f32.mrf.mxu0
      %v737 = vadd.f32 %v517, %v736
      %738 = vmatmul.bf16.gmra.mxu0 %v656
      %v739 = vpop.f32.mrf.mxu0
      %v740 = vadd.f32 %v520, %v739
      %v741 = vpop.f32.mrf.mxu0
      %v742 = vadd.f32 %v522, %v741
      %743 = vmatmul.bf16.gmra.mxu0 %v659
      %v744 = vpop.f32.mrf.mxu0
      %v745 = vadd.f32 %v525, %v744
      %v746 = vpop.f32.mrf.mxu0
      %v747 = vadd.f32 %v527, %v746
      %748 = vmatmul.bf16.gmra.mxu0 %v662
      %v749 = vpop.f32.mrf.mxu0
      %v750 = vadd.f32 %v530, %v749
      %v751 = vpop.f32.mrf.mxu0
      %v752 = vadd.f32 %v532, %v751
      %753 = vmatmul.bf16.gmra.mxu0 %v665
      %v754 = vpop.f32.mrf.mxu0
      %v755 = vadd.f32 %v535, %v754
      %v756 = vpop.f32.mrf.mxu0
      %v757 = vadd.f32 %v537, %v756
      %758 = vdwg.mxu0
      %v759 = vld [vmem:[%s4] sm:$0x1]
      %v761 = vperm.slane %v759, 0
      %v763 = vadd.f32 %v680, %v761
      %v764 = vadd.f32 %v682, %v761
      %v765 = vadd.f32 %v685, %v761
      %v766 = vadd.f32 %v687, %v761
      %v767 = vadd.f32 %v690, %v761
      %v768 = vadd.f32 %v692, %v761
      %v769 = vadd.f32 %v695, %v761
      %v770 = vadd.f32 %v697, %v761
      %v771 = vadd.f32 %v700, %v761
      %v772 = vadd.f32 %v702, %v761
      %v773 = vadd.f32 %v705, %v761
      %v774 = vadd.f32 %v707, %v761
      %v775 = vadd.f32 %v710, %v761
      %v776 = vadd.f32 %v712, %v761
      %v777 = vadd.f32 %v715, %v761
      %v778 = vadd.f32 %v717, %v761
      %v779 = vadd.f32 %v720, %v761
      %v780 = vadd.f32 %v722, %v761
      %v781 = vadd.f32 %v725, %v761
      %v782 = vadd.f32 %v727, %v761
      %v783 = vadd.f32 %v730, %v761
      %v784 = vadd.f32 %v732, %v761
      %v785 = vadd.f32 %v735, %v761
      %v786 = vadd.f32 %v737, %v761
      %v787 = vadd.f32 %v740, %v761
      %v788 = vadd.f32 %v742, %v761
      %v789 = vadd.f32 %v745, %v761
      %v790 = vadd.f32 %v747, %v761
      %v791 = vadd.f32 %v750, %v761
      %v792 = vadd.f32 %v752, %v761
      %v793 = vadd.f32 %v755, %v761
      %v794 = vadd.f32 %v757, %v761
      %v795 = vmax.f32 %v763, 0.0
      %v796 = vmax.f32 %v764, 0.0
      %v797 = vmax.f32 %v765, 0.0
      %v798 = vmax.f32 %v766, 0.0
      %v799 = vmax.f32 %v767, 0.0
      %v800 = vmax.f32 %v768, 0.0
      %v801 = vmax.f32 %v769, 0.0
      %v802 = vmax.f32 %v770, 0.0
      %v803 = vmax.f32 %v771, 0.0
      %v804 = vmax.f32 %v772, 0.0
      %v805 = vmax.f32 %v773, 0.0
      %v806 = vmax.f32 %v774, 0.0
      %v807 = vmax.f32 %v775, 0.0
      %v808 = vmax.f32 %v776, 0.0
      %v809 = vmax.f32 %v777, 0.0
      %v810 = vmax.f32 %v778, 0.0
      %v811 = vmax.f32 %v779, 0.0
      %v812 = vmax.f32 %v780, 0.0
      %v813 = vmax.f32 %v781, 0.0
      %v814 = vmax.f32 %v782, 0.0
      %v815 = vmax.f32 %v783, 0.0
      %v816 = vmax.f32 %v784, 0.0
      %v817 = vmax.f32 %v785, 0.0
      %v818 = vmax.f32 %v786, 0.0
      %v819 = vmax.f32 %v787, 0.0
      %v820 = vmax.f32 %v788, 0.0
      %v821 = vmax.f32 %v789, 0.0
      %v822 = vmax.f32 %v790, 0.0
      %v823 = vmax.f32 %v791, 0.0
      %v824 = vmax.f32 %v792, 0.0
      %v825 = vmax.f32 %v793, 0.0
      %v826 = vmax.f32 %v794, 0.0
      %827 = vst [vmem:[%s248] sm:$0xff] %v795
      %828 = vst [vmem:[%s248 + $0x8] sm:$0xff] %v796
      %829 = vst [vmem:[%s248 + $0x10] sm:$0xff] %v797
      %830 = vst [vmem:[%s248 + $0x18] sm:$0xff] %v798
      %831 = vst [vmem:[%s248 + $0x20] sm:$0xff] %v799
      %832 = vst [vmem:[%s248 + $0x28] sm:$0xff] %v800
      %833 = vst [vmem:[%s248 + $0x30] sm:$0xff] %v801
      %834 = vst [vmem:[%s248 + $0x38] sm:$0xff] %v802
      %835 = vst [vmem:[%s248 + $0x40] sm:$0xff] %v803
      %836 = vst [vmem:[%s248 + $0x48] sm:$0xff] %v804
      %837 = vst [vmem:[%s248 + $0x50] sm:$0xff] %v805
      %838 = vst [vmem:[%s248 + $0x58] sm:$0xff] %v806
      %839 = vst [vmem:[%s248 + $0x60] sm:$0xff] %v807
      %840 = vst [vmem:[%s248 + $0x68] sm:$0xff] %v808
      %841 = vst [vmem:[%s248 + $0x70] sm:$0xff] %v809
      %842 = vst [vmem:[%s248 + $0x78] sm:$0xff] %v810
      %843 = vst [vmem:[%s248 + $0x80] sm:$0xff] %v811
      %844 = vst [vmem:[%s248 + $0x88] sm:$0xff] %v812
      %845 = vst [vmem:[%s248 + $0x90] sm:$0xff] %v813
      %846 = vst [vmem:[%s248 + $0x98] sm:$0xff] %v814
      %847 = vst [vmem:[%s248 + $0xa0] sm:$0xff] %v815
      %848 = vst [vmem:[%s248 + $0xa8] sm:$0xff] %v816
      %849 = vst [vmem:[%s248 + $0xb0] sm:$0xff] %v817
      %850 = vst [vmem:[%s248 + $0xb8] sm:$0xff] %v818
      %851 = vst [vmem:[%s248 + $0xc0] sm:$0xff] %v819
      %852 = vst [vmem:[%s248 + $0xc8] sm:$0xff] %v820
      %853 = vst [vmem:[%s248 + $0xd0] sm:$0xff] %v821
      %854 = vst [vmem:[%s248 + $0xd8] sm:$0xff] %v822
      %855 = vst [vmem:[%s248 + $0xe0] sm:$0xff] %v823
      %856 = vst [vmem:[%s248 + $0xe8] sm:$0xff] %v824
      %857 = vst [vmem:[%s248 + $0xf0] sm:$0xff] %v825
      %858 = vst [vmem:[%s248 + $0xf8] sm:$0xff] %v826
      %s859 = smul.u32 32, %s16
      %p860 = scmp.lt.s32.totalorder %s859, 63
      %s861 = scalar_select %p860, %s859, 63
      %s862 = smul.addr %s861, 8
      %s863 = scalar_lea.vmem %s5, %s862
      // Predicated region
      $region41: #{encoder_forward.23} parent=39 // pred_check
        %p864 = pneg %p149
      $region42: #{encoder_forward.23} parent=39 // pred_check_branch
        %866 = sbr.rel (%p864) target = $region44
      $region43: #{encoder_forward.23} parent=39 // pred_region
        %s867 = smul.u32 32, %s16
      $region44: #{encoder_forward.23} parent=39 // pred_fallthru
        _
    $region40: #{encoder_forward.23} parent=5 // pred_fallthru
      _
    %p868 = scmp.le.s32.totalorder 2, %s11
    // Predicated region
    $region45: #{encoder_forward.23} parent=5 // pred_check
      %p869 = pneg %p868
    $region46: #{encoder_forward.23} parent=5 // pred_check_branch
      %871 = sbr.rel (%p869) target = $region48
    $region47: #{encoder_forward.23} parent=5 // pred_region
      %s872 = ssub.s32 %s11, 2
      // Predicated region
      $region49: #{encoder_forward.23} parent=47 // pred_check
        %p873 = pneg %p155
      $region50: #{encoder_forward.23} parent=47 // pred_check_branch
        %875 = sbr.rel (%p873) target = $region52
      $region51: #{encoder_forward.23} parent=47 // pred_region
        %s876 = smul.u32 32, %s17
        %p877 = scmp.lt.s32.totalorder %s876, 63
        %s878 = scalar_select %p877, %s876, 63
        %s879 = smul.addr %s878, 8
        %s880 = scalar_lea.vmem %s5, %s879
      $region52: #{encoder_forward.23} parent=47 // pred_fallthru
        _
    $region48: #{encoder_forward.23} parent=5 // pred_fallthru
      _
  $region6: #{encoder_forward.23} parent=0 // loop_footer
    %s15 = sadd.s32 1, %s11
  $region7: #{encoder_forward.23} parent=0 // loop_footer_branch
    %10 = sbr.rel target = $region3
  $region8: #{encoder_forward.23} parent=0 // loop_exit
    _

// kernel: encoder_forward.24
$region0: #{encoder_forward.24}
  #allocation0 [shape = 'u32[]', space=smem, size = 0x4, offset = 0x4, fixed_abs, tag = 'smem constant byte address 0x4 - core index']
  #allocation1 [shape = 'u32[72,128]{1,0:T(1,128)}', space=vmem, size = 0x9000, scoped, tag = 'internal scratch']
  #allocation2 [shape = 'f32[256,128]{1,0:T(8,128)}', space=vmem, size = 0x20000, scoped, tag = 'scratch operand']
  %s0 = inlined_call_operand.vmem [shape: bf16[512,72], index: 0, kind: input, shape index: {}]
  %s1 = inlined_call_operand.vmem [shape: bf16[72,128], index: 1, kind: input, shape index: {}]
  %s2 = inlined_call_operand.vmem [shape: f32[1,128], index: 2, kind: input, shape index: {}]
  %s3 = inlined_call_operand.vmem [shape: f32[512,128], index: 3, kind: output, shape index: {}]
  %s4 = sld [smem:[#allocation0]]
  $region53: #{encoder_forward.24} parent=0
    _
  %s6 = ssub.s32 1, %s4
  %s7 = scalar_select 0, %s6, %s4
  loop: start=0, step=1, limit=4
  $region2: #{encoder_forward.24} parent=0 // loop_pre_header
    _
  $region3: #{encoder_forward.24} parent=0 // loop_header
    %s9 = sphi 0, %s13
    %p10 = scmp.ge.s32.totalorder %s9, 4
    %s16 = sphi 0, %s28
    %s17 = sphi 0, %s24
    %s18 = sphi 0, %s16
    %s19 = sphi 0, %s17
    %s20 = sphi 0, %s18
    %s21 = sphi 0, %s19
    %s33 = sphi 0, %s35
    %s36 = sphi 0, %s33
    %s37 = sphi 0, %s36
    %s53 = sphi 0, %s37
    %s59 = sphi 0, %s61
    %s62 = sphi 0, %s59
    %s63 = sphi 0, %s62
    %s79 = sphi 0, %s63
    %s83 = sphi 0, %s83
    %s85 = sphi 0, %s83
    %s86 = sphi 0, %s85
    %s100 = sphi 0, %s86
    %s106 = sphi 0, %s108
    %s109 = sphi 0, %s106
    %s110 = sphi 0, %s109
    %s126 = sphi 0, %s110
  $region4: #{encoder_forward.24} parent=0 // loop_header_branch
    %12 = sbr.rel (%p10) target = $region8
  $region5: #{encoder_forward.24} parent=0 // loop_body
    %s14 = ssub.s32 %s9, 1
    %s15 = ssub.s32 %s9, 2
    %s22 = sadd.s32 1, %s17
    %p23 = scmp.ge.s32.totalorder %s22, 1
    %s24 = scalar_select %p23, 0, %s22
    %s25 = sadd.s32 1, %s16
    %s26 = scalar_select %p23, %s25, %s16
    %p27 = scmp.ge.s32.totalorder %s26, 2
    %s28 = scalar_select %p27, 0, %s26
    %s29 = ssub.s32 %s16, %s28
    %s30 = ssub.s32 %s17, %s24
    %s31 = sor.u32 %s29, %s30
    %p32 = scmp.eq.s32.totalorder %s31, 0
    %s34 = sadd.s32 %s33, 1
    %s35 = scalar_select %p32, %s33, %s34
    %p38 = pneg %p32
    %p39 = scmp.eq.s32.totalorder %s9, 1
    %p40 = por %p38, %p39
    %p41 = scmp.ne.s32.totalorder %s33, %s36
    %p42 = scmp.eq.s32.totalorder %s9, 0
    %p43 = por %p41, %p42
    %p44 = scmp.ne.s32.totalorder %s33, %s36
    %p45 = scmp.eq.s32.totalorder %s14, 1
    %p46 = por %p44, %p45
    %p47 = scmp.ne.s32.totalorder %s36, %s37
    %p48 = scmp.eq.s32.totalorder %s14, 0
    %p49 = por %p47, %p48
    %p50 = scmp.ne.s32.totalorder %s36, %s37
    %p51 = scmp.eq.s32.totalorder %s15, 1
    %p52 = por %p50, %p51
    %p54 = scmp.ne.s32.totalorder %s37, %s53
    %p55 = scmp.eq.s32.totalorder %s15, 0
    %p56 = por %p54, %p55
    %s57 = ssub.s32 %s17, %s24
    %p58 = scmp.eq.s32.totalorder %s57, 0
    %s60 = sadd.s32 %s59, 1
    %s61 = scalar_select %p58, %s59, %s60
    %p64 = pneg %p58
    %p65 = scmp.eq.s32.totalorder %s9, 1
    %p66 = por %p64, %p65
    %p67 = scmp.ne.s32.totalorder %s59, %s62
    %p68 = scmp.eq.s32.totalorder %s9, 0
    %p69 = por %p67, %p68
    %p70 = scmp.ne.s32.totalorder %s59, %s62
    %p71 = scmp.eq.s32.totalorder %s14, 1
    %p72 = por %p70, %p71
    %p73 = scmp.ne.s32.totalorder %s62, %s63
    %p74 = scmp.eq.s32.totalorder %s14, 0
    %p75 = por %p73, %p74
    %p76 = scmp.ne.s32.totalorder %s62, %s63
    %p77 = scmp.eq.s32.totalorder %s15, 1
    %p78 = por %p76, %p77
    %p80 = scmp.ne.s32.totalorder %s63, %s79
    %p81 = scmp.eq.s32.totalorder %s15, 0
    %p82 = por %p80, %p81
    %s84 = sadd.s32 %s83, 1
    %p87 = scmp.eq.s32.totalorder %s9, 1
    %p88 = scmp.ne.s32.totalorder %s83, %s85
    %p89 = scmp.eq.s32.totalorder %s9, 0
    %p90 = por %p88, %p89
    %p91 = scmp.ne.s32.totalorder %s83, %s85
    %p92 = scmp.eq.s32.totalorder %s14, 1
    %p93 = por %p91, %p92
    %p94 = scmp.ne.s32.totalorder %s85, %s86
    %p95 = scmp.eq.s32.totalorder %s14, 0
    %p96 = por %p94, %p95
    %p97 = scmp.ne.s32.totalorder %s85, %s86
    %p98 = scmp.eq.s32.totalorder %s15, 1
    %p99 = por %p97, %p98
    %p101 = scmp.ne.s32.totalorder %s86, %s100
    %p102 = scmp.eq.s32.totalorder %s15, 0
    %p103 = por %p101, %p102
    %s104 = ssub.s32 %s16, %s28
    %p105 = scmp.eq.s32.totalorder %s104, 0
    %s107 = sadd.s32 %s106, 1
    %s108 = scalar_select %p105, %s106, %s107
    %p111 = pneg %p105
    %p112 = scmp.eq.s32.totalorder %s9, 1
    %p113 = por %p111, %p112
    %p114 = scmp.ne.s32.totalorder %s106, %s109
    %p115 = scmp.eq.s32.totalorder %s9, 0
    %p116 = por %p114, %p115
    %p117 = scmp.ne.s32.totalorder %s106, %s109
    %p118 = scmp.eq.s32.totalorder %s14, 1
    %p119 = por %p117, %p118
    %p120 = scmp.ne.s32.totalorder %s109, %s110
    %p121 = scmp.eq.s32.totalorder %s14, 0
    %p122 = por %p120, %p121
    %p123 = scmp.ne.s32.totalorder %s109, %s110
    %p124 = scmp.eq.s32.totalorder %s15, 1
    %p125 = por %p123, %p124
    %p127 = scmp.ne.s32.totalorder %s110, %s126
    %p128 = scmp.eq.s32.totalorder %s15, 0
    %p129 = por %p127, %p128
    %p130 = scmp.le.s32.totalorder 1, %s9
    %p131 = scmp.lt.s32.totalorder %s9, 3
    %p132 = pnand %p130, %p131
    %p133 = pneg %p132
    // Predicated region
    $region9: #{encoder_forward.24} parent=5 // pred_check
      _
    $region10: #{encoder_forward.24} parent=5 // pred_check_branch
      %135 = sbr.rel (%p132) target = $region12
    $region11: #{encoder_forward.24} parent=5 // pred_region
      %s136 = ssub.s32 %s9, 1
      // Predicated region
      $region13: #{encoder_forward.24} parent=11 // pred_check
        %p137 = pneg %p75
      $region14: #{encoder_forward.24} parent=11 // pred_check_branch
        %139 = sbr.rel (%p137) target = $region16
      $region15: #{encoder_forward.24} parent=11 // pred_region
        %s140 = smul.u32 9, %s19
        %p141 = scmp.lt.s32.totalorder %s140, 8
        %s142 = scalar_select %p141, %s140, 8
        %s143 = smul.addr %s142, 4
        %s144 = scalar_lea.vmem %s1, %s143
        %s145 = smul.u32 9, %s19
      $region16: #{encoder_forward.24} parent=11 // pred_fallthru
        _
      // Predicated region
      $region17: #{encoder_forward.24} parent=11 // pred_check
        %p146 = pneg %p96
      $region18: #{encoder_forward.24} parent=11 // pred_check_branch
        %148 = sbr.rel (%p146) target = $region20
      $region19: #{encoder_forward.24} parent=11 // pred_region
        _
      $region20: #{encoder_forward.24} parent=11 // pred_fallthru
        _
    $region12: #{encoder_forward.24} parent=5 // pred_fallthru
      _
    %p149 = scmp.lt.s32.totalorder %s9, 2
    // Predicated region
    $region21: #{encoder_forward.24} parent=5 // pred_check
      %p150 = pneg %p149
    $region22: #{encoder_forward.24} parent=5 // pred_check_branch
      %152 = sbr.rel (%p150) target = $region24
    $region23: #{encoder_forward.24} parent=5 // pred_region
      // Predicated region
      $region25: #{encoder_forward.24} parent=23 // pred_check
        %p153 = pneg %p43
      $region26: #{encoder_forward.24} parent=23 // pred_check_branch
        %155 = sbr.rel (%p153) target = $region28
      $region27: #{encoder_forward.24} parent=23 // pred_region
        %s156 = smul.u32 32, %s16
        %p157 = scmp.lt.s32.totalorder %s156, 63
        %s158 = scalar_select %p157, %s156, 63
        %p159 = scmp.lt.s32.totalorder %s17, 0
        %s160 = scalar_select %p159, %s17, 0
        %s161 = sadd.s32 %s160, %s158
        %s162 = smul.addr %s161, 4
        %s163 = scalar_lea.vmem %s0, %s162
        %s164 = smul.u32 32, %s16
      $region28: #{encoder_forward.24} parent=23 // pred_fallthru
        _
    $region24: #{encoder_forward.24} parent=5 // pred_fallthru
      _
    %p165 = scmp.le.s32.totalorder 1, %s9
    %p166 = scmp.lt.s32.totalorder %s9, 3
    %p167 = pnand %p165, %p166
    %p168 = pneg %p167
    // Predicated region
    $region29: #{encoder_forward.24} parent=5 // pred_check
      _
    $region30: #{encoder_forward.24} parent=5 // pred_check_branch
      %170 = sbr.rel (%p167) target = $region32
    $region31: #{encoder_forward.24} parent=5 // pred_region
      %s171 = ssub.s32 %s9, 1
      %s172 = smul.u32 32, %s18
      %p173 = scmp.lt.s32.totalorder %s172, 63
      %s174 = scalar_select %p173, %s172, 63
      %p175 = scmp.lt.s32.totalorder %s19, 0
      %s176 = scalar_select %p175, %s19, 0
      %s177 = sadd.s32 %s176, %s174
      %s178 = smul.addr %s177, 4
      %s179 = scalar_lea.vmem %s0, %s178
      %p180 = pneg %p49
      %p181 = pneg %p46
      %s182 = smul.u32 9, %s19
      %p183 = scmp.lt.s32.totalorder %s182, 8
      %s184 = scalar_select %p183, %s182, 8
      %s185 = smul.addr %s184, 4
      %s186 = scalar_lea.vmem %s1, %s185
      %p187 = pneg %p75
      %p188 = pneg %p72
      %p189 = pneg %p96
      %p190 = pneg %p93
      %p191 = pneg %p122
      %p192 = pneg %p119
      %s193 = smul.u32 32, %s18
      %p194 = scmp.lt.s32.totalorder %s193, 63
      %s195 = scalar_select %p194, %s193, 63
      %s196 = smul.addr %s195, 8
      %s197 = scalar_lea.vmem %s3, %s196
      %s198 = smul.u32 32, %s18
      %p199 = scmp.lt.s32.totalorder %s198, 63
      %s200 = scalar_select %p199, %s198, 63
      %p201 = scmp.lt.s32.totalorder %s19, 0
      %s202 = scalar_select %p201, %s19, 0
      %s203 = sadd.s32 %s202, %s200
      %s204 = smul.addr %s203, 4
      %s205 = scalar_lea.vmem %s0, %s204
      %s206 = smul.u32 32, %s18
      %s207 = smul.u32 9, %s19
      %p208 = scmp.lt.s32.totalorder %s207, 8
      %s209 = scalar_select %p208, %s207, 8
      %s210 = smul.addr %s209, 4
      %s211 = scalar_lea.vmem %s1, %s210
      %s212 = smul.u32 9, %s19
      %s213 = smul.u32 32, %s18
      %p214 = scmp.lt.s32.totalorder %s213, 63
      %s215 = scalar_select %p214, %s213, 63
      %s216 = smul.addr %s215, 8
      %s217 = scalar_lea.vmem %s3, %s216
      %s218 = smul.u32 32, %s18
      %p220 = scmp.eq.s32.totalorder %s19, 0
      // Predicated region
      $region33: #{encoder_forward.24} parent=31 // pred_check
        %p221 = pneg %p220
      $region34: #{encoder_forward.24} parent=31 // pred_check_branch
        %223 = sbr.rel (%p221) target = $region36
      $region35: #{encoder_forward.24} parent=31 // pred_region
        %224 = vst [vmem:[#allocation2] sm:$0xff] 0.0
        %225 = vst [vmem:[#allocation2 + $0x8] sm:$0xff] 0.0
        %226 = vst [vmem:[#allocation2 + $0x10] sm:$0xff] 0.0
        %227 = vst [vmem:[#allocation2 + $0x18] sm:$0xff] 0.0
        %228 = vst [vmem:[#allocation2 + $0x20] sm:$0xff] 0.0
        %229 = vst [vmem:[#allocation2 + $0x28] sm:$0xff] 0.0
        %230 = vst [vmem:[#allocation2 + $0x30] sm:$0xff] 0.0
        %231 = vst [vmem:[#allocation2 + $0x38] sm:$0xff] 0.0
        %232 = vst [vmem:[#allocation2 + $0x40] sm:$0xff] 0.0
        %233 = vst [vmem:[#allocation2 + $0x48] sm:$0xff] 0.0
        %234 = vst [vmem:[#allocation2 + $0x50] sm:$0xff] 0.0
        %235 = vst [vmem:[#allocation2 + $0x58] sm:$0xff] 0.0
        %236 = vst [vmem:[#allocation2 + $0x60] sm:$0xff] 0.0
        %237 = vst [vmem:[#allocation2 + $0x68] sm:$0xff] 0.0
        %238 = vst [vmem:[#allocation2 + $0x70] sm:$0xff] 0.0
        %239 = vst [vmem:[#allocation2 + $0x78] sm:$0xff] 0.0
        %240 = vst [vmem:[#allocation2 + $0x80] sm:$0xff] 0.0
        %241 = vst [vmem:[#allocation2 + $0x88] sm:$0xff] 0.0
        %242 = vst [vmem:[#allocation2 + $0x90] sm:$0xff] 0.0
        %243 = vst [vmem:[#allocation2 + $0x98] sm:$0xff] 0.0
        %244 = vst [vmem:[#allocation2 + $0xa0] sm:$0xff] 0.0
        %245 = vst [vmem:[#allocation2 + $0xa8] sm:$0xff] 0.0
        %246 = vst [vmem:[#allocation2 + $0xb0] sm:$0xff] 0.0
        %247 = vst [vmem:[#allocation2 + $0xb8] sm:$0xff] 0.0
        %248 = vst [vmem:[#allocation2 + $0xc0] sm:$0xff] 0.0
        %249 = vst [vmem:[#allocation2 + $0xc8] sm:$0xff] 0.0
        %250 = vst [vmem:[#allocation2 + $0xd0] sm:$0xff] 0.0
        %251 = vst [vmem:[#allocation2 + $0xd8] sm:$0xff] 0.0
        %252 = vst [vmem:[#allocation2 + $0xe0] sm:$0xff] 0.0
        %253 = vst [vmem:[#allocation2 + $0xe8] sm:$0xff] 0.0
        %254 = vst [vmem:[#allocation2 + $0xf0] sm:$0xff] 0.0
        %255 = vst [vmem:[#allocation2 + $0xf8] sm:$0xff] 0.0
      $region36: #{encoder_forward.24} parent=31 // pred_fallthru
        _
      %v256 = vld [vmem:[#allocation2] sm:$0xff]
      %v257 = vld [vmem:[#allocation2 + $0x8] sm:$0xff]
      %v258 = vld [vmem:[#allocation2 + $0x10] sm:$0xff]
      %v259 = vld [vmem:[#allocation2 + $0x18] sm:$0xff]
      %v260 = vld [vmem:[#allocation2 + $0x20] sm:$0xff]
      %v261 = vld [vmem:[#allocation2 + $0x28] sm:$0xff]
      %v262 = vld [vmem:[#allocation2 + $0x30] sm:$0xff]
      %v263 = vld [vmem:[#allocation2 + $0x38] sm:$0xff]
      %v264 = vld [vmem:[#allocation2 + $0x40] sm:$0xff]
      %v265 = vld [vmem:[#allocation2 + $0x48] sm:$0xff]
      %v266 = vld [vmem:[#allocation2 + $0x50] sm:$0xff]
      %v267 = vld [vmem:[#allocation2 + $0x58] sm:$0xff]
      %v268 = vld [vmem:[#allocation2 + $0x60] sm:$0xff]
      %v269 = vld [vmem:[#allocation2 + $0x68] sm:$0xff]
      %v270 = vld [vmem:[#allocation2 + $0x70] sm:$0xff]
      %v271 = vld [vmem:[#allocation2 + $0x78] sm:$0xff]
      %v272 = vld [vmem:[#allocation2 + $0x80] sm:$0xff]
      %v273 = vld [vmem:[#allocation2 + $0x88] sm:$0xff]
      %v274 = vld [vmem:[#allocation2 + $0x90] sm:$0xff]
      %v275 = vld [vmem:[#allocation2 + $0x98] sm:$0xff]
      %v276 = vld [vmem:[#allocation2 + $0xa0] sm:$0xff]
      %v277 = vld [vmem:[#allocation2 + $0xa8] sm:$0xff]
      %v278 = vld [vmem:[#allocation2 + $0xb0] sm:$0xff]
      %v279 = vld [vmem:[#allocation2 + $0xb8] sm:$0xff]
      %v280 = vld [vmem:[#allocation2 + $0xc0] sm:$0xff]
      %v281 = vld [vmem:[#allocation2 + $0xc8] sm:$0xff]
      %v282 = vld [vmem:[#allocation2 + $0xd0] sm:$0xff]
      %v283 = vld [vmem:[#allocation2 + $0xd8] sm:$0xff]
      %v284 = vld [vmem:[#allocation2 + $0xe0] sm:$0xff]
      %v285 = vld [vmem:[#allocation2 + $0xe8] sm:$0xff]
      %v286 = vld [vmem:[#allocation2 + $0xf0] sm:$0xff]
      %v287 = vld [vmem:[#allocation2 + $0xf8] sm:$0xff]
      %v288 = vld [vmem:[%s205] sm:$0xf]
      %v289 = vld [vmem:[%s205 + $0x4] sm:$0xf]
      %v290 = vld [vmem:[%s205 + $0x8] sm:$0xf]
      %v291 = vld [vmem:[%s205 + $0xc] sm:$0xf]
      %v292 = vld [vmem:[%s205 + $0x10] sm:$0xf]
      %v293 = vld [vmem:[%s205 + $0x14] sm:$0xf]
      %v294 = vld [vmem:[%s205 + $0x18] sm:$0xf]
      %v295 = vld [vmem:[%s205 + $0x1c] sm:$0xf]
      %v296 = vld [vmem:[%s205 + $0x20] sm:$0xf]
      %v297 = vld [vmem:[%s205 + $0x24] sm:$0xf]
      %v298 = vld [vmem:[%s205 + $0x28] sm:$0xf]
      %v299 = vld [vmem:[%s205 + $0x2c] sm:$0xf]
      %v300 = vld [vmem:[%s205 + $0x30] sm:$0xf]
      %v301 = vld [vmem:[%s205 + $0x34] sm:$0xf]
      %v302 = vld [vmem:[%s205 + $0x38] sm:$0xf]
      %v303 = vld [vmem:[%s205 + $0x3c] sm:$0xf]
      %v304 = vld [vmem:[%s205 + $0x40] sm:$0xf]
      %v305 = vld [vmem:[%s205 + $0x44] sm:$0xf]
      %v306 = vld [vmem:[%s205 + $0x48] sm:$0xf]
      %v307 = vld [vmem:[%s205 + $0x4c] sm:$0xf]
      %v308 = vld [vmem:[%s205 + $0x50] sm:$0xf]
      %v309 = vld [vmem:[%s205 + $0x54] sm:$0xf]
      %v310 = vld [vmem:[%s205 + $0x58] sm:$0xf]
      %v311 = vld [vmem:[%s205 + $0x5c] sm:$0xf]
      %v312 = vld [vmem:[%s205 + $0x60] sm:$0xf]
      %v313 = vld [vmem:[%s205 + $0x64] sm:$0xf]
      %v314 = vld [vmem:[%s205 + $0x68] sm:$0xf]
      %v315 = vld [vmem:[%s205 + $0x6c] sm:$0xf]
      %v316 = vld [vmem:[%s205 + $0x70] sm:$0xf]
      %v317 = vld [vmem:[%s205 + $0x74] sm:$0xf]
      %v318 = vld [vmem:[%s205 + $0x78] sm:$0xf]
      %v319 = vld [vmem:[%s205 + $0x7c] sm:$0xf]
      %v320 = vld [vmem:[%s211] sm:$0xf]
      %v321 = vld [vmem:[%s211 + $0x4] sm:$0xf]
      %v322 = vld [vmem:[%s211 + $0x8] sm:$0xf]
      %v323 = vld [vmem:[%s211 + $0xc] sm:$0xf]
      %v324 = vld [vmem:[%s211 + $0x10] sm:$0xf]
      %v325 = vld [vmem:[%s211 + $0x14] sm:$0xf]
      %v326 = vld [vmem:[%s211 + $0x18] sm:$0xf]
      %v327 = vld [vmem:[%s211 + $0x1c] sm:$0xf]
      %v328 = vld [vmem:[%s211 + $0x20] sm:$0xf]
      %v361 = vunpack.c.l.b16 %v288
      %v362 = vunpack.c.l.b16 %v289
      %v363 = vunpack.c.l.b16 %v290
      %v364 = vunpack.c.l.b16 %v291
      %v365 = vunpack.c.l.b16 %v292
      %v366 = vunpack.c.l.b16 %v293
      %v367 = vunpack.c.l.b16 %v294
      %v368 = vunpack.c.l.b16 %v295
      %v369 = vunpack.c.l.b16 %v296
      %v370 = vunpack.c.l.b16 %v297
      %v371 = vunpack.c.l.b16 %v298
      %v372 = vunpack.c.l.b16 %v299
      %v373 = vunpack.c.l.b16 %v300
      %v374 = vunpack.c.l.b16 %v301
      %v375 = vunpack.c.l.b16 %v302
      %v376 = vunpack.c.l.b16 %v303
      %v377 = vunpack.c.l.b16 %v304
      %v378 = vunpack.c.l.b16 %v305
      %v379 = vunpack.c.l.b16 %v306
      %v380 = vunpack.c.l.b16 %v307
      %v381 = vunpack.c.l.b16 %v308
      %v382 = vunpack.c.l.b16 %v309
      %v383 = vunpack.c.l.b16 %v310
      %v384 = vunpack.c.l.b16 %v311
      %v385 = vunpack.c.l.b16 %v312
      %v386 = vunpack.c.l.b16 %v313
      %v387 = vunpack.c.l.b16 %v314
      %v388 = vunpack.c.l.b16 %v315
      %v389 = vunpack.c.l.b16 %v316
      %v390 = vunpack.c.l.b16 %v317
      %v391 = vunpack.c.l.b16 %v318
      %v392 = vunpack.c.l.b16 %v319
      %v393 = vpack.c.b16 %v362, %v361
      %v394 = vpack.c.b16 %v364, %v363
      %v395 = vpack.c.b16 %v366, %v365
      %v396 = vpack.c.b16 %v368, %v367
      %v397 = vpack.c.b16 %v370, %v369
      %v398 = vpack.c.b16 %v372, %v371
      %v399 = vpack.c.b16 %v374, %v373
      %v400 = vpack.c.b16 %v376, %v375
      %v401 = vpack.c.b16 %v378, %v377
      %v402 = vpack.c.b16 %v380, %v379
      %v403 = vpack.c.b16 %v382, %v381
      %v404 = vpack.c.b16 %v384, %v383
      %v405 = vpack.c.b16 %v386, %v385
      %v406 = vpack.c.b16 %v388, %v387
      %v407 = vpack.c.b16 %v390, %v389
      %v408 = vpack.c.b16 %v392, %v391
      %v418 = vunpack.c.l.b16 %v320
      %v419 = vunpack.c.l.b16 %v321
      %v420 = vunpack.c.l.b16 %v322
      %v421 = vunpack.c.l.b16 %v323
      %v422 = vunpack.c.l.b16 %v324
      %v423 = vunpack.c.l.b16 %v325
      %v424 = vunpack.c.l.b16 %v326
      %v425 = vunpack.c.l.b16 %v327
      %v426 = vunpack.c.l.b16 %v328
      %v427 = vpack.c.b16 %v419, %v418
      %v428 = vpack.c.b16 %v421, %v420
      %v429 = vpack.c.b16 %v423, %v422
      %v430 = vpack.c.b16 %v425, %v424
      %v431 = vpack.c.b16 %v426, %v426
      %vm436 = vcmask 588800
      %v438 = vsel %vm436, %v393, 0
      %v441 = vsel %vm436, %v394, 0
      %v444 = vsel %vm436, %v395, 0
      %v447 = vsel %vm436, %v396, 0
      %v450 = vsel %vm436, %v397, 0
      %v453 = vsel %vm436, %v398, 0
      %v456 = vsel %vm436, %v399, 0
      %v459 = vsel %vm436, %v400, 0
      %v462 = vsel %vm436, %v401, 0
      %v465 = vsel %vm436, %v402, 0
      %v468 = vsel %vm436, %v403, 0
      %v471 = vsel %vm436, %v404, 0
      %v474 = vsel %vm436, %v405, 0
      %v477 = vsel %vm436, %v406, 0
      %v480 = vsel %vm436, %v407, 0
      %v483 = vsel %vm436, %v408, 0
      %vm485 = vcmask 1043456
      %v487 = vsel %vm485, %v431, 0
      %489 = vmatpush.bf16.msra.mxu0 0
      %490 = vmatpush.bf16.msra.mxu0 0
      %491 = vmatpush.bf16.msra.mxu0 0
      %492 = vmatpush.bf16.msra.mxu0 %v487
      %493 = vmatpush.bf16.msra.mxu0 %v430
      %494 = vmatpush.bf16.msra.mxu0 %v429
      %495 = vmatpush.bf16.msra.mxu0 %v428
      %496 = vmatpush.bf16.msra.mxu0 %v427
      %497 = vmatmul.bf16.gmra.mxu0 %v438
      %v498 = vpop.f32.mrf.mxu0
      %v499 = vadd.f32 0.0, %v498
      %v500 = vpop.f32.mrf.mxu0
      %v501 = vadd.f32 0.0, %v500
      %502 = vmatmul.bf16.gmra.mxu0 %v441
      %v503 = vpop.f32.mrf.mxu0
      %v504 = vadd.f32 0.0, %v503
      %v505 = vpop.f32.mrf.mxu0
      %v506 = vadd.f32 0.0, %v505
      %507 = vmatmul.bf16.gmra.mxu0 %v444
      %v508 = vpop.f32.mrf.mxu0
      %v509 = vadd.f32 0.0, %v508
      %v510 = vpop.f32.mrf.mxu0
      %v511 = vadd.f32 0.0, %v510
      %512 = vmatmul.bf16.gmra.mxu0 %v447
      %v513 = vpop.f32.mrf.mxu0
      %v514 = vadd.f32 0.0, %v513
      %v515 = vpop.f32.mrf.mxu0
      %v516 = vadd.f32 0.0, %v515
      %517 = vmatmul.bf16.gmra.mxu0 %v450
      %v518 = vpop.f32.mrf.mxu0
      %v519 = vadd.f32 0.0, %v518
      %v520 = vpop.f32.mrf.mxu0
      %v521 = vadd.f32 0.0, %v520
      %522 = vmatmul.bf16.gmra.mxu0 %v453
      %v523 = vpop.f32.mrf.mxu0
      %v524 = vadd.f32 0.0, %v523
      %v525 = vpop.f32.mrf.mxu0
      %v526 = vadd.f32 0.0, %v525
      %527 = vmatmul.bf16.gmra.mxu0 %v456
      %v528 = vpop.f32.mrf.mxu0
      %v529 = vadd.f32 0.0, %v528
      %v530 = vpop.f32.mrf.mxu0
      %v531 = vadd.f32 0.0, %v530
      %532 = vmatmul.bf16.gmra.mxu0 %v459
      %v533 = vpop.f32.mrf.mxu0
      %v534 = vadd.f32 0.0, %v533
      %v535 = vpop.f32.mrf.mxu0
      %v536 = vadd.f32 0.0, %v535
      %537 = vmatmul.bf16.gmra.mxu0 %v462
      %v538 = vpop.f32.mrf.mxu0
      %v539 = vadd.f32 0.0, %v538
      %v540 = vpop.f32.mrf.mxu0
      %v541 = vadd.f32 0.0, %v540
      %542 = vmatmul.bf16.gmra.mxu0 %v465
      %v543 = vpop.f32.mrf.mxu0
      %v544 = vadd.f32 0.0, %v543
      %v545 = vpop.f32.mrf.mxu0
      %v546 = vadd.f32 0.0, %v545
      %547 = vmatmul.bf16.gmra.mxu0 %v468
      %v548 = vpop.f32.mrf.mxu0
      %v549 = vadd.f32 0.0, %v548
      %v550 = vpop.f32.mrf.mxu0
      %v551 = vadd.f32 0.0, %v550
      %552 = vmatmul.bf16.gmra.mxu0 %v471
      %v553 = vpop.f32.mrf.mxu0
      %v554 = vadd.f32 0.0, %v553
      %v555 = vpop.f32.mrf.mxu0
      %v556 = vadd.f32 0.0, %v555
      %557 = vmatmul.bf16.gmra.mxu0 %v474
      %v558 = vpop.f32.mrf.mxu0
      %v559 = vadd.f32 0.0, %v558
      %v560 = vpop.f32.mrf.mxu0
      %v561 = vadd.f32 0.0, %v560
      %562 = vmatmul.bf16.gmra.mxu0 %v477
      %v563 = vpop.f32.mrf.mxu0
      %v564 = vadd.f32 0.0, %v563
      %v565 = vpop.f32.mrf.mxu0
      %v566 = vadd.f32 0.0, %v565
      %567 = vmatmul.bf16.gmra.mxu0 %v480
      %v568 = vpop.f32.mrf.mxu0
      %v569 = vadd.f32 0.0, %v568
      %v570 = vpop.f32.mrf.mxu0
      %v571 = vadd.f32 0.0, %v570
      %572 = vmatmul.bf16.gmra.mxu0 %v483
      %v573 = vpop.f32.mrf.mxu0
      %v574 = vadd.f32 0.0, %v573
      %v575 = vpop.f32.mrf.mxu0
      %v576 = vadd.f32 0.0, %v575
      %577 = vdwg.mxu0
      %v578 = vadd.f32 %v256, %v499
      %v579 = vadd.f32 %v257, %v501
      %v580 = vadd.f32 %v258, %v504
      %v581 = vadd.f32 %v259, %v506
      %v582 = vadd.f32 %v260, %v509
      %v583 = vadd.f32 %v261, %v511
      %v584 = vadd.f32 %v262, %v514
      %v585 = vadd.f32 %v263, %v516
      %v586 = vadd.f32 %v264, %v519
      %v587 = vadd.f32 %v265, %v521
      %v588 = vadd.f32 %v266, %v524
      %v589 = vadd.f32 %v267, %v526
      %v590 = vadd.f32 %v268, %v529
      %v591 = vadd.f32 %v269, %v531
      %v592 = vadd.f32 %v270, %v534
      %v593 = vadd.f32 %v271, %v536
      %v594 = vadd.f32 %v272, %v539
      %v595 = vadd.f32 %v273, %v541
      %v596 = vadd.f32 %v274, %v544
      %v597 = vadd.f32 %v275, %v546
      %v598 = vadd.f32 %v276, %v549
      %v599 = vadd.f32 %v277, %v551
      %v600 = vadd.f32 %v278, %v554
      %v601 = vadd.f32 %v279, %v556
      %v602 = vadd.f32 %v280, %v559
      %v603 = vadd.f32 %v281, %v561
      %v604 = vadd.f32 %v282, %v564
      %v605 = vadd.f32 %v283, %v566
      %v606 = vadd.f32 %v284, %v569
      %v607 = vadd.f32 %v285, %v571
      %v608 = vadd.f32 %v286, %v574
      %v609 = vadd.f32 %v287, %v576
      %610 = vst [vmem:[#allocation2] sm:$0xff] %v578
      %611 = vst [vmem:[#allocation2 + $0x8] sm:$0xff] %v579
      %612 = vst [vmem:[#allocation2 + $0x10] sm:$0xff] %v580
      %613 = vst [vmem:[#allocation2 + $0x18] sm:$0xff] %v581
      %614 = vst [vmem:[#allocation2 + $0x20] sm:$0xff] %v582
      %615 = vst [vmem:[#allocation2 + $0x28] sm:$0xff] %v583
      %616 = vst [vmem:[#allocation2 + $0x30] sm:$0xff] %v584
      %617 = vst [vmem:[#allocation2 + $0x38] sm:$0xff] %v585
      %618 = vst [vmem:[#allocation2 + $0x40] sm:$0xff] %v586
      %619 = vst [vmem:[#allocation2 + $0x48] sm:$0xff] %v587
      %620 = vst [vmem:[#allocation2 + $0x50] sm:$0xff] %v588
      %621 = vst [vmem:[#allocation2 + $0x58] sm:$0xff] %v589
      %622 = vst [vmem:[#allocation2 + $0x60] sm:$0xff] %v590
      %623 = vst [vmem:[#allocation2 + $0x68] sm:$0xff] %v591
      %624 = vst [vmem:[#allocation2 + $0x70] sm:$0xff] %v592
      %625 = vst [vmem:[#allocation2 + $0x78] sm:$0xff] %v593
      %626 = vst [vmem:[#allocation2 + $0x80] sm:$0xff] %v594
      %627 = vst [vmem:[#allocation2 + $0x88] sm:$0xff] %v595
      %628 = vst [vmem:[#allocation2 + $0x90] sm:$0xff] %v596
      %629 = vst [vmem:[#allocation2 + $0x98] sm:$0xff] %v597
      %630 = vst [vmem:[#allocation2 + $0xa0] sm:$0xff] %v598
      %631 = vst [vmem:[#allocation2 + $0xa8] sm:$0xff] %v599
      %632 = vst [vmem:[#allocation2 + $0xb0] sm:$0xff] %v600
      %633 = vst [vmem:[#allocation2 + $0xb8] sm:$0xff] %v601
      %634 = vst [vmem:[#allocation2 + $0xc0] sm:$0xff] %v602
      %635 = vst [vmem:[#allocation2 + $0xc8] sm:$0xff] %v603
      %636 = vst [vmem:[#allocation2 + $0xd0] sm:$0xff] %v604
      %637 = vst [vmem:[#allocation2 + $0xd8] sm:$0xff] %v605
      %638 = vst [vmem:[#allocation2 + $0xe0] sm:$0xff] %v606
      %639 = vst [vmem:[#allocation2 + $0xe8] sm:$0xff] %v607
      %640 = vst [vmem:[#allocation2 + $0xf0] sm:$0xff] %v608
      %641 = vst [vmem:[#allocation2 + $0xf8] sm:$0xff] %v609
      // Predicated region
      $region37: #{encoder_forward.24} parent=31 // pred_check
        %p642 = pneg %p220
      $region38: #{encoder_forward.24} parent=31 // pred_check_branch
        %644 = sbr.rel (%p642) target = $region40
      $region39: #{encoder_forward.24} parent=31 // pred_region
        %v645 = vld [vmem:[#allocation2] sm:$0xff]
        %v646 = vld [vmem:[#allocation2 + $0x8] sm:$0xff]
        %v647 = vld [vmem:[#allocation2 + $0x10] sm:$0xff]
        %v648 = vld [vmem:[#allocation2 + $0x18] sm:$0xff]
        %v649 = vld [vmem:[#allocation2 + $0x20] sm:$0xff]
        %v650 = vld [vmem:[#allocation2 + $0x28] sm:$0xff]
        %v651 = vld [vmem:[#allocation2 + $0x30] sm:$0xff]
        %v652 = vld [vmem:[#allocation2 + $0x38] sm:$0xff]
        %v653 = vld [vmem:[#allocation2 + $0x40] sm:$0xff]
        %v654 = vld [vmem:[#allocation2 + $0x48] sm:$0xff]
        %v655 = vld [vmem:[#allocation2 + $0x50] sm:$0xff]
        %v656 = vld [vmem:[#allocation2 + $0x58] sm:$0xff]
        %v657 = vld [vmem:[#allocation2 + $0x60] sm:$0xff]
        %v658 = vld [vmem:[#allocation2 + $0x68] sm:$0xff]
        %v659 = vld [vmem:[#allocation2 + $0x70] sm:$0xff]
        %v660 = vld [vmem:[#allocation2 + $0x78] sm:$0xff]
        %v661 = vld [vmem:[#allocation2 + $0x80] sm:$0xff]
        %v662 = vld [vmem:[#allocation2 + $0x88] sm:$0xff]
        %v663 = vld [vmem:[#allocation2 + $0x90] sm:$0xff]
        %v664 = vld [vmem:[#allocation2 + $0x98] sm:$0xff]
        %v665 = vld [vmem:[#allocation2 + $0xa0] sm:$0xff]
        %v666 = vld [vmem:[#allocation2 + $0xa8] sm:$0xff]
        %v667 = vld [vmem:[#allocation2 + $0xb0] sm:$0xff]
        %v668 = vld [vmem:[#allocation2 + $0xb8] sm:$0xff]
        %v669 = vld [vmem:[#allocation2 + $0xc0] sm:$0xff]
        %v670 = vld [vmem:[#allocation2 + $0xc8] sm:$0xff]
        %v671 = vld [vmem:[#allocation2 + $0xd0] sm:$0xff]
        %v672 = vld [vmem:[#allocation2 + $0xd8] sm:$0xff]
        %v673 = vld [vmem:[#allocation2 + $0xe0] sm:$0xff]
        %v674 = vld [vmem:[#allocation2 + $0xe8] sm:$0xff]
        %v675 = vld [vmem:[#allocation2 + $0xf0] sm:$0xff]
        %v676 = vld [vmem:[#allocation2 + $0xf8] sm:$0xff]
        %v677 = vld [vmem:[%s2] sm:$0x1]
        %v679 = vperm.slane %v677, 0
        %v681 = vadd.f32 %v645, %v679
        %v682 = vadd.f32 %v646, %v679
        %v683 = vadd.f32 %v647, %v679
        %v684 = vadd.f32 %v648, %v679
        %v685 = vadd.f32 %v649, %v679
        %v686 = vadd.f32 %v650, %v679
        %v687 = vadd.f32 %v651, %v679
        %v688 = vadd.f32 %v652, %v679
        %v689 = vadd.f32 %v653, %v679
        %v690 = vadd.f32 %v654, %v679
        %v691 = vadd.f32 %v655, %v679
        %v692 = vadd.f32 %v656, %v679
        %v693 = vadd.f32 %v657, %v679
        %v694 = vadd.f32 %v658, %v679
        %v695 = vadd.f32 %v659, %v679
        %v696 = vadd.f32 %v660, %v679
        %v697 = vadd.f32 %v661, %v679
        %v698 = vadd.f32 %v662, %v679
        %v699 = vadd.f32 %v663, %v679
        %v700 = vadd.f32 %v664, %v679
        %v701 = vadd.f32 %v665, %v679
        %v702 = vadd.f32 %v666, %v679
        %v703 = vadd.f32 %v667, %v679
        %v704 = vadd.f32 %v668, %v679
        %v705 = vadd.f32 %v669, %v679
        %v706 = vadd.f32 %v670, %v679
        %v707 = vadd.f32 %v671, %v679
        %v708 = vadd.f32 %v672, %v679
        %v709 = vadd.f32 %v673, %v679
        %v710 = vadd.f32 %v674, %v679
        %v711 = vadd.f32 %v675, %v679
        %v712 = vadd.f32 %v676, %v679
        %v713 = vmax.f32 %v681, 0.0
        %v714 = vmax.f32 %v682, 0.0
        %v715 = vmax.f32 %v683, 0.0
        %v716 = vmax.f32 %v684, 0.0
        %v717 = vmax.f32 %v685, 0.0
        %v718 = vmax.f32 %v686, 0.0
        %v719 = vmax.f32 %v687, 0.0
        %v720 = vmax.f32 %v688, 0.0
        %v721 = vmax.f32 %v689, 0.0
        %v722 = vmax.f32 %v690, 0.0
        %v723 = vmax.f32 %v691, 0.0
        %v724 = vmax.f32 %v692, 0.0
        %v725 = vmax.f32 %v693, 0.0
        %v726 = vmax.f32 %v694, 0.0
        %v727 = vmax.f32 %v695, 0.0
        %v728 = vmax.f32 %v696, 0.0
        %v729 = vmax.f32 %v697, 0.0
        %v730 = vmax.f32 %v698, 0.0
        %v731 = vmax.f32 %v699, 0.0
        %v732 = vmax.f32 %v700, 0.0
        %v733 = vmax.f32 %v701, 0.0
        %v734 = vmax.f32 %v702, 0.0
        %v735 = vmax.f32 %v703, 0.0
        %v736 = vmax.f32 %v704, 0.0
        %v737 = vmax.f32 %v705, 0.0
        %v738 = vmax.f32 %v706, 0.0
        %v739 = vmax.f32 %v707, 0.0
        %v740 = vmax.f32 %v708, 0.0
        %v741 = vmax.f32 %v709, 0.0
        %v742 = vmax.f32 %v710, 0.0
        %v743 = vmax.f32 %v711, 0.0
        %v744 = vmax.f32 %v712, 0.0
        %745 = vst [vmem:[%s217] sm:$0xff] %v713
        %746 = vst [vmem:[%s217 + $0x8] sm:$0xff] %v714
        %747 = vst [vmem:[%s217 + $0x10] sm:$0xff] %v715
        %748 = vst [vmem:[%s217 + $0x18] sm:$0xff] %v716
        %749 = vst [vmem:[%s217 + $0x20] sm:$0xff] %v717
        %750 = vst [vmem:[%s217 + $0x28] sm:$0xff] %v718
        %751 = vst [vmem:[%s217 + $0x30] sm:$0xff] %v719
        %752 = vst [vmem:[%s217 + $0x38] sm:$0xff] %v720
        %753 = vst [vmem:[%s217 + $0x40] sm:$0xff] %v721
        %754 = vst [vmem:[%s217 + $0x48] sm:$0xff] %v722
        %755 = vst [vmem:[%s217 + $0x50] sm:$0xff] %v723
        %756 = vst [vmem:[%s217 + $0x58] sm:$0xff] %v724
        %757 = vst [vmem:[%s217 + $0x60] sm:$0xff] %v725
        %758 = vst [vmem:[%s217 + $0x68] sm:$0xff] %v726
        %759 = vst [vmem:[%s217 + $0x70] sm:$0xff] %v727
        %760 = vst [vmem:[%s217 + $0x78] sm:$0xff] %v728
        %761 = vst [vmem:[%s217 + $0x80] sm:$0xff] %v729
        %762 = vst [vmem:[%s217 + $0x88] sm:$0xff] %v730
        %763 = vst [vmem:[%s217 + $0x90] sm:$0xff] %v731
        %764 = vst [vmem:[%s217 + $0x98] sm:$0xff] %v732
        %765 = vst [vmem:[%s217 + $0xa0] sm:$0xff] %v733
        %766 = vst [vmem:[%s217 + $0xa8] sm:$0xff] %v734
        %767 = vst [vmem:[%s217 + $0xb0] sm:$0xff] %v735
        %768 = vst [vmem:[%s217 + $0xb8] sm:$0xff] %v736
        %769 = vst [vmem:[%s217 + $0xc0] sm:$0xff] %v737
        %770 = vst [vmem:[%s217 + $0xc8] sm:$0xff] %v738
        %771 = vst [vmem:[%s217 + $0xd0] sm:$0xff] %v739
        %772 = vst [vmem:[%s217 + $0xd8] sm:$0xff] %v740
        %773 = vst [vmem:[%s217 + $0xe0] sm:$0xff] %v741
        %774 = vst [vmem:[%s217 + $0xe8] sm:$0xff] %v742
        %775 = vst [vmem:[%s217 + $0xf0] sm:$0xff] %v743
        %776 = vst [vmem:[%s217 + $0xf8] sm:$0xff] %v744
      $region40: #{encoder_forward.24} parent=31 // pred_fallthru
        _
      %s777 = smul.u32 32, %s18
      %p778 = scmp.lt.s32.totalorder %s777, 63
      %s779 = scalar_select %p778, %s777, 63
      %s780 = smul.addr %s779, 8
      %s781 = scalar_lea.vmem %s3, %s780
      // Predicated region
      $region41: #{encoder_forward.24} parent=31 // pred_check
        %p782 = pneg %p119
      $region42: #{encoder_forward.24} parent=31 // pred_check_branch
        %784 = sbr.rel (%p782) target = $region44
      $region43: #{encoder_forward.24} parent=31 // pred_region
        %s785 = smul.u32 32, %s18
      $region44: #{encoder_forward.24} parent=31 // pred_fallthru
        _
    $region32: #{encoder_forward.24} parent=5 // pred_fallthru
      _
    %p786 = scmp.le.s32.totalorder 2, %s9
    // Predicated region
    $region45: #{encoder_forward.24} parent=5 // pred_check
      %p787 = pneg %p786
    $region46: #{encoder_forward.24} parent=5 // pred_check_branch
      %789 = sbr.rel (%p787) target = $region48
    $region47: #{encoder_forward.24} parent=5 // pred_region
      %s790 = ssub.s32 %s9, 2
      // Predicated region
      $region49: #{encoder_forward.24} parent=47 // pred_check
        %p791 = pneg %p125
      $region50: #{encoder_forward.24} parent=47 // pred_check_branch
        %793 = sbr.rel (%p791) target = $region52
      $region51: #{encoder_forward.24} parent=47 // pred_region
        %s794 = smul.u32 32, %s20
        %p795 = scmp.lt.s32.totalorder %s794, 63
        %s796 = scalar_select %p795, %s794, 63
        %s797 = smul.addr %s796, 8
        %s798 = scalar_lea.vmem %s3, %s797
      $region52: #{encoder_forward.24} parent=47 // pred_fallthru
        _
    $region48: #{encoder_forward.24} parent=5 // pred_fallthru
      _
  $region6: #{encoder_forward.24} parent=0 // loop_footer
    %s13 = sadd.s32 1, %s9
  $region7: #{encoder_forward.24} parent=0 // loop_footer_branch
    %8 = sbr.rel target = $region3
  $region8: #{encoder_forward.24} parent=0 // loop_exit
    _

// kernel: encoder_forward.27
$region0: #{encoder_forward.27}
  #allocation0 [shape = 'u32[]', space=smem, size = 0x4, offset = 0x4, fixed_abs, tag = 'smem constant byte address 0x4 - core index']
  #allocation1 [shape = 'u32[72,128]{1,0:T(1,128)}', space=vmem, size = 0x9000, scoped, tag = 'internal scratch']
  %s0 = inlined_call_operand.vmem [shape: bf16[128,16], index: 0, kind: input, shape index: {}]
  %s1 = inlined_call_operand.vmem [shape: bf16[128,16], index: 1, kind: input, shape index: {}]
  %s2 = inlined_call_operand.vmem [shape: bf16[16,128], index: 2, kind: input, shape index: {}]
  %s3 = inlined_call_operand.vmem [shape: bf16[16,128], index: 3, kind: input, shape index: {}]
  %s4 = inlined_call_operand.vmem [shape: f32[1,128], index: 4, kind: input, shape index: {}]
  %s5 = inlined_call_operand.hbm [shape: f32[128,128], index: 5, kind: output, shape index: {}]
  %s6 = sld [smem:[#allocation0]]
  $region30: #{encoder_forward.27} parent=0
    _
  %s8 = ssub.s32 1, %s6
  %s9 = scalar_select 0, %s8, %s6
  $region1: #{encoder_forward.27} parent=0
    #allocation2 [shape = 'u8[65536]{0}', space=vmem, size = 0x10000, scoped, tag = 'output window, operand 0, single buffered']
    #allocation3 [shape = 's32[1]{0}', space=sflag, size = 0x4, scoped, tag = 'scoped memory for encoder_forward.27']
    %10 = vsyncpa [#allocation3], 0
    // Predicated region
    $region2: #{encoder_forward.27} parent=1 // pred_check
      _
    $region3: #{encoder_forward.27} parent=1 // pred_check_branch
      %12 = sbr.rel (0) target = $region5
    $region4: #{encoder_forward.27} parent=1 // pred_region
      _
    $region5: #{encoder_forward.27} parent=1 // pred_fallthru
      _
    // Predicated region
    $region6: #{encoder_forward.27} parent=1 // pred_check
      _
    $region7: #{encoder_forward.27} parent=1 // pred_check_branch
      %14 = sbr.rel (0) target = $region9
    $region8: #{encoder_forward.27} parent=1 // pred_region
      _
    $region9: #{encoder_forward.27} parent=1 // pred_fallthru
      _
    // Predicated region
    $region10: #{encoder_forward.27} parent=1 // pred_check
      _
    $region11: #{encoder_forward.27} parent=1 // pred_check_branch
      %16 = sbr.rel (0) target = $region13
    $region12: #{encoder_forward.27} parent=1 // pred_region
      _
    $region13: #{encoder_forward.27} parent=1 // pred_fallthru
      _
    // Predicated region
    $region14: #{encoder_forward.27} parent=1 // pred_check
      _
    $region15: #{encoder_forward.27} parent=1 // pred_check_branch
      %18 = sbr.rel (0) target = $region17
    $region16: #{encoder_forward.27} parent=1 // pred_region
      _
    $region17: #{encoder_forward.27} parent=1 // pred_fallthru
      _
    // Predicated region
    $region18: #{encoder_forward.27} parent=1 // pred_check
      _
    $region19: #{encoder_forward.27} parent=1 // pred_check_branch
      %20 = sbr.rel (0) target = $region21
    $region20: #{encoder_forward.27} parent=1 // pred_region
      _
    $region21: #{encoder_forward.27} parent=1 // pred_fallthru
      _
    %v22 = vld [vmem:[%s0] sm:$0xf]
    %v23 = vld [vmem:[%s0 + $0x4] sm:$0xf]
    %v24 = vld [vmem:[%s0 + $0x8] sm:$0xf]
    %v25 = vld [vmem:[%s0 + $0xc] sm:$0xf]
    %v26 = vld [vmem:[%s0 + $0x10] sm:$0xf]
    %v27 = vld [vmem:[%s0 + $0x14] sm:$0xf]
    %v28 = vld [vmem:[%s0 + $0x18] sm:$0xf]
    %v29 = vld [vmem:[%s0 + $0x1c] sm:$0xf]
    %v30 = vld [vmem:[%s0 + $0x20] sm:$0xf]
    %v31 = vld [vmem:[%s0 + $0x24] sm:$0xf]
    %v32 = vld [vmem:[%s0 + $0x28] sm:$0xf]
    %v33 = vld [vmem:[%s0 + $0x2c] sm:$0xf]
    %v34 = vld [vmem:[%s0 + $0x30] sm:$0xf]
    %v35 = vld [vmem:[%s0 + $0x34] sm:$0xf]
    %v36 = vld [vmem:[%s0 + $0x38] sm:$0xf]
    %v37 = vld [vmem:[%s0 + $0x3c] sm:$0xf]
    %v38 = vld [vmem:[%s2] sm:$0xf]
    %v39 = vld [vmem:[%s2 + $0x4] sm:$0xf]
    %v40 = vld [vmem:[%s1] sm:$0xf]
    %v41 = vld [vmem:[%s1 + $0x4] sm:$0xf]
    %v42 = vld [vmem:[%s1 + $0x8] sm:$0xf]
    %v43 = vld [vmem:[%s1 + $0xc] sm:$0xf]
    %v44 = vld [vmem:[%s1 + $0x10] sm:$0xf]
    %v45 = vld [vmem:[%s1 + $0x14] sm:$0xf]
    %v46 = vld [vmem:[%s1 + $0x18] sm:$0xf]
    %v47 = vld [vmem:[%s1 + $0x1c] sm:$0xf]
    %v48 = vld [vmem:[%s1 + $0x20] sm:$0xf]
    %v49 = vld [vmem:[%s1 + $0x24] sm:$0xf]
    %v50 = vld [vmem:[%s1 + $0x28] sm:$0xf]
    %v51 = vld [vmem:[%s1 + $0x2c] sm:$0xf]
    %v52 = vld [vmem:[%s1 + $0x30] sm:$0xf]
    %v53 = vld [vmem:[%s1 + $0x34] sm:$0xf]
    %v54 = vld [vmem:[%s1 + $0x38] sm:$0xf]
    %v55 = vld [vmem:[%s1 + $0x3c] sm:$0xf]
    %v56 = vld [vmem:[%s3] sm:$0xf]
    %v57 = vld [vmem:[%s3 + $0x4] sm:$0xf]
    %v74 = vunpack.c.l.b16 %v40
    %v75 = vunpack.c.l.b16 %v41
    %v76 = vunpack.c.l.b16 %v42
    %v77 = vunpack.c.l.b16 %v43
    %v78 = vunpack.c.l.b16 %v44
    %v79 = vunpack.c.l.b16 %v45
    %v80 = vunpack.c.l.b16 %v46
    %v81 = vunpack.c.l.b16 %v47
    %v82 = vunpack.c.l.b16 %v48
    %v83 = vunpack.c.l.b16 %v49
    %v84 = vunpack.c.l.b16 %v50
    %v85 = vunpack.c.l.b16 %v51
    %v86 = vunpack.c.l.b16 %v52
    %v87 = vunpack.c.l.b16 %v53
    %v88 = vunpack.c.l.b16 %v54
    %v89 = vunpack.c.l.b16 %v55
    %v90 = vpack.c.b16 %v75, %v74
    %v91 = vpack.c.b16 %v77, %v76
    %v92 = vpack.c.b16 %v79, %v78
    %v93 = vpack.c.b16 %v81, %v80
    %v94 = vpack.c.b16 %v83, %v82
    %v95 = vpack.c.b16 %v85, %v84
    %v96 = vpack.c.b16 %v87, %v86
    %v97 = vpack.c.b16 %v89, %v88
    %v100 = vunpack.c.l.b16 %v56
    %v101 = vunpack.c.l.b16 %v57
    %v102 = vpack.c.b16 %v101, %v100
    %vm104 = vcmask 130048
    %v106 = vsel %vm104, %v90, 0
    %v109 = vsel %vm104, %v91, 0
    %v112 = vsel %vm104, %v92, 0
    %v115 = vsel %vm104, %v93, 0
    %v118 = vsel %vm104, %v94, 0
    %v121 = vsel %vm104, %v95, 0
    %v124 = vsel %vm104, %v96, 0
    %v127 = vsel %vm104, %v97, 0
    %129 = vmatpush.bf16.msra.mxu0 0
    %130 = vmatpush.bf16.msra.mxu0 0
    %131 = vmatpush.bf16.msra.mxu0 0
    %132 = vmatpush.bf16.msra.mxu0 0
    %133 = vmatpush.bf16.msra.mxu0 0
    %134 = vmatpush.bf16.msra.mxu0 0
    %135 = vmatpush.bf16.msra.mxu0 0
    %136 = vmatpush.bf16.msra.mxu0 %v102
    %137 = vmatmul.bf16.gmra.mxu0 %v106
    %v138 = vpop.f32.mrf.mxu0
    %v139 = vadd.f32 0.0, %v138
    %v140 = vpop.f32.mrf.mxu0
    %v141 = vadd.f32 0.0, %v140
    %142 = vmatmul.bf16.gmra.mxu0 %v109
    %v143 = vpop.f32.mrf.mxu0
    %v144 = vadd.f32 0.0, %v143
    %v145 = vpop.f32.mrf.mxu0
    %v146 = vadd.f32 0.0, %v145
    %147 = vmatmul.bf16.gmra.mxu0 %v112
    %v148 = vpop.f32.mrf.mxu0
    %v149 = vadd.f32 0.0, %v148
    %v150 = vpop.f32.mrf.mxu0
    %v151 = vadd.f32 0.0, %v150
    %152 = vmatmul.bf16.gmra.mxu0 %v115
    %v153 = vpop.f32.mrf.mxu0
    %v154 = vadd.f32 0.0, %v153
    %v155 = vpop.f32.mrf.mxu0
    %v156 = vadd.f32 0.0, %v155
    %157 = vmatmul.bf16.gmra.mxu0 %v118
    %v158 = vpop.f32.mrf.mxu0
    %v159 = vadd.f32 0.0, %v158
    %v160 = vpop.f32.mrf.mxu0
    %v161 = vadd.f32 0.0, %v160
    %162 = vmatmul.bf16.gmra.mxu0 %v121
    %v163 = vpop.f32.mrf.mxu0
    %v164 = vadd.f32 0.0, %v163
    %v165 = vpop.f32.mrf.mxu0
    %v166 = vadd.f32 0.0, %v165
    %167 = vmatmul.bf16.gmra.mxu0 %v124
    %v168 = vpop.f32.mrf.mxu0
    %v169 = vadd.f32 0.0, %v168
    %v170 = vpop.f32.mrf.mxu0
    %v171 = vadd.f32 0.0, %v170
    %172 = vmatmul.bf16.gmra.mxu0 %v127
    %v173 = vpop.f32.mrf.mxu0
    %v174 = vadd.f32 0.0, %v173
    %v175 = vpop.f32.mrf.mxu0
    %v176 = vadd.f32 0.0, %v175
    %177 = vdwg.mxu0
    %v194 = vunpack.c.l.b16 %v22
    %v195 = vunpack.c.l.b16 %v23
    %v196 = vunpack.c.l.b16 %v24
    %v197 = vunpack.c.l.b16 %v25
    %v198 = vunpack.c.l.b16 %v26
    %v199 = vunpack.c.l.b16 %v27
    %v200 = vunpack.c.l.b16 %v28
    %v201 = vunpack.c.l.b16 %v29
    %v202 = vunpack.c.l.b16 %v30
    %v203 = vunpack.c.l.b16 %v31
    %v204 = vunpack.c.l.b16 %v32
    %v205 = vunpack.c.l.b16 %v33
    %v206 = vunpack.c.l.b16 %v34
    %v207 = vunpack.c.l.b16 %v35
    %v208 = vunpack.c.l.b16 %v36
    %v209 = vunpack.c.l.b16 %v37
    %v210 = vpack.c.b16 %v195, %v194
    %v211 = vpack.c.b16 %v197, %v196
    %v212 = vpack.c.b16 %v199, %v198
    %v213 = vpack.c.b16 %v201, %v200
    %v214 = vpack.c.b16 %v203, %v202
    %v215 = vpack.c.b16 %v205, %v204
    %v216 = vpack.c.b16 %v207, %v206
    %v217 = vpack.c.b16 %v209, %v208
    %v220 = vunpack.c.l.b16 %v38
    %v221 = vunpack.c.l.b16 %v39
    %v222 = vpack.c.b16 %v221, %v220
    %v225 = vsel %vm104, %v210, 0
    %v228 = vsel %vm104, %v211, 0
    %v231 = vsel %vm104, %v212, 0
    %v234 = vsel %vm104, %v213, 0
    %v237 = vsel %vm104, %v214, 0
    %v240 = vsel %vm104, %v215, 0
    %v243 = vsel %vm104, %v216, 0
    %v246 = vsel %vm104, %v217, 0
    %248 = vmatpush.bf16.msra.mxu0 0
    %249 = vmatpush.bf16.msra.mxu0 0
    %250 = vmatpush.bf16.msra.mxu0 0
    %251 = vmatpush.bf16.msra.mxu0 0
    %252 = vmatpush.bf16.msra.mxu0 0
    %253 = vmatpush.bf16.msra.mxu0 0
    %254 = vmatpush.bf16.msra.mxu0 0
    %255 = vmatpush.bf16.msra.mxu0 %v222
    %256 = vmatmul.bf16.gmra.mxu0 %v225
    %v257 = vpop.f32.mrf.mxu0
    %v258 = vadd.f32 %v139, %v257
    %v259 = vpop.f32.mrf.mxu0
    %v260 = vadd.f32 %v141, %v259
    %261 = vmatmul.bf16.gmra.mxu0 %v228
    %v262 = vpop.f32.mrf.mxu0
    %v263 = vadd.f32 %v144, %v262
    %v264 = vpop.f32.mrf.mxu0
    %v265 = vadd.f32 %v146, %v264
    %266 = vmatmul.bf16.gmra.mxu0 %v231
    %v267 = vpop.f32.mrf.mxu0
    %v268 = vadd.f32 %v149, %v267
    %v269 = vpop.f32.mrf.mxu0
    %v270 = vadd.f32 %v151, %v269
    %271 = vmatmul.bf16.gmra.mxu0 %v234
    %v272 = vpop.f32.mrf.mxu0
    %v273 = vadd.f32 %v154, %v272
    %v274 = vpop.f32.mrf.mxu0
    %v275 = vadd.f32 %v156, %v274
    %276 = vmatmul.bf16.gmra.mxu0 %v237
    %v277 = vpop.f32.mrf.mxu0
    %v278 = vadd.f32 %v159, %v277
    %v279 = vpop.f32.mrf.mxu0
    %v280 = vadd.f32 %v161, %v279
    %281 = vmatmul.bf16.gmra.mxu0 %v240
    %v282 = vpop.f32.mrf.mxu0
    %v283 = vadd.f32 %v164, %v282
    %v284 = vpop.f32.mrf.mxu0
    %v285 = vadd.f32 %v166, %v284
    %286 = vmatmul.bf16.gmra.mxu0 %v243
    %v287 = vpop.f32.mrf.mxu0
    %v288 = vadd.f32 %v169, %v287
    %v289 = vpop.f32.mrf.mxu0
    %v290 = vadd.f32 %v171, %v289
    %291 = vmatmul.bf16.gmra.mxu0 %v246
    %v292 = vpop.f32.mrf.mxu0
    %v293 = vadd.f32 %v174, %v292
    %v294 = vpop.f32.mrf.mxu0
    %v295 = vadd.f32 %v176, %v294
    %296 = vdwg.mxu0
    %v297 = vld [vmem:[%s4] sm:$0x1]
    %v299 = vperm.slane %v297, 0
    %v301 = vadd.f32 %v258, %v299
    %v302 = vadd.f32 %v260, %v299
    %v303 = vadd.f32 %v263, %v299
    %v304 = vadd.f32 %v265, %v299
    %v305 = vadd.f32 %v268, %v299
    %v306 = vadd.f32 %v270, %v299
    %v307 = vadd.f32 %v273, %v299
    %v308 = vadd.f32 %v275, %v299
    %v309 = vadd.f32 %v278, %v299
    %v310 = vadd.f32 %v280, %v299
    %v311 = vadd.f32 %v283, %v299
    %v312 = vadd.f32 %v285, %v299
    %v313 = vadd.f32 %v288, %v299
    %v314 = vadd.f32 %v290, %v299
    %v315 = vadd.f32 %v293, %v299
    %v316 = vadd.f32 %v295, %v299
    %v317 = vmax.f32 %v301, 0.0
    %v318 = vmax.f32 %v302, 0.0
    %v319 = vmax.f32 %v303, 0.0
    %v320 = vmax.f32 %v304, 0.0
    %v321 = vmax.f32 %v305, 0.0
    %v322 = vmax.f32 %v306, 0.0
    %v323 = vmax.f32 %v307, 0.0
    %v324 = vmax.f32 %v308, 0.0
    %v325 = vmax.f32 %v309, 0.0
    %v326 = vmax.f32 %v310, 0.0
    %v327 = vmax.f32 %v311, 0.0
    %v328 = vmax.f32 %v312, 0.0
    %v329 = vmax.f32 %v313, 0.0
    %v330 = vmax.f32 %v314, 0.0
    %v331 = vmax.f32 %v315, 0.0
    %v332 = vmax.f32 %v316, 0.0
    %333 = vst [vmem:[#allocation2] sm:$0xff] %v317
    %334 = vst [vmem:[#allocation2 + $0x8] sm:$0xff] %v318
    %335 = vst [vmem:[#allocation2 + $0x10] sm:$0xff] %v319
    %336 = vst [vmem:[#allocation2 + $0x18] sm:$0xff] %v320
    %337 = vst [vmem:[#allocation2 + $0x20] sm:$0xff] %v321
    %338 = vst [vmem:[#allocation2 + $0x28] sm:$0xff] %v322
    %339 = vst [vmem:[#allocation2 + $0x30] sm:$0xff] %v323
    %340 = vst [vmem:[#allocation2 + $0x38] sm:$0xff] %v324
    %341 = vst [vmem:[#allocation2 + $0x40] sm:$0xff] %v325
    %342 = vst [vmem:[#allocation2 + $0x48] sm:$0xff] %v326
    %343 = vst [vmem:[#allocation2 + $0x50] sm:$0xff] %v327
    %344 = vst [vmem:[#allocation2 + $0x58] sm:$0xff] %v328
    %345 = vst [vmem:[#allocation2 + $0x60] sm:$0xff] %v329
    %346 = vst [vmem:[#allocation2 + $0x68] sm:$0xff] %v330
    %347 = vst [vmem:[#allocation2 + $0x70] sm:$0xff] %v331
    %348 = vst [vmem:[#allocation2 + $0x78] sm:$0xff] %v332
    // Predicated region
    $region22: #{encoder_forward.27} parent=1 // pred_check
      _
    $region23: #{encoder_forward.27} parent=1 // pred_check_branch
      %350 = sbr.rel (0) target = $region25
    $region24: #{encoder_forward.27} parent=1 // pred_region
      %352 = vsyncadd [#allocation3], 0
      %s353 = sshll.u32 [#allocation2], 4
      %s354 = int_to_ptr.vmem [resolvable:$true] %s353
      %s355 = sshll.u32 %s5, 4
      %s356 = int_to_ptr.hbm [resolvable:$true] %s355
      %361 = dma.vmem_to_hbm [thread:$0]  %s354, 2048, %s356, [#allocation3], 128, 128, 8
    $region25: #{encoder_forward.27} parent=1 // pred_fallthru
      _
    // Predicated region
    $region26: #{encoder_forward.27} parent=1 // pred_check
      _
    $region27: #{encoder_forward.27} parent=1 // pred_check_branch
      %363 = sbr.rel (0) target = $region29
    $region28: #{encoder_forward.27} parent=1 // pred_region
      %365 = dma.done [#allocation3], 2048
    $region29: #{encoder_forward.27} parent=1 // pred_fallthru
      _
    %366 = vsyncpa [#allocation3], 1

// kernel: encoder_forward.25
$region0: #{encoder_forward.25}
  #allocation0 [shape = 'u32[]', space=smem, size = 0x4, offset = 0x4, fixed_abs, tag = 'smem constant byte address 0x4 - core index']
  #allocation1 [shape = 'u32[72,128]{1,0:T(1,128)}', space=vmem, size = 0x9000, scoped, tag = 'internal scratch']
  #allocation2 [shape = 'f32[128,128]{1,0:T(8,128)}', space=vmem, size = 0x10000, scoped, tag = 'scratch operand']
  %s0 = inlined_call_operand.vmem [shape: bf16[128,72], index: 0, kind: input, shape index: {}]
  %s1 = inlined_call_operand.vmem [shape: bf16[72,128], index: 1, kind: input, shape index: {}]
  %s2 = inlined_call_operand.vmem [shape: f32[1,128], index: 2, kind: input, shape index: {}]
  %s3 = inlined_call_operand.vmem [shape: f32[128,2], index: 3, kind: input, shape index: {}]
  %s4 = inlined_call_operand.vmem [shape: f32[128,128], index: 4, kind: output, shape index: {}]
  %s5 = sld [smem:[#allocation0]]
  $region34: #{encoder_forward.25} parent=0
    _
  %s7 = ssub.s32 1, %s5
  %s8 = scalar_select 0, %s7, %s5
  // Predicated region
  $region2: #{encoder_forward.25} parent=0 // pred_check
    _
  $region3: #{encoder_forward.25} parent=0 // pred_check_branch
    %10 = sbr.rel (0) target = $region5
  $region4: #{encoder_forward.25} parent=0 // pred_region
    _
  $region5: #{encoder_forward.25} parent=0 // pred_fallthru
    _
  // Predicated region
  $region6: #{encoder_forward.25} parent=0 // pred_check
    _
  $region7: #{encoder_forward.25} parent=0 // pred_check_branch
    %12 = sbr.rel (0) target = $region9
  $region8: #{encoder_forward.25} parent=0 // pred_region
    _
  $region9: #{encoder_forward.25} parent=0 // pred_fallthru
    _
  // Predicated region
  $region10: #{encoder_forward.25} parent=0 // pred_check
    _
  $region11: #{encoder_forward.25} parent=0 // pred_check_branch
    %14 = sbr.rel (0) target = $region13
  $region12: #{encoder_forward.25} parent=0 // pred_region
    _
  $region13: #{encoder_forward.25} parent=0 // pred_fallthru
    _
  // Predicated region
  $region14: #{encoder_forward.25} parent=0 // pred_check
    _
  $region15: #{encoder_forward.25} parent=0 // pred_check_branch
    %16 = sbr.rel (0) target = $region17
  $region16: #{encoder_forward.25} parent=0 // pred_region
    _
  $region17: #{encoder_forward.25} parent=0 // pred_fallthru
    _
  %p18 = scmp.eq.s32.totalorder 0, 0
  // Predicated region
  $region18: #{encoder_forward.25} parent=0 // pred_check
    %p19 = pneg %p18
  $region19: #{encoder_forward.25} parent=0 // pred_check_branch
    %21 = sbr.rel (%p19) target = $region21
  $region20: #{encoder_forward.25} parent=0 // pred_region
    %22 = vst [vmem:[#allocation2] sm:$0xff] 0.0
    %23 = vst [vmem:[#allocation2 + $0x8] sm:$0xff] 0.0
    %24 = vst [vmem:[#allocation2 + $0x10] sm:$0xff] 0.0
    %25 = vst [vmem:[#allocation2 + $0x18] sm:$0xff] 0.0
    %26 = vst [vmem:[#allocation2 + $0x20] sm:$0xff] 0.0
    %27 = vst [vmem:[#allocation2 + $0x28] sm:$0xff] 0.0
    %28 = vst [vmem:[#allocation2 + $0x30] sm:$0xff] 0.0
    %29 = vst [vmem:[#allocation2 + $0x38] sm:$0xff] 0.0
    %30 = vst [vmem:[#allocation2 + $0x40] sm:$0xff] 0.0
    %31 = vst [vmem:[#allocation2 + $0x48] sm:$0xff] 0.0
    %32 = vst [vmem:[#allocation2 + $0x50] sm:$0xff] 0.0
    %33 = vst [vmem:[#allocation2 + $0x58] sm:$0xff] 0.0
    %34 = vst [vmem:[#allocation2 + $0x60] sm:$0xff] 0.0
    %35 = vst [vmem:[#allocation2 + $0x68] sm:$0xff] 0.0
    %36 = vst [vmem:[#allocation2 + $0x70] sm:$0xff] 0.0
    %37 = vst [vmem:[#allocation2 + $0x78] sm:$0xff] 0.0
  $region21: #{encoder_forward.25} parent=0 // pred_fallthru
    _
  %v38 = vld [vmem:[#allocation2] sm:$0xff]
  %v39 = vld [vmem:[#allocation2 + $0x8] sm:$0xff]
  %v40 = vld [vmem:[#allocation2 + $0x10] sm:$0xff]
  %v41 = vld [vmem:[#allocation2 + $0x18] sm:$0xff]
  %v42 = vld [vmem:[#allocation2 + $0x20] sm:$0xff]
  %v43 = vld [vmem:[#allocation2 + $0x28] sm:$0xff]
  %v44 = vld [vmem:[#allocation2 + $0x30] sm:$0xff]
  %v45 = vld [vmem:[#allocation2 + $0x38] sm:$0xff]
  %v46 = vld [vmem:[#allocation2 + $0x40] sm:$0xff]
  %v47 = vld [vmem:[#allocation2 + $0x48] sm:$0xff]
  %v48 = vld [vmem:[#allocation2 + $0x50] sm:$0xff]
  %v49 = vld [vmem:[#allocation2 + $0x58] sm:$0xff]
  %v50 = vld [vmem:[#allocation2 + $0x60] sm:$0xff]
  %v51 = vld [vmem:[#allocation2 + $0x68] sm:$0xff]
  %v52 = vld [vmem:[#allocation2 + $0x70] sm:$0xff]
  %v53 = vld [vmem:[#allocation2 + $0x78] sm:$0xff]
  %v54 = vld [vmem:[%s0] sm:$0xf]
  %v55 = vld [vmem:[%s0 + $0x4] sm:$0xf]
  %v56 = vld [vmem:[%s0 + $0x8] sm:$0xf]
  %v57 = vld [vmem:[%s0 + $0xc] sm:$0xf]
  %v58 = vld [vmem:[%s0 + $0x10] sm:$0xf]
  %v59 = vld [vmem:[%s0 + $0x14] sm:$0xf]
  %v60 = vld [vmem:[%s0 + $0x18] sm:$0xf]
  %v61 = vld [vmem:[%s0 + $0x1c] sm:$0xf]
  %v62 = vld [vmem:[%s0 + $0x20] sm:$0xf]
  %v63 = vld [vmem:[%s0 + $0x24] sm:$0xf]
  %v64 = vld [vmem:[%s0 + $0x28] sm:$0xf]
  %v65 = vld [vmem:[%s0 + $0x2c] sm:$0xf]
  %v66 = vld [vmem:[%s0 + $0x30] sm:$0xf]
  %v67 = vld [vmem:[%s0 + $0x34] sm:$0xf]
  %v68 = vld [vmem:[%s0 + $0x38] sm:$0xf]
  %v69 = vld [vmem:[%s0 + $0x3c] sm:$0xf]
  %v70 = vld [vmem:[%s1] sm:$0xf]
  %v71 = vld [vmem:[%s1 + $0x4] sm:$0xf]
  %v72 = vld [vmem:[%s1 + $0x8] sm:$0xf]
  %v73 = vld [vmem:[%s1 + $0xc] sm:$0xf]
  %v74 = vld [vmem:[%s1 + $0x10] sm:$0xf]
  %v75 = vld [vmem:[%s1 + $0x14] sm:$0xf]
  %v76 = vld [vmem:[%s1 + $0x18] sm:$0xf]
  %v77 = vld [vmem:[%s1 + $0x1c] sm:$0xf]
  %v78 = vld [vmem:[%s1 + $0x20] sm:$0xf]
  %v95 = vunpack.c.l.b16 %v54
  %v96 = vunpack.c.l.b16 %v55
  %v97 = vunpack.c.l.b16 %v56
  %v98 = vunpack.c.l.b16 %v57
  %v99 = vunpack.c.l.b16 %v58
  %v100 = vunpack.c.l.b16 %v59
  %v101 = vunpack.c.l.b16 %v60
  %v102 = vunpack.c.l.b16 %v61
  %v103 = vunpack.c.l.b16 %v62
  %v104 = vunpack.c.l.b16 %v63
  %v105 = vunpack.c.l.b16 %v64
  %v106 = vunpack.c.l.b16 %v65
  %v107 = vunpack.c.l.b16 %v66
  %v108 = vunpack.c.l.b16 %v67
  %v109 = vunpack.c.l.b16 %v68
  %v110 = vunpack.c.l.b16 %v69
  %v111 = vpack.c.b16 %v96, %v95
  %v112 = vpack.c.b16 %v98, %v97
  %v113 = vpack.c.b16 %v100, %v99
  %v114 = vpack.c.b16 %v102, %v101
  %v115 = vpack.c.b16 %v104, %v103
  %v116 = vpack.c.b16 %v106, %v105
  %v117 = vpack.c.b16 %v108, %v107
  %v118 = vpack.c.b16 %v110, %v109
  %v128 = vunpack.c.l.b16 %v70
  %v129 = vunpack.c.l.b16 %v71
  %v130 = vunpack.c.l.b16 %v72
  %v131 = vunpack.c.l.b16 %v73
  %v132 = vunpack.c.l.b16 %v74
  %v133 = vunpack.c.l.b16 %v75
  %v134 = vunpack.c.l.b16 %v76
  %v135 = vunpack.c.l.b16 %v77
  %v136 = vunpack.c.l.b16 %v78
  %v137 = vpack.c.b16 %v129, %v128
  %v138 = vpack.c.b16 %v131, %v130
  %v139 = vpack.c.b16 %v133, %v132
  %v140 = vpack.c.b16 %v135, %v134
  %v141 = vpack.c.b16 %v136, %v136
  %vm146 = vcmask 588800
  %v148 = vsel %vm146, %v111, 0
  %v151 = vsel %vm146, %v112, 0
  %v154 = vsel %vm146, %v113, 0
  %v157 = vsel %vm146, %v114, 0
  %v160 = vsel %vm146, %v115, 0
  %v163 = vsel %vm146, %v116, 0
  %v166 = vsel %vm146, %v117, 0
  %v169 = vsel %vm146, %v118, 0
  %vm171 = vcmask 1043456
  %v173 = vsel %vm171, %v141, 0
  %175 = vmatpush.bf16.msra.mxu0 0
  %176 = vmatpush.bf16.msra.mxu0 0
  %177 = vmatpush.bf16.msra.mxu0 0
  %178 = vmatpush.bf16.msra.mxu0 %v173
  %179 = vmatpush.bf16.msra.mxu0 %v140
  %180 = vmatpush.bf16.msra.mxu0 %v139
  %181 = vmatpush.bf16.msra.mxu0 %v138
  %182 = vmatpush.bf16.msra.mxu0 %v137
  %183 = vmatmul.bf16.gmra.mxu0 %v148
  %v184 = vpop.f32.mrf.mxu0
  %v185 = vadd.f32 0.0, %v184
  %v186 = vpop.f32.mrf.mxu0
  %v187 = vadd.f32 0.0, %v186
  %188 = vmatmul.bf16.gmra.mxu0 %v151
  %v189 = vpop.f32.mrf.mxu0
  %v190 = vadd.f32 0.0, %v189
  %v191 = vpop.f32.mrf.mxu0
  %v192 = vadd.f32 0.0, %v191
  %193 = vmatmul.bf16.gmra.mxu0 %v154
  %v194 = vpop.f32.mrf.mxu0
  %v195 = vadd.f32 0.0, %v194
  %v196 = vpop.f32.mrf.mxu0
  %v197 = vadd.f32 0.0, %v196
  %198 = vmatmul.bf16.gmra.mxu0 %v157
  %v199 = vpop.f32.mrf.mxu0
  %v200 = vadd.f32 0.0, %v199
  %v201 = vpop.f32.mrf.mxu0
  %v202 = vadd.f32 0.0, %v201
  %203 = vmatmul.bf16.gmra.mxu0 %v160
  %v204 = vpop.f32.mrf.mxu0
  %v205 = vadd.f32 0.0, %v204
  %v206 = vpop.f32.mrf.mxu0
  %v207 = vadd.f32 0.0, %v206
  %208 = vmatmul.bf16.gmra.mxu0 %v163
  %v209 = vpop.f32.mrf.mxu0
  %v210 = vadd.f32 0.0, %v209
  %v211 = vpop.f32.mrf.mxu0
  %v212 = vadd.f32 0.0, %v211
  %213 = vmatmul.bf16.gmra.mxu0 %v166
  %v214 = vpop.f32.mrf.mxu0
  %v215 = vadd.f32 0.0, %v214
  %v216 = vpop.f32.mrf.mxu0
  %v217 = vadd.f32 0.0, %v216
  %218 = vmatmul.bf16.gmra.mxu0 %v169
  %v219 = vpop.f32.mrf.mxu0
  %v220 = vadd.f32 0.0, %v219
  %v221 = vpop.f32.mrf.mxu0
  %v222 = vadd.f32 0.0, %v221
  %223 = vdwg.mxu0
  %v224 = vadd.f32 %v38, %v185
  %v225 = vadd.f32 %v39, %v187
  %v226 = vadd.f32 %v40, %v190
  %v227 = vadd.f32 %v41, %v192
  %v228 = vadd.f32 %v42, %v195
  %v229 = vadd.f32 %v43, %v197
  %v230 = vadd.f32 %v44, %v200
  %v231 = vadd.f32 %v45, %v202
  %v232 = vadd.f32 %v46, %v205
  %v233 = vadd.f32 %v47, %v207
  %v234 = vadd.f32 %v48, %v210
  %v235 = vadd.f32 %v49, %v212
  %v236 = vadd.f32 %v50, %v215
  %v237 = vadd.f32 %v51, %v217
  %v238 = vadd.f32 %v52, %v220
  %v239 = vadd.f32 %v53, %v222
  %240 = vst [vmem:[#allocation2] sm:$0xff] %v224
  %241 = vst [vmem:[#allocation2 + $0x8] sm:$0xff] %v225
  %242 = vst [vmem:[#allocation2 + $0x10] sm:$0xff] %v226
  %243 = vst [vmem:[#allocation2 + $0x18] sm:$0xff] %v227
  %244 = vst [vmem:[#allocation2 + $0x20] sm:$0xff] %v228
  %245 = vst [vmem:[#allocation2 + $0x28] sm:$0xff] %v229
  %246 = vst [vmem:[#allocation2 + $0x30] sm:$0xff] %v230
  %247 = vst [vmem:[#allocation2 + $0x38] sm:$0xff] %v231
  %248 = vst [vmem:[#allocation2 + $0x40] sm:$0xff] %v232
  %249 = vst [vmem:[#allocation2 + $0x48] sm:$0xff] %v233
  %250 = vst [vmem:[#allocation2 + $0x50] sm:$0xff] %v234
  %251 = vst [vmem:[#allocation2 + $0x58] sm:$0xff] %v235
  %252 = vst [vmem:[#allocation2 + $0x60] sm:$0xff] %v236
  %253 = vst [vmem:[#allocation2 + $0x68] sm:$0xff] %v237
  %254 = vst [vmem:[#allocation2 + $0x70] sm:$0xff] %v238
  %255 = vst [vmem:[#allocation2 + $0x78] sm:$0xff] %v239
  // Predicated region
  $region22: #{encoder_forward.25} parent=0 // pred_check
    %p256 = pneg %p18
  $region23: #{encoder_forward.25} parent=0 // pred_check_branch
    %258 = sbr.rel (%p256) target = $region25
  $region24: #{encoder_forward.25} parent=0 // pred_region
    %v259 = vld [vmem:[#allocation2] sm:$0xff]
    %v260 = vld [vmem:[#allocation2 + $0x8] sm:$0xff]
    %v261 = vld [vmem:[#allocation2 + $0x10] sm:$0xff]
    %v262 = vld [vmem:[#allocation2 + $0x18] sm:$0xff]
    %v263 = vld [vmem:[#allocation2 + $0x20] sm:$0xff]
    %v264 = vld [vmem:[#allocation2 + $0x28] sm:$0xff]
    %v265 = vld [vmem:[#allocation2 + $0x30] sm:$0xff]
    %v266 = vld [vmem:[#allocation2 + $0x38] sm:$0xff]
    %v267 = vld [vmem:[#allocation2 + $0x40] sm:$0xff]
    %v268 = vld [vmem:[#allocation2 + $0x48] sm:$0xff]
    %v269 = vld [vmem:[#allocation2 + $0x50] sm:$0xff]
    %v270 = vld [vmem:[#allocation2 + $0x58] sm:$0xff]
    %v271 = vld [vmem:[#allocation2 + $0x60] sm:$0xff]
    %v272 = vld [vmem:[#allocation2 + $0x68] sm:$0xff]
    %v273 = vld [vmem:[#allocation2 + $0x70] sm:$0xff]
    %v274 = vld [vmem:[#allocation2 + $0x78] sm:$0xff]
    %v275 = vld [vmem:[%s3] sm:$0xff]
    %v276 = vld [vmem:[%s3 + $0x8] sm:$0xff]
    %v277 = vld [vmem:[%s3 + $0x10] sm:$0xff]
    %v278 = vld [vmem:[%s3 + $0x18] sm:$0xff]
    %v279 = vld [vmem:[%s3 + $0x20] sm:$0xff]
    %v280 = vld [vmem:[%s3 + $0x28] sm:$0xff]
    %v281 = vld [vmem:[%s3 + $0x30] sm:$0xff]
    %v282 = vld [vmem:[%s3 + $0x38] sm:$0xff]
    %v283 = vld [vmem:[%s3 + $0x40] sm:$0xff]
    %v284 = vld [vmem:[%s3 + $0x48] sm:$0xff]
    %v285 = vld [vmem:[%s3 + $0x50] sm:$0xff]
    %v286 = vld [vmem:[%s3 + $0x58] sm:$0xff]
    %v287 = vld [vmem:[%s3 + $0x60] sm:$0xff]
    %v288 = vld [vmem:[%s3 + $0x68] sm:$0xff]
    %v289 = vld [vmem:[%s3 + $0x70] sm:$0xff]
    %v290 = vld [vmem:[%s3 + $0x78] sm:$0xff]
    %292 = vset.pattern.permute.xlu0 0
    %293 = vperm.xlu0 %292, %v275
    %v294 = vpop.permute.xlu0 %293
    %297 = vset.pattern.permute.xlu0 0
    %298 = vperm.xlu0 %297, %v276
    %v299 = vpop.permute.xlu0 %298
    %302 = vset.pattern.permute.xlu0 0
    %303 = vperm.xlu0 %302, %v277
    %v304 = vpop.permute.xlu0 %303
    %307 = vset.pattern.permute.xlu0 0
    %308 = vperm.xlu0 %307, %v278
    %v309 = vpop.permute.xlu0 %308
    %312 = vset.pattern.permute.xlu0 0
    %313 = vperm.xlu0 %312, %v279
    %v314 = vpop.permute.xlu0 %313
    %317 = vset.pattern.permute.xlu0 0
    %318 = vperm.xlu0 %317, %v280
    %v319 = vpop.permute.xlu0 %318
    %322 = vset.pattern.permute.xlu0 0
    %323 = vperm.xlu0 %322, %v281
    %v324 = vpop.permute.xlu0 %323
    %327 = vset.pattern.permute.xlu0 0
    %328 = vperm.xlu0 %327, %v282
    %v329 = vpop.permute.xlu0 %328
    %332 = vset.pattern.permute.xlu0 0
    %333 = vperm.xlu0 %332, %v283
    %v334 = vpop.permute.xlu0 %333
    %337 = vset.pattern.permute.xlu0 0
    %338 = vperm.xlu0 %337, %v284
    %v339 = vpop.permute.xlu0 %338
    %342 = vset.pattern.permute.xlu0 0
    %343 = vperm.xlu0 %342, %v285
    %v344 = vpop.permute.xlu0 %343
    %347 = vset.pattern.permute.xlu0 0
    %348 = vperm.xlu0 %347, %v286
    %v349 = vpop.permute.xlu0 %348
    %352 = vset.pattern.permute.xlu0 0
    %353 = vperm.xlu0 %352, %v287
    %v354 = vpop.permute.xlu0 %353
    %357 = vset.pattern.permute.xlu0 0
    %358 = vperm.xlu0 %357, %v288
    %v359 = vpop.permute.xlu0 %358
    %362 = vset.pattern.permute.xlu0 0
    %363 = vperm.xlu0 %362, %v289
    %v364 = vpop.permute.xlu0 %363
    %367 = vset.pattern.permute.xlu0 0
    %368 = vperm.xlu0 %367, %v290
    %v369 = vpop.permute.xlu0 %368
    %v371 = vmul.f32 %v259, %v294
    %v372 = vmul.f32 %v260, %v299
    %v373 = vmul.f32 %v261, %v304
    %v374 = vmul.f32 %v262, %v309
    %v375 = vmul.f32 %v263, %v314
    %v376 = vmul.f32 %v264, %v319
    %v377 = vmul.f32 %v265, %v324
    %v378 = vmul.f32 %v266, %v329
    %v379 = vmul.f32 %v267, %v334
    %v380 = vmul.f32 %v268, %v339
    %v381 = vmul.f32 %v269, %v344
    %v382 = vmul.f32 %v270, %v349
    %v383 = vmul.f32 %v271, %v354
    %v384 = vmul.f32 %v272, %v359
    %v385 = vmul.f32 %v273, %v364
    %v386 = vmul.f32 %v274, %v369
    %v387 = vld [vmem:[%s2] sm:$0x1]
    %v389 = vperm.slane %v387, 0
    %391 = vset.pattern.permute.xlu0 1
    %392 = vperm.xlu0 %391, %v275
    %v393 = vpop.permute.xlu0 %392
    %395 = vset.pattern.permute.xlu0 1
    %396 = vperm.xlu0 %395, %v276
    %v397 = vpop.permute.xlu0 %396
    %399 = vset.pattern.permute.xlu0 1
    %400 = vperm.xlu0 %399, %v277
    %v401 = vpop.permute.xlu0 %400
    %403 = vset.pattern.permute.xlu0 1
    %404 = vperm.xlu0 %403, %v278
    %v405 = vpop.permute.xlu0 %404
    %407 = vset.pattern.permute.xlu0 1
    %408 = vperm.xlu0 %407, %v279
    %v409 = vpop.permute.xlu0 %408
    %411 = vset.pattern.permute.xlu0 1
    %412 = vperm.xlu0 %411, %v280
    %v413 = vpop.permute.xlu0 %412
    %415 = vset.pattern.permute.xlu0 1
    %416 = vperm.xlu0 %415, %v281
    %v417 = vpop.permute.xlu0 %416
    %419 = vset.pattern.permute.xlu0 1
    %420 = vperm.xlu0 %419, %v282
    %v421 = vpop.permute.xlu0 %420
    %423 = vset.pattern.permute.xlu0 1
    %424 = vperm.xlu0 %423, %v283
    %v425 = vpop.permute.xlu0 %424
    %427 = vset.pattern.permute.xlu0 1
    %428 = vperm.xlu0 %427, %v284
    %v429 = vpop.permute.xlu0 %428
    %431 = vset.pattern.permute.xlu0 1
    %432 = vperm.xlu0 %431, %v285
    %v433 = vpop.permute.xlu0 %432
    %435 = vset.pattern.permute.xlu0 1
    %436 = vperm.xlu0 %435, %v286
    %v437 = vpop.permute.xlu0 %436
    %439 = vset.pattern.permute.xlu0 1
    %440 = vperm.xlu0 %439, %v287
    %v441 = vpop.permute.xlu0 %440
    %443 = vset.pattern.permute.xlu0 1
    %444 = vperm.xlu0 %443, %v288
    %v445 = vpop.permute.xlu0 %444
    %447 = vset.pattern.permute.xlu0 1
    %448 = vperm.xlu0 %447, %v289
    %v449 = vpop.permute.xlu0 %448
    %451 = vset.pattern.permute.xlu0 1
    %452 = vperm.xlu0 %451, %v290
    %v453 = vpop.permute.xlu0 %452
    %v455 = vmul.f32 %v389, %v393
    %v456 = vmul.f32 %v389, %v397
    %v457 = vmul.f32 %v389, %v401
    %v458 = vmul.f32 %v389, %v405
    %v459 = vmul.f32 %v389, %v409
    %v460 = vmul.f32 %v389, %v413
    %v461 = vmul.f32 %v389, %v417
    %v462 = vmul.f32 %v389, %v421
    %v463 = vmul.f32 %v389, %v425
    %v464 = vmul.f32 %v389, %v429
    %v465 = vmul.f32 %v389, %v433
    %v466 = vmul.f32 %v389, %v437
    %v467 = vmul.f32 %v389, %v441
    %v468 = vmul.f32 %v389, %v445
    %v469 = vmul.f32 %v389, %v449
    %v470 = vmul.f32 %v389, %v453
    %v471 = vadd.f32 %v371, %v455
    %v472 = vadd.f32 %v372, %v456
    %v473 = vadd.f32 %v373, %v457
    %v474 = vadd.f32 %v374, %v458
    %v475 = vadd.f32 %v375, %v459
    %v476 = vadd.f32 %v376, %v460
    %v477 = vadd.f32 %v377, %v461
    %v478 = vadd.f32 %v378, %v462
    %v479 = vadd.f32 %v379, %v463
    %v480 = vadd.f32 %v380, %v464
    %v481 = vadd.f32 %v381, %v465
    %v482 = vadd.f32 %v382, %v466
    %v483 = vadd.f32 %v383, %v467
    %v484 = vadd.f32 %v384, %v468
    %v485 = vadd.f32 %v385, %v469
    %v486 = vadd.f32 %v386, %v470
    %v487 = vmax.f32 %v471, 0.0
    %v488 = vmax.f32 %v472, 0.0
    %v489 = vmax.f32 %v473, 0.0
    %v490 = vmax.f32 %v474, 0.0
    %v491 = vmax.f32 %v475, 0.0
    %v492 = vmax.f32 %v476, 0.0
    %v493 = vmax.f32 %v477, 0.0
    %v494 = vmax.f32 %v478, 0.0
    %v495 = vmax.f32 %v479, 0.0
    %v496 = vmax.f32 %v480, 0.0
    %v497 = vmax.f32 %v481, 0.0
    %v498 = vmax.f32 %v482, 0.0
    %v499 = vmax.f32 %v483, 0.0
    %v500 = vmax.f32 %v484, 0.0
    %v501 = vmax.f32 %v485, 0.0
    %v502 = vmax.f32 %v486, 0.0
    %503 = vst [vmem:[%s4] sm:$0xff] %v487
    %504 = vst [vmem:[%s4 + $0x8] sm:$0xff] %v488
    %505 = vst [vmem:[%s4 + $0x10] sm:$0xff] %v489
    %506 = vst [vmem:[%s4 + $0x18] sm:$0xff] %v490
    %507 = vst [vmem:[%s4 + $0x20] sm:$0xff] %v491
    %508 = vst [vmem:[%s4 + $0x28] sm:$0xff] %v492
    %509 = vst [vmem:[%s4 + $0x30] sm:$0xff] %v493
    %510 = vst [vmem:[%s4 + $0x38] sm:$0xff] %v494
    %511 = vst [vmem:[%s4 + $0x40] sm:$0xff] %v495
    %512 = vst [vmem:[%s4 + $0x48] sm:$0xff] %v496
    %513 = vst [vmem:[%s4 + $0x50] sm:$0xff] %v497
    %514 = vst [vmem:[%s4 + $0x58] sm:$0xff] %v498
    %515 = vst [vmem:[%s4 + $0x60] sm:$0xff] %v499
    %516 = vst [vmem:[%s4 + $0x68] sm:$0xff] %v500
    %517 = vst [vmem:[%s4 + $0x70] sm:$0xff] %v501
    %518 = vst [vmem:[%s4 + $0x78] sm:$0xff] %v502
  $region25: #{encoder_forward.25} parent=0 // pred_fallthru
    _
  // Predicated region
  $region26: #{encoder_forward.25} parent=0 // pred_check
    _
  $region27: #{encoder_forward.25} parent=0 // pred_check_branch
    %520 = sbr.rel (0) target = $region29
  $region28: #{encoder_forward.25} parent=0 // pred_region
    _
  $region29: #{encoder_forward.25} parent=0 // pred_fallthru
    _
  // Predicated region
  $region30: #{encoder_forward.25} parent=0 // pred_check
    _
  $region31: #{encoder_forward.25} parent=0 // pred_check_branch
    %522 = sbr.rel (0) target = $region33
  $region32: #{encoder_forward.25} parent=0 // pred_region
    _
  $region33: #{encoder_forward.25} parent=0 // pred_fallthru
    _

// kernel: encoder_forward.28
$region0: #{encoder_forward.28}
  #allocation0 [shape = 'u32[]', space=smem, size = 0x4, offset = 0x4, fixed_abs, tag = 'smem constant byte address 0x4 - core index']
  #allocation1 [shape = 'u32[72,128]{1,0:T(1,128)}', space=vmem, size = 0x9000, scoped, tag = 'internal scratch']
  #allocation2 [shape = 'f32[128,128]{1,0:T(8,128)}', space=vmem, size = 0x10000, scoped, tag = 'scratch operand']
  %s0 = inlined_call_operand.vmem [shape: bf16[128,144], index: 0, kind: input, shape index: {}]
  %s1 = inlined_call_operand.vmem [shape: bf16[144,128], index: 1, kind: input, shape index: {}]
  %s2 = inlined_call_operand.vmem [shape: f32[1,128], index: 2, kind: input, shape index: {}]
  %s3 = inlined_call_operand.vmem [shape: f32[128,128], index: 3, kind: output, shape index: {}]
  %s4 = sld [smem:[#allocation0]]
  $region30: #{encoder_forward.28} parent=0
    _
  %s6 = ssub.s32 1, %s4
  %s7 = scalar_select 0, %s6, %s4
  // Predicated region
  $region2: #{encoder_forward.28} parent=0 // pred_check
    _
  $region3: #{encoder_forward.28} parent=0 // pred_check_branch
    %9 = sbr.rel (0) target = $region5
  $region4: #{encoder_forward.28} parent=0 // pred_region
    _
  $region5: #{encoder_forward.28} parent=0 // pred_fallthru
    _
  // Predicated region
  $region6: #{encoder_forward.28} parent=0 // pred_check
    _
  $region7: #{encoder_forward.28} parent=0 // pred_check_branch
    %11 = sbr.rel (0) target = $region9
  $region8: #{encoder_forward.28} parent=0 // pred_region
    _
  $region9: #{encoder_forward.28} parent=0 // pred_fallthru
    _
  // Predicated region
  $region10: #{encoder_forward.28} parent=0 // pred_check
    _
  $region11: #{encoder_forward.28} parent=0 // pred_check_branch
    %13 = sbr.rel (0) target = $region13
  $region12: #{encoder_forward.28} parent=0 // pred_region
    _
  $region13: #{encoder_forward.28} parent=0 // pred_fallthru
    _
  %p15 = scmp.eq.s32.totalorder 0, 0
  // Predicated region
  $region14: #{encoder_forward.28} parent=0 // pred_check
    %p16 = pneg %p15
  $region15: #{encoder_forward.28} parent=0 // pred_check_branch
    %18 = sbr.rel (%p16) target = $region17
  $region16: #{encoder_forward.28} parent=0 // pred_region
    %19 = vst [vmem:[#allocation2] sm:$0xff] 0.0
    %20 = vst [vmem:[#allocation2 + $0x8] sm:$0xff] 0.0
    %21 = vst [vmem:[#allocation2 + $0x10] sm:$0xff] 0.0
    %22 = vst [vmem:[#allocation2 + $0x18] sm:$0xff] 0.0
    %23 = vst [vmem:[#allocation2 + $0x20] sm:$0xff] 0.0
    %24 = vst [vmem:[#allocation2 + $0x28] sm:$0xff] 0.0
    %25 = vst [vmem:[#allocation2 + $0x30] sm:$0xff] 0.0
    %26 = vst [vmem:[#allocation2 + $0x38] sm:$0xff] 0.0
    %27 = vst [vmem:[#allocation2 + $0x40] sm:$0xff] 0.0
    %28 = vst [vmem:[#allocation2 + $0x48] sm:$0xff] 0.0
    %29 = vst [vmem:[#allocation2 + $0x50] sm:$0xff] 0.0
    %30 = vst [vmem:[#allocation2 + $0x58] sm:$0xff] 0.0
    %31 = vst [vmem:[#allocation2 + $0x60] sm:$0xff] 0.0
    %32 = vst [vmem:[#allocation2 + $0x68] sm:$0xff] 0.0
    %33 = vst [vmem:[#allocation2 + $0x70] sm:$0xff] 0.0
    %34 = vst [vmem:[#allocation2 + $0x78] sm:$0xff] 0.0
  $region17: #{encoder_forward.28} parent=0 // pred_fallthru
    _
  %v35 = vld [vmem:[#allocation2] sm:$0xff]
  %v36 = vld [vmem:[#allocation2 + $0x8] sm:$0xff]
  %v37 = vld [vmem:[#allocation2 + $0x10] sm:$0xff]
  %v38 = vld [vmem:[#allocation2 + $0x18] sm:$0xff]
  %v39 = vld [vmem:[#allocation2 + $0x20] sm:$0xff]
  %v40 = vld [vmem:[#allocation2 + $0x28] sm:$0xff]
  %v41 = vld [vmem:[#allocation2 + $0x30] sm:$0xff]
  %v42 = vld [vmem:[#allocation2 + $0x38] sm:$0xff]
  %v43 = vld [vmem:[#allocation2 + $0x40] sm:$0xff]
  %v44 = vld [vmem:[#allocation2 + $0x48] sm:$0xff]
  %v45 = vld [vmem:[#allocation2 + $0x50] sm:$0xff]
  %v46 = vld [vmem:[#allocation2 + $0x58] sm:$0xff]
  %v47 = vld [vmem:[#allocation2 + $0x60] sm:$0xff]
  %v48 = vld [vmem:[#allocation2 + $0x68] sm:$0xff]
  %v49 = vld [vmem:[#allocation2 + $0x70] sm:$0xff]
  %v50 = vld [vmem:[#allocation2 + $0x78] sm:$0xff]
  %v51 = vld [vmem:[%s0] sm:$0xff]
  %v52 = vld [vmem:[%s0 + $0x8] sm:$0xff]
  %v53 = vld [vmem:[%s0 + $0x10] sm:$0xff]
  %v54 = vld [vmem:[%s0 + $0x18] sm:$0xff]
  %v55 = vld [vmem:[%s0 + $0x20] sm:$0xff]
  %v56 = vld [vmem:[%s0 + $0x28] sm:$0xff]
  %v57 = vld [vmem:[%s0 + $0x30] sm:$0xff]
  %v58 = vld [vmem:[%s0 + $0x38] sm:$0xff]
  %v59 = vld [vmem:[%s0 + $0x40] sm:$0xff]
  %v60 = vld [vmem:[%s0 + $0x48] sm:$0xff]
  %v61 = vld [vmem:[%s0 + $0x50] sm:$0xff]
  %v62 = vld [vmem:[%s0 + $0x58] sm:$0xff]
  %v63 = vld [vmem:[%s0 + $0x60] sm:$0xff]
  %v64 = vld [vmem:[%s0 + $0x68] sm:$0xff]
  %v65 = vld [vmem:[%s0 + $0x70] sm:$0xff]
  %v66 = vld [vmem:[%s0 + $0x78] sm:$0xff]
  %v67 = vld [vmem:[%s1] sm:$0xf]
  %v68 = vld [vmem:[%s1 + $0x4] sm:$0xf]
  %v69 = vld [vmem:[%s1 + $0x8] sm:$0xf]
  %v70 = vld [vmem:[%s1 + $0xc] sm:$0xf]
  %v71 = vld [vmem:[%s1 + $0x10] sm:$0xf]
  %v72 = vld [vmem:[%s1 + $0x14] sm:$0xf]
  %v73 = vld [vmem:[%s1 + $0x18] sm:$0xf]
  %v74 = vld [vmem:[%s1 + $0x1c] sm:$0xf]
  %v75 = vld [vmem:[%s1 + $0x20] sm:$0xf]
  %v76 = vld [vmem:[%s1 + $0x24] sm:$0xf]
  %v77 = vld [vmem:[%s1 + $0x28] sm:$0xf]
  %v78 = vld [vmem:[%s1 + $0x2c] sm:$0xf]
  %v79 = vld [vmem:[%s1 + $0x30] sm:$0xf]
  %v80 = vld [vmem:[%s1 + $0x34] sm:$0xf]
  %v81 = vld [vmem:[%s1 + $0x38] sm:$0xf]
  %v82 = vld [vmem:[%s1 + $0x3c] sm:$0xf]
  %v83 = vld [vmem:[%s1 + $0x40] sm:$0xf]
  %v84 = vld [vmem:[%s1 + $0x44] sm:$0xf]
  %v101 = vunpack.c.l.b16 %v51
  %v102 = vunpack.c.h.b16 %v51
  %v103 = vunpack.c.l.b16 %v52
  %v104 = vunpack.c.h.b16 %v52
  %v105 = vunpack.c.l.b16 %v53
  %v106 = vunpack.c.h.b16 %v53
  %v107 = vunpack.c.l.b16 %v54
  %v108 = vunpack.c.h.b16 %v54
  %v109 = vunpack.c.l.b16 %v55
  %v110 = vunpack.c.h.b16 %v55
  %v111 = vunpack.c.l.b16 %v56
  %v112 = vunpack.c.h.b16 %v56
  %v113 = vunpack.c.l.b16 %v57
  %v114 = vunpack.c.h.b16 %v57
  %v115 = vunpack.c.l.b16 %v58
  %v116 = vunpack.c.h.b16 %v58
  %v117 = vunpack.c.l.b16 %v59
  %v118 = vunpack.c.h.b16 %v59
  %v119 = vunpack.c.l.b16 %v60
  %v120 = vunpack.c.h.b16 %v60
  %v121 = vunpack.c.l.b16 %v61
  %v122 = vunpack.c.h.b16 %v61
  %v123 = vunpack.c.l.b16 %v62
  %v124 = vunpack.c.h.b16 %v62
  %v125 = vunpack.c.l.b16 %v63
  %v126 = vunpack.c.h.b16 %v63
  %v127 = vunpack.c.l.b16 %v64
  %v128 = vunpack.c.h.b16 %v64
  %v129 = vunpack.c.l.b16 %v65
  %v130 = vunpack.c.h.b16 %v65
  %v131 = vunpack.c.l.b16 %v66
  %v132 = vunpack.c.h.b16 %v66
  %v133 = vpack.c.b16 %v103, %v101
  %v134 = vpack.c.b16 %v104, %v102
  %v135 = vpack.c.b16 %v107, %v105
  %v136 = vpack.c.b16 %v108, %v106
  %v137 = vpack.c.b16 %v111, %v109
  %v138 = vpack.c.b16 %v112, %v110
  %v139 = vpack.c.b16 %v115, %v113
  %v140 = vpack.c.b16 %v116, %v114
  %v141 = vpack.c.b16 %v119, %v117
  %v142 = vpack.c.b16 %v120, %v118
  %v143 = vpack.c.b16 %v123, %v121
  %v144 = vpack.c.b16 %v124, %v122
  %v145 = vpack.c.b16 %v127, %v125
  %v146 = vpack.c.b16 %v128, %v126
  %v147 = vpack.c.b16 %v131, %v129
  %v148 = vpack.c.b16 %v132, %v130
  %v175 = vunpack.c.l.b16 %v67
  %v176 = vunpack.c.l.b16 %v68
  %v177 = vunpack.c.l.b16 %v69
  %v178 = vunpack.c.l.b16 %v70
  %v179 = vunpack.c.l.b16 %v71
  %v180 = vunpack.c.l.b16 %v72
  %v181 = vunpack.c.l.b16 %v73
  %v182 = vunpack.c.l.b16 %v74
  %v183 = vunpack.c.l.b16 %v75
  %v184 = vunpack.c.l.b16 %v76
  %v185 = vunpack.c.l.b16 %v77
  %v186 = vunpack.c.l.b16 %v78
  %v187 = vunpack.c.l.b16 %v79
  %v188 = vunpack.c.l.b16 %v80
  %v189 = vunpack.c.l.b16 %v81
  %v190 = vunpack.c.l.b16 %v82
  %v191 = vunpack.c.l.b16 %v83
  %v192 = vunpack.c.l.b16 %v84
  %v193 = vpack.c.b16 %v176, %v175
  %v194 = vpack.c.b16 %v178, %v177
  %v195 = vpack.c.b16 %v180, %v179
  %v196 = vpack.c.b16 %v182, %v181
  %v197 = vpack.c.b16 %v184, %v183
  %v198 = vpack.c.b16 %v186, %v185
  %v199 = vpack.c.b16 %v188, %v187
  %v200 = vpack.c.b16 %v190, %v189
  %v201 = vpack.c.b16 %v192, %v191
  %vm211 = vcmask 130048
  %v213 = vsel %vm211, %v134, 0
  %v216 = vsel %vm211, %v136, 0
  %v219 = vsel %vm211, %v138, 0
  %v222 = vsel %vm211, %v140, 0
  %v225 = vsel %vm211, %v142, 0
  %v228 = vsel %vm211, %v144, 0
  %v231 = vsel %vm211, %v146, 0
  %v234 = vsel %vm211, %v148, 0
  %236 = vmatpush.bf16.msra.mxu0 %v200
  %237 = vmatpush.bf16.msra.mxu0 %v199
  %238 = vmatpush.bf16.msra.mxu0 %v198
  %239 = vmatpush.bf16.msra.mxu0 %v197
  %240 = vmatpush.bf16.msra.mxu0 %v196
  %241 = vmatpush.bf16.msra.mxu0 %v195
  %242 = vmatpush.bf16.msra.mxu0 %v194
  %243 = vmatpush.bf16.msra.mxu0 %v193
  %244 = vmatmul.bf16.gmra.mxu0 %v133
  %v245 = vpop.f32.mrf.mxu0
  %v246 = vadd.f32 0.0, %v245
  %v247 = vpop.f32.mrf.mxu0
  %v248 = vadd.f32 0.0, %v247
  %249 = vmatmul.bf16.gmra.mxu0 %v135
  %v250 = vpop.f32.mrf.mxu0
  %v251 = vadd.f32 0.0, %v250
  %v252 = vpop.f32.mrf.mxu0
  %v253 = vadd.f32 0.0, %v252
  %254 = vmatmul.bf16.gmra.mxu0 %v137
  %v255 = vpop.f32.mrf.mxu0
  %v256 = vadd.f32 0.0, %v255
  %v257 = vpop.f32.mrf.mxu0
  %v258 = vadd.f32 0.0, %v257
  %259 = vmatmul.bf16.gmra.mxu0 %v139
  %v260 = vpop.f32.mrf.mxu0
  %v261 = vadd.f32 0.0, %v260
  %v262 = vpop.f32.mrf.mxu0
  %v263 = vadd.f32 0.0, %v262
  %264 = vmatmul.bf16.gmra.mxu0 %v141
  %v265 = vpop.f32.mrf.mxu0
  %v266 = vadd.f32 0.0, %v265
  %v267 = vpop.f32.mrf.mxu0
  %v268 = vadd.f32 0.0, %v267
  %269 = vmatmul.bf16.gmra.mxu0 %v143
  %v270 = vpop.f32.mrf.mxu0
  %v271 = vadd.f32 0.0, %v270
  %v272 = vpop.f32.mrf.mxu0
  %v273 = vadd.f32 0.0, %v272
  %274 = vmatmul.bf16.gmra.mxu0 %v145
  %v275 = vpop.f32.mrf.mxu0
  %v276 = vadd.f32 0.0, %v275
  %v277 = vpop.f32.mrf.mxu0
  %v278 = vadd.f32 0.0, %v277
  %279 = vmatmul.bf16.gmra.mxu0 %v147
  %v280 = vpop.f32.mrf.mxu0
  %v281 = vadd.f32 0.0, %v280
  %v282 = vpop.f32.mrf.mxu0
  %v283 = vadd.f32 0.0, %v282
  %284 = vdwg.mxu0
  %285 = vmatpush.bf16.msra.mxu0 0
  %286 = vmatpush.bf16.msra.mxu0 0
  %287 = vmatpush.bf16.msra.mxu0 0
  %288 = vmatpush.bf16.msra.mxu0 0
  %289 = vmatpush.bf16.msra.mxu0 0
  %290 = vmatpush.bf16.msra.mxu0 0
  %291 = vmatpush.bf16.msra.mxu0 0
  %292 = vmatpush.bf16.msra.mxu0 %v201
  %293 = vmatmul.bf16.gmra.mxu0 %v213
  %v294 = vpop.f32.mrf.mxu0
  %v295 = vadd.f32 %v246, %v294
  %v296 = vpop.f32.mrf.mxu0
  %v297 = vadd.f32 %v248, %v296
  %298 = vmatmul.bf16.gmra.mxu0 %v216
  %v299 = vpop.f32.mrf.mxu0
  %v300 = vadd.f32 %v251, %v299
  %v301 = vpop.f32.mrf.mxu0
  %v302 = vadd.f32 %v253, %v301
  %303 = vmatmul.bf16.gmra.mxu0 %v219
  %v304 = vpop.f32.mrf.mxu0
  %v305 = vadd.f32 %v256, %v304
  %v306 = vpop.f32.mrf.mxu0
  %v307 = vadd.f32 %v258, %v306
  %308 = vmatmul.bf16.gmra.mxu0 %v222
  %v309 = vpop.f32.mrf.mxu0
  %v310 = vadd.f32 %v261, %v309
  %v311 = vpop.f32.mrf.mxu0
  %v312 = vadd.f32 %v263, %v311
  %313 = vmatmul.bf16.gmra.mxu0 %v225
  %v314 = vpop.f32.mrf.mxu0
  %v315 = vadd.f32 %v266, %v314
  %v316 = vpop.f32.mrf.mxu0
  %v317 = vadd.f32 %v268, %v316
  %318 = vmatmul.bf16.gmra.mxu0 %v228
  %v319 = vpop.f32.mrf.mxu0
  %v320 = vadd.f32 %v271, %v319
  %v321 = vpop.f32.mrf.mxu0
  %v322 = vadd.f32 %v273, %v321
  %323 = vmatmul.bf16.gmra.mxu0 %v231
  %v324 = vpop.f32.mrf.mxu0
  %v325 = vadd.f32 %v276, %v324
  %v326 = vpop.f32.mrf.mxu0
  %v327 = vadd.f32 %v278, %v326
  %328 = vmatmul.bf16.gmra.mxu0 %v234
  %v329 = vpop.f32.mrf.mxu0
  %v330 = vadd.f32 %v281, %v329
  %v331 = vpop.f32.mrf.mxu0
  %v332 = vadd.f32 %v283, %v331
  %333 = vdwg.mxu0
  %v334 = vadd.f32 %v35, %v295
  %v335 = vadd.f32 %v36, %v297
  %v336 = vadd.f32 %v37, %v300
  %v337 = vadd.f32 %v38, %v302
  %v338 = vadd.f32 %v39, %v305
  %v339 = vadd.f32 %v40, %v307
  %v340 = vadd.f32 %v41, %v310
  %v341 = vadd.f32 %v42, %v312
  %v342 = vadd.f32 %v43, %v315
  %v343 = vadd.f32 %v44, %v317
  %v344 = vadd.f32 %v45, %v320
  %v345 = vadd.f32 %v46, %v322
  %v346 = vadd.f32 %v47, %v325
  %v347 = vadd.f32 %v48, %v327
  %v348 = vadd.f32 %v49, %v330
  %v349 = vadd.f32 %v50, %v332
  %350 = vst [vmem:[#allocation2] sm:$0xff] %v334
  %351 = vst [vmem:[#allocation2 + $0x8] sm:$0xff] %v335
  %352 = vst [vmem:[#allocation2 + $0x10] sm:$0xff] %v336
  %353 = vst [vmem:[#allocation2 + $0x18] sm:$0xff] %v337
  %354 = vst [vmem:[#allocation2 + $0x20] sm:$0xff] %v338
  %355 = vst [vmem:[#allocation2 + $0x28] sm:$0xff] %v339
  %356 = vst [vmem:[#allocation2 + $0x30] sm:$0xff] %v340
  %357 = vst [vmem:[#allocation2 + $0x38] sm:$0xff] %v341
  %358 = vst [vmem:[#allocation2 + $0x40] sm:$0xff] %v342
  %359 = vst [vmem:[#allocation2 + $0x48] sm:$0xff] %v343
  %360 = vst [vmem:[#allocation2 + $0x50] sm:$0xff] %v344
  %361 = vst [vmem:[#allocation2 + $0x58] sm:$0xff] %v345
  %362 = vst [vmem:[#allocation2 + $0x60] sm:$0xff] %v346
  %363 = vst [vmem:[#allocation2 + $0x68] sm:$0xff] %v347
  %364 = vst [vmem:[#allocation2 + $0x70] sm:$0xff] %v348
  %365 = vst [vmem:[#allocation2 + $0x78] sm:$0xff] %v349
  // Predicated region
  $region18: #{encoder_forward.28} parent=0 // pred_check
    %p366 = pneg %p15
  $region19: #{encoder_forward.28} parent=0 // pred_check_branch
    %368 = sbr.rel (%p366) target = $region21
  $region20: #{encoder_forward.28} parent=0 // pred_region
    %v369 = vld [vmem:[#allocation2] sm:$0xff]
    %v370 = vld [vmem:[#allocation2 + $0x8] sm:$0xff]
    %v371 = vld [vmem:[#allocation2 + $0x10] sm:$0xff]
    %v372 = vld [vmem:[#allocation2 + $0x18] sm:$0xff]
    %v373 = vld [vmem:[#allocation2 + $0x20] sm:$0xff]
    %v374 = vld [vmem:[#allocation2 + $0x28] sm:$0xff]
    %v375 = vld [vmem:[#allocation2 + $0x30] sm:$0xff]
    %v376 = vld [vmem:[#allocation2 + $0x38] sm:$0xff]
    %v377 = vld [vmem:[#allocation2 + $0x40] sm:$0xff]
    %v378 = vld [vmem:[#allocation2 + $0x48] sm:$0xff]
    %v379 = vld [vmem:[#allocation2 + $0x50] sm:$0xff]
    %v380 = vld [vmem:[#allocation2 + $0x58] sm:$0xff]
    %v381 = vld [vmem:[#allocation2 + $0x60] sm:$0xff]
    %v382 = vld [vmem:[#allocation2 + $0x68] sm:$0xff]
    %v383 = vld [vmem:[#allocation2 + $0x70] sm:$0xff]
    %v384 = vld [vmem:[#allocation2 + $0x78] sm:$0xff]
    %v385 = vld [vmem:[%s2] sm:$0x1]
    %v387 = vperm.slane %v385, 0
    %v389 = vadd.f32 %v369, %v387
    %v390 = vadd.f32 %v370, %v387
    %v391 = vadd.f32 %v371, %v387
    %v392 = vadd.f32 %v372, %v387
    %v393 = vadd.f32 %v373, %v387
    %v394 = vadd.f32 %v374, %v387
    %v395 = vadd.f32 %v375, %v387
    %v396 = vadd.f32 %v376, %v387
    %v397 = vadd.f32 %v377, %v387
    %v398 = vadd.f32 %v378, %v387
    %v399 = vadd.f32 %v379, %v387
    %v400 = vadd.f32 %v380, %v387
    %v401 = vadd.f32 %v381, %v387
    %v402 = vadd.f32 %v382, %v387
    %v403 = vadd.f32 %v383, %v387
    %v404 = vadd.f32 %v384, %v387
    %v405 = vmax.f32 %v389, 0.0
    %v406 = vmax.f32 %v390, 0.0
    %v407 = vmax.f32 %v391, 0.0
    %v408 = vmax.f32 %v392, 0.0
    %v409 = vmax.f32 %v393, 0.0
    %v410 = vmax.f32 %v394, 0.0
    %v411 = vmax.f32 %v395, 0.0
    %v412 = vmax.f32 %v396, 0.0
    %v413 = vmax.f32 %v397, 0.0
    %v414 = vmax.f32 %v398, 0.0
    %v415 = vmax.f32 %v399, 0.0
    %v416 = vmax.f32 %v400, 0.0
    %v417 = vmax.f32 %v401, 0.0
    %v418 = vmax.f32 %v402, 0.0
    %v419 = vmax.f32 %v403, 0.0
    %v420 = vmax.f32 %v404, 0.0
    %421 = vst [vmem:[%s3] sm:$0xff] %v405
    %422 = vst [vmem:[%s3 + $0x8] sm:$0xff] %v406
    %423 = vst [vmem:[%s3 + $0x10] sm:$0xff] %v407
    %424 = vst [vmem:[%s3 + $0x18] sm:$0xff] %v408
    %425 = vst [vmem:[%s3 + $0x20] sm:$0xff] %v409
    %426 = vst [vmem:[%s3 + $0x28] sm:$0xff] %v410
    %427 = vst [vmem:[%s3 + $0x30] sm:$0xff] %v411
    %428 = vst [vmem:[%s3 + $0x38] sm:$0xff] %v412
    %429 = vst [vmem:[%s3 + $0x40] sm:$0xff] %v413
    %430 = vst [vmem:[%s3 + $0x48] sm:$0xff] %v414
    %431 = vst [vmem:[%s3 + $0x50] sm:$0xff] %v415
    %432 = vst [vmem:[%s3 + $0x58] sm:$0xff] %v416
    %433 = vst [vmem:[%s3 + $0x60] sm:$0xff] %v417
    %434 = vst [vmem:[%s3 + $0x68] sm:$0xff] %v418
    %435 = vst [vmem:[%s3 + $0x70] sm:$0xff] %v419
    %436 = vst [vmem:[%s3 + $0x78] sm:$0xff] %v420
  $region21: #{encoder_forward.28} parent=0 // pred_fallthru
    _
  // Predicated region
  $region22: #{encoder_forward.28} parent=0 // pred_check
    _
  $region23: #{encoder_forward.28} parent=0 // pred_check_branch
    %438 = sbr.rel (0) target = $region25
  $region24: #{encoder_forward.28} parent=0 // pred_region
    _
  $region25: #{encoder_forward.28} parent=0 // pred_fallthru
    _
  // Predicated region
  $region26: #{encoder_forward.28} parent=0 // pred_check
    _
  $region27: #{encoder_forward.28} parent=0 // pred_check_branch
    %440 = sbr.rel (0) target = $region29
  $region28: #{encoder_forward.28} parent=0 // pred_region
    _
  $region29: #{encoder_forward.28} parent=0 // pred_fallthru
    _

// kernel: encoder_forward.29
$region0: #{encoder_forward.29}
  #allocation0 [shape = 'u32[]', space=smem, size = 0x4, offset = 0x4, fixed_abs, tag = 'smem constant byte address 0x4 - core index']
  #allocation1 [shape = 'u32[72,128]{1,0:T(1,128)}', space=vmem, size = 0x9000, scoped, tag = 'internal scratch']
  #allocation2 [shape = 'f32[32,128]{1,0:T(8,128)}', space=vmem, size = 0x4000, scoped, tag = 'scratch operand']
  %s0 = inlined_call_operand.vmem [shape: bf16[32,144], index: 0, kind: input, shape index: {}]
  %s1 = inlined_call_operand.vmem [shape: bf16[144,128], index: 1, kind: input, shape index: {}]
  %s2 = inlined_call_operand.vmem [shape: f32[1,128], index: 2, kind: input, shape index: {}]
  %s3 = inlined_call_operand.vmem [shape: f32[32,2], index: 3, kind: input, shape index: {}]
  %s4 = inlined_call_operand.vmem [shape: f32[32,128], index: 4, kind: output, shape index: {}]
  %s5 = sld [smem:[#allocation0]]
  $region34: #{encoder_forward.29} parent=0
    _
  %s7 = ssub.s32 1, %s5
  %s8 = scalar_select 0, %s7, %s5
  // Predicated region
  $region2: #{encoder_forward.29} parent=0 // pred_check
    _
  $region3: #{encoder_forward.29} parent=0 // pred_check_branch
    %10 = sbr.rel (0) target = $region5
  $region4: #{encoder_forward.29} parent=0 // pred_region
    _
  $region5: #{encoder_forward.29} parent=0 // pred_fallthru
    _
  // Predicated region
  $region6: #{encoder_forward.29} parent=0 // pred_check
    _
  $region7: #{encoder_forward.29} parent=0 // pred_check_branch
    %12 = sbr.rel (0) target = $region9
  $region8: #{encoder_forward.29} parent=0 // pred_region
    _
  $region9: #{encoder_forward.29} parent=0 // pred_fallthru
    _
  // Predicated region
  $region10: #{encoder_forward.29} parent=0 // pred_check
    _
  $region11: #{encoder_forward.29} parent=0 // pred_check_branch
    %14 = sbr.rel (0) target = $region13
  $region12: #{encoder_forward.29} parent=0 // pred_region
    _
  $region13: #{encoder_forward.29} parent=0 // pred_fallthru
    _
  // Predicated region
  $region14: #{encoder_forward.29} parent=0 // pred_check
    _
  $region15: #{encoder_forward.29} parent=0 // pred_check_branch
    %16 = sbr.rel (0) target = $region17
  $region16: #{encoder_forward.29} parent=0 // pred_region
    _
  $region17: #{encoder_forward.29} parent=0 // pred_fallthru
    _
  %p18 = scmp.eq.s32.totalorder 0, 0
  // Predicated region
  $region18: #{encoder_forward.29} parent=0 // pred_check
    %p19 = pneg %p18
  $region19: #{encoder_forward.29} parent=0 // pred_check_branch
    %21 = sbr.rel (%p19) target = $region21
  $region20: #{encoder_forward.29} parent=0 // pred_region
    %22 = vst [vmem:[#allocation2] sm:$0xff] 0.0
    %23 = vst [vmem:[#allocation2 + $0x8] sm:$0xff] 0.0
    %24 = vst [vmem:[#allocation2 + $0x10] sm:$0xff] 0.0
    %25 = vst [vmem:[#allocation2 + $0x18] sm:$0xff] 0.0
  $region21: #{encoder_forward.29} parent=0 // pred_fallthru
    _
  %v26 = vld [vmem:[#allocation2] sm:$0xff]
  %v27 = vld [vmem:[#allocation2 + $0x8] sm:$0xff]
  %v28 = vld [vmem:[#allocation2 + $0x10] sm:$0xff]
  %v29 = vld [vmem:[#allocation2 + $0x18] sm:$0xff]
  %v30 = vld [vmem:[%s0] sm:$0xff]
  %v31 = vld [vmem:[%s0 + $0x8] sm:$0xff]
  %v32 = vld [vmem:[%s0 + $0x10] sm:$0xff]
  %v33 = vld [vmem:[%s0 + $0x18] sm:$0xff]
  %v34 = vld [vmem:[%s1] sm:$0xf]
  %v35 = vld [vmem:[%s1 + $0x4] sm:$0xf]
  %v36 = vld [vmem:[%s1 + $0x8] sm:$0xf]
  %v37 = vld [vmem:[%s1 + $0xc] sm:$0xf]
  %v38 = vld [vmem:[%s1 + $0x10] sm:$0xf]
  %v39 = vld [vmem:[%s1 + $0x14] sm:$0xf]
  %v40 = vld [vmem:[%s1 + $0x18] sm:$0xf]
  %v41 = vld [vmem:[%s1 + $0x1c] sm:$0xf]
  %v42 = vld [vmem:[%s1 + $0x20] sm:$0xf]
  %v43 = vld [vmem:[%s1 + $0x24] sm:$0xf]
  %v44 = vld [vmem:[%s1 + $0x28] sm:$0xf]
  %v45 = vld [vmem:[%s1 + $0x2c] sm:$0xf]
  %v46 = vld [vmem:[%s1 + $0x30] sm:$0xf]
  %v47 = vld [vmem:[%s1 + $0x34] sm:$0xf]
  %v48 = vld [vmem:[%s1 + $0x38] sm:$0xf]
  %v49 = vld [vmem:[%s1 + $0x3c] sm:$0xf]
  %v50 = vld [vmem:[%s1 + $0x40] sm:$0xf]
  %v51 = vld [vmem:[%s1 + $0x44] sm:$0xf]
  %v56 = vunpack.c.l.b16 %v30
  %v57 = vunpack.c.h.b16 %v30
  %v58 = vunpack.c.l.b16 %v31
  %v59 = vunpack.c.h.b16 %v31
  %v60 = vunpack.c.l.b16 %v32
  %v61 = vunpack.c.h.b16 %v32
  %v62 = vunpack.c.l.b16 %v33
  %v63 = vunpack.c.h.b16 %v33
  %v64 = vpack.c.b16 %v58, %v56
  %v65 = vpack.c.b16 %v59, %v57
  %v66 = vpack.c.b16 %v62, %v60
  %v67 = vpack.c.b16 %v63, %v61
  %v88 = vunpack.c.l.b16 %v34
  %v89 = vunpack.c.l.b16 %v35
  %v90 = vunpack.c.l.b16 %v36
  %v91 = vunpack.c.l.b16 %v37
  %v92 = vunpack.c.l.b16 %v38
  %v93 = vunpack.c.l.b16 %v39
  %v94 = vunpack.c.l.b16 %v40
  %v95 = vunpack.c.l.b16 %v41
  %v96 = vunpack.c.l.b16 %v42
  %v97 = vunpack.c.l.b16 %v43
  %v98 = vunpack.c.l.b16 %v44
  %v99 = vunpack.c.l.b16 %v45
  %v100 = vunpack.c.l.b16 %v46
  %v101 = vunpack.c.l.b16 %v47
  %v102 = vunpack.c.l.b16 %v48
  %v103 = vunpack.c.l.b16 %v49
  %v104 = vunpack.c.l.b16 %v50
  %v105 = vunpack.c.l.b16 %v51
  %v106 = vpack.c.b16 %v89, %v88
  %v107 = vpack.c.b16 %v91, %v90
  %v108 = vpack.c.b16 %v93, %v92
  %v109 = vpack.c.b16 %v95, %v94
  %v110 = vpack.c.b16 %v97, %v96
  %v111 = vpack.c.b16 %v99, %v98
  %v112 = vpack.c.b16 %v101, %v100
  %v113 = vpack.c.b16 %v103, %v102
  %v114 = vpack.c.b16 %v105, %v104
  %vm124 = vcmask 130048
  %v126 = vsel %vm124, %v65, 0
  %v129 = vsel %vm124, %v67, 0
  %131 = vmatpush.bf16.msra.mxu0 %v113
  %132 = vmatpush.bf16.msra.mxu0 %v112
  %133 = vmatpush.bf16.msra.mxu0 %v111
  %134 = vmatpush.bf16.msra.mxu0 %v110
  %135 = vmatpush.bf16.msra.mxu0 %v109
  %136 = vmatpush.bf16.msra.mxu0 %v108
  %137 = vmatpush.bf16.msra.mxu0 %v107
  %138 = vmatpush.bf16.msra.mxu0 %v106
  %139 = vmatmul.bf16.gmra.mxu0 %v64
  %v140 = vpop.f32.mrf.mxu0
  %v141 = vadd.f32 0.0, %v140
  %v142 = vpop.f32.mrf.mxu0
  %v143 = vadd.f32 0.0, %v142
  %144 = vmatmul.bf16.gmra.mxu0 %v66
  %v145 = vpop.f32.mrf.mxu0
  %v146 = vadd.f32 0.0, %v145
  %v147 = vpop.f32.mrf.mxu0
  %v148 = vadd.f32 0.0, %v147
  %149 = vdwg.mxu0
  %150 = vmatpush.bf16.msra.mxu0 0
  %151 = vmatpush.bf16.msra.mxu0 0
  %152 = vmatpush.bf16.msra.mxu0 0
  %153 = vmatpush.bf16.msra.mxu0 0
  %154 = vmatpush.bf16.msra.mxu0 0
  %155 = vmatpush.bf16.msra.mxu0 0
  %156 = vmatpush.bf16.msra.mxu0 0
  %157 = vmatpush.bf16.msra.mxu0 %v114
  %158 = vmatmul.bf16.gmra.mxu0 %v126
  %v159 = vpop.f32.mrf.mxu0
  %v160 = vadd.f32 %v141, %v159
  %v161 = vpop.f32.mrf.mxu0
  %v162 = vadd.f32 %v143, %v161
  %163 = vmatmul.bf16.gmra.mxu0 %v129
  %v164 = vpop.f32.mrf.mxu0
  %v165 = vadd.f32 %v146, %v164
  %v166 = vpop.f32.mrf.mxu0
  %v167 = vadd.f32 %v148, %v166
  %168 = vdwg.mxu0
  %v169 = vadd.f32 %v26, %v160
  %v170 = vadd.f32 %v27, %v162
  %v171 = vadd.f32 %v28, %v165
  %v172 = vadd.f32 %v29, %v167
  %173 = vst [vmem:[#allocation2] sm:$0xff] %v169
  %174 = vst [vmem:[#allocation2 + $0x8] sm:$0xff] %v170
  %175 = vst [vmem:[#allocation2 + $0x10] sm:$0xff] %v171
  %176 = vst [vmem:[#allocation2 + $0x18] sm:$0xff] %v172
  // Predicated region
  $region22: #{encoder_forward.29} parent=0 // pred_check
    %p177 = pneg %p18
  $region23: #{encoder_forward.29} parent=0 // pred_check_branch
    %179 = sbr.rel (%p177) target = $region25
  $region24: #{encoder_forward.29} parent=0 // pred_region
    %v180 = vld [vmem:[#allocation2] sm:$0xff]
    %v181 = vld [vmem:[#allocation2 + $0x8] sm:$0xff]
    %v182 = vld [vmem:[#allocation2 + $0x10] sm:$0xff]
    %v183 = vld [vmem:[#allocation2 + $0x18] sm:$0xff]
    %v184 = vld [vmem:[%s3] sm:$0xff]
    %v185 = vld [vmem:[%s3 + $0x8] sm:$0xff]
    %v186 = vld [vmem:[%s3 + $0x10] sm:$0xff]
    %v187 = vld [vmem:[%s3 + $0x18] sm:$0xff]
    %189 = vset.pattern.permute.xlu0 0
    %190 = vperm.xlu0 %189, %v184
    %v191 = vpop.permute.xlu0 %190
    %194 = vset.pattern.permute.xlu0 0
    %195 = vperm.xlu0 %194, %v185
    %v196 = vpop.permute.xlu0 %195
    %199 = vset.pattern.permute.xlu0 0
    %200 = vperm.xlu0 %199, %v186
    %v201 = vpop.permute.xlu0 %200
    %204 = vset.pattern.permute.xlu0 0
    %205 = vperm.xlu0 %204, %v187
    %v206 = vpop.permute.xlu0 %205
    %v208 = vmul.f32 %v180, %v191
    %v209 = vmul.f32 %v181, %v196
    %v210 = vmul.f32 %v182, %v201
    %v211 = vmul.f32 %v183, %v206
    %v212 = vld [vmem:[%s2] sm:$0x1]
    %v214 = vperm.slane %v212, 0
    %216 = vset.pattern.permute.xlu0 1
    %217 = vperm.xlu0 %216, %v184
    %v218 = vpop.permute.xlu0 %217
    %220 = vset.pattern.permute.xlu0 1
    %221 = vperm.xlu0 %220, %v185
    %v222 = vpop.permute.xlu0 %221
    %224 = vset.pattern.permute.xlu0 1
    %225 = vperm.xlu0 %224, %v186
    %v226 = vpop.permute.xlu0 %225
    %228 = vset.pattern.permute.xlu0 1
    %229 = vperm.xlu0 %228, %v187
    %v230 = vpop.permute.xlu0 %229
    %v232 = vmul.f32 %v214, %v218
    %v233 = vmul.f32 %v214, %v222
    %v234 = vmul.f32 %v214, %v226
    %v235 = vmul.f32 %v214, %v230
    %v236 = vadd.f32 %v208, %v232
    %v237 = vadd.f32 %v209, %v233
    %v238 = vadd.f32 %v210, %v234
    %v239 = vadd.f32 %v211, %v235
    %v240 = vmax.f32 %v236, 0.0
    %v241 = vmax.f32 %v237, 0.0
    %v242 = vmax.f32 %v238, 0.0
    %v243 = vmax.f32 %v239, 0.0
    %244 = vst [vmem:[%s4] sm:$0xff] %v240
    %245 = vst [vmem:[%s4 + $0x8] sm:$0xff] %v241
    %246 = vst [vmem:[%s4 + $0x10] sm:$0xff] %v242
    %247 = vst [vmem:[%s4 + $0x18] sm:$0xff] %v243
  $region25: #{encoder_forward.29} parent=0 // pred_fallthru
    _
  // Predicated region
  $region26: #{encoder_forward.29} parent=0 // pred_check
    _
  $region27: #{encoder_forward.29} parent=0 // pred_check_branch
    %249 = sbr.rel (0) target = $region29
  $region28: #{encoder_forward.29} parent=0 // pred_region
    _
  $region29: #{encoder_forward.29} parent=0 // pred_fallthru
    _
  // Predicated region
  $region30: #{encoder_forward.29} parent=0 // pred_check
    _
  $region31: #{encoder_forward.29} parent=0 // pred_check_branch
    %251 = sbr.rel (0) target = $region33
  $region32: #{encoder_forward.29} parent=0 // pred_region
    _
  $region33: #{encoder_forward.29} parent=0 // pred_fallthru
    _

// kernel: encoder_forward.31
$region0: #{encoder_forward.31}
  #allocation0 [shape = 'u32[]', space=smem, size = 0x4, offset = 0x4, fixed_abs, tag = 'smem constant byte address 0x4 - core index']
  #allocation1 [shape = 'u32[72,128]{1,0:T(1,128)}', space=vmem, size = 0x9000, scoped, tag = 'internal scratch']
  %s0 = inlined_call_operand.vmem [shape: bf16[32,16], index: 0, kind: input, shape index: {}]
  %s1 = inlined_call_operand.vmem [shape: bf16[32,16], index: 1, kind: input, shape index: {}]
  %s2 = inlined_call_operand.vmem [shape: bf16[16,128], index: 2, kind: input, shape index: {}]
  %s3 = inlined_call_operand.vmem [shape: bf16[16,128], index: 3, kind: input, shape index: {}]
  %s4 = inlined_call_operand.vmem [shape: f32[1,128], index: 4, kind: input, shape index: {}]
  %s5 = inlined_call_operand.hbm [shape: f32[32,128], index: 5, kind: output, shape index: {}]
  %s6 = sld [smem:[#allocation0]]
  $region30: #{encoder_forward.31} parent=0
    _
  %s8 = ssub.s32 1, %s6
  %s9 = scalar_select 0, %s8, %s6
  $region1: #{encoder_forward.31} parent=0
    #allocation2 [shape = 'u8[16384]{0}', space=vmem, size = 0x4000, scoped, tag = 'output window, operand 0, single buffered']
    #allocation3 [shape = 's32[1]{0}', space=sflag, size = 0x4, scoped, tag = 'scoped memory for encoder_forward.31']
    %10 = vsyncpa [#allocation3], 0
    // Predicated region
    $region2: #{encoder_forward.31} parent=1 // pred_check
      _
    $region3: #{encoder_forward.31} parent=1 // pred_check_branch
      %12 = sbr.rel (0) target = $region5
    $region4: #{encoder_forward.31} parent=1 // pred_region
      _
    $region5: #{encoder_forward.31} parent=1 // pred_fallthru
      _
    // Predicated region
    $region6: #{encoder_forward.31} parent=1 // pred_check
      _
    $region7: #{encoder_forward.31} parent=1 // pred_check_branch
      %14 = sbr.rel (0) target = $region9
    $region8: #{encoder_forward.31} parent=1 // pred_region
      _
    $region9: #{encoder_forward.31} parent=1 // pred_fallthru
      _
    // Predicated region
    $region10: #{encoder_forward.31} parent=1 // pred_check
      _
    $region11: #{encoder_forward.31} parent=1 // pred_check_branch
      %16 = sbr.rel (0) target = $region13
    $region12: #{encoder_forward.31} parent=1 // pred_region
      _
    $region13: #{encoder_forward.31} parent=1 // pred_fallthru
      _
    // Predicated region
    $region14: #{encoder_forward.31} parent=1 // pred_check
      _
    $region15: #{encoder_forward.31} parent=1 // pred_check_branch
      %18 = sbr.rel (0) target = $region17
    $region16: #{encoder_forward.31} parent=1 // pred_region
      _
    $region17: #{encoder_forward.31} parent=1 // pred_fallthru
      _
    // Predicated region
    $region18: #{encoder_forward.31} parent=1 // pred_check
      _
    $region19: #{encoder_forward.31} parent=1 // pred_check_branch
      %20 = sbr.rel (0) target = $region21
    $region20: #{encoder_forward.31} parent=1 // pred_region
      _
    $region21: #{encoder_forward.31} parent=1 // pred_fallthru
      _
    %v22 = vld [vmem:[%s0] sm:$0xf]
    %v23 = vld [vmem:[%s0 + $0x4] sm:$0xf]
    %v24 = vld [vmem:[%s0 + $0x8] sm:$0xf]
    %v25 = vld [vmem:[%s0 + $0xc] sm:$0xf]
    %v26 = vld [vmem:[%s2] sm:$0xf]
    %v27 = vld [vmem:[%s2 + $0x4] sm:$0xf]
    %v28 = vld [vmem:[%s1] sm:$0xf]
    %v29 = vld [vmem:[%s1 + $0x4] sm:$0xf]
    %v30 = vld [vmem:[%s1 + $0x8] sm:$0xf]
    %v31 = vld [vmem:[%s1 + $0xc] sm:$0xf]
    %v32 = vld [vmem:[%s3] sm:$0xf]
    %v33 = vld [vmem:[%s3 + $0x4] sm:$0xf]
    %v38 = vunpack.c.l.b16 %v28
    %v39 = vunpack.c.l.b16 %v29
    %v40 = vunpack.c.l.b16 %v30
    %v41 = vunpack.c.l.b16 %v31
    %v42 = vpack.c.b16 %v39, %v38
    %v43 = vpack.c.b16 %v41, %v40
    %v46 = vunpack.c.l.b16 %v32
    %v47 = vunpack.c.l.b16 %v33
    %v48 = vpack.c.b16 %v47, %v46
    %vm50 = vcmask 130048
    %v52 = vsel %vm50, %v42, 0
    %v55 = vsel %vm50, %v43, 0
    %57 = vmatpush.bf16.msra.mxu0 0
    %58 = vmatpush.bf16.msra.mxu0 0
    %59 = vmatpush.bf16.msra.mxu0 0
    %60 = vmatpush.bf16.msra.mxu0 0
    %61 = vmatpush.bf16.msra.mxu0 0
    %62 = vmatpush.bf16.msra.mxu0 0
    %63 = vmatpush.bf16.msra.mxu0 0
    %64 = vmatpush.bf16.msra.mxu0 %v48
    %65 = vmatmul.bf16.gmra.mxu0 %v52
    %v66 = vpop.f32.mrf.mxu0
    %v67 = vadd.f32 0.0, %v66
    %v68 = vpop.f32.mrf.mxu0
    %v69 = vadd.f32 0.0, %v68
    %70 = vmatmul.bf16.gmra.mxu0 %v55
    %v71 = vpop.f32.mrf.mxu0
    %v72 = vadd.f32 0.0, %v71
    %v73 = vpop.f32.mrf.mxu0
    %v74 = vadd.f32 0.0, %v73
    %75 = vdwg.mxu0
    %v80 = vunpack.c.l.b16 %v22
    %v81 = vunpack.c.l.b16 %v23
    %v82 = vunpack.c.l.b16 %v24
    %v83 = vunpack.c.l.b16 %v25
    %v84 = vpack.c.b16 %v81, %v80
    %v85 = vpack.c.b16 %v83, %v82
    %v88 = vunpack.c.l.b16 %v26
    %v89 = vunpack.c.l.b16 %v27
    %v90 = vpack.c.b16 %v89, %v88
    %v93 = vsel %vm50, %v84, 0
    %v96 = vsel %vm50, %v85, 0
    %98 = vmatpush.bf16.msra.mxu0 0
    %99 = vmatpush.bf16.msra.mxu0 0
    %100 = vmatpush.bf16.msra.mxu0 0
    %101 = vmatpush.bf16.msra.mxu0 0
    %102 = vmatpush.bf16.msra.mxu0 0
    %103 = vmatpush.bf16.msra.mxu0 0
    %104 = vmatpush.bf16.msra.mxu0 0
    %105 = vmatpush.bf16.msra.mxu0 %v90
    %106 = vmatmul.bf16.gmra.mxu0 %v93
    %v107 = vpop.f32.mrf.mxu0
    %v108 = vadd.f32 %v67, %v107
    %v109 = vpop.f32.mrf.mxu0
    %v110 = vadd.f32 %v69, %v109
    %111 = vmatmul.bf16.gmra.mxu0 %v96
    %v112 = vpop.f32.mrf.mxu0
    %v113 = vadd.f32 %v72, %v112
    %v114 = vpop.f32.mrf.mxu0
    %v115 = vadd.f32 %v74, %v114
    %116 = vdwg.mxu0
    %v117 = vld [vmem:[%s4] sm:$0x1]
    %v119 = vperm.slane %v117, 0
    %v121 = vadd.f32 %v108, %v119
    %v122 = vadd.f32 %v110, %v119
    %v123 = vadd.f32 %v113, %v119
    %v124 = vadd.f32 %v115, %v119
    %v125 = vmax.f32 %v121, 0.0
    %v126 = vmax.f32 %v122, 0.0
    %v127 = vmax.f32 %v123, 0.0
    %v128 = vmax.f32 %v124, 0.0
    %129 = vst [vmem:[#allocation2] sm:$0xff] %v125
    %130 = vst [vmem:[#allocation2 + $0x8] sm:$0xff] %v126
    %131 = vst [vmem:[#allocation2 + $0x10] sm:$0xff] %v127
    %132 = vst [vmem:[#allocation2 + $0x18] sm:$0xff] %v128
    // Predicated region
    $region22: #{encoder_forward.31} parent=1 // pred_check
      _
    $region23: #{encoder_forward.31} parent=1 // pred_check_branch
      %134 = sbr.rel (0) target = $region25
    $region24: #{encoder_forward.31} parent=1 // pred_region
      %136 = vsyncadd [#allocation3], 0
      %s137 = sshll.u32 [#allocation2], 4
      %s138 = int_to_ptr.vmem [resolvable:$true] %s137
      %s139 = sshll.u32 %s5, 4
      %s140 = int_to_ptr.hbm [resolvable:$true] %s139
      %145 = dma.vmem_to_hbm [thread:$0]  %s138, 512, %s140, [#allocation3], 128, 128, 8
    $region25: #{encoder_forward.31} parent=1 // pred_fallthru
      _
    // Predicated region
    $region26: #{encoder_forward.31} parent=1 // pred_check
      _
    $region27: #{encoder_forward.31} parent=1 // pred_check_branch
      %147 = sbr.rel (0) target = $region29
    $region28: #{encoder_forward.31} parent=1 // pred_region
      %149 = dma.done [#allocation3], 512
    $region29: #{encoder_forward.31} parent=1 // pred_fallthru
      _
    %150 = vsyncpa [#allocation3], 1

// kernel: encoder_forward.32
$region0: #{encoder_forward.32}
  #allocation0 [shape = 'u32[]', space=smem, size = 0x4, offset = 0x4, fixed_abs, tag = 'smem constant byte address 0x4 - core index']
  #allocation1 [shape = 'u32[72,128]{1,0:T(1,128)}', space=vmem, size = 0x9000, scoped, tag = 'internal scratch']
  #allocation2 [shape = 'f32[32,128]{1,0:T(8,128)}', space=vmem, size = 0x4000, scoped, tag = 'scratch operand']
  %s0 = inlined_call_operand.vmem [shape: bf16[32,144], index: 0, kind: input, shape index: {}]
  %s1 = inlined_call_operand.vmem [shape: bf16[144,128], index: 1, kind: input, shape index: {}]
  %s2 = inlined_call_operand.vmem [shape: f32[1,128], index: 2, kind: input, shape index: {}]
  %s3 = inlined_call_operand.vmem [shape: f32[32,128], index: 3, kind: output, shape index: {}]
  %s4 = sld [smem:[#allocation0]]
  $region30: #{encoder_forward.32} parent=0
    _
  %s6 = ssub.s32 1, %s4
  %s7 = scalar_select 0, %s6, %s4
  // Predicated region
  $region2: #{encoder_forward.32} parent=0 // pred_check
    _
  $region3: #{encoder_forward.32} parent=0 // pred_check_branch
    %9 = sbr.rel (0) target = $region5
  $region4: #{encoder_forward.32} parent=0 // pred_region
    _
  $region5: #{encoder_forward.32} parent=0 // pred_fallthru
    _
  // Predicated region
  $region6: #{encoder_forward.32} parent=0 // pred_check
    _
  $region7: #{encoder_forward.32} parent=0 // pred_check_branch
    %11 = sbr.rel (0) target = $region9
  $region8: #{encoder_forward.32} parent=0 // pred_region
    _
  $region9: #{encoder_forward.32} parent=0 // pred_fallthru
    _
  // Predicated region
  $region10: #{encoder_forward.32} parent=0 // pred_check
    _
  $region11: #{encoder_forward.32} parent=0 // pred_check_branch
    %13 = sbr.rel (0) target = $region13
  $region12: #{encoder_forward.32} parent=0 // pred_region
    _
  $region13: #{encoder_forward.32} parent=0 // pred_fallthru
    _
  %p15 = scmp.eq.s32.totalorder 0, 0
  // Predicated region
  $region14: #{encoder_forward.32} parent=0 // pred_check
    %p16 = pneg %p15
  $region15: #{encoder_forward.32} parent=0 // pred_check_branch
    %18 = sbr.rel (%p16) target = $region17
  $region16: #{encoder_forward.32} parent=0 // pred_region
    %19 = vst [vmem:[#allocation2] sm:$0xff] 0.0
    %20 = vst [vmem:[#allocation2 + $0x8] sm:$0xff] 0.0
    %21 = vst [vmem:[#allocation2 + $0x10] sm:$0xff] 0.0
    %22 = vst [vmem:[#allocation2 + $0x18] sm:$0xff] 0.0
  $region17: #{encoder_forward.32} parent=0 // pred_fallthru
    _
  %v23 = vld [vmem:[#allocation2] sm:$0xff]
  %v24 = vld [vmem:[#allocation2 + $0x8] sm:$0xff]
  %v25 = vld [vmem:[#allocation2 + $0x10] sm:$0xff]
  %v26 = vld [vmem:[#allocation2 + $0x18] sm:$0xff]
  %v27 = vld [vmem:[%s0] sm:$0xff]
  %v28 = vld [vmem:[%s0 + $0x8] sm:$0xff]
  %v29 = vld [vmem:[%s0 + $0x10] sm:$0xff]
  %v30 = vld [vmem:[%s0 + $0x18] sm:$0xff]
  %v31 = vld [vmem:[%s1] sm:$0xf]
  %v32 = vld [vmem:[%s1 + $0x4] sm:$0xf]
  %v33 = vld [vmem:[%s1 + $0x8] sm:$0xf]
  %v34 = vld [vmem:[%s1 + $0xc] sm:$0xf]
  %v35 = vld [vmem:[%s1 + $0x10] sm:$0xf]
  %v36 = vld [vmem:[%s1 + $0x14] sm:$0xf]
  %v37 = vld [vmem:[%s1 + $0x18] sm:$0xf]
  %v38 = vld [vmem:[%s1 + $0x1c] sm:$0xf]
  %v39 = vld [vmem:[%s1 + $0x20] sm:$0xf]
  %v40 = vld [vmem:[%s1 + $0x24] sm:$0xf]
  %v41 = vld [vmem:[%s1 + $0x28] sm:$0xf]
  %v42 = vld [vmem:[%s1 + $0x2c] sm:$0xf]
  %v43 = vld [vmem:[%s1 + $0x30] sm:$0xf]
  %v44 = vld [vmem:[%s1 + $0x34] sm:$0xf]
  %v45 = vld [vmem:[%s1 + $0x38] sm:$0xf]
  %v46 = vld [vmem:[%s1 + $0x3c] sm:$0xf]
  %v47 = vld [vmem:[%s1 + $0x40] sm:$0xf]
  %v48 = vld [vmem:[%s1 + $0x44] sm:$0xf]
  %v53 = vunpack.c.l.b16 %v27
  %v54 = vunpack.c.h.b16 %v27
  %v55 = vunpack.c.l.b16 %v28
  %v56 = vunpack.c.h.b16 %v28
  %v57 = vunpack.c.l.b16 %v29
  %v58 = vunpack.c.h.b16 %v29
  %v59 = vunpack.c.l.b16 %v30
  %v60 = vunpack.c.h.b16 %v30
  %v61 = vpack.c.b16 %v55, %v53
  %v62 = vpack.c.b16 %v56, %v54
  %v63 = vpack.c.b16 %v59, %v57
  %v64 = vpack.c.b16 %v60, %v58
  %v85 = vunpack.c.l.b16 %v31
  %v86 = vunpack.c.l.b16 %v32
  %v87 = vunpack.c.l.b16 %v33
  %v88 = vunpack.c.l.b16 %v34
  %v89 = vunpack.c.l.b16 %v35
  %v90 = vunpack.c.l.b16 %v36
  %v91 = vunpack.c.l.b16 %v37
  %v92 = vunpack.c.l.b16 %v38
  %v93 = vunpack.c.l.b16 %v39
  %v94 = vunpack.c.l.b16 %v40
  %v95 = vunpack.c.l.b16 %v41
  %v96 = vunpack.c.l.b16 %v42
  %v97 = vunpack.c.l.b16 %v43
  %v98 = vunpack.c.l.b16 %v44
  %v99 = vunpack.c.l.b16 %v45
  %v100 = vunpack.c.l.b16 %v46
  %v101 = vunpack.c.l.b16 %v47
  %v102 = vunpack.c.l.b16 %v48
  %v103 = vpack.c.b16 %v86, %v85
  %v104 = vpack.c.b16 %v88, %v87
  %v105 = vpack.c.b16 %v90, %v89
  %v106 = vpack.c.b16 %v92, %v91
  %v107 = vpack.c.b16 %v94, %v93
  %v108 = vpack.c.b16 %v96, %v95
  %v109 = vpack.c.b16 %v98, %v97
  %v110 = vpack.c.b16 %v100, %v99
  %v111 = vpack.c.b16 %v102, %v101
  %vm121 = vcmask 130048
  %v123 = vsel %vm121, %v62, 0
  %v126 = vsel %vm121, %v64, 0
  %128 = vmatpush.bf16.msra.mxu0 %v110
  %129 = vmatpush.bf16.msra.mxu0 %v109
  %130 = vmatpush.bf16.msra.mxu0 %v108
  %131 = vmatpush.bf16.msra.mxu0 %v107
  %132 = vmatpush.bf16.msra.mxu0 %v106
  %133 = vmatpush.bf16.msra.mxu0 %v105
  %134 = vmatpush.bf16.msra.mxu0 %v104
  %135 = vmatpush.bf16.msra.mxu0 %v103
  %136 = vmatmul.bf16.gmra.mxu0 %v61
  %v137 = vpop.f32.mrf.mxu0
  %v138 = vadd.f32 0.0, %v137
  %v139 = vpop.f32.mrf.mxu0
  %v140 = vadd.f32 0.0, %v139
  %141 = vmatmul.bf16.gmra.mxu0 %v63
  %v142 = vpop.f32.mrf.mxu0
  %v143 = vadd.f32 0.0, %v142
  %v144 = vpop.f32.mrf.mxu0
  %v145 = vadd.f32 0.0, %v144
  %146 = vdwg.mxu0
  %147 = vmatpush.bf16.msra.mxu0 0
  %148 = vmatpush.bf16.msra.mxu0 0
  %149 = vmatpush.bf16.msra.mxu0 0
  %150 = vmatpush.bf16.msra.mxu0 0
  %151 = vmatpush.bf16.msra.mxu0 0
  %152 = vmatpush.bf16.msra.mxu0 0
  %153 = vmatpush.bf16.msra.mxu0 0
  %154 = vmatpush.bf16.msra.mxu0 %v111
  %155 = vmatmul.bf16.gmra.mxu0 %v123
  %v156 = vpop.f32.mrf.mxu0
  %v157 = vadd.f32 %v138, %v156
  %v158 = vpop.f32.mrf.mxu0
  %v159 = vadd.f32 %v140, %v158
  %160 = vmatmul.bf16.gmra.mxu0 %v126
  %v161 = vpop.f32.mrf.mxu0
  %v162 = vadd.f32 %v143, %v161
  %v163 = vpop.f32.mrf.mxu0
  %v164 = vadd.f32 %v145, %v163
  %165 = vdwg.mxu0
  %v166 = vadd.f32 %v23, %v157
  %v167 = vadd.f32 %v24, %v159
  %v168 = vadd.f32 %v25, %v162
  %v169 = vadd.f32 %v26, %v164
  %170 = vst [vmem:[#allocation2] sm:$0xff] %v166
  %171 = vst [vmem:[#allocation2 + $0x8] sm:$0xff] %v167
  %172 = vst [vmem:[#allocation2 + $0x10] sm:$0xff] %v168
  %173 = vst [vmem:[#allocation2 + $0x18] sm:$0xff] %v169
  // Predicated region
  $region18: #{encoder_forward.32} parent=0 // pred_check
    %p174 = pneg %p15
  $region19: #{encoder_forward.32} parent=0 // pred_check_branch
    %176 = sbr.rel (%p174) target = $region21
  $region20: #{encoder_forward.32} parent=0 // pred_region
    %v177 = vld [vmem:[#allocation2] sm:$0xff]
    %v178 = vld [vmem:[#allocation2 + $0x8] sm:$0xff]
    %v179 = vld [vmem:[#allocation2 + $0x10] sm:$0xff]
    %v180 = vld [vmem:[#allocation2 + $0x18] sm:$0xff]
    %v181 = vld [vmem:[%s2] sm:$0x1]
    %v183 = vperm.slane %v181, 0
    %v185 = vadd.f32 %v177, %v183
    %v186 = vadd.f32 %v178, %v183
    %v187 = vadd.f32 %v179, %v183
    %v188 = vadd.f32 %v180, %v183
    %v189 = vmax.f32 %v185, 0.0
    %v190 = vmax.f32 %v186, 0.0
    %v191 = vmax.f32 %v187, 0.0
    %v192 = vmax.f32 %v188, 0.0
    %193 = vst [vmem:[%s3] sm:$0xff] %v189
    %194 = vst [vmem:[%s3 + $0x8] sm:$0xff] %v190
    %195 = vst [vmem:[%s3 + $0x10] sm:$0xff] %v191
    %196 = vst [vmem:[%s3 + $0x18] sm:$0xff] %v192
  $region21: #{encoder_forward.32} parent=0 // pred_fallthru
    _
  // Predicated region
  $region22: #{encoder_forward.32} parent=0 // pred_check
    _
  $region23: #{encoder_forward.32} parent=0 // pred_check_branch
    %198 = sbr.rel (0) target = $region25
  $region24: #{encoder_forward.32} parent=0 // pred_region
    _
  $region25: #{encoder_forward.32} parent=0 // pred_fallthru
    _
  // Predicated region
  $region26: #{encoder_forward.32} parent=0 // pred_check
    _
  $region27: #{encoder_forward.32} parent=0 // pred_check_branch
    %200 = sbr.rel (0) target = $region29
  $region28: #{encoder_forward.32} parent=0 // pred_region
    _
  $region29: #{encoder_forward.32} parent=0 // pred_fallthru
    _

// kernel: encoder_forward.33
$region0: #{encoder_forward.33}
  #allocation0 [shape = 'u32[]', space=smem, size = 0x4, offset = 0x4, fixed_abs, tag = 'smem constant byte address 0x4 - core index']
  #allocation1 [shape = 'u32[72,128]{1,0:T(1,128)}', space=vmem, size = 0x9000, scoped, tag = 'internal scratch']
  #allocation2 [shape = 'f32[16,128]{1,0:T(8,128)}', space=vmem, size = 0x2000, scoped, tag = 'scratch operand']
  %s0 = inlined_call_operand.vmem [shape: bf16[16,144], index: 0, kind: input, shape index: {}]
  %s1 = inlined_call_operand.vmem [shape: bf16[144,128], index: 1, kind: input, shape index: {}]
  %s2 = inlined_call_operand.vmem [shape: f32[1,128], index: 2, kind: input, shape index: {}]
  %s3 = inlined_call_operand.vmem [shape: f32[16,2], index: 3, kind: input, shape index: {}]
  %s4 = inlined_call_operand.vmem [shape: f32[16,128], index: 4, kind: output, shape index: {}]
  %s5 = sld [smem:[#allocation0]]
  $region34: #{encoder_forward.33} parent=0
    _
  %s7 = ssub.s32 1, %s5
  %s8 = scalar_select 0, %s7, %s5
  // Predicated region
  $region2: #{encoder_forward.33} parent=0 // pred_check
    _
  $region3: #{encoder_forward.33} parent=0 // pred_check_branch
    %10 = sbr.rel (0) target = $region5
  $region4: #{encoder_forward.33} parent=0 // pred_region
    _
  $region5: #{encoder_forward.33} parent=0 // pred_fallthru
    _
  // Predicated region
  $region6: #{encoder_forward.33} parent=0 // pred_check
    _
  $region7: #{encoder_forward.33} parent=0 // pred_check_branch
    %12 = sbr.rel (0) target = $region9
  $region8: #{encoder_forward.33} parent=0 // pred_region
    _
  $region9: #{encoder_forward.33} parent=0 // pred_fallthru
    _
  // Predicated region
  $region10: #{encoder_forward.33} parent=0 // pred_check
    _
  $region11: #{encoder_forward.33} parent=0 // pred_check_branch
    %14 = sbr.rel (0) target = $region13
  $region12: #{encoder_forward.33} parent=0 // pred_region
    _
  $region13: #{encoder_forward.33} parent=0 // pred_fallthru
    _
  // Predicated region
  $region14: #{encoder_forward.33} parent=0 // pred_check
    _
  $region15: #{encoder_forward.33} parent=0 // pred_check_branch
    %16 = sbr.rel (0) target = $region17
  $region16: #{encoder_forward.33} parent=0 // pred_region
    _
  $region17: #{encoder_forward.33} parent=0 // pred_fallthru
    _
  %p18 = scmp.eq.s32.totalorder 0, 0
  // Predicated region
  $region18: #{encoder_forward.33} parent=0 // pred_check
    %p19 = pneg %p18
  $region19: #{encoder_forward.33} parent=0 // pred_check_branch
    %21 = sbr.rel (%p19) target = $region21
  $region20: #{encoder_forward.33} parent=0 // pred_region
    %22 = vst [vmem:[#allocation2] sm:$0xff] 0.0
    %23 = vst [vmem:[#allocation2 + $0x8] sm:$0xff] 0.0
  $region21: #{encoder_forward.33} parent=0 // pred_fallthru
    _
  %v24 = vld [vmem:[#allocation2] sm:$0xff]
  %v25 = vld [vmem:[#allocation2 + $0x8] sm:$0xff]
  %v26 = vld [vmem:[%s0] sm:$0xff]
  %v27 = vld [vmem:[%s0 + $0x8] sm:$0xff]
  %v28 = vld [vmem:[%s1] sm:$0xf]
  %v29 = vld [vmem:[%s1 + $0x4] sm:$0xf]
  %v30 = vld [vmem:[%s1 + $0x8] sm:$0xf]
  %v31 = vld [vmem:[%s1 + $0xc] sm:$0xf]
  %v32 = vld [vmem:[%s1 + $0x10] sm:$0xf]
  %v33 = vld [vmem:[%s1 + $0x14] sm:$0xf]
  %v34 = vld [vmem:[%s1 + $0x18] sm:$0xf]
  %v35 = vld [vmem:[%s1 + $0x1c] sm:$0xf]
  %v36 = vld [vmem:[%s1 + $0x20] sm:$0xf]
  %v37 = vld [vmem:[%s1 + $0x24] sm:$0xf]
  %v38 = vld [vmem:[%s1 + $0x28] sm:$0xf]
  %v39 = vld [vmem:[%s1 + $0x2c] sm:$0xf]
  %v40 = vld [vmem:[%s1 + $0x30] sm:$0xf]
  %v41 = vld [vmem:[%s1 + $0x34] sm:$0xf]
  %v42 = vld [vmem:[%s1 + $0x38] sm:$0xf]
  %v43 = vld [vmem:[%s1 + $0x3c] sm:$0xf]
  %v44 = vld [vmem:[%s1 + $0x40] sm:$0xf]
  %v45 = vld [vmem:[%s1 + $0x44] sm:$0xf]
  %v48 = vunpack.c.l.b16 %v26
  %v49 = vunpack.c.h.b16 %v26
  %v50 = vunpack.c.l.b16 %v27
  %v51 = vunpack.c.h.b16 %v27
  %v52 = vpack.c.b16 %v50, %v48
  %v53 = vpack.c.b16 %v51, %v49
  %v73 = vunpack.c.l.b16 %v28
  %v74 = vunpack.c.l.b16 %v29
  %v75 = vunpack.c.l.b16 %v30
  %v76 = vunpack.c.l.b16 %v31
  %v77 = vunpack.c.l.b16 %v32
  %v78 = vunpack.c.l.b16 %v33
  %v79 = vunpack.c.l.b16 %v34
  %v80 = vunpack.c.l.b16 %v35
  %v81 = vunpack.c.l.b16 %v36
  %v82 = vunpack.c.l.b16 %v37
  %v83 = vunpack.c.l.b16 %v38
  %v84 = vunpack.c.l.b16 %v39
  %v85 = vunpack.c.l.b16 %v40
  %v86 = vunpack.c.l.b16 %v41
  %v87 = vunpack.c.l.b16 %v42
  %v88 = vunpack.c.l.b16 %v43
  %v89 = vunpack.c.l.b16 %v44
  %v90 = vunpack.c.l.b16 %v45
  %v91 = vpack.c.b16 %v74, %v73
  %v92 = vpack.c.b16 %v76, %v75
  %v93 = vpack.c.b16 %v78, %v77
  %v94 = vpack.c.b16 %v80, %v79
  %v95 = vpack.c.b16 %v82, %v81
  %v96 = vpack.c.b16 %v84, %v83
  %v97 = vpack.c.b16 %v86, %v85
  %v98 = vpack.c.b16 %v88, %v87
  %v99 = vpack.c.b16 %v90, %v89
  %vm109 = vcmask 130048
  %v111 = vsel %vm109, %v53, 0
  %113 = vmatpush.bf16.msra.mxu0 %v98
  %114 = vmatpush.bf16.msra.mxu0 %v97
  %115 = vmatpush.bf16.msra.mxu0 %v96
  %116 = vmatpush.bf16.msra.mxu0 %v95
  %117 = vmatpush.bf16.msra.mxu0 %v94
  %118 = vmatpush.bf16.msra.mxu0 %v93
  %119 = vmatpush.bf16.msra.mxu0 %v92
  %120 = vmatpush.bf16.msra.mxu0 %v91
  %121 = vmatmul.bf16.gmra.mxu0 %v52
  %v122 = vpop.f32.mrf.mxu0
  %v123 = vadd.f32 0.0, %v122
  %v124 = vpop.f32.mrf.mxu0
  %v125 = vadd.f32 0.0, %v124
  %126 = vdwg.mxu0
  %127 = vmatpush.bf16.msra.mxu0 0
  %128 = vmatpush.bf16.msra.mxu0 0
  %129 = vmatpush.bf16.msra.mxu0 0
  %130 = vmatpush.bf16.msra.mxu0 0
  %131 = vmatpush.bf16.msra.mxu0 0
  %132 = vmatpush.bf16.msra.mxu0 0
  %133 = vmatpush.bf16.msra.mxu0 0
  %134 = vmatpush.bf16.msra.mxu0 %v99
  %135 = vmatmul.bf16.gmra.mxu0 %v111
  %v136 = vpop.f32.mrf.mxu0
  %v137 = vadd.f32 %v123, %v136
  %v138 = vpop.f32.mrf.mxu0
  %v139 = vadd.f32 %v125, %v138
  %140 = vdwg.mxu0
  %v141 = vadd.f32 %v24, %v137
  %v142 = vadd.f32 %v25, %v139
  %143 = vst [vmem:[#allocation2] sm:$0xff] %v141
  %144 = vst [vmem:[#allocation2 + $0x8] sm:$0xff] %v142
  // Predicated region
  $region22: #{encoder_forward.33} parent=0 // pred_check
    %p145 = pneg %p18
  $region23: #{encoder_forward.33} parent=0 // pred_check_branch
    %147 = sbr.rel (%p145) target = $region25
  $region24: #{encoder_forward.33} parent=0 // pred_region
    %v148 = vld [vmem:[#allocation2] sm:$0xff]
    %v149 = vld [vmem:[#allocation2 + $0x8] sm:$0xff]
    %v150 = vld [vmem:[%s3] sm:$0xff]
    %v151 = vld [vmem:[%s3 + $0x8] sm:$0xff]
    %153 = vset.pattern.permute.xlu0 0
    %154 = vperm.xlu0 %153, %v150
    %v155 = vpop.permute.xlu0 %154
    %158 = vset.pattern.permute.xlu0 0
    %159 = vperm.xlu0 %158, %v151
    %v160 = vpop.permute.xlu0 %159
    %v162 = vmul.f32 %v148, %v155
    %v163 = vmul.f32 %v149, %v160
    %v164 = vld [vmem:[%s2] sm:$0x1]
    %v166 = vperm.slane %v164, 0
    %168 = vset.pattern.permute.xlu0 1
    %169 = vperm.xlu0 %168, %v150
    %v170 = vpop.permute.xlu0 %169
    %172 = vset.pattern.permute.xlu0 1
    %173 = vperm.xlu0 %172, %v151
    %v174 = vpop.permute.xlu0 %173
    %v176 = vmul.f32 %v166, %v170
    %v177 = vmul.f32 %v166, %v174
    %v178 = vadd.f32 %v162, %v176
    %v179 = vadd.f32 %v163, %v177
    %v180 = vmax.f32 %v178, 0.0
    %v181 = vmax.f32 %v179, 0.0
    %182 = vst [vmem:[%s4] sm:$0xff] %v180
    %183 = vst [vmem:[%s4 + $0x8] sm:$0xff] %v181
  $region25: #{encoder_forward.33} parent=0 // pred_fallthru
    _
  // Predicated region
  $region26: #{encoder_forward.33} parent=0 // pred_check
    _
  $region27: #{encoder_forward.33} parent=0 // pred_check_branch
    %185 = sbr.rel (0) target = $region29
  $region28: #{encoder_forward.33} parent=0 // pred_region
    _
  $region29: #{encoder_forward.33} parent=0 // pred_fallthru
    _
  // Predicated region
  $region30: #{encoder_forward.33} parent=0 // pred_check
    _
  $region31: #{encoder_forward.33} parent=0 // pred_check_branch
    %187 = sbr.rel (0) target = $region33
  $region32: #{encoder_forward.33} parent=0 // pred_region
    _
  $region33: #{encoder_forward.33} parent=0 // pred_fallthru
    _

// kernel: encoder_forward.35
$region0: #{encoder_forward.35}
  #allocation0 [shape = 'u32[]', space=smem, size = 0x4, offset = 0x4, fixed_abs, tag = 'smem constant byte address 0x4 - core index']
  #allocation1 [shape = 'u32[72,128]{1,0:T(1,128)}', space=vmem, size = 0x9000, scoped, tag = 'internal scratch']
  %s0 = inlined_call_operand.vmem [shape: bf16[16,32], index: 0, kind: input, shape index: {}]
  %s1 = inlined_call_operand.vmem [shape: bf16[16,32], index: 1, kind: input, shape index: {}]
  %s2 = inlined_call_operand.vmem [shape: bf16[32,128], index: 2, kind: input, shape index: {}]
  %s3 = inlined_call_operand.vmem [shape: bf16[32,128], index: 3, kind: input, shape index: {}]
  %s4 = inlined_call_operand.vmem [shape: f32[1,128], index: 4, kind: input, shape index: {}]
  %s5 = inlined_call_operand.vmem [shape: f32[16,128], index: 5, kind: output, shape index: {}]
  %s6 = sld [smem:[#allocation0]]
  $region30: #{encoder_forward.35} parent=0
    _
  %s8 = ssub.s32 1, %s6
  %s9 = scalar_select 0, %s8, %s6
  // Predicated region
  $region2: #{encoder_forward.35} parent=0 // pred_check
    _
  $region3: #{encoder_forward.35} parent=0 // pred_check_branch
    %11 = sbr.rel (0) target = $region5
  $region4: #{encoder_forward.35} parent=0 // pred_region
    _
  $region5: #{encoder_forward.35} parent=0 // pred_fallthru
    _
  // Predicated region
  $region6: #{encoder_forward.35} parent=0 // pred_check
    _
  $region7: #{encoder_forward.35} parent=0 // pred_check_branch
    %13 = sbr.rel (0) target = $region9
  $region8: #{encoder_forward.35} parent=0 // pred_region
    _
  $region9: #{encoder_forward.35} parent=0 // pred_fallthru
    _
  // Predicated region
  $region10: #{encoder_forward.35} parent=0 // pred_check
    _
  $region11: #{encoder_forward.35} parent=0 // pred_check_branch
    %15 = sbr.rel (0) target = $region13
  $region12: #{encoder_forward.35} parent=0 // pred_region
    _
  $region13: #{encoder_forward.35} parent=0 // pred_fallthru
    _
  // Predicated region
  $region14: #{encoder_forward.35} parent=0 // pred_check
    _
  $region15: #{encoder_forward.35} parent=0 // pred_check_branch
    %17 = sbr.rel (0) target = $region17
  $region16: #{encoder_forward.35} parent=0 // pred_region
    _
  $region17: #{encoder_forward.35} parent=0 // pred_fallthru
    _
  // Predicated region
  $region18: #{encoder_forward.35} parent=0 // pred_check
    _
  $region19: #{encoder_forward.35} parent=0 // pred_check_branch
    %19 = sbr.rel (0) target = $region21
  $region20: #{encoder_forward.35} parent=0 // pred_region
    _
  $region21: #{encoder_forward.35} parent=0 // pred_fallthru
    _
  %v21 = vld [vmem:[%s0] sm:$0xf]
  %v22 = vld [vmem:[%s0 + $0x4] sm:$0xf]
  %v23 = vld [vmem:[%s2] sm:$0xf]
  %v24 = vld [vmem:[%s2 + $0x4] sm:$0xf]
  %v25 = vld [vmem:[%s2 + $0x8] sm:$0xf]
  %v26 = vld [vmem:[%s2 + $0xc] sm:$0xf]
  %v27 = vld [vmem:[%s1] sm:$0xf]
  %v28 = vld [vmem:[%s1 + $0x4] sm:$0xf]
  %v29 = vld [vmem:[%s3] sm:$0xf]
  %v30 = vld [vmem:[%s3 + $0x4] sm:$0xf]
  %v31 = vld [vmem:[%s3 + $0x8] sm:$0xf]
  %v32 = vld [vmem:[%s3 + $0xc] sm:$0xf]
  %v35 = vunpack.c.l.b16 %v27
  %v36 = vunpack.c.l.b16 %v28
  %v37 = vpack.c.b16 %v36, %v35
  %v42 = vunpack.c.l.b16 %v29
  %v43 = vunpack.c.l.b16 %v30
  %v44 = vunpack.c.l.b16 %v31
  %v45 = vunpack.c.l.b16 %v32
  %v46 = vpack.c.b16 %v43, %v42
  %v47 = vpack.c.b16 %v45, %v44
  %vm50 = vcmask 261120
  %v52 = vsel %vm50, %v37, 0
  %54 = vmatpush.bf16.msra.mxu0 0
  %55 = vmatpush.bf16.msra.mxu0 0
  %56 = vmatpush.bf16.msra.mxu0 0
  %57 = vmatpush.bf16.msra.mxu0 0
  %58 = vmatpush.bf16.msra.mxu0 0
  %59 = vmatpush.bf16.msra.mxu0 0
  %60 = vmatpush.bf16.msra.mxu0 %v47
  %61 = vmatpush.bf16.msra.mxu0 %v46
  %62 = vmatmul.bf16.gmra.mxu0 %v52
  %v63 = vpop.f32.mrf.mxu0
  %v64 = vadd.f32 0.0, %v63
  %v65 = vpop.f32.mrf.mxu0
  %v66 = vadd.f32 0.0, %v65
  %67 = vdwg.mxu0
  %v70 = vunpack.c.l.b16 %v21
  %v71 = vunpack.c.l.b16 %v22
  %v72 = vpack.c.b16 %v71, %v70
  %v77 = vunpack.c.l.b16 %v23
  %v78 = vunpack.c.l.b16 %v24
  %v79 = vunpack.c.l.b16 %v25
  %v80 = vunpack.c.l.b16 %v26
  %v81 = vpack.c.b16 %v78, %v77
  %v82 = vpack.c.b16 %v80, %v79
  %v86 = vsel %vm50, %v72, 0
  %88 = vmatpush.bf16.msra.mxu0 0
  %89 = vmatpush.bf16.msra.mxu0 0
  %90 = vmatpush.bf16.msra.mxu0 0
  %91 = vmatpush.bf16.msra.mxu0 0
  %92 = vmatpush.bf16.msra.mxu0 0
  %93 = vmatpush.bf16.msra.mxu0 0
  %94 = vmatpush.bf16.msra.mxu0 %v82
  %95 = vmatpush.bf16.msra.mxu0 %v81
  %96 = vmatmul.bf16.gmra.mxu0 %v86
  %v97 = vpop.f32.mrf.mxu0
  %v98 = vadd.f32 %v64, %v97
  %v99 = vpop.f32.mrf.mxu0
  %v100 = vadd.f32 %v66, %v99
  %101 = vdwg.mxu0
  %v102 = vld [vmem:[%s4] sm:$0x1]
  %v104 = vperm.slane %v102, 0
  %v106 = vadd.f32 %v98, %v104
  %v107 = vadd.f32 %v100, %v104
  %v108 = vmax.f32 %v106, 0.0
  %v109 = vmax.f32 %v107, 0.0
  %110 = vst [vmem:[%s5] sm:$0xff] %v108
  %111 = vst [vmem:[%s5 + $0x8] sm:$0xff] %v109
  // Predicated region
  $region22: #{encoder_forward.35} parent=0 // pred_check
    _
  $region23: #{encoder_forward.35} parent=0 // pred_check_branch
    %113 = sbr.rel (0) target = $region25
  $region24: #{encoder_forward.35} parent=0 // pred_region
    _
  $region25: #{encoder_forward.35} parent=0 // pred_fallthru
    _
  // Predicated region
  $region26: #{encoder_forward.35} parent=0 // pred_check
    _
  $region27: #{encoder_forward.35} parent=0 // pred_check_branch
    %115 = sbr.rel (0) target = $region29
  $region28: #{encoder_forward.35} parent=0 // pred_region
    _
  $region29: #{encoder_forward.35} parent=0 // pred_fallthru
    _

// kernel: encoder_forward.36
$region0: #{encoder_forward.36}
  #allocation0 [shape = 'u32[]', space=smem, size = 0x4, offset = 0x4, fixed_abs, tag = 'smem constant byte address 0x4 - core index']
  #allocation1 [shape = 'u32[72,128]{1,0:T(1,128)}', space=vmem, size = 0x9000, scoped, tag = 'internal scratch']
  #allocation2 [shape = 'f32[16,128]{1,0:T(8,128)}', space=vmem, size = 0x2000, scoped, tag = 'scratch operand']
  %s0 = inlined_call_operand.vmem [shape: bf16[16,288], index: 0, kind: input, shape index: {}]
  %s1 = inlined_call_operand.vmem [shape: bf16[288,128], index: 1, kind: input, shape index: {}]
  %s2 = inlined_call_operand.vmem [shape: f32[1,128], index: 2, kind: input, shape index: {}]
  %s3 = inlined_call_operand.vmem [shape: f32[16,128], index: 3, kind: output, shape index: {}]
  %s4 = sld [smem:[#allocation0]]
  $region30: #{encoder_forward.36} parent=0
    _
  %s6 = ssub.s32 1, %s4
  %s7 = scalar_select 0, %s6, %s4
  // Predicated region
  $region2: #{encoder_forward.36} parent=0 // pred_check
    _
  $region3: #{encoder_forward.36} parent=0 // pred_check_branch
    %9 = sbr.rel (0) target = $region5
  $region4: #{encoder_forward.36} parent=0 // pred_region
    _
  $region5: #{encoder_forward.36} parent=0 // pred_fallthru
    _
  // Predicated region
  $region6: #{encoder_forward.36} parent=0 // pred_check
    _
  $region7: #{encoder_forward.36} parent=0 // pred_check_branch
    %11 = sbr.rel (0) target = $region9
  $region8: #{encoder_forward.36} parent=0 // pred_region
    _
  $region9: #{encoder_forward.36} parent=0 // pred_fallthru
    _
  // Predicated region
  $region10: #{encoder_forward.36} parent=0 // pred_check
    _
  $region11: #{encoder_forward.36} parent=0 // pred_check_branch
    %13 = sbr.rel (0) target = $region13
  $region12: #{encoder_forward.36} parent=0 // pred_region
    _
  $region13: #{encoder_forward.36} parent=0 // pred_fallthru
    _
  %p15 = scmp.eq.s32.totalorder 0, 0
  // Predicated region
  $region14: #{encoder_forward.36} parent=0 // pred_check
    %p16 = pneg %p15
  $region15: #{encoder_forward.36} parent=0 // pred_check_branch
    %18 = sbr.rel (%p16) target = $region17
  $region16: #{encoder_forward.36} parent=0 // pred_region
    %19 = vst [vmem:[#allocation2] sm:$0xff] 0.0
    %20 = vst [vmem:[#allocation2 + $0x8] sm:$0xff] 0.0
  $region17: #{encoder_forward.36} parent=0 // pred_fallthru
    _
  %v21 = vld [vmem:[#allocation2] sm:$0xff]
  %v22 = vld [vmem:[#allocation2 + $0x8] sm:$0xff]
  %v23 = vld [vmem:[%s0] sm:$0xff]
  %v24 = vld [vmem:[%s0 + $0x8] sm:$0xf]
  %v25 = vld [vmem:[%s0 + $0xc] sm:$0xff]
  %v26 = vld [vmem:[%s0 + $0x14] sm:$0xf]
  %v27 = vld [vmem:[%s1] sm:$0xf]
  %v28 = vld [vmem:[%s1 + $0x4] sm:$0xf]
  %v29 = vld [vmem:[%s1 + $0x8] sm:$0xf]
  %v30 = vld [vmem:[%s1 + $0xc] sm:$0xf]
  %v31 = vld [vmem:[%s1 + $0x10] sm:$0xf]
  %v32 = vld [vmem:[%s1 + $0x14] sm:$0xf]
  %v33 = vld [vmem:[%s1 + $0x18] sm:$0xf]
  %v34 = vld [vmem:[%s1 + $0x1c] sm:$0xf]
  %v35 = vld [vmem:[%s1 + $0x20] sm:$0xf]
  %v36 = vld [vmem:[%s1 + $0x24] sm:$0xf]
  %v37 = vld [vmem:[%s1 + $0x28] sm:$0xf]
  %v38 = vld [vmem:[%s1 + $0x2c] sm:$0xf]
  %v39 = vld [vmem:[%s1 + $0x30] sm:$0xf]
  %v40 = vld [vmem:[%s1 + $0x34] sm:$0xf]
  %v41 = vld [vmem:[%s1 + $0x38] sm:$0xf]
  %v42 = vld [vmem:[%s1 + $0x3c] sm:$0xf]
  %v43 = vld [vmem:[%s1 + $0x40] sm:$0xf]
  %v44 = vld [vmem:[%s1 + $0x44] sm:$0xf]
  %v45 = vld [vmem:[%s1 + $0x48] sm:$0xf]
  %v46 = vld [vmem:[%s1 + $0x4c] sm:$0xf]
  %v47 = vld [vmem:[%s1 + $0x50] sm:$0xf]
  %v48 = vld [vmem:[%s1 + $0x54] sm:$0xf]
  %v49 = vld [vmem:[%s1 + $0x58] sm:$0xf]
  %v50 = vld [vmem:[%s1 + $0x5c] sm:$0xf]
  %v51 = vld [vmem:[%s1 + $0x60] sm:$0xf]
  %v52 = vld [vmem:[%s1 + $0x64] sm:$0xf]
  %v53 = vld [vmem:[%s1 + $0x68] sm:$0xf]
  %v54 = vld [vmem:[%s1 + $0x6c] sm:$0xf]
  %v55 = vld [vmem:[%s1 + $0x70] sm:$0xf]
  %v56 = vld [vmem:[%s1 + $0x74] sm:$0xf]
  %v57 = vld [vmem:[%s1 + $0x78] sm:$0xf]
  %v58 = vld [vmem:[%s1 + $0x7c] sm:$0xf]
  %v59 = vld [vmem:[%s1 + $0x80] sm:$0xf]
  %v60 = vld [vmem:[%s1 + $0x84] sm:$0xf]
  %v61 = vld [vmem:[%s1 + $0x88] sm:$0xf]
  %v62 = vld [vmem:[%s1 + $0x8c] sm:$0xf]
  %v67 = vunpack.c.l.b16 %v23
  %v68 = vunpack.c.h.b16 %v23
  %v69 = vunpack.c.l.b16 %v24
  %v70 = vunpack.c.l.b16 %v25
  %v71 = vunpack.c.h.b16 %v25
  %v72 = vunpack.c.l.b16 %v26
  %v73 = vpack.c.b16 %v70, %v67
  %v74 = vpack.c.b16 %v71, %v68
  %v75 = vpack.c.b16 %v72, %v69
  %v114 = vunpack.c.l.b16 %v27
  %v115 = vunpack.c.l.b16 %v28
  %v116 = vunpack.c.l.b16 %v29
  %v117 = vunpack.c.l.b16 %v30
  %v118 = vunpack.c.l.b16 %v31
  %v119 = vunpack.c.l.b16 %v32
  %v120 = vunpack.c.l.b16 %v33
  %v121 = vunpack.c.l.b16 %v34
  %v122 = vunpack.c.l.b16 %v35
  %v123 = vunpack.c.l.b16 %v36
  %v124 = vunpack.c.l.b16 %v37
  %v125 = vunpack.c.l.b16 %v38
  %v126 = vunpack.c.l.b16 %v39
  %v127 = vunpack.c.l.b16 %v40
  %v128 = vunpack.c.l.b16 %v41
  %v129 = vunpack.c.l.b16 %v42
  %v130 = vunpack.c.l.b16 %v43
  %v131 = vunpack.c.l.b16 %v44
  %v132 = vunpack.c.l.b16 %v45
  %v133 = vunpack.c.l.b16 %v46
  %v134 = vunpack.c.l.b16 %v47
  %v135 = vunpack.c.l.b16 %v48
  %v136 = vunpack.c.l.b16 %v49
  %v137 = vunpack.c.l.b16 %v50
  %v138 = vunpack.c.l.b16 %v51
  %v139 = vunpack.c.l.b16 %v52
  %v140 = vunpack.c.l.b16 %v53
  %v141 = vunpack.c.l.b16 %v54
  %v142 = vunpack.c.l.b16 %v55
  %v143 = vunpack.c.l.b16 %v56
  %v144 = vunpack.c.l.b16 %v57
  %v145 = vunpack.c.l.b16 %v58
  %v146 = vunpack.c.l.b16 %v59
  %v147 = vunpack.c.l.b16 %v60
  %v148 = vunpack.c.l.b16 %v61
  %v149 = vunpack.c.l.b16 %v62
  %v150 = vpack.c.b16 %v115, %v114
  %v151 = vpack.c.b16 %v117, %v116
  %v152 = vpack.c.b16 %v119, %v118
  %v153 = vpack.c.b16 %v121, %v120
  %v154 = vpack.c.b16 %v123, %v122
  %v155 = vpack.c.b16 %v125, %v124
  %v156 = vpack.c.b16 %v127, %v126
  %v157 = vpack.c.b16 %v129, %v128
  %v158 = vpack.c.b16 %v131, %v130
  %v159 = vpack.c.b16 %v133, %v132
  %v160 = vpack.c.b16 %v135, %v134
  %v161 = vpack.c.b16 %v137, %v136
  %v162 = vpack.c.b16 %v139, %v138
  %v163 = vpack.c.b16 %v141, %v140
  %v164 = vpack.c.b16 %v143, %v142
  %v165 = vpack.c.b16 %v145, %v144
  %v166 = vpack.c.b16 %v147, %v146
  %v167 = vpack.c.b16 %v149, %v148
  %vm186 = vcmask 261120
  %v188 = vsel %vm186, %v75, 0
  %190 = vmatpush.bf16.msra.mxu0 %v157
  %191 = vmatpush.bf16.msra.mxu0 %v156
  %192 = vmatpush.bf16.msra.mxu0 %v155
  %193 = vmatpush.bf16.msra.mxu0 %v154
  %194 = vmatpush.bf16.msra.mxu0 %v153
  %195 = vmatpush.bf16.msra.mxu0 %v152
  %196 = vmatpush.bf16.msra.mxu0 %v151
  %197 = vmatpush.bf16.msra.mxu0 %v150
  %198 = vmatmul.bf16.gmra.mxu0 %v73
  %v199 = vpop.f32.mrf.mxu0
  %v200 = vadd.f32 0.0, %v199
  %v201 = vpop.f32.mrf.mxu0
  %v202 = vadd.f32 0.0, %v201
  %203 = vdwg.mxu0
  %204 = vmatpush.bf16.msra.mxu0 %v165
  %205 = vmatpush.bf16.msra.mxu0 %v164
  %206 = vmatpush.bf16.msra.mxu0 %v163
  %207 = vmatpush.bf16.msra.mxu0 %v162
  %208 = vmatpush.bf16.msra.mxu0 %v161
  %209 = vmatpush.bf16.msra.mxu0 %v160
  %210 = vmatpush.bf16.msra.mxu0 %v159
  %211 = vmatpush.bf16.msra.mxu0 %v158
  %212 = vmatmul.bf16.gmra.mxu0 %v74
  %v213 = vpop.f32.mrf.mxu0
  %v214 = vadd.f32 %v200, %v213
  %v215 = vpop.f32.mrf.mxu0
  %v216 = vadd.f32 %v202, %v215
  %217 = vdwg.mxu0
  %218 = vmatpush.bf16.msra.mxu0 0
  %219 = vmatpush.bf16.msra.mxu0 0
  %220 = vmatpush.bf16.msra.mxu0 0
  %221 = vmatpush.bf16.msra.mxu0 0
  %222 = vmatpush.bf16.msra.mxu0 0
  %223 = vmatpush.bf16.msra.mxu0 0
  %224 = vmatpush.bf16.msra.mxu0 %v167
  %225 = vmatpush.bf16.msra.mxu0 %v166
  %226 = vmatmul.bf16.gmra.mxu0 %v188
  %v227 = vpop.f32.mrf.mxu0
  %v228 = vadd.f32 %v214, %v227
  %v229 = vpop.f32.mrf.mxu0
  %v230 = vadd.f32 %v216, %v229
  %231 = vdwg.mxu0
  %v232 = vadd.f32 %v21, %v228
  %v233 = vadd.f32 %v22, %v230
  %234 = vst [vmem:[#allocation2] sm:$0xff] %v232
  %235 = vst [vmem:[#allocation2 + $0x8] sm:$0xff] %v233
  // Predicated region
  $region18: #{encoder_forward.36} parent=0 // pred_check
    %p236 = pneg %p15
  $region19: #{encoder_forward.36} parent=0 // pred_check_branch
    %238 = sbr.rel (%p236) target = $region21
  $region20: #{encoder_forward.36} parent=0 // pred_region
    %v239 = vld [vmem:[#allocation2] sm:$0xff]
    %v240 = vld [vmem:[#allocation2 + $0x8] sm:$0xff]
    %v241 = vld [vmem:[%s2] sm:$0x1]
    %v243 = vperm.slane %v241, 0
    %v245 = vadd.f32 %v239, %v243
    %v246 = vadd.f32 %v240, %v243
    %v247 = vmax.f32 %v245, 0.0
    %v248 = vmax.f32 %v246, 0.0
    %249 = vst [vmem:[%s3] sm:$0xff] %v247
    %250 = vst [vmem:[%s3 + $0x8] sm:$0xff] %v248
  $region21: #{encoder_forward.36} parent=0 // pred_fallthru
    _
  // Predicated region
  $region22: #{encoder_forward.36} parent=0 // pred_check
    _
  $region23: #{encoder_forward.36} parent=0 // pred_check_branch
    %252 = sbr.rel (0) target = $region25
  $region24: #{encoder_forward.36} parent=0 // pred_region
    _
  $region25: #{encoder_forward.36} parent=0 // pred_fallthru
    _
  // Predicated region
  $region26: #{encoder_forward.36} parent=0 // pred_check
    _
  $region27: #{encoder_forward.36} parent=0 // pred_check_branch
    %254 = sbr.rel (0) target = $region29
  $region28: #{encoder_forward.36} parent=0 // pred_region
    _
  $region29: #{encoder_forward.36} parent=0 // pred_fallthru
    _

// kernel: encoder_forward.37
$region0: #{encoder_forward.37}
  #allocation0 [shape = 'u32[]', space=smem, size = 0x4, offset = 0x4, fixed_abs, tag = 'smem constant byte address 0x4 - core index']
  #allocation1 [shape = 'u32[72,128]{1,0:T(1,128)}', space=vmem, size = 0x9000, scoped, tag = 'internal scratch']
  #allocation2 [shape = 'f32[16,128]{1,0:T(8,128)}', space=vmem, size = 0x2000, scoped, tag = 'scratch operand']
  %s0 = inlined_call_operand.vmem [shape: bf16[16,288], index: 0, kind: input, shape index: {}]
  %s1 = inlined_call_operand.vmem [shape: bf16[288,128], index: 1, kind: input, shape index: {}]
  %s2 = inlined_call_operand.vmem [shape: f32[1,128], index: 2, kind: input, shape index: {}]
  %s3 = inlined_call_operand.vmem [shape: f32[16,2], index: 3, kind: input, shape index: {}]
  %s4 = inlined_call_operand.vmem [shape: f32[16,128], index: 4, kind: output, shape index: {}]
  %s5 = sld [smem:[#allocation0]]
  $region34: #{encoder_forward.37} parent=0
    _
  %s7 = ssub.s32 1, %s5
  %s8 = scalar_select 0, %s7, %s5
  // Predicated region
  $region2: #{encoder_forward.37} parent=0 // pred_check
    _
  $region3: #{encoder_forward.37} parent=0 // pred_check_branch
    %10 = sbr.rel (0) target = $region5
  $region4: #{encoder_forward.37} parent=0 // pred_region
    _
  $region5: #{encoder_forward.37} parent=0 // pred_fallthru
    _
  // Predicated region
  $region6: #{encoder_forward.37} parent=0 // pred_check
    _
  $region7: #{encoder_forward.37} parent=0 // pred_check_branch
    %12 = sbr.rel (0) target = $region9
  $region8: #{encoder_forward.37} parent=0 // pred_region
    _
  $region9: #{encoder_forward.37} parent=0 // pred_fallthru
    _
  // Predicated region
  $region10: #{encoder_forward.37} parent=0 // pred_check
    _
  $region11: #{encoder_forward.37} parent=0 // pred_check_branch
    %14 = sbr.rel (0) target = $region13
  $region12: #{encoder_forward.37} parent=0 // pred_region
    _
  $region13: #{encoder_forward.37} parent=0 // pred_fallthru
    _
  // Predicated region
  $region14: #{encoder_forward.37} parent=0 // pred_check
    _
  $region15: #{encoder_forward.37} parent=0 // pred_check_branch
    %16 = sbr.rel (0) target = $region17
  $region16: #{encoder_forward.37} parent=0 // pred_region
    _
  $region17: #{encoder_forward.37} parent=0 // pred_fallthru
    _
  %p18 = scmp.eq.s32.totalorder 0, 0
  // Predicated region
  $region18: #{encoder_forward.37} parent=0 // pred_check
    %p19 = pneg %p18
  $region19: #{encoder_forward.37} parent=0 // pred_check_branch
    %21 = sbr.rel (%p19) target = $region21
  $region20: #{encoder_forward.37} parent=0 // pred_region
    %22 = vst [vmem:[#allocation2] sm:$0xff] 0.0
    %23 = vst [vmem:[#allocation2 + $0x8] sm:$0xff] 0.0
  $region21: #{encoder_forward.37} parent=0 // pred_fallthru
    _
  %v24 = vld [vmem:[#allocation2] sm:$0xff]
  %v25 = vld [vmem:[#allocation2 + $0x8] sm:$0xff]
  %v26 = vld [vmem:[%s0] sm:$0xff]
  %v27 = vld [vmem:[%s0 + $0x8] sm:$0xf]
  %v28 = vld [vmem:[%s0 + $0xc] sm:$0xff]
  %v29 = vld [vmem:[%s0 + $0x14] sm:$0xf]
  %v30 = vld [vmem:[%s1] sm:$0xf]
  %v31 = vld [vmem:[%s1 + $0x4] sm:$0xf]
  %v32 = vld [vmem:[%s1 + $0x8] sm:$0xf]
  %v33 = vld [vmem:[%s1 + $0xc] sm:$0xf]
  %v34 = vld [vmem:[%s1 + $0x10] sm:$0xf]
  %v35 = vld [vmem:[%s1 + $0x14] sm:$0xf]
  %v36 = vld [vmem:[%s1 + $0x18] sm:$0xf]
  %v37 = vld [vmem:[%s1 + $0x1c] sm:$0xf]
  %v38 = vld [vmem:[%s1 + $0x20] sm:$0xf]
  %v39 = vld [vmem:[%s1 + $0x24] sm:$0xf]
  %v40 = vld [vmem:[%s1 + $0x28] sm:$0xf]
  %v41 = vld [vmem:[%s1 + $0x2c] sm:$0xf]
  %v42 = vld [vmem:[%s1 + $0x30] sm:$0xf]
  %v43 = vld [vmem:[%s1 + $0x34] sm:$0xf]
  %v44 = vld [vmem:[%s1 + $0x38] sm:$0xf]
  %v45 = vld [vmem:[%s1 + $0x3c] sm:$0xf]
  %v46 = vld [vmem:[%s1 + $0x40] sm:$0xf]
  %v47 = vld [vmem:[%s1 + $0x44] sm:$0xf]
  %v48 = vld [vmem:[%s1 + $0x48] sm:$0xf]
  %v49 = vld [vmem:[%s1 + $0x4c] sm:$0xf]
  %v50 = vld [vmem:[%s1 + $0x50] sm:$0xf]
  %v51 = vld [vmem:[%s1 + $0x54] sm:$0xf]
  %v52 = vld [vmem:[%s1 + $0x58] sm:$0xf]
  %v53 = vld [vmem:[%s1 + $0x5c] sm:$0xf]
  %v54 = vld [vmem:[%s1 + $0x60] sm:$0xf]
  %v55 = vld [vmem:[%s1 + $0x64] sm:$0xf]
  %v56 = vld [vmem:[%s1 + $0x68] sm:$0xf]
  %v57 = vld [vmem:[%s1 + $0x6c] sm:$0xf]
  %v58 = vld [vmem:[%s1 + $0x70] sm:$0xf]
  %v59 = vld [vmem:[%s1 + $0x74] sm:$0xf]
  %v60 = vld [vmem:[%s1 + $0x78] sm:$0xf]
  %v61 = vld [vmem:[%s1 + $0x7c] sm:$0xf]
  %v62 = vld [vmem:[%s1 + $0x80] sm:$0xf]
  %v63 = vld [vmem:[%s1 + $0x84] sm:$0xf]
  %v64 = vld [vmem:[%s1 + $0x88] sm:$0xf]
  %v65 = vld [vmem:[%s1 + $0x8c] sm:$0xf]
  %v70 = vunpack.c.l.b16 %v26
  %v71 = vunpack.c.h.b16 %v26
  %v72 = vunpack.c.l.b16 %v27
  %v73 = vunpack.c.l.b16 %v28
  %v74 = vunpack.c.h.b16 %v28
  %v75 = vunpack.c.l.b16 %v29
  %v76 = vpack.c.b16 %v73, %v70
  %v77 = vpack.c.b16 %v74, %v71
  %v78 = vpack.c.b16 %v75, %v72
  %v117 = vunpack.c.l.b16 %v30
  %v118 = vunpack.c.l.b16 %v31
  %v119 = vunpack.c.l.b16 %v32
  %v120 = vunpack.c.l.b16 %v33
  %v121 = vunpack.c.l.b16 %v34
  %v122 = vunpack.c.l.b16 %v35
  %v123 = vunpack.c.l.b16 %v36
  %v124 = vunpack.c.l.b16 %v37
  %v125 = vunpack.c.l.b16 %v38
  %v126 = vunpack.c.l.b16 %v39
  %v127 = vunpack.c.l.b16 %v40
  %v128 = vunpack.c.l.b16 %v41
  %v129 = vunpack.c.l.b16 %v42
  %v130 = vunpack.c.l.b16 %v43
  %v131 = vunpack.c.l.b16 %v44
  %v132 = vunpack.c.l.b16 %v45
  %v133 = vunpack.c.l.b16 %v46
  %v134 = vunpack.c.l.b16 %v47
  %v135 = vunpack.c.l.b16 %v48
  %v136 = vunpack.c.l.b16 %v49
  %v137 = vunpack.c.l.b16 %v50
  %v138 = vunpack.c.l.b16 %v51
  %v139 = vunpack.c.l.b16 %v52
  %v140 = vunpack.c.l.b16 %v53
  %v141 = vunpack.c.l.b16 %v54
  %v142 = vunpack.c.l.b16 %v55
  %v143 = vunpack.c.l.b16 %v56
  %v144 = vunpack.c.l.b16 %v57
  %v145 = vunpack.c.l.b16 %v58
  %v146 = vunpack.c.l.b16 %v59
  %v147 = vunpack.c.l.b16 %v60
  %v148 = vunpack.c.l.b16 %v61
  %v149 = vunpack.c.l.b16 %v62
  %v150 = vunpack.c.l.b16 %v63
  %v151 = vunpack.c.l.b16 %v64
  %v152 = vunpack.c.l.b16 %v65
  %v153 = vpack.c.b16 %v118, %v117
  %v154 = vpack.c.b16 %v120, %v119
  %v155 = vpack.c.b16 %v122, %v121
  %v156 = vpack.c.b16 %v124, %v123
  %v157 = vpack.c.b16 %v126, %v125
  %v158 = vpack.c.b16 %v128, %v127
  %v159 = vpack.c.b16 %v130, %v129
  %v160 = vpack.c.b16 %v132, %v131
  %v161 = vpack.c.b16 %v134, %v133
  %v162 = vpack.c.b16 %v136, %v135
  %v163 = vpack.c.b16 %v138, %v137
  %v164 = vpack.c.b16 %v140, %v139
  %v165 = vpack.c.b16 %v142, %v141
  %v166 = vpack.c.b16 %v144, %v143
  %v167 = vpack.c.b16 %v146, %v145
  %v168 = vpack.c.b16 %v148, %v147
  %v169 = vpack.c.b16 %v150, %v149
  %v170 = vpack.c.b16 %v152, %v151
  %vm189 = vcmask 261120
  %v191 = vsel %vm189, %v78, 0
  %193 = vmatpush.bf16.msra.mxu0 %v160
  %194 = vmatpush.bf16.msra.mxu0 %v159
  %195 = vmatpush.bf16.msra.mxu0 %v158
  %196 = vmatpush.bf16.msra.mxu0 %v157
  %197 = vmatpush.bf16.msra.mxu0 %v156
  %198 = vmatpush.bf16.msra.mxu0 %v155
  %199 = vmatpush.bf16.msra.mxu0 %v154
  %200 = vmatpush.bf16.msra.mxu0 %v153
  %201 = vmatmul.bf16.gmra.mxu0 %v76
  %v202 = vpop.f32.mrf.mxu0
  %v203 = vadd.f32 0.0, %v202
  %v204 = vpop.f32.mrf.mxu0
  %v205 = vadd.f32 0.0, %v204
  %206 = vdwg.mxu0
  %207 = vmatpush.bf16.msra.mxu0 %v168
  %208 = vmatpush.bf16.msra.mxu0 %v167
  %209 = vmatpush.bf16.msra.mxu0 %v166
  %210 = vmatpush.bf16.msra.mxu0 %v165
  %211 = vmatpush.bf16.msra.mxu0 %v164
  %212 = vmatpush.bf16.msra.mxu0 %v163
  %213 = vmatpush.bf16.msra.mxu0 %v162
  %214 = vmatpush.bf16.msra.mxu0 %v161
  %215 = vmatmul.bf16.gmra.mxu0 %v77
  %v216 = vpop.f32.mrf.mxu0
  %v217 = vadd.f32 %v203, %v216
  %v218 = vpop.f32.mrf.mxu0
  %v219 = vadd.f32 %v205, %v218
  %220 = vdwg.mxu0
  %221 = vmatpush.bf16.msra.mxu0 0
  %222 = vmatpush.bf16.msra.mxu0 0
  %223 = vmatpush.bf16.msra.mxu0 0
  %224 = vmatpush.bf16.msra.mxu0 0
  %225 = vmatpush.bf16.msra.mxu0 0
  %226 = vmatpush.bf16.msra.mxu0 0
  %227 = vmatpush.bf16.msra.mxu0 %v170
  %228 = vmatpush.bf16.msra.mxu0 %v169
  %229 = vmatmul.bf16.gmra.mxu0 %v191
  %v230 = vpop.f32.mrf.mxu0
  %v231 = vadd.f32 %v217, %v230
  %v232 = vpop.f32.mrf.mxu0
  %v233 = vadd.f32 %v219, %v232
  %234 = vdwg.mxu0
  %v235 = vadd.f32 %v24, %v231
  %v236 = vadd.f32 %v25, %v233
  %237 = vst [vmem:[#allocation2] sm:$0xff] %v235
  %238 = vst [vmem:[#allocation2 + $0x8] sm:$0xff] %v236
  // Predicated region
  $region22: #{encoder_forward.37} parent=0 // pred_check
    %p239 = pneg %p18
  $region23: #{encoder_forward.37} parent=0 // pred_check_branch
    %241 = sbr.rel (%p239) target = $region25
  $region24: #{encoder_forward.37} parent=0 // pred_region
    %v242 = vld [vmem:[#allocation2] sm:$0xff]
    %v243 = vld [vmem:[#allocation2 + $0x8] sm:$0xff]
    %v244 = vld [vmem:[%s3] sm:$0xff]
    %v245 = vld [vmem:[%s3 + $0x8] sm:$0xff]
    %247 = vset.pattern.permute.xlu0 0
    %248 = vperm.xlu0 %247, %v244
    %v249 = vpop.permute.xlu0 %248
    %252 = vset.pattern.permute.xlu0 0
    %253 = vperm.xlu0 %252, %v245
    %v254 = vpop.permute.xlu0 %253
    %v256 = vmul.f32 %v242, %v249
    %v257 = vmul.f32 %v243, %v254
    %v258 = vld [vmem:[%s2] sm:$0x1]
    %v260 = vperm.slane %v258, 0
    %262 = vset.pattern.permute.xlu0 1
    %263 = vperm.xlu0 %262, %v244
    %v264 = vpop.permute.xlu0 %263
    %266 = vset.pattern.permute.xlu0 1
    %267 = vperm.xlu0 %266, %v245
    %v268 = vpop.permute.xlu0 %267
    %v270 = vmul.f32 %v260, %v264
    %v271 = vmul.f32 %v260, %v268
    %v272 = vadd.f32 %v256, %v270
    %v273 = vadd.f32 %v257, %v271
    %v274 = vmax.f32 %v272, 0.0
    %v275 = vmax.f32 %v273, 0.0
    %276 = vst [vmem:[%s4] sm:$0xff] %v274
    %277 = vst [vmem:[%s4 + $0x8] sm:$0xff] %v275
  $region25: #{encoder_forward.37} parent=0 // pred_fallthru
    _
  // Predicated region
  $region26: #{encoder_forward.37} parent=0 // pred_check
    _
  $region27: #{encoder_forward.37} parent=0 // pred_check_branch
    %279 = sbr.rel (0) target = $region29
  $region28: #{encoder_forward.37} parent=0 // pred_region
    _
  $region29: #{encoder_forward.37} parent=0 // pred_fallthru
    _
  // Predicated region
  $region30: #{encoder_forward.37} parent=0 // pred_check
    _
  $region31: #{encoder_forward.37} parent=0 // pred_check_branch
    %281 = sbr.rel (0) target = $region33
  $region32: #{encoder_forward.37} parent=0 // pred_region
    _
  $region33: #{encoder_forward.37} parent=0 // pred_fallthru
    _

</llo_original>
